<compile_context>
chip_gen: v7x
topology: tpu7x:2x2x1
jax: 0.10.0
libtpu: 0.0.40
codegen_flags: <defaults>
</compile_context>

<pallas_src>
import functools
import numpy as np
import jax
import jax.numpy as jnp
from jax.experimental import pallas as pl
from jax.experimental.pallas import tpu as pltpu


def _round_up(a, b):
    return -(-a // b) * b


def _cdiv(a, b):
    return -(-a // b)


def _gaussian_1d_np(window_size: int, sigma: float) -> np.ndarray:
    x = np.arange(window_size, dtype=np.float32) - window_size // 2
    if window_size % 2 == 0:
        x = x + 0.5
    g = np.exp(-(x ** 2) / (2.0 * sigma ** 2)).astype(np.float32)
    return g / g.sum()


def _reflect_blur_matrix(n: int, g: np.ndarray) -> np.ndarray:
    """(n, n) matrix M so that (M @ v) equals Gaussian blur of v along axis 0
    with 'reflect' boundary handling (== F.pad(mode='reflect') + conv)."""
    win = len(g)
    pad = win // 2
    m = np.zeros((n, n), np.float32)
    for i in range(n):
        for t in range(win):
            p = i - pad + t
            if p < 0:
                p = -p
            elif p > n - 1:
                p = 2 * (n - 1) - p
            m[i, p] += float(g[t])
    return m


def _make_ssim_kernel(c1: float, c2: float, eps: float):
    hi = jax.lax.Precision.HIGHEST

    def kernel(x1_ref, x2_ref, bh_ref, bd_ref, seg_ref, out_ref):
        x1 = x1_ref[...]            # (H, LW) f32, k images packed along lanes
        x2 = x2_ref[...]
        bh = bh_ref[...]            # (H, H)   column blur, reflect folded in
        bd = bd_ref[...]            # (LW, LW) block-diag per-image row blur
        seg = seg_ref[...]          # (LW, KOUT) 0/1 per-image lane-segment sum

        def blur(v):                # gaussian conv2d with reflect padding (MXU)
            t = jnp.dot(bh, v, precision=hi,
                        preferred_element_type=jnp.float32)          # col pass
            return jnp.dot(t, bd, precision=hi,
                           preferred_element_type=jnp.float32)       # row pass

        # One field end-to-end at a time keeps the VMEM high-water mark low.
        mu1 = blur(x1)
        mu2 = blur(x2)
        e11 = blur(x1 * x1)
        e22 = blur(x2 * x2)
        e12 = blur(x1 * x2)

        mu1_sq = mu1 * mu1
        mu2_sq = mu2 * mu2
        mu1_mu2 = mu1 * mu2
        sigma1_sq = e11 - mu1_sq
        sigma2_sq = e22 - mu2_sq
        sigma12 = e12 - mu1_mu2

        num = (2.0 * mu1_mu2 + c1) * (2.0 * sigma12 + c2)
        den = (mu1_sq + mu2_sq + c1) * (sigma1_sq + sigma2_sq + c2)
        ssim_map = num * pl.reciprocal(den + eps)          # divide on the EUP
        loss_map = jnp.clip(0.5 * (1.0 - ssim_map), 0.0, 1.0)

        # Per-image partial sums: lane-segment sum on the MXU, then a cheap
        # sublane reduction; lane-dense (1, 1, KOUT) store.
        per_img = jnp.dot(loss_map, seg, precision=hi,
                          preferred_element_type=jnp.float32)        # (H, KOUT)
        out_ref[...] = jnp.sum(per_img, axis=0, keepdims=True)[None]  # (1,1,KOUT)

    return kernel


@functools.partial(jax.jit, static_argnames=("window_size", "max_val", "eps"))
def ssim_loss_pallas(img1, img2, window_size: int = 5, max_val: float = 1.0,
                     eps: float = 1e-12):
    """Equivalent of SSIMLoss(window_size, max_val, eps, reduction='mean')."""
    assert img1.shape == img2.shape and img1.ndim == 4
    assert window_size % 2 == 1, "only odd window sizes are supported"
    B, C, H, W = img1.shape
    pad = window_size // 2
    assert H > pad and W > pad, "reflect padding needs H, W > window_size // 2"
    BC = B * C

    g = _gaussian_1d_np(window_size, 1.5)
    c1 = (0.01 * max_val) ** 2
    c2 = (0.03 * max_val) ** 2

    # ---- generation-aware VMEM budget (real (8,128)-padded footprint) ----
    try:
        vmem_phys = int(pltpu.get_tpu_info().vmem_capacity_bytes)
    except Exception:
        vmem_phys = 64 * 1024 * 1024           # v7x per-core size as a safe floor
    vmem_limit = max(32 * 1024 * 1024,
                     min(vmem_phys * 3 // 4, 100 * 1024 * 1024))
    ws_budget = vmem_limit * 2 // 3            # headroom for Mosaic internal scratch

    def ws_bytes(k):
        lw = _round_up(k * W, 128)
        field = _round_up(H, 8) * lw * 4
        io = 2 * 2 * field                                          # x1,x2 double-buffered
        consts = 2 * (_round_up(H, 8) * _round_up(H, 128) * 4       # Bh
                      + lw * lw * 4                                 # BD
                      + lw * _round_up(max(k, 128), 128) * 4)       # segment matrix
        temps = 10 * field                                          # live temporaries
        return io + consts + temps

    # ---- images-per-block selection (lane density first, then >=2 steps) ----
    k_dense = min(BC, max(1, _cdiv(128, W)))          # smallest k giving >=128 lanes
    n_dense_blocks = max(1, BC // max(1, _cdiv(128, W)))
    k = max(1, k_dense)
    # Grow the block (fewer grid steps) while: lanes <= 512 (keeps BD small),
    # VMEM fits, and >=2 grid steps remain whenever >=2 lane-dense blocks of
    # work exist (v7x megacore + pipelining).
    while (k * 2 <= BC and k * 2 * W <= 512
           and not (n_dense_blocks >= 2 and _cdiv(BC, k * 2) < 2)
           and ws_bytes(k * 2) <= ws_budget):
        k *= 2
    while k > 1 and ws_bytes(k) > ws_budget:          # shrink for large H*W
        k = max(1, k // 2)

    num_blocks = _cdiv(BC, k)
    LW = _round_up(k * W, 128)
    KOUT = _round_up(max(k, 128), 128)
    BCp = num_blocks * k

    # ---- compile-time blur / reduction matrices (reflect folded in) ----
    bh = _reflect_blur_matrix(H, g)                   # left-multiply over rows
    bw_t = _reflect_blur_matrix(W, g).T               # right-multiply over cols
    bd = np.zeros((LW, LW), np.float32)
    bd[:k * W, :k * W] = np.kron(np.eye(k, dtype=np.float32), bw_t)
    seg = np.zeros((LW, KOUT), np.float32)
    for m in range(k):
        seg[m * W:(m + 1) * W, m] = 1.0

    # ---- data layout: (BC, H, W) -> (H, num_blocks*LW), images along lanes ----
    x1 = img1.reshape(BC, H, W).astype(jnp.float32)
    x2 = img2.reshape(BC, H, W).astype(jnp.float32)
    if BCp > BC:
        x1 = jnp.pad(x1, ((0, BCp - BC), (0, 0), (0, 0)))
        x2 = jnp.pad(x2, ((0, BCp - BC), (0, 0), (0, 0)))

    def repack(x):
        x = jnp.transpose(x, (1, 0, 2)).reshape(H, num_blocks, k * W)
        if LW > k * W:
            x = jnp.pad(x, ((0, 0), (0, 0), (0, LW - k * W)))
        return x.reshape(H, num_blocks * LW)

    x1 = repack(x1)
    x2 = repack(x2)

    kernel = _make_ssim_kernel(c1, c2, eps)
    partial = pl.pallas_call(
        kernel,
        out_shape=jax.ShapeDtypeStruct((num_blocks, 1, KOUT), jnp.float32),
        grid=(num_blocks,),
        in_specs=[
            pl.BlockSpec((H, LW), lambda i: (0, i)),
            pl.BlockSpec((H, LW), lambda i: (0, i)),
            pl.BlockSpec((H, H), lambda i: (0, 0)),
            pl.BlockSpec((LW, LW), lambda i: (0, 0)),
            pl.BlockSpec((LW, KOUT), lambda i: (0, 0)),
        ],
        out_specs=pl.BlockSpec((1, 1, KOUT), lambda i: (i, 0, 0)),
        compiler_params=pltpu.CompilerParams(
            dimension_semantics=("parallel",),
            vmem_limit_bytes=int(vmem_limit)),
    )(x1, x2, jnp.asarray(bh), jnp.asarray(bd), jnp.asarray(seg))

    # Final 'mean' reduction in the wrapper (drops padded image slots exactly).
    per_image = partial.reshape(num_blocks, KOUT)[:, :k].reshape(-1)[:BC]
    return jnp.sum(per_image) / float(BC * H * W)


def ssim_loss_ref(img1, img2, window_size: int = 5, max_val: float = 1.0,
                  eps: float = 1e-12):
    """Pure-JAX reference (same math as the kornia/PyTorch module)."""
    B, C, H, W = img1.shape
    pad = window_size // 2
    g = _gaussian_1d_np(window_size, 1.5)
    k2 = np.outer(g, g).astype(np.float32)
    c1 = (0.01 * max_val) ** 2
    c2 = (0.03 * max_val) ** 2

    x1 = img1.reshape(B * C, H, W).astype(jnp.float32)
    x2 = img2.reshape(B * C, H, W).astype(jnp.float32)
    x1p = jnp.pad(x1, ((0, 0), (pad, pad), (pad, pad)), mode='reflect')
    x2p = jnp.pad(x2, ((0, 0), (pad, pad), (pad, pad)), mode='reflect')

    def conv(xp):
        acc = jnp.zeros((B * C, H, W), jnp.float32)
        for ki in range(window_size):
            for kj in range(window_size):
                acc = acc + float(k2[ki, kj]) * xp[:, ki:ki + H, kj:kj + W]
        return acc

    mu1 = conv(x1p)
    mu2 = conv(x2p)
    sigma1_sq = conv(x1p * x1p) - mu1 * mu1
    sigma2_sq = conv(x2p * x2p) - mu2 * mu2
    sigma12 = conv(x1p * x2p) - mu1 * mu2
    num = (2.0 * mu1 * mu2 + c1) * (2.0 * sigma12 + c2)
    den = (mu1 * mu1 + mu2 * mu2 + c1) * (sigma1_sq + sigma2_sq + c2)
    ssim_map = num / (den + eps)
    loss = jnp.clip((1.0 - ssim_map) * 0.5, 0.0, 1.0)
    return jnp.mean(loss)


if __name__ == "__main__":
    key = jax.random.PRNGKey(0)
    key1, key2 = jax.random.split(key)
    B, C, H, W = 2, 4, 16, 16
    window_size = 5

    img1 = jax.random.uniform(key1, (B, C, H, W), dtype=jnp.float32)
    img2 = jax.random.uniform(key2, (B, C, H, W), dtype=jnp.float32)

    loss = jax.block_until_ready(
        ssim_loss_pallas(img1, img2, window_size=window_size))
    ref = jax.block_until_ready(ssim_loss_ref(img1, img2, window_size))
    assert jnp.allclose(loss, ref, rtol=2e-4, atol=1e-5), (loss, ref)

    print("KERNEL_OK")
</pallas_src>

<mosaic_0001>
module attributes {stable_mosaic.version = 11 : i64} {
  func.func @kernel(%arg0: i32, %arg1: memref<16x128xf32, #tpu.memory_space<vmem>>, %arg2: memref<16x128xf32, #tpu.memory_space<vmem>>, %arg3: memref<16x16xf32, #tpu.memory_space<vmem>>, %arg4: memref<128x128xf32, #tpu.memory_space<vmem>>, %arg5: memref<128x128xf32, #tpu.memory_space<vmem>>, %arg6: memref<1x1x128xf32, #tpu.memory_space<vmem>>) attributes {dimension_semantics = [#tpu.dimension_semantics<parallel>], iteration_bounds = array<i64: 1>, scalar_prefetch = 0 : i64, scratch_operands = 0 : i64, tpu.core_type = #tpu.core_type<tc>, window_params = [{transform_indices = @transform_0, window_bounds = array<i64: 16, 128>}, {transform_indices = @transform_1, window_bounds = array<i64: 16, 128>}, {pipeline_mode = #tpu.pipeline_mode<synchronous>, transform_indices = @transform_2, window_bounds = array<i64: 16, 16>}, {pipeline_mode = #tpu.pipeline_mode<synchronous>, transform_indices = @transform_3, window_bounds = array<i64: 128, 128>}, {pipeline_mode = #tpu.pipeline_mode<synchronous>, transform_indices = @transform_4, window_bounds = array<i64: 128, 128>}, {transform_indices = @transform_5, window_bounds = array<i64: 1, 1, 128>}]} {
    %c0 = arith.constant 0 : index
    %c0_0 = arith.constant 0 : index
    %0 = vector.load %arg1[%c0, %c0_0] : memref<16x128xf32, #tpu.memory_space<vmem>>, vector<16x128xf32>
    %c0_1 = arith.constant 0 : index
    %c0_2 = arith.constant 0 : index
    %1 = vector.load %arg2[%c0_1, %c0_2] : memref<16x128xf32, #tpu.memory_space<vmem>>, vector<16x128xf32>
    %c0_3 = arith.constant 0 : index
    %c0_4 = arith.constant 0 : index
    %2 = vector.load %arg3[%c0_3, %c0_4] : memref<16x16xf32, #tpu.memory_space<vmem>>, vector<16x16xf32>
    %c0_5 = arith.constant 0 : index
    %c0_6 = arith.constant 0 : index
    %3 = vector.load %arg4[%c0_5, %c0_6] : memref<128x128xf32, #tpu.memory_space<vmem>>, vector<128x128xf32>
    %c0_7 = arith.constant 0 : index
    %c0_8 = arith.constant 0 : index
    %4 = vector.load %arg5[%c0_7, %c0_8] : memref<128x128xf32, #tpu.memory_space<vmem>>, vector<128x128xf32>
    %cst = arith.constant dense<0.000000e+00> : vector<16x128xf32>
    %5 = tpu.matmul %2, %0, %cst {dimension_numbers = #tpu.dot_dimension_numbers<[1], [0], [0], [1], [0, 0, 1, 1], [], []>, precision = #tpu.contract_precision<fp32>} : vector<16x16xf32>, vector<16x128xf32>, vector<16x128xf32> -> vector<16x128xf32>
    %cst_9 = arith.constant dense<0.000000e+00> : vector<16x128xf32>
    %6 = tpu.matmul %5, %3, %cst_9 {dimension_numbers = #tpu.dot_dimension_numbers<[1], [0], [0], [1], [0, 0, 1, 1], [], []>, precision = #tpu.contract_precision<fp32>} : vector<16x128xf32>, vector<128x128xf32>, vector<16x128xf32> -> vector<16x128xf32>
    %cst_10 = arith.constant dense<0.000000e+00> : vector<16x128xf32>
    %7 = tpu.matmul %2, %1, %cst_10 {dimension_numbers = #tpu.dot_dimension_numbers<[1], [0], [0], [1], [0, 0, 1, 1], [], []>, precision = #tpu.contract_precision<fp32>} : vector<16x16xf32>, vector<16x128xf32>, vector<16x128xf32> -> vector<16x128xf32>
    %cst_11 = arith.constant dense<0.000000e+00> : vector<16x128xf32>
    %8 = tpu.matmul %7, %3, %cst_11 {dimension_numbers = #tpu.dot_dimension_numbers<[1], [0], [0], [1], [0, 0, 1, 1], [], []>, precision = #tpu.contract_precision<fp32>} : vector<16x128xf32>, vector<128x128xf32>, vector<16x128xf32> -> vector<16x128xf32>
    %9 = arith.mulf %0, %0 : vector<16x128xf32>
    %cst_12 = arith.constant dense<0.000000e+00> : vector<16x128xf32>
    %10 = tpu.matmul %2, %9, %cst_12 {dimension_numbers = #tpu.dot_dimension_numbers<[1], [0], [0], [1], [0, 0, 1, 1], [], []>, precision = #tpu.contract_precision<fp32>} : vector<16x16xf32>, vector<16x128xf32>, vector<16x128xf32> -> vector<16x128xf32>
    %cst_13 = arith.constant dense<0.000000e+00> : vector<16x128xf32>
    %11 = tpu.matmul %10, %3, %cst_13 {dimension_numbers = #tpu.dot_dimension_numbers<[1], [0], [0], [1], [0, 0, 1, 1], [], []>, precision = #tpu.contract_precision<fp32>} : vector<16x128xf32>, vector<128x128xf32>, vector<16x128xf32> -> vector<16x128xf32>
    %12 = arith.mulf %1, %1 : vector<16x128xf32>
    %cst_14 = arith.constant dense<0.000000e+00> : vector<16x128xf32>
    %13 = tpu.matmul %2, %12, %cst_14 {dimension_numbers = #tpu.dot_dimension_numbers<[1], [0], [0], [1], [0, 0, 1, 1], [], []>, precision = #tpu.contract_precision<fp32>} : vector<16x16xf32>, vector<16x128xf32>, vector<16x128xf32> -> vector<16x128xf32>
    %cst_15 = arith.constant dense<0.000000e+00> : vector<16x128xf32>
    %14 = tpu.matmul %13, %3, %cst_15 {dimension_numbers = #tpu.dot_dimension_numbers<[1], [0], [0], [1], [0, 0, 1, 1], [], []>, precision = #tpu.contract_precision<fp32>} : vector<16x128xf32>, vector<128x128xf32>, vector<16x128xf32> -> vector<16x128xf32>
    %15 = arith.mulf %0, %1 : vector<16x128xf32>
    %cst_16 = arith.constant dense<0.000000e+00> : vector<16x128xf32>
    %16 = tpu.matmul %2, %15, %cst_16 {dimension_numbers = #tpu.dot_dimension_numbers<[1], [0], [0], [1], [0, 0, 1, 1], [], []>, precision = #tpu.contract_precision<fp32>} : vector<16x16xf32>, vector<16x128xf32>, vector<16x128xf32> -> vector<16x128xf32>
    %cst_17 = arith.constant dense<0.000000e+00> : vector<16x128xf32>
    %17 = tpu.matmul %16, %3, %cst_17 {dimension_numbers = #tpu.dot_dimension_numbers<[1], [0], [0], [1], [0, 0, 1, 1], [], []>, precision = #tpu.contract_precision<fp32>} : vector<16x128xf32>, vector<128x128xf32>, vector<16x128xf32> -> vector<16x128xf32>
    %18 = arith.mulf %6, %6 : vector<16x128xf32>
    %19 = arith.mulf %8, %8 : vector<16x128xf32>
    %20 = arith.mulf %6, %8 : vector<16x128xf32>
    %21 = arith.subf %11, %18 : vector<16x128xf32>
    %22 = arith.subf %14, %19 : vector<16x128xf32>
    %23 = arith.subf %17, %20 : vector<16x128xf32>
    %cst_18 = arith.constant 2.000000e+00 : f32
    %24 = vector.broadcast %cst_18 : f32 to vector<16x128xf32>
    %25 = arith.mulf %24, %20 : vector<16x128xf32>
    %cst_19 = arith.constant 9.99999974E-5 : f32
    %26 = vector.broadcast %cst_19 : f32 to vector<16x128xf32>
    %27 = arith.addf %25, %26 : vector<16x128xf32>
    %cst_20 = arith.constant 2.000000e+00 : f32
    %28 = vector.broadcast %cst_20 : f32 to vector<16x128xf32>
    %29 = arith.mulf %28, %23 : vector<16x128xf32>
    %cst_21 = arith.constant 8.99999984E-4 : f32
    %30 = vector.broadcast %cst_21 : f32 to vector<16x128xf32>
    %31 = arith.addf %29, %30 : vector<16x128xf32>
    %32 = arith.mulf %27, %31 : vector<16x128xf32>
    %33 = arith.addf %18, %19 : vector<16x128xf32>
    %cst_22 = arith.constant 9.99999974E-5 : f32
    %34 = vector.broadcast %cst_22 : f32 to vector<16x128xf32>
    %35 = arith.addf %33, %34 : vector<16x128xf32>
    %36 = arith.addf %21, %22 : vector<16x128xf32>
    %cst_23 = arith.constant 8.99999984E-4 : f32
    %37 = vector.broadcast %cst_23 : f32 to vector<16x128xf32>
    %38 = arith.addf %36, %37 : vector<16x128xf32>
    %39 = arith.mulf %35, %38 : vector<16x128xf32>
    %cst_24 = arith.constant 9.99999996E-13 : f32
    %40 = vector.broadcast %cst_24 : f32 to vector<16x128xf32>
    %41 = arith.addf %39, %40 : vector<16x128xf32>
    %42 = tpu.reciprocal %41 : vector<16x128xf32> -> vector<16x128xf32>
    %43 = arith.mulf %32, %42 : vector<16x128xf32>
    %cst_25 = arith.constant 1.000000e+00 : f32
    %44 = vector.broadcast %cst_25 : f32 to vector<16x128xf32>
    %45 = arith.subf %44, %43 : vector<16x128xf32>
    %cst_26 = arith.constant 5.000000e-01 : f32
    %46 = vector.broadcast %cst_26 : f32 to vector<16x128xf32>
    %47 = arith.mulf %46, %45 : vector<16x128xf32>
    %cst_27 = arith.constant 0.000000e+00 : f32
    %cst_28 = arith.constant 1.000000e+00 : f32
    %48 = vector.broadcast %cst_27 : f32 to vector<16x128xf32>
    %49 = arith.maximumf %48, %47 : vector<16x128xf32>
    %50 = vector.broadcast %cst_28 : f32 to vector<16x128xf32>
    %51 = arith.minimumf %50, %49 : vector<16x128xf32>
    %cst_29 = arith.constant dense<0.000000e+00> : vector<16x128xf32>
    %52 = tpu.matmul %51, %4, %cst_29 {dimension_numbers = #tpu.dot_dimension_numbers<[1], [0], [0], [1], [0, 0, 1, 1], [], []>, precision = #tpu.contract_precision<fp32>} : vector<16x128xf32>, vector<128x128xf32>, vector<16x128xf32> -> vector<16x128xf32>
    %cst_30 = arith.constant dense<0.000000e+00> : vector<128xf32>
    %53 = vector.multi_reduction <add>, %52, %cst_30 [0] : vector<16x128xf32> to vector<128xf32>
    %54 = vector.shape_cast %53 : vector<128xf32> to vector<1x128xf32>
    %55 = vector.shape_cast %54 : vector<1x128xf32> to vector<1x1x128xf32>
    %c0_31 = arith.constant 0 : index
    %c0_32 = arith.constant 0 : index
    %c0_33 = arith.constant 0 : index
    %56 = vector.load %arg6[%c0_31, %c0_32, %c0_33] : memref<1x1x128xf32, #tpu.memory_space<vmem>>, vector<1x1x128xf32>
    tpu.vector_store %arg6[%c0_31, %c0_32, %c0_33], %55 {strides = array<i32>} : memref<1x1x128xf32, #tpu.memory_space<vmem>>, vector<1x1x128xf32>,
    return
  }
  func.func @transform_0(%arg0: i32) -> (i32, i32) {
    %c0_i32 = arith.constant 0 : i32
    %c0_i32_0 = arith.constant 0 : i32
    return %c0_i32, %arg0 : i32, i32
  }
  func.func @transform_1(%arg0: i32) -> (i32, i32) {
    %c0_i32 = arith.constant 0 : i32
    %c0_i32_0 = arith.constant 0 : i32
    return %c0_i32, %arg0 : i32, i32
  }
  func.func @transform_2(%arg0: i32) -> (i32, i32) {
    %c0_i32 = arith.constant 0 : i32
    %c0_i32_0 = arith.constant 0 : i32
    %c0_i32_1 = arith.constant 0 : i32
    return %c0_i32, %c0_i32_0 : i32, i32
  }
  func.func @transform_3(%arg0: i32) -> (i32, i32) {
    %c0_i32 = arith.constant 0 : i32
    %c0_i32_0 = arith.constant 0 : i32
    %c0_i32_1 = arith.constant 0 : i32
    return %c0_i32, %c0_i32_0 : i32, i32
  }
  func.func @transform_4(%arg0: i32) -> (i32, i32) {
    %c0_i32 = arith.constant 0 : i32
    %c0_i32_0 = arith.constant 0 : i32
    %c0_i32_1 = arith.constant 0 : i32
    return %c0_i32, %c0_i32_0 : i32, i32
  }
  func.func @transform_5(%arg0: i32) -> (i32, i32, i32) {
    %c0_i32 = arith.constant 0 : i32
    %c0_i32_0 = arith.constant 0 : i32
    %c0_i32_1 = arith.constant 0 : i32
    return %arg0, %c0_i32, %c0_i32_0 : i32, i32, i32
  }
}

</mosaic_0001>

<llo_original>
// kernel: ssim_loss_pallas.1
$region0: #{ssim_loss_pallas.1}
  #allocation0 [shape = 'u32[]', space=smem, size = 0x4, offset = 0x4, fixed_abs, tag = 'smem constant byte address 0x4 - core index']
  #allocation1 [shape = 'u32[144,128]{1,0:T(1,128)}', space=vmem, size = 0x12000, scoped, tag = 'internal scratch']
  %s0 = inlined_call_operand.vmem [shape: f32[16,128], index: 0, kind: input, shape index: {}]
  %s1 = inlined_call_operand.vmem [shape: f32[16,128], index: 1, kind: input, shape index: {}]
  %s2 = inlined_call_operand.vmem [shape: f32[16,16], index: 2, kind: input, shape index: {}]
  %s3 = inlined_call_operand.vmem [shape: f32[128,128], index: 3, kind: input, shape index: {}]
  %s4 = inlined_call_operand.vmem [shape: f32[128,128], index: 4, kind: input, shape index: {}]
  %s5 = inlined_call_operand.vmem [shape: f32[1,1,128], index: 5, kind: output, shape index: {}]
  %s6 = sld [smem:[#allocation0]]
  $region30: #{ssim_loss_pallas.1} parent=0
    _
  %s8 = ssub.s32 1, %s6
  %s9 = scalar_select 0, %s8, %s6
  // Predicated region
  $region2: #{ssim_loss_pallas.1} parent=0 // pred_check
    _
  $region3: #{ssim_loss_pallas.1} parent=0 // pred_check_branch
    %11 = sbr.rel (0) target = $region5
  $region4: #{ssim_loss_pallas.1} parent=0 // pred_region
    _
  $region5: #{ssim_loss_pallas.1} parent=0 // pred_fallthru
    _
  // Predicated region
  $region6: #{ssim_loss_pallas.1} parent=0 // pred_check
    _
  $region7: #{ssim_loss_pallas.1} parent=0 // pred_check_branch
    %13 = sbr.rel (0) target = $region9
  $region8: #{ssim_loss_pallas.1} parent=0 // pred_region
    _
  $region9: #{ssim_loss_pallas.1} parent=0 // pred_fallthru
    _
  // Predicated region
  $region10: #{ssim_loss_pallas.1} parent=0 // pred_check
    _
  $region11: #{ssim_loss_pallas.1} parent=0 // pred_check_branch
    %15 = sbr.rel (0) target = $region13
  $region12: #{ssim_loss_pallas.1} parent=0 // pred_region
    _
  $region13: #{ssim_loss_pallas.1} parent=0 // pred_fallthru
    _
  // Predicated region
  $region14: #{ssim_loss_pallas.1} parent=0 // pred_check
    _
  $region15: #{ssim_loss_pallas.1} parent=0 // pred_check_branch
    %17 = sbr.rel (0) target = $region17
  $region16: #{ssim_loss_pallas.1} parent=0 // pred_region
    _
  $region17: #{ssim_loss_pallas.1} parent=0 // pred_fallthru
    _
  // Predicated region
  $region18: #{ssim_loss_pallas.1} parent=0 // pred_check
    _
  $region19: #{ssim_loss_pallas.1} parent=0 // pred_check_branch
    %19 = sbr.rel (0) target = $region21
  $region20: #{ssim_loss_pallas.1} parent=0 // pred_region
    _
  $region21: #{ssim_loss_pallas.1} parent=0 // pred_fallthru
    _
  %v20 = vld [vmem:[%s0] sm:$0xff]
  %v21 = vld [vmem:[%s0 + $0x8] sm:$0xff]
  %v22 = vld [vmem:[%s1] sm:$0xff]
  %v23 = vld [vmem:[%s1 + $0x8] sm:$0xff]
  %v24 = vld [vmem:[%s2] sm:$0xff]
  %v25 = vld [vmem:[%s2 + $0x8] sm:$0xff]
  %v26 = vld [vmem:[%s3] sm:$0xff]
  %v27 = vld [vmem:[%s3 + $0x8] sm:$0xff]
  %v28 = vld [vmem:[%s3 + $0x10] sm:$0xff]
  %v29 = vld [vmem:[%s3 + $0x18] sm:$0xff]
  %v30 = vld [vmem:[%s3 + $0x20] sm:$0xff]
  %v31 = vld [vmem:[%s3 + $0x28] sm:$0xff]
  %v32 = vld [vmem:[%s3 + $0x30] sm:$0xff]
  %v33 = vld [vmem:[%s3 + $0x38] sm:$0xff]
  %v34 = vld [vmem:[%s3 + $0x40] sm:$0xff]
  %v35 = vld [vmem:[%s3 + $0x48] sm:$0xff]
  %v36 = vld [vmem:[%s3 + $0x50] sm:$0xff]
  %v37 = vld [vmem:[%s3 + $0x58] sm:$0xff]
  %v38 = vld [vmem:[%s3 + $0x60] sm:$0xff]
  %v39 = vld [vmem:[%s3 + $0x68] sm:$0xff]
  %v40 = vld [vmem:[%s3 + $0x70] sm:$0xff]
  %v41 = vld [vmem:[%s3 + $0x78] sm:$0xff]
  %v42 = vld [vmem:[%s4] sm:$0xff]
  %v43 = vld [vmem:[%s4 + $0x8] sm:$0xff]
  %v44 = vld [vmem:[%s4 + $0x10] sm:$0xff]
  %v45 = vld [vmem:[%s4 + $0x18] sm:$0xff]
  %v46 = vld [vmem:[%s4 + $0x20] sm:$0xff]
  %v47 = vld [vmem:[%s4 + $0x28] sm:$0xff]
  %v48 = vld [vmem:[%s4 + $0x30] sm:$0xff]
  %v49 = vld [vmem:[%s4 + $0x38] sm:$0xff]
  %v50 = vld [vmem:[%s4 + $0x40] sm:$0xff]
  %v51 = vld [vmem:[%s4 + $0x48] sm:$0xff]
  %v52 = vld [vmem:[%s4 + $0x50] sm:$0xff]
  %v53 = vld [vmem:[%s4 + $0x58] sm:$0xff]
  %v54 = vld [vmem:[%s4 + $0x60] sm:$0xff]
  %v55 = vld [vmem:[%s4 + $0x68] sm:$0xff]
  %v56 = vld [vmem:[%s4 + $0x70] sm:$0xff]
  %v57 = vld [vmem:[%s4 + $0x78] sm:$0xff]
  %vm58 = vcmask 130048
  %v60 = vsel %vm58, %v24, 0
  %v63 = vsel %vm58, %v25, 0
  %65 = vmatprep.subr.mxu0 0.0
  %v66 = vand.u32 %v20, 4294901760
  %67 = vmatpush1.msra.mxu0 %v66
  %68 = vmatprep.subr.mxu0 0.0
  %v69 = vand.u32 %v21, 4294901760
  %70 = vmatpush1.msra.mxu0 %v69
  %71 = vmatprep.subr.mxu0 0.0
  %72 = vmatpush1.msra.mxu0 0.0
  %73 = vmatprep.subr.mxu0 0.0
  %74 = vmatpush1.msra.mxu0 0.0
  %75 = vmatprep.subr.mxu0 0.0
  %76 = vmatpush1.msra.mxu0 0.0
  %77 = vmatprep.subr.mxu0 0.0
  %78 = vmatpush1.msra.mxu0 0.0
  %79 = vmatprep.subr.mxu0 0.0
  %80 = vmatpush1.msra.mxu0 0.0
  %81 = vmatprep.subr.mxu0 0.0
  %82 = vmatpush1.msra.mxu0 0.0
  %83 = vmatprep.subr.mxu0 0.0
  %84 = vmatpush1.msra.mxu0 0.0
  %85 = vmatprep.subr.mxu0 0.0
  %86 = vmatpush1.msra.mxu0 0.0
  %87 = vmatprep.subr.mxu0 0.0
  %88 = vmatpush1.msra.mxu0 0.0
  %89 = vmatprep.subr.mxu0 0.0
  %90 = vmatpush1.msra.mxu0 0.0
  %91 = vmatprep.subr.mxu0 0.0
  %92 = vmatpush1.msra.mxu0 0.0
  %93 = vmatprep.subr.mxu0 0.0
  %94 = vmatpush1.msra.mxu0 0.0
  %95 = vmatprep.subr.mxu0 0.0
  %96 = vmatpush1.msra.mxu0 0.0
  %97 = vmatprep.subr.mxu0 0.0
  %98 = vmatpush1.msra.mxu0 0.0
  %99 = vmatprep.subr.mxu0 0.0
  %100 = vmatpush1.msra.mxu0 0.0
  %101 = vmatprep.subr.mxu0 0.0
  %102 = vmatpush1.msra.mxu0 0.0
  %103 = vmatprep.subr.mxu0 0.0
  %104 = vmatpush1.msra.mxu0 0.0
  %105 = vmatprep.subr.mxu0 0.0
  %106 = vmatpush1.msra.mxu0 0.0
  %107 = vmatprep.subr.mxu0 0.0
  %108 = vmatpush1.msra.mxu0 0.0
  %109 = vmatprep.subr.mxu0 0.0
  %110 = vmatpush1.msra.mxu0 0.0
  %111 = vmatprep.subr.mxu0 0.0
  %112 = vmatpush1.msra.mxu0 0.0
  %113 = vmatprep.subr.mxu0 0.0
  %114 = vmatpush1.msra.mxu0 0.0
  %115 = vmatprep.subr.mxu0 0.0
  %116 = vmatpush1.msra.mxu0 0.0
  %117 = vmatprep.subr.mxu0 0.0
  %118 = vmatpush1.msra.mxu0 0.0
  %119 = vmatprep.subr.mxu0 0.0
  %120 = vmatpush1.msra.mxu0 0.0
  %121 = vmatprep.subr.mxu0 0.0
  %122 = vmatpush1.msra.mxu0 0.0
  %123 = vmatprep.subr.mxu0 0.0
  %124 = vmatpush1.msra.mxu0 0.0
  %125 = vmatprep.subr.mxu0 0.0
  %126 = vmatpush1.msra.mxu0 0.0
  %127 = vmatprep.subr.mxu0 0.0
  %128 = vmatpush1.msra.mxu0 0.0
  %129 = vmatprep.subr.mxu0 0.0
  %130 = vmatpush1.msra.mxu0 0.0
  %131 = vmatprep.mubr.f32.mxu0 0.0
  %v132 = vand.u32 %v60, 4294901760
  %v133 = vsub.f32 %v60, %v132
  %v134 = vand.u32 %v133, 4294901760
  %v135 = vsub.f32 %v133, %v134
  %v136 = vand.u32 %v135, 4294901760
  %137 = vmatmul.mubr.f32.gmra.mrb[0].mxu0 %v136
  %v138 = vpop.f32.mrb[0].mxu0
  %v139 = vadd.f32 0.0, %v138
  %v140 = vpop.f32.mrb[0].mxu0
  %141 = vmatprep.mubr.f32.mxu0 0.0
  %v142 = vand.u32 %v63, 4294901760
  %v143 = vsub.f32 %v63, %v142
  %v144 = vand.u32 %v143, 4294901760
  %v145 = vsub.f32 %v143, %v144
  %v146 = vand.u32 %v145, 4294901760
  %147 = vmatmul.mubr.f32.gmra.mrb[0].mxu0 %v146
  %v148 = vpop.f32.mrb[0].mxu0
  %v149 = vadd.f32 0.0, %v148
  %v150 = vpop.f32.mrb[0].mxu0
  %151 = vdwg.mxu0
  %152 = vmatprep.subr.mxu0 0.0
  %v153 = vand.u32 %v20, 4294901760
  %v154 = vsub.f32 %v20, %v153
  %v155 = vand.u32 %v154, 4294901760
  %v156 = vsub.f32 %v154, %v155
  %v157 = vand.u32 %v156, 4294901760
  %158 = vmatpush1.msra.mxu0 %v157
  %159 = vmatprep.subr.mxu0 0.0
  %v160 = vand.u32 %v21, 4294901760
  %v161 = vsub.f32 %v21, %v160
  %v162 = vand.u32 %v161, 4294901760
  %v163 = vsub.f32 %v161, %v162
  %v164 = vand.u32 %v163, 4294901760
  %165 = vmatpush1.msra.mxu0 %v164
  %166 = vmatprep.subr.mxu0 0.0
  %167 = vmatpush1.msra.mxu0 0.0
  %168 = vmatprep.subr.mxu0 0.0
  %169 = vmatpush1.msra.mxu0 0.0
  %170 = vmatprep.subr.mxu0 0.0
  %171 = vmatpush1.msra.mxu0 0.0
  %172 = vmatprep.subr.mxu0 0.0
  %173 = vmatpush1.msra.mxu0 0.0
  %174 = vmatprep.subr.mxu0 0.0
  %175 = vmatpush1.msra.mxu0 0.0
  %176 = vmatprep.subr.mxu0 0.0
  %177 = vmatpush1.msra.mxu0 0.0
  %178 = vmatprep.subr.mxu0 0.0
  %179 = vmatpush1.msra.mxu0 0.0
  %180 = vmatprep.subr.mxu0 0.0
  %181 = vmatpush1.msra.mxu0 0.0
  %182 = vmatprep.subr.mxu0 0.0
  %183 = vmatpush1.msra.mxu0 0.0
  %184 = vmatprep.subr.mxu0 0.0
  %185 = vmatpush1.msra.mxu0 0.0
  %186 = vmatprep.subr.mxu0 0.0
  %187 = vmatpush1.msra.mxu0 0.0
  %188 = vmatprep.subr.mxu0 0.0
  %189 = vmatpush1.msra.mxu0 0.0
  %190 = vmatprep.subr.mxu0 0.0
  %191 = vmatpush1.msra.mxu0 0.0
  %192 = vmatprep.subr.mxu0 0.0
  %193 = vmatpush1.msra.mxu0 0.0
  %194 = vmatprep.subr.mxu0 0.0
  %195 = vmatpush1.msra.mxu0 0.0
  %196 = vmatprep.subr.mxu0 0.0
  %197 = vmatpush1.msra.mxu0 0.0
  %198 = vmatprep.subr.mxu0 0.0
  %199 = vmatpush1.msra.mxu0 0.0
  %200 = vmatprep.subr.mxu0 0.0
  %201 = vmatpush1.msra.mxu0 0.0
  %202 = vmatprep.subr.mxu0 0.0
  %203 = vmatpush1.msra.mxu0 0.0
  %204 = vmatprep.subr.mxu0 0.0
  %205 = vmatpush1.msra.mxu0 0.0
  %206 = vmatprep.subr.mxu0 0.0
  %207 = vmatpush1.msra.mxu0 0.0
  %208 = vmatprep.subr.mxu0 0.0
  %209 = vmatpush1.msra.mxu0 0.0
  %210 = vmatprep.subr.mxu0 0.0
  %211 = vmatpush1.msra.mxu0 0.0
  %212 = vmatprep.subr.mxu0 0.0
  %213 = vmatpush1.msra.mxu0 0.0
  %214 = vmatprep.subr.mxu0 0.0
  %215 = vmatpush1.msra.mxu0 0.0
  %216 = vmatprep.subr.mxu0 0.0
  %217 = vmatpush1.msra.mxu0 0.0
  %218 = vmatprep.subr.mxu0 0.0
  %219 = vmatpush1.msra.mxu0 0.0
  %220 = vmatprep.subr.mxu0 0.0
  %221 = vmatpush1.msra.mxu0 0.0
  %222 = vmatprep.subr.mxu0 0.0
  %223 = vmatpush1.msra.mxu0 0.0
  %224 = vmatprep.subr.mxu0 0.0
  %225 = vmatpush1.msra.mxu0 0.0
  %226 = vmatprep.mubr.f32.mxu0 0.0
  %v227 = vand.u32 %v60, 4294901760
  %228 = vmatmul.mubr.f32.gmra.mrb[0].mxu0 %v227
  %v229 = vpop.f32.mrb[0].mxu0
  %v230 = vadd.f32 %v139, %v229
  %v231 = vpop.f32.mrb[0].mxu0
  %232 = vmatprep.mubr.f32.mxu0 0.0
  %v233 = vand.u32 %v63, 4294901760
  %234 = vmatmul.mubr.f32.gmra.mrb[0].mxu0 %v233
  %v235 = vpop.f32.mrb[0].mxu0
  %v236 = vadd.f32 %v149, %v235
  %v237 = vpop.f32.mrb[0].mxu0
  %238 = vdwg.mxu0
  %239 = vmatprep.subr.mxu0 0.0
  %v240 = vand.u32 %v20, 4294901760
  %v241 = vsub.f32 %v20, %v240
  %242 = vmatpush1.msra.mxu0 %v241
  %243 = vmatprep.subr.mxu0 0.0
  %v244 = vand.u32 %v21, 4294901760
  %v245 = vsub.f32 %v21, %v244
  %246 = vmatpush1.msra.mxu0 %v245
  %247 = vmatprep.subr.mxu0 0.0
  %248 = vmatpush1.msra.mxu0 0.0
  %249 = vmatprep.subr.mxu0 0.0
  %250 = vmatpush1.msra.mxu0 0.0
  %251 = vmatprep.subr.mxu0 0.0
  %252 = vmatpush1.msra.mxu0 0.0
  %253 = vmatprep.subr.mxu0 0.0
  %254 = vmatpush1.msra.mxu0 0.0
  %255 = vmatprep.subr.mxu0 0.0
  %256 = vmatpush1.msra.mxu0 0.0
  %257 = vmatprep.subr.mxu0 0.0
  %258 = vmatpush1.msra.mxu0 0.0
  %259 = vmatprep.subr.mxu0 0.0
  %260 = vmatpush1.msra.mxu0 0.0
  %261 = vmatprep.subr.mxu0 0.0
  %262 = vmatpush1.msra.mxu0 0.0
  %263 = vmatprep.subr.mxu0 0.0
  %264 = vmatpush1.msra.mxu0 0.0
  %265 = vmatprep.subr.mxu0 0.0
  %266 = vmatpush1.msra.mxu0 0.0
  %267 = vmatprep.subr.mxu0 0.0
  %268 = vmatpush1.msra.mxu0 0.0
  %269 = vmatprep.subr.mxu0 0.0
  %270 = vmatpush1.msra.mxu0 0.0
  %271 = vmatprep.subr.mxu0 0.0
  %272 = vmatpush1.msra.mxu0 0.0
  %273 = vmatprep.subr.mxu0 0.0
  %274 = vmatpush1.msra.mxu0 0.0
  %275 = vmatprep.subr.mxu0 0.0
  %276 = vmatpush1.msra.mxu0 0.0
  %277 = vmatprep.subr.mxu0 0.0
  %278 = vmatpush1.msra.mxu0 0.0
  %279 = vmatprep.subr.mxu0 0.0
  %280 = vmatpush1.msra.mxu0 0.0
  %281 = vmatprep.subr.mxu0 0.0
  %282 = vmatpush1.msra.mxu0 0.0
  %283 = vmatprep.subr.mxu0 0.0
  %284 = vmatpush1.msra.mxu0 0.0
  %285 = vmatprep.subr.mxu0 0.0
  %286 = vmatpush1.msra.mxu0 0.0
  %287 = vmatprep.subr.mxu0 0.0
  %288 = vmatpush1.msra.mxu0 0.0
  %289 = vmatprep.subr.mxu0 0.0
  %290 = vmatpush1.msra.mxu0 0.0
  %291 = vmatprep.subr.mxu0 0.0
  %292 = vmatpush1.msra.mxu0 0.0
  %293 = vmatprep.subr.mxu0 0.0
  %294 = vmatpush1.msra.mxu0 0.0
  %295 = vmatprep.subr.mxu0 0.0
  %296 = vmatpush1.msra.mxu0 0.0
  %297 = vmatprep.subr.mxu0 0.0
  %298 = vmatpush1.msra.mxu0 0.0
  %299 = vmatprep.subr.mxu0 0.0
  %300 = vmatpush1.msra.mxu0 0.0
  %301 = vmatprep.subr.mxu0 0.0
  %302 = vmatpush1.msra.mxu0 0.0
  %303 = vmatprep.subr.mxu0 0.0
  %304 = vmatpush1.msra.mxu0 0.0
  %305 = vmatprep.subr.mxu0 0.0
  %306 = vmatpush1.msra.mxu0 0.0
  %307 = vmatprep.mubr.f32.mxu0 0.0
  %v308 = vand.u32 %v60, 4294901760
  %v309 = vsub.f32 %v60, %v308
  %310 = vmatmul.mubr.f32.gmra.mrb[0].mxu0 %v309
  %v311 = vpop.f32.mrb[0].mxu0
  %v312 = vadd.f32 %v230, %v311
  %v313 = vpop.f32.mrb[0].mxu0
  %314 = vmatprep.mubr.f32.mxu0 0.0
  %v315 = vand.u32 %v63, 4294901760
  %v316 = vsub.f32 %v63, %v315
  %317 = vmatmul.mubr.f32.gmra.mrb[0].mxu0 %v316
  %v318 = vpop.f32.mrb[0].mxu0
  %v319 = vadd.f32 %v236, %v318
  %v320 = vpop.f32.mrb[0].mxu0
  %321 = vdwg.mxu0
  %322 = vmatprep.subr.mxu0 0.0
  %v323 = vand.u32 %v20, 4294901760
  %324 = vmatpush1.msra.mxu0 %v323
  %325 = vmatprep.subr.mxu0 0.0
  %v326 = vand.u32 %v21, 4294901760
  %327 = vmatpush1.msra.mxu0 %v326
  %328 = vmatprep.subr.mxu0 0.0
  %329 = vmatpush1.msra.mxu0 0.0
  %330 = vmatprep.subr.mxu0 0.0
  %331 = vmatpush1.msra.mxu0 0.0
  %332 = vmatprep.subr.mxu0 0.0
  %333 = vmatpush1.msra.mxu0 0.0
  %334 = vmatprep.subr.mxu0 0.0
  %335 = vmatpush1.msra.mxu0 0.0
  %336 = vmatprep.subr.mxu0 0.0
  %337 = vmatpush1.msra.mxu0 0.0
  %338 = vmatprep.subr.mxu0 0.0
  %339 = vmatpush1.msra.mxu0 0.0
  %340 = vmatprep.subr.mxu0 0.0
  %341 = vmatpush1.msra.mxu0 0.0
  %342 = vmatprep.subr.mxu0 0.0
  %343 = vmatpush1.msra.mxu0 0.0
  %344 = vmatprep.subr.mxu0 0.0
  %345 = vmatpush1.msra.mxu0 0.0
  %346 = vmatprep.subr.mxu0 0.0
  %347 = vmatpush1.msra.mxu0 0.0
  %348 = vmatprep.subr.mxu0 0.0
  %349 = vmatpush1.msra.mxu0 0.0
  %350 = vmatprep.subr.mxu0 0.0
  %351 = vmatpush1.msra.mxu0 0.0
  %352 = vmatprep.subr.mxu0 0.0
  %353 = vmatpush1.msra.mxu0 0.0
  %354 = vmatprep.subr.mxu0 0.0
  %355 = vmatpush1.msra.mxu0 0.0
  %356 = vmatprep.subr.mxu0 0.0
  %357 = vmatpush1.msra.mxu0 0.0
  %358 = vmatprep.subr.mxu0 0.0
  %359 = vmatpush1.msra.mxu0 0.0
  %360 = vmatprep.subr.mxu0 0.0
  %361 = vmatpush1.msra.mxu0 0.0
  %362 = vmatprep.subr.mxu0 0.0
  %363 = vmatpush1.msra.mxu0 0.0
  %364 = vmatprep.subr.mxu0 0.0
  %365 = vmatpush1.msra.mxu0 0.0
  %366 = vmatprep.subr.mxu0 0.0
  %367 = vmatpush1.msra.mxu0 0.0
  %368 = vmatprep.subr.mxu0 0.0
  %369 = vmatpush1.msra.mxu0 0.0
  %370 = vmatprep.subr.mxu0 0.0
  %371 = vmatpush1.msra.mxu0 0.0
  %372 = vmatprep.subr.mxu0 0.0
  %373 = vmatpush1.msra.mxu0 0.0
  %374 = vmatprep.subr.mxu0 0.0
  %375 = vmatpush1.msra.mxu0 0.0
  %376 = vmatprep.subr.mxu0 0.0
  %377 = vmatpush1.msra.mxu0 0.0
  %378 = vmatprep.subr.mxu0 0.0
  %379 = vmatpush1.msra.mxu0 0.0
  %380 = vmatprep.subr.mxu0 0.0
  %381 = vmatpush1.msra.mxu0 0.0
  %382 = vmatprep.subr.mxu0 0.0
  %383 = vmatpush1.msra.mxu0 0.0
  %384 = vmatprep.subr.mxu0 0.0
  %385 = vmatpush1.msra.mxu0 0.0
  %386 = vmatprep.subr.mxu0 0.0
  %387 = vmatpush1.msra.mxu0 0.0
  %388 = vmatprep.mubr.f32.mxu0 0.0
  %v389 = vand.u32 %v60, 4294901760
  %v390 = vsub.f32 %v60, %v389
  %v391 = vand.u32 %v390, 4294901760
  %392 = vmatmul.mubr.f32.gmra.mrb[0].mxu0 %v391
  %v393 = vpop.f32.mrb[0].mxu0
  %v394 = vadd.f32 %v312, %v393
  %v395 = vpop.f32.mrb[0].mxu0
  %396 = vmatprep.mubr.f32.mxu0 0.0
  %v397 = vand.u32 %v63, 4294901760
  %v398 = vsub.f32 %v63, %v397
  %v399 = vand.u32 %v398, 4294901760
  %400 = vmatmul.mubr.f32.gmra.mrb[0].mxu0 %v399
  %v401 = vpop.f32.mrb[0].mxu0
  %v402 = vadd.f32 %v319, %v401
  %v403 = vpop.f32.mrb[0].mxu0
  %404 = vdwg.mxu0
  %405 = vmatprep.subr.mxu0 0.0
  %v406 = vand.u32 %v20, 4294901760
  %v407 = vsub.f32 %v20, %v406
  %v408 = vand.u32 %v407, 4294901760
  %409 = vmatpush1.msra.mxu0 %v408
  %410 = vmatprep.subr.mxu0 0.0
  %v411 = vand.u32 %v21, 4294901760
  %v412 = vsub.f32 %v21, %v411
  %v413 = vand.u32 %v412, 4294901760
  %414 = vmatpush1.msra.mxu0 %v413
  %415 = vmatprep.subr.mxu0 0.0
  %416 = vmatpush1.msra.mxu0 0.0
  %417 = vmatprep.subr.mxu0 0.0
  %418 = vmatpush1.msra.mxu0 0.0
  %419 = vmatprep.subr.mxu0 0.0
  %420 = vmatpush1.msra.mxu0 0.0
  %421 = vmatprep.subr.mxu0 0.0
  %422 = vmatpush1.msra.mxu0 0.0
  %423 = vmatprep.subr.mxu0 0.0
  %424 = vmatpush1.msra.mxu0 0.0
  %425 = vmatprep.subr.mxu0 0.0
  %426 = vmatpush1.msra.mxu0 0.0
  %427 = vmatprep.subr.mxu0 0.0
  %428 = vmatpush1.msra.mxu0 0.0
  %429 = vmatprep.subr.mxu0 0.0
  %430 = vmatpush1.msra.mxu0 0.0
  %431 = vmatprep.subr.mxu0 0.0
  %432 = vmatpush1.msra.mxu0 0.0
  %433 = vmatprep.subr.mxu0 0.0
  %434 = vmatpush1.msra.mxu0 0.0
  %435 = vmatprep.subr.mxu0 0.0
  %436 = vmatpush1.msra.mxu0 0.0
  %437 = vmatprep.subr.mxu0 0.0
  %438 = vmatpush1.msra.mxu0 0.0
  %439 = vmatprep.subr.mxu0 0.0
  %440 = vmatpush1.msra.mxu0 0.0
  %441 = vmatprep.subr.mxu0 0.0
  %442 = vmatpush1.msra.mxu0 0.0
  %443 = vmatprep.subr.mxu0 0.0
  %444 = vmatpush1.msra.mxu0 0.0
  %445 = vmatprep.subr.mxu0 0.0
  %446 = vmatpush1.msra.mxu0 0.0
  %447 = vmatprep.subr.mxu0 0.0
  %448 = vmatpush1.msra.mxu0 0.0
  %449 = vmatprep.subr.mxu0 0.0
  %450 = vmatpush1.msra.mxu0 0.0
  %451 = vmatprep.subr.mxu0 0.0
  %452 = vmatpush1.msra.mxu0 0.0
  %453 = vmatprep.subr.mxu0 0.0
  %454 = vmatpush1.msra.mxu0 0.0
  %455 = vmatprep.subr.mxu0 0.0
  %456 = vmatpush1.msra.mxu0 0.0
  %457 = vmatprep.subr.mxu0 0.0
  %458 = vmatpush1.msra.mxu0 0.0
  %459 = vmatprep.subr.mxu0 0.0
  %460 = vmatpush1.msra.mxu0 0.0
  %461 = vmatprep.subr.mxu0 0.0
  %462 = vmatpush1.msra.mxu0 0.0
  %463 = vmatprep.subr.mxu0 0.0
  %464 = vmatpush1.msra.mxu0 0.0
  %465 = vmatprep.subr.mxu0 0.0
  %466 = vmatpush1.msra.mxu0 0.0
  %467 = vmatprep.subr.mxu0 0.0
  %468 = vmatpush1.msra.mxu0 0.0
  %469 = vmatprep.subr.mxu0 0.0
  %470 = vmatpush1.msra.mxu0 0.0
  %471 = vmatprep.subr.mxu0 0.0
  %472 = vmatpush1.msra.mxu0 0.0
  %473 = vmatprep.subr.mxu0 0.0
  %474 = vmatpush1.msra.mxu0 0.0
  %475 = vmatprep.mubr.f32.mxu0 0.0
  %v476 = vand.u32 %v60, 4294901760
  %477 = vmatmul.mubr.f32.gmra.mrb[0].mxu0 %v476
  %v478 = vpop.f32.mrb[0].mxu0
  %v479 = vadd.f32 %v394, %v478
  %v480 = vpop.f32.mrb[0].mxu0
  %481 = vmatprep.mubr.f32.mxu0 0.0
  %v482 = vand.u32 %v63, 4294901760
  %483 = vmatmul.mubr.f32.gmra.mrb[0].mxu0 %v482
  %v484 = vpop.f32.mrb[0].mxu0
  %v485 = vadd.f32 %v402, %v484
  %v486 = vpop.f32.mrb[0].mxu0
  %487 = vdwg.mxu0
  %488 = vmatprep.subr.mxu0 0.0
  %v489 = vand.u32 %v20, 4294901760
  %490 = vmatpush1.msra.mxu0 %v489
  %491 = vmatprep.subr.mxu0 0.0
  %v492 = vand.u32 %v21, 4294901760
  %493 = vmatpush1.msra.mxu0 %v492
  %494 = vmatprep.subr.mxu0 0.0
  %495 = vmatpush1.msra.mxu0 0.0
  %496 = vmatprep.subr.mxu0 0.0
  %497 = vmatpush1.msra.mxu0 0.0
  %498 = vmatprep.subr.mxu0 0.0
  %499 = vmatpush1.msra.mxu0 0.0
  %500 = vmatprep.subr.mxu0 0.0
  %501 = vmatpush1.msra.mxu0 0.0
  %502 = vmatprep.subr.mxu0 0.0
  %503 = vmatpush1.msra.mxu0 0.0
  %504 = vmatprep.subr.mxu0 0.0
  %505 = vmatpush1.msra.mxu0 0.0
  %506 = vmatprep.subr.mxu0 0.0
  %507 = vmatpush1.msra.mxu0 0.0
  %508 = vmatprep.subr.mxu0 0.0
  %509 = vmatpush1.msra.mxu0 0.0
  %510 = vmatprep.subr.mxu0 0.0
  %511 = vmatpush1.msra.mxu0 0.0
  %512 = vmatprep.subr.mxu0 0.0
  %513 = vmatpush1.msra.mxu0 0.0
  %514 = vmatprep.subr.mxu0 0.0
  %515 = vmatpush1.msra.mxu0 0.0
  %516 = vmatprep.subr.mxu0 0.0
  %517 = vmatpush1.msra.mxu0 0.0
  %518 = vmatprep.subr.mxu0 0.0
  %519 = vmatpush1.msra.mxu0 0.0
  %520 = vmatprep.subr.mxu0 0.0
  %521 = vmatpush1.msra.mxu0 0.0
  %522 = vmatprep.subr.mxu0 0.0
  %523 = vmatpush1.msra.mxu0 0.0
  %524 = vmatprep.subr.mxu0 0.0
  %525 = vmatpush1.msra.mxu0 0.0
  %526 = vmatprep.subr.mxu0 0.0
  %527 = vmatpush1.msra.mxu0 0.0
  %528 = vmatprep.subr.mxu0 0.0
  %529 = vmatpush1.msra.mxu0 0.0
  %530 = vmatprep.subr.mxu0 0.0
  %531 = vmatpush1.msra.mxu0 0.0
  %532 = vmatprep.subr.mxu0 0.0
  %533 = vmatpush1.msra.mxu0 0.0
  %534 = vmatprep.subr.mxu0 0.0
  %535 = vmatpush1.msra.mxu0 0.0
  %536 = vmatprep.subr.mxu0 0.0
  %537 = vmatpush1.msra.mxu0 0.0
  %538 = vmatprep.subr.mxu0 0.0
  %539 = vmatpush1.msra.mxu0 0.0
  %540 = vmatprep.subr.mxu0 0.0
  %541 = vmatpush1.msra.mxu0 0.0
  %542 = vmatprep.subr.mxu0 0.0
  %543 = vmatpush1.msra.mxu0 0.0
  %544 = vmatprep.subr.mxu0 0.0
  %545 = vmatpush1.msra.mxu0 0.0
  %546 = vmatprep.subr.mxu0 0.0
  %547 = vmatpush1.msra.mxu0 0.0
  %548 = vmatprep.subr.mxu0 0.0
  %549 = vmatpush1.msra.mxu0 0.0
  %550 = vmatprep.subr.mxu0 0.0
  %551 = vmatpush1.msra.mxu0 0.0
  %552 = vmatprep.subr.mxu0 0.0
  %553 = vmatpush1.msra.mxu0 0.0
  %554 = vmatprep.mubr.f32.mxu0 0.0
  %v555 = vand.u32 %v60, 4294901760
  %556 = vmatmul.mubr.f32.gmra.mrb[0].mxu0 %v555
  %v557 = vpop.f32.mrb[0].mxu0
  %v558 = vadd.f32 %v479, %v557
  %v559 = vpop.f32.mrb[0].mxu0
  %560 = vmatprep.mubr.f32.mxu0 0.0
  %v561 = vand.u32 %v63, 4294901760
  %562 = vmatmul.mubr.f32.gmra.mrb[0].mxu0 %v561
  %v563 = vpop.f32.mrb[0].mxu0
  %v564 = vadd.f32 %v485, %v563
  %v565 = vpop.f32.mrb[0].mxu0
  %566 = vdwg.mxu0
  %567 = vmatprep.subr.mxu0 0.0
  %v568 = vand.u32 %v26, 4294901760
  %569 = vmatpush1.msra.mxu0 %v568
  %570 = vmatprep.subr.mxu0 0.0
  %v571 = vand.u32 %v27, 4294901760
  %572 = vmatpush1.msra.mxu0 %v571
  %573 = vmatprep.subr.mxu0 0.0
  %v574 = vand.u32 %v28, 4294901760
  %575 = vmatpush1.msra.mxu0 %v574
  %576 = vmatprep.subr.mxu0 0.0
  %v577 = vand.u32 %v29, 4294901760
  %578 = vmatpush1.msra.mxu0 %v577
  %579 = vmatprep.subr.mxu0 0.0
  %v580 = vand.u32 %v30, 4294901760
  %581 = vmatpush1.msra.mxu0 %v580
  %582 = vmatprep.subr.mxu0 0.0
  %v583 = vand.u32 %v31, 4294901760
  %584 = vmatpush1.msra.mxu0 %v583
  %585 = vmatprep.subr.mxu0 0.0
  %v586 = vand.u32 %v32, 4294901760
  %587 = vmatpush1.msra.mxu0 %v586
  %588 = vmatprep.subr.mxu0 0.0
  %v589 = vand.u32 %v33, 4294901760
  %590 = vmatpush1.msra.mxu0 %v589
  %591 = vmatprep.subr.mxu0 0.0
  %v592 = vand.u32 %v34, 4294901760
  %593 = vmatpush1.msra.mxu0 %v592
  %594 = vmatprep.subr.mxu0 0.0
  %v595 = vand.u32 %v35, 4294901760
  %596 = vmatpush1.msra.mxu0 %v595
  %597 = vmatprep.subr.mxu0 0.0
  %v598 = vand.u32 %v36, 4294901760
  %599 = vmatpush1.msra.mxu0 %v598
  %600 = vmatprep.subr.mxu0 0.0
  %v601 = vand.u32 %v37, 4294901760
  %602 = vmatpush1.msra.mxu0 %v601
  %603 = vmatprep.subr.mxu0 0.0
  %v604 = vand.u32 %v38, 4294901760
  %605 = vmatpush1.msra.mxu0 %v604
  %606 = vmatprep.subr.mxu0 0.0
  %v607 = vand.u32 %v39, 4294901760
  %608 = vmatpush1.msra.mxu0 %v607
  %609 = vmatprep.subr.mxu0 0.0
  %v610 = vand.u32 %v40, 4294901760
  %611 = vmatpush1.msra.mxu0 %v610
  %612 = vmatprep.subr.mxu0 0.0
  %v613 = vand.u32 %v41, 4294901760
  %614 = vmatpush1.msra.mxu0 %v613
  %615 = vmatprep.subr.mxu0 0.0
  %616 = vmatpush1.msra.mxu0 0.0
  %617 = vmatprep.subr.mxu0 0.0
  %618 = vmatpush1.msra.mxu0 0.0
  %619 = vmatprep.subr.mxu0 0.0
  %620 = vmatpush1.msra.mxu0 0.0
  %621 = vmatprep.subr.mxu0 0.0
  %622 = vmatpush1.msra.mxu0 0.0
  %623 = vmatprep.subr.mxu0 0.0
  %624 = vmatpush1.msra.mxu0 0.0
  %625 = vmatprep.subr.mxu0 0.0
  %626 = vmatpush1.msra.mxu0 0.0
  %627 = vmatprep.subr.mxu0 0.0
  %628 = vmatpush1.msra.mxu0 0.0
  %629 = vmatprep.subr.mxu0 0.0
  %630 = vmatpush1.msra.mxu0 0.0
  %631 = vmatprep.subr.mxu0 0.0
  %632 = vmatpush1.msra.mxu0 0.0
  %633 = vmatprep.subr.mxu0 0.0
  %634 = vmatpush1.msra.mxu0 0.0
  %635 = vmatprep.subr.mxu0 0.0
  %636 = vmatpush1.msra.mxu0 0.0
  %637 = vmatprep.subr.mxu0 0.0
  %638 = vmatpush1.msra.mxu0 0.0
  %639 = vmatprep.subr.mxu0 0.0
  %640 = vmatpush1.msra.mxu0 0.0
  %641 = vmatprep.subr.mxu0 0.0
  %642 = vmatpush1.msra.mxu0 0.0
  %643 = vmatprep.subr.mxu0 0.0
  %644 = vmatpush1.msra.mxu0 0.0
  %645 = vmatprep.subr.mxu0 0.0
  %646 = vmatpush1.msra.mxu0 0.0
  %647 = vmatprep.mubr.f32.mxu0 0.0
  %v648 = vand.u32 %v558, 4294901760
  %v649 = vsub.f32 %v558, %v648
  %v650 = vand.u32 %v649, 4294901760
  %v651 = vsub.f32 %v649, %v650
  %v652 = vand.u32 %v651, 4294901760
  %653 = vmatmul.mubr.f32.gmra.mrb[0].mxu0 %v652
  %v654 = vpop.f32.mrb[0].mxu0
  %v655 = vadd.f32 0.0, %v654
  %v656 = vpop.f32.mrb[0].mxu0
  %657 = vmatprep.mubr.f32.mxu0 0.0
  %v658 = vand.u32 %v564, 4294901760
  %v659 = vsub.f32 %v564, %v658
  %v660 = vand.u32 %v659, 4294901760
  %v661 = vsub.f32 %v659, %v660
  %v662 = vand.u32 %v661, 4294901760
  %663 = vmatmul.mubr.f32.gmra.mrb[0].mxu0 %v662
  %v664 = vpop.f32.mrb[0].mxu0
  %v665 = vadd.f32 0.0, %v664
  %v666 = vpop.f32.mrb[0].mxu0
  %667 = vdwg.mxu0
  %668 = vmatprep.subr.mxu0 0.0
  %v669 = vand.u32 %v26, 4294901760
  %v670 = vsub.f32 %v26, %v669
  %v671 = vand.u32 %v670, 4294901760
  %v672 = vsub.f32 %v670, %v671
  %v673 = vand.u32 %v672, 4294901760
  %674 = vmatpush1.msra.mxu0 %v673
  %675 = vmatprep.subr.mxu0 0.0
  %v676 = vand.u32 %v27, 4294901760
  %v677 = vsub.f32 %v27, %v676
  %v678 = vand.u32 %v677, 4294901760
  %v679 = vsub.f32 %v677, %v678
  %v680 = vand.u32 %v679, 4294901760
  %681 = vmatpush1.msra.mxu0 %v680
  %682 = vmatprep.subr.mxu0 0.0
  %v683 = vand.u32 %v28, 4294901760
  %v684 = vsub.f32 %v28, %v683
  %v685 = vand.u32 %v684, 4294901760
  %v686 = vsub.f32 %v684, %v685
  %v687 = vand.u32 %v686, 4294901760
  %688 = vmatpush1.msra.mxu0 %v687
  %689 = vmatprep.subr.mxu0 0.0
  %v690 = vand.u32 %v29, 4294901760
  %v691 = vsub.f32 %v29, %v690
  %v692 = vand.u32 %v691, 4294901760
  %v693 = vsub.f32 %v691, %v692
  %v694 = vand.u32 %v693, 4294901760
  %695 = vmatpush1.msra.mxu0 %v694
  %696 = vmatprep.subr.mxu0 0.0
  %v697 = vand.u32 %v30, 4294901760
  %v698 = vsub.f32 %v30, %v697
  %v699 = vand.u32 %v698, 4294901760
  %v700 = vsub.f32 %v698, %v699
  %v701 = vand.u32 %v700, 4294901760
  %702 = vmatpush1.msra.mxu0 %v701
  %703 = vmatprep.subr.mxu0 0.0
  %v704 = vand.u32 %v31, 4294901760
  %v705 = vsub.f32 %v31, %v704
  %v706 = vand.u32 %v705, 4294901760
  %v707 = vsub.f32 %v705, %v706
  %v708 = vand.u32 %v707, 4294901760
  %709 = vmatpush1.msra.mxu0 %v708
  %710 = vmatprep.subr.mxu0 0.0
  %v711 = vand.u32 %v32, 4294901760
  %v712 = vsub.f32 %v32, %v711
  %v713 = vand.u32 %v712, 4294901760
  %v714 = vsub.f32 %v712, %v713
  %v715 = vand.u32 %v714, 4294901760
  %716 = vmatpush1.msra.mxu0 %v715
  %717 = vmatprep.subr.mxu0 0.0
  %v718 = vand.u32 %v33, 4294901760
  %v719 = vsub.f32 %v33, %v718
  %v720 = vand.u32 %v719, 4294901760
  %v721 = vsub.f32 %v719, %v720
  %v722 = vand.u32 %v721, 4294901760
  %723 = vmatpush1.msra.mxu0 %v722
  %724 = vmatprep.subr.mxu0 0.0
  %v725 = vand.u32 %v34, 4294901760
  %v726 = vsub.f32 %v34, %v725
  %v727 = vand.u32 %v726, 4294901760
  %v728 = vsub.f32 %v726, %v727
  %v729 = vand.u32 %v728, 4294901760
  %730 = vmatpush1.msra.mxu0 %v729
  %731 = vmatprep.subr.mxu0 0.0
  %v732 = vand.u32 %v35, 4294901760
  %v733 = vsub.f32 %v35, %v732
  %v734 = vand.u32 %v733, 4294901760
  %v735 = vsub.f32 %v733, %v734
  %v736 = vand.u32 %v735, 4294901760
  %737 = vmatpush1.msra.mxu0 %v736
  %738 = vmatprep.subr.mxu0 0.0
  %v739 = vand.u32 %v36, 4294901760
  %v740 = vsub.f32 %v36, %v739
  %v741 = vand.u32 %v740, 4294901760
  %v742 = vsub.f32 %v740, %v741
  %v743 = vand.u32 %v742, 4294901760
  %744 = vmatpush1.msra.mxu0 %v743
  %745 = vmatprep.subr.mxu0 0.0
  %v746 = vand.u32 %v37, 4294901760
  %v747 = vsub.f32 %v37, %v746
  %v748 = vand.u32 %v747, 4294901760
  %v749 = vsub.f32 %v747, %v748
  %v750 = vand.u32 %v749, 4294901760
  %751 = vmatpush1.msra.mxu0 %v750
  %752 = vmatprep.subr.mxu0 0.0
  %v753 = vand.u32 %v38, 4294901760
  %v754 = vsub.f32 %v38, %v753
  %v755 = vand.u32 %v754, 4294901760
  %v756 = vsub.f32 %v754, %v755
  %v757 = vand.u32 %v756, 4294901760
  %758 = vmatpush1.msra.mxu0 %v757
  %759 = vmatprep.subr.mxu0 0.0
  %v760 = vand.u32 %v39, 4294901760
  %v761 = vsub.f32 %v39, %v760
  %v762 = vand.u32 %v761, 4294901760
  %v763 = vsub.f32 %v761, %v762
  %v764 = vand.u32 %v763, 4294901760
  %765 = vmatpush1.msra.mxu0 %v764
  %766 = vmatprep.subr.mxu0 0.0
  %v767 = vand.u32 %v40, 4294901760
  %v768 = vsub.f32 %v40, %v767
  %v769 = vand.u32 %v768, 4294901760
  %v770 = vsub.f32 %v768, %v769
  %v771 = vand.u32 %v770, 4294901760
  %772 = vmatpush1.msra.mxu0 %v771
  %773 = vmatprep.subr.mxu0 0.0
  %v774 = vand.u32 %v41, 4294901760
  %v775 = vsub.f32 %v41, %v774
  %v776 = vand.u32 %v775, 4294901760
  %v777 = vsub.f32 %v775, %v776
  %v778 = vand.u32 %v777, 4294901760
  %779 = vmatpush1.msra.mxu0 %v778
  %780 = vmatprep.subr.mxu0 0.0
  %781 = vmatpush1.msra.mxu0 0.0
  %782 = vmatprep.subr.mxu0 0.0
  %783 = vmatpush1.msra.mxu0 0.0
  %784 = vmatprep.subr.mxu0 0.0
  %785 = vmatpush1.msra.mxu0 0.0
  %786 = vmatprep.subr.mxu0 0.0
  %787 = vmatpush1.msra.mxu0 0.0
  %788 = vmatprep.subr.mxu0 0.0
  %789 = vmatpush1.msra.mxu0 0.0
  %790 = vmatprep.subr.mxu0 0.0
  %791 = vmatpush1.msra.mxu0 0.0
  %792 = vmatprep.subr.mxu0 0.0
  %793 = vmatpush1.msra.mxu0 0.0
  %794 = vmatprep.subr.mxu0 0.0
  %795 = vmatpush1.msra.mxu0 0.0
  %796 = vmatprep.subr.mxu0 0.0
  %797 = vmatpush1.msra.mxu0 0.0
  %798 = vmatprep.subr.mxu0 0.0
  %799 = vmatpush1.msra.mxu0 0.0
  %800 = vmatprep.subr.mxu0 0.0
  %801 = vmatpush1.msra.mxu0 0.0
  %802 = vmatprep.subr.mxu0 0.0
  %803 = vmatpush1.msra.mxu0 0.0
  %804 = vmatprep.subr.mxu0 0.0
  %805 = vmatpush1.msra.mxu0 0.0
  %806 = vmatprep.subr.mxu0 0.0
  %807 = vmatpush1.msra.mxu0 0.0
  %808 = vmatprep.subr.mxu0 0.0
  %809 = vmatpush1.msra.mxu0 0.0
  %810 = vmatprep.subr.mxu0 0.0
  %811 = vmatpush1.msra.mxu0 0.0
  %812 = vmatprep.mubr.f32.mxu0 0.0
  %v813 = vand.u32 %v558, 4294901760
  %814 = vmatmul.mubr.f32.gmra.mrb[0].mxu0 %v813
  %v815 = vpop.f32.mrb[0].mxu0
  %v816 = vadd.f32 %v655, %v815
  %v817 = vpop.f32.mrb[0].mxu0
  %818 = vmatprep.mubr.f32.mxu0 0.0
  %v819 = vand.u32 %v564, 4294901760
  %820 = vmatmul.mubr.f32.gmra.mrb[0].mxu0 %v819
  %v821 = vpop.f32.mrb[0].mxu0
  %v822 = vadd.f32 %v665, %v821
  %v823 = vpop.f32.mrb[0].mxu0
  %824 = vdwg.mxu0
  %825 = vmatprep.subr.mxu0 0.0
  %v826 = vand.u32 %v26, 4294901760
  %v827 = vsub.f32 %v26, %v826
  %828 = vmatpush1.msra.mxu0 %v827
  %829 = vmatprep.subr.mxu0 0.0
  %v830 = vand.u32 %v27, 4294901760
  %v831 = vsub.f32 %v27, %v830
  %832 = vmatpush1.msra.mxu0 %v831
  %833 = vmatprep.subr.mxu0 0.0
  %v834 = vand.u32 %v28, 4294901760
  %v835 = vsub.f32 %v28, %v834
  %836 = vmatpush1.msra.mxu0 %v835
  %837 = vmatprep.subr.mxu0 0.0
  %v838 = vand.u32 %v29, 4294901760
  %v839 = vsub.f32 %v29, %v838
  %840 = vmatpush1.msra.mxu0 %v839
  %841 = vmatprep.subr.mxu0 0.0
  %v842 = vand.u32 %v30, 4294901760
  %v843 = vsub.f32 %v30, %v842
  %844 = vmatpush1.msra.mxu0 %v843
  %845 = vmatprep.subr.mxu0 0.0
  %v846 = vand.u32 %v31, 4294901760
  %v847 = vsub.f32 %v31, %v846
  %848 = vmatpush1.msra.mxu0 %v847
  %849 = vmatprep.subr.mxu0 0.0
  %v850 = vand.u32 %v32, 4294901760
  %v851 = vsub.f32 %v32, %v850
  %852 = vmatpush1.msra.mxu0 %v851
  %853 = vmatprep.subr.mxu0 0.0
  %v854 = vand.u32 %v33, 4294901760
  %v855 = vsub.f32 %v33, %v854
  %856 = vmatpush1.msra.mxu0 %v855
  %857 = vmatprep.subr.mxu0 0.0
  %v858 = vand.u32 %v34, 4294901760
  %v859 = vsub.f32 %v34, %v858
  %860 = vmatpush1.msra.mxu0 %v859
  %861 = vmatprep.subr.mxu0 0.0
  %v862 = vand.u32 %v35, 4294901760
  %v863 = vsub.f32 %v35, %v862
  %864 = vmatpush1.msra.mxu0 %v863
  %865 = vmatprep.subr.mxu0 0.0
  %v866 = vand.u32 %v36, 4294901760
  %v867 = vsub.f32 %v36, %v866
  %868 = vmatpush1.msra.mxu0 %v867
  %869 = vmatprep.subr.mxu0 0.0
  %v870 = vand.u32 %v37, 4294901760
  %v871 = vsub.f32 %v37, %v870
  %872 = vmatpush1.msra.mxu0 %v871
  %873 = vmatprep.subr.mxu0 0.0
  %v874 = vand.u32 %v38, 4294901760
  %v875 = vsub.f32 %v38, %v874
  %876 = vmatpush1.msra.mxu0 %v875
  %877 = vmatprep.subr.mxu0 0.0
  %v878 = vand.u32 %v39, 4294901760
  %v879 = vsub.f32 %v39, %v878
  %880 = vmatpush1.msra.mxu0 %v879
  %881 = vmatprep.subr.mxu0 0.0
  %v882 = vand.u32 %v40, 4294901760
  %v883 = vsub.f32 %v40, %v882
  %884 = vmatpush1.msra.mxu0 %v883
  %885 = vmatprep.subr.mxu0 0.0
  %v886 = vand.u32 %v41, 4294901760
  %v887 = vsub.f32 %v41, %v886
  %888 = vmatpush1.msra.mxu0 %v887
  %889 = vmatprep.subr.mxu0 0.0
  %890 = vmatpush1.msra.mxu0 0.0
  %891 = vmatprep.subr.mxu0 0.0
  %892 = vmatpush1.msra.mxu0 0.0
  %893 = vmatprep.subr.mxu0 0.0
  %894 = vmatpush1.msra.mxu0 0.0
  %895 = vmatprep.subr.mxu0 0.0
  %896 = vmatpush1.msra.mxu0 0.0
  %897 = vmatprep.subr.mxu0 0.0
  %898 = vmatpush1.msra.mxu0 0.0
  %899 = vmatprep.subr.mxu0 0.0
  %900 = vmatpush1.msra.mxu0 0.0
  %901 = vmatprep.subr.mxu0 0.0
  %902 = vmatpush1.msra.mxu0 0.0
  %903 = vmatprep.subr.mxu0 0.0
  %904 = vmatpush1.msra.mxu0 0.0
  %905 = vmatprep.subr.mxu0 0.0
  %906 = vmatpush1.msra.mxu0 0.0
  %907 = vmatprep.subr.mxu0 0.0
  %908 = vmatpush1.msra.mxu0 0.0
  %909 = vmatprep.subr.mxu0 0.0
  %910 = vmatpush1.msra.mxu0 0.0
  %911 = vmatprep.subr.mxu0 0.0
  %912 = vmatpush1.msra.mxu0 0.0
  %913 = vmatprep.subr.mxu0 0.0
  %914 = vmatpush1.msra.mxu0 0.0
  %915 = vmatprep.subr.mxu0 0.0
  %916 = vmatpush1.msra.mxu0 0.0
  %917 = vmatprep.subr.mxu0 0.0
  %918 = vmatpush1.msra.mxu0 0.0
  %919 = vmatprep.subr.mxu0 0.0
  %920 = vmatpush1.msra.mxu0 0.0
  %921 = vmatprep.mubr.f32.mxu0 0.0
  %v922 = vand.u32 %v558, 4294901760
  %v923 = vsub.f32 %v558, %v922
  %924 = vmatmul.mubr.f32.gmra.mrb[0].mxu0 %v923
  %v925 = vpop.f32.mrb[0].mxu0
  %v926 = vadd.f32 %v816, %v925
  %v927 = vpop.f32.mrb[0].mxu0
  %928 = vmatprep.mubr.f32.mxu0 0.0
  %v929 = vand.u32 %v564, 4294901760
  %v930 = vsub.f32 %v564, %v929
  %931 = vmatmul.mubr.f32.gmra.mrb[0].mxu0 %v930
  %v932 = vpop.f32.mrb[0].mxu0
  %v933 = vadd.f32 %v822, %v932
  %v934 = vpop.f32.mrb[0].mxu0
  %935 = vdwg.mxu0
  %936 = vmatprep.subr.mxu0 0.0
  %v937 = vand.u32 %v26, 4294901760
  %938 = vmatpush1.msra.mxu0 %v937
  %939 = vmatprep.subr.mxu0 0.0
  %v940 = vand.u32 %v27, 4294901760
  %941 = vmatpush1.msra.mxu0 %v940
  %942 = vmatprep.subr.mxu0 0.0
  %v943 = vand.u32 %v28, 4294901760
  %944 = vmatpush1.msra.mxu0 %v943
  %945 = vmatprep.subr.mxu0 0.0
  %v946 = vand.u32 %v29, 4294901760
  %947 = vmatpush1.msra.mxu0 %v946
  %948 = vmatprep.subr.mxu0 0.0
  %v949 = vand.u32 %v30, 4294901760
  %950 = vmatpush1.msra.mxu0 %v949
  %951 = vmatprep.subr.mxu0 0.0
  %v952 = vand.u32 %v31, 4294901760
  %953 = vmatpush1.msra.mxu0 %v952
  %954 = vmatprep.subr.mxu0 0.0
  %v955 = vand.u32 %v32, 4294901760
  %956 = vmatpush1.msra.mxu0 %v955
  %957 = vmatprep.subr.mxu0 0.0
  %v958 = vand.u32 %v33, 4294901760
  %959 = vmatpush1.msra.mxu0 %v958
  %960 = vmatprep.subr.mxu0 0.0
  %v961 = vand.u32 %v34, 4294901760
  %962 = vmatpush1.msra.mxu0 %v961
  %963 = vmatprep.subr.mxu0 0.0
  %v964 = vand.u32 %v35, 4294901760
  %965 = vmatpush1.msra.mxu0 %v964
  %966 = vmatprep.subr.mxu0 0.0
  %v967 = vand.u32 %v36, 4294901760
  %968 = vmatpush1.msra.mxu0 %v967
  %969 = vmatprep.subr.mxu0 0.0
  %v970 = vand.u32 %v37, 4294901760
  %971 = vmatpush1.msra.mxu0 %v970
  %972 = vmatprep.subr.mxu0 0.0
  %v973 = vand.u32 %v38, 4294901760
  %974 = vmatpush1.msra.mxu0 %v973
  %975 = vmatprep.subr.mxu0 0.0
  %v976 = vand.u32 %v39, 4294901760
  %977 = vmatpush1.msra.mxu0 %v976
  %978 = vmatprep.subr.mxu0 0.0
  %v979 = vand.u32 %v40, 4294901760
  %980 = vmatpush1.msra.mxu0 %v979
  %981 = vmatprep.subr.mxu0 0.0
  %v982 = vand.u32 %v41, 4294901760
  %983 = vmatpush1.msra.mxu0 %v982
  %984 = vmatprep.subr.mxu0 0.0
  %985 = vmatpush1.msra.mxu0 0.0
  %986 = vmatprep.subr.mxu0 0.0
  %987 = vmatpush1.msra.mxu0 0.0
  %988 = vmatprep.subr.mxu0 0.0
  %989 = vmatpush1.msra.mxu0 0.0
  %990 = vmatprep.subr.mxu0 0.0
  %991 = vmatpush1.msra.mxu0 0.0
  %992 = vmatprep.subr.mxu0 0.0
  %993 = vmatpush1.msra.mxu0 0.0
  %994 = vmatprep.subr.mxu0 0.0
  %995 = vmatpush1.msra.mxu0 0.0
  %996 = vmatprep.subr.mxu0 0.0
  %997 = vmatpush1.msra.mxu0 0.0
  %998 = vmatprep.subr.mxu0 0.0
  %999 = vmatpush1.msra.mxu0 0.0
  %1000 = vmatprep.subr.mxu0 0.0
  %1001 = vmatpush1.msra.mxu0 0.0
  %1002 = vmatprep.subr.mxu0 0.0
  %1003 = vmatpush1.msra.mxu0 0.0
  %1004 = vmatprep.subr.mxu0 0.0
  %1005 = vmatpush1.msra.mxu0 0.0
  %1006 = vmatprep.subr.mxu0 0.0
  %1007 = vmatpush1.msra.mxu0 0.0
  %1008 = vmatprep.subr.mxu0 0.0
  %1009 = vmatpush1.msra.mxu0 0.0
  %1010 = vmatprep.subr.mxu0 0.0
  %1011 = vmatpush1.msra.mxu0 0.0
  %1012 = vmatprep.subr.mxu0 0.0
  %1013 = vmatpush1.msra.mxu0 0.0
  %1014 = vmatprep.subr.mxu0 0.0
  %1015 = vmatpush1.msra.mxu0 0.0
  %1016 = vmatprep.mubr.f32.mxu0 0.0
  %v1017 = vand.u32 %v558, 4294901760
  %v1018 = vsub.f32 %v558, %v1017
  %v1019 = vand.u32 %v1018, 4294901760
  %1020 = vmatmul.mubr.f32.gmra.mrb[0].mxu0 %v1019
  %v1021 = vpop.f32.mrb[0].mxu0
  %v1022 = vadd.f32 %v926, %v1021
  %v1023 = vpop.f32.mrb[0].mxu0
  %1024 = vmatprep.mubr.f32.mxu0 0.0
  %v1025 = vand.u32 %v564, 4294901760
  %v1026 = vsub.f32 %v564, %v1025
  %v1027 = vand.u32 %v1026, 4294901760
  %1028 = vmatmul.mubr.f32.gmra.mrb[0].mxu0 %v1027
  %v1029 = vpop.f32.mrb[0].mxu0
  %v1030 = vadd.f32 %v933, %v1029
  %v1031 = vpop.f32.mrb[0].mxu0
  %1032 = vdwg.mxu0
  %1033 = vmatprep.subr.mxu0 0.0
  %v1034 = vand.u32 %v26, 4294901760
  %v1035 = vsub.f32 %v26, %v1034
  %v1036 = vand.u32 %v1035, 4294901760
  %1037 = vmatpush1.msra.mxu0 %v1036
  %1038 = vmatprep.subr.mxu0 0.0
  %v1039 = vand.u32 %v27, 4294901760
  %v1040 = vsub.f32 %v27, %v1039
  %v1041 = vand.u32 %v1040, 4294901760
  %1042 = vmatpush1.msra.mxu0 %v1041
  %1043 = vmatprep.subr.mxu0 0.0
  %v1044 = vand.u32 %v28, 4294901760
  %v1045 = vsub.f32 %v28, %v1044
  %v1046 = vand.u32 %v1045, 4294901760
  %1047 = vmatpush1.msra.mxu0 %v1046
  %1048 = vmatprep.subr.mxu0 0.0
  %v1049 = vand.u32 %v29, 4294901760
  %v1050 = vsub.f32 %v29, %v1049
  %v1051 = vand.u32 %v1050, 4294901760
  %1052 = vmatpush1.msra.mxu0 %v1051
  %1053 = vmatprep.subr.mxu0 0.0
  %v1054 = vand.u32 %v30, 4294901760
  %v1055 = vsub.f32 %v30, %v1054
  %v1056 = vand.u32 %v1055, 4294901760
  %1057 = vmatpush1.msra.mxu0 %v1056
  %1058 = vmatprep.subr.mxu0 0.0
  %v1059 = vand.u32 %v31, 4294901760
  %v1060 = vsub.f32 %v31, %v1059
  %v1061 = vand.u32 %v1060, 4294901760
  %1062 = vmatpush1.msra.mxu0 %v1061
  %1063 = vmatprep.subr.mxu0 0.0
  %v1064 = vand.u32 %v32, 4294901760
  %v1065 = vsub.f32 %v32, %v1064
  %v1066 = vand.u32 %v1065, 4294901760
  %1067 = vmatpush1.msra.mxu0 %v1066
  %1068 = vmatprep.subr.mxu0 0.0
  %v1069 = vand.u32 %v33, 4294901760
  %v1070 = vsub.f32 %v33, %v1069
  %v1071 = vand.u32 %v1070, 4294901760
  %1072 = vmatpush1.msra.mxu0 %v1071
  %1073 = vmatprep.subr.mxu0 0.0
  %v1074 = vand.u32 %v34, 4294901760
  %v1075 = vsub.f32 %v34, %v1074
  %v1076 = vand.u32 %v1075, 4294901760
  %1077 = vmatpush1.msra.mxu0 %v1076
  %1078 = vmatprep.subr.mxu0 0.0
  %v1079 = vand.u32 %v35, 4294901760
  %v1080 = vsub.f32 %v35, %v1079
  %v1081 = vand.u32 %v1080, 4294901760
  %1082 = vmatpush1.msra.mxu0 %v1081
  %1083 = vmatprep.subr.mxu0 0.0
  %v1084 = vand.u32 %v36, 4294901760
  %v1085 = vsub.f32 %v36, %v1084
  %v1086 = vand.u32 %v1085, 4294901760
  %1087 = vmatpush1.msra.mxu0 %v1086
  %1088 = vmatprep.subr.mxu0 0.0
  %v1089 = vand.u32 %v37, 4294901760
  %v1090 = vsub.f32 %v37, %v1089
  %v1091 = vand.u32 %v1090, 4294901760
  %1092 = vmatpush1.msra.mxu0 %v1091
  %1093 = vmatprep.subr.mxu0 0.0
  %v1094 = vand.u32 %v38, 4294901760
  %v1095 = vsub.f32 %v38, %v1094
  %v1096 = vand.u32 %v1095, 4294901760
  %1097 = vmatpush1.msra.mxu0 %v1096
  %1098 = vmatprep.subr.mxu0 0.0
  %v1099 = vand.u32 %v39, 4294901760
  %v1100 = vsub.f32 %v39, %v1099
  %v1101 = vand.u32 %v1100, 4294901760
  %1102 = vmatpush1.msra.mxu0 %v1101
  %1103 = vmatprep.subr.mxu0 0.0
  %v1104 = vand.u32 %v40, 4294901760
  %v1105 = vsub.f32 %v40, %v1104
  %v1106 = vand.u32 %v1105, 4294901760
  %1107 = vmatpush1.msra.mxu0 %v1106
  %1108 = vmatprep.subr.mxu0 0.0
  %v1109 = vand.u32 %v41, 4294901760
  %v1110 = vsub.f32 %v41, %v1109
  %v1111 = vand.u32 %v1110, 4294901760
  %1112 = vmatpush1.msra.mxu0 %v1111
  %1113 = vmatprep.subr.mxu0 0.0
  %1114 = vmatpush1.msra.mxu0 0.0
  %1115 = vmatprep.subr.mxu0 0.0
  %1116 = vmatpush1.msra.mxu0 0.0
  %1117 = vmatprep.subr.mxu0 0.0
  %1118 = vmatpush1.msra.mxu0 0.0
  %1119 = vmatprep.subr.mxu0 0.0
  %1120 = vmatpush1.msra.mxu0 0.0
  %1121 = vmatprep.subr.mxu0 0.0
  %1122 = vmatpush1.msra.mxu0 0.0
  %1123 = vmatprep.subr.mxu0 0.0
  %1124 = vmatpush1.msra.mxu0 0.0
  %1125 = vmatprep.subr.mxu0 0.0
  %1126 = vmatpush1.msra.mxu0 0.0
  %1127 = vmatprep.subr.mxu0 0.0
  %1128 = vmatpush1.msra.mxu0 0.0
  %1129 = vmatprep.subr.mxu0 0.0
  %1130 = vmatpush1.msra.mxu0 0.0
  %1131 = vmatprep.subr.mxu0 0.0
  %1132 = vmatpush1.msra.mxu0 0.0
  %1133 = vmatprep.subr.mxu0 0.0
  %1134 = vmatpush1.msra.mxu0 0.0
  %1135 = vmatprep.subr.mxu0 0.0
  %1136 = vmatpush1.msra.mxu0 0.0
  %1137 = vmatprep.subr.mxu0 0.0
  %1138 = vmatpush1.msra.mxu0 0.0
  %1139 = vmatprep.subr.mxu0 0.0
  %1140 = vmatpush1.msra.mxu0 0.0
  %1141 = vmatprep.subr.mxu0 0.0
  %1142 = vmatpush1.msra.mxu0 0.0
  %1143 = vmatprep.subr.mxu0 0.0
  %1144 = vmatpush1.msra.mxu0 0.0
  %1145 = vmatprep.mubr.f32.mxu0 0.0
  %v1146 = vand.u32 %v558, 4294901760
  %1147 = vmatmul.mubr.f32.gmra.mrb[0].mxu0 %v1146
  %v1148 = vpop.f32.mrb[0].mxu0
  %v1149 = vadd.f32 %v1022, %v1148
  %v1150 = vpop.f32.mrb[0].mxu0
  %1151 = vmatprep.mubr.f32.mxu0 0.0
  %v1152 = vand.u32 %v564, 4294901760
  %1153 = vmatmul.mubr.f32.gmra.mrb[0].mxu0 %v1152
  %v1154 = vpop.f32.mrb[0].mxu0
  %v1155 = vadd.f32 %v1030, %v1154
  %v1156 = vpop.f32.mrb[0].mxu0
  %1157 = vdwg.mxu0
  %1158 = vmatprep.subr.mxu0 0.0
  %v1159 = vand.u32 %v26, 4294901760
  %1160 = vmatpush1.msra.mxu0 %v1159
  %1161 = vmatprep.subr.mxu0 0.0
  %v1162 = vand.u32 %v27, 4294901760
  %1163 = vmatpush1.msra.mxu0 %v1162
  %1164 = vmatprep.subr.mxu0 0.0
  %v1165 = vand.u32 %v28, 4294901760
  %1166 = vmatpush1.msra.mxu0 %v1165
  %1167 = vmatprep.subr.mxu0 0.0
  %v1168 = vand.u32 %v29, 4294901760
  %1169 = vmatpush1.msra.mxu0 %v1168
  %1170 = vmatprep.subr.mxu0 0.0
  %v1171 = vand.u32 %v30, 4294901760
  %1172 = vmatpush1.msra.mxu0 %v1171
  %1173 = vmatprep.subr.mxu0 0.0
  %v1174 = vand.u32 %v31, 4294901760
  %1175 = vmatpush1.msra.mxu0 %v1174
  %1176 = vmatprep.subr.mxu0 0.0
  %v1177 = vand.u32 %v32, 4294901760
  %1178 = vmatpush1.msra.mxu0 %v1177
  %1179 = vmatprep.subr.mxu0 0.0
  %v1180 = vand.u32 %v33, 4294901760
  %1181 = vmatpush1.msra.mxu0 %v1180
  %1182 = vmatprep.subr.mxu0 0.0
  %v1183 = vand.u32 %v34, 4294901760
  %1184 = vmatpush1.msra.mxu0 %v1183
  %1185 = vmatprep.subr.mxu0 0.0
  %v1186 = vand.u32 %v35, 4294901760
  %1187 = vmatpush1.msra.mxu0 %v1186
  %1188 = vmatprep.subr.mxu0 0.0
  %v1189 = vand.u32 %v36, 4294901760
  %1190 = vmatpush1.msra.mxu0 %v1189
  %1191 = vmatprep.subr.mxu0 0.0
  %v1192 = vand.u32 %v37, 4294901760
  %1193 = vmatpush1.msra.mxu0 %v1192
  %1194 = vmatprep.subr.mxu0 0.0
  %v1195 = vand.u32 %v38, 4294901760
  %1196 = vmatpush1.msra.mxu0 %v1195
  %1197 = vmatprep.subr.mxu0 0.0
  %v1198 = vand.u32 %v39, 4294901760
  %1199 = vmatpush1.msra.mxu0 %v1198
  %1200 = vmatprep.subr.mxu0 0.0
  %v1201 = vand.u32 %v40, 4294901760
  %1202 = vmatpush1.msra.mxu0 %v1201
  %1203 = vmatprep.subr.mxu0 0.0
  %v1204 = vand.u32 %v41, 4294901760
  %1205 = vmatpush1.msra.mxu0 %v1204
  %1206 = vmatprep.subr.mxu0 0.0
  %1207 = vmatpush1.msra.mxu0 0.0
  %1208 = vmatprep.subr.mxu0 0.0
  %1209 = vmatpush1.msra.mxu0 0.0
  %1210 = vmatprep.subr.mxu0 0.0
  %1211 = vmatpush1.msra.mxu0 0.0
  %1212 = vmatprep.subr.mxu0 0.0
  %1213 = vmatpush1.msra.mxu0 0.0
  %1214 = vmatprep.subr.mxu0 0.0
  %1215 = vmatpush1.msra.mxu0 0.0
  %1216 = vmatprep.subr.mxu0 0.0
  %1217 = vmatpush1.msra.mxu0 0.0
  %1218 = vmatprep.subr.mxu0 0.0
  %1219 = vmatpush1.msra.mxu0 0.0
  %1220 = vmatprep.subr.mxu0 0.0
  %1221 = vmatpush1.msra.mxu0 0.0
  %1222 = vmatprep.subr.mxu0 0.0
  %1223 = vmatpush1.msra.mxu0 0.0
  %1224 = vmatprep.subr.mxu0 0.0
  %1225 = vmatpush1.msra.mxu0 0.0
  %1226 = vmatprep.subr.mxu0 0.0
  %1227 = vmatpush1.msra.mxu0 0.0
  %1228 = vmatprep.subr.mxu0 0.0
  %1229 = vmatpush1.msra.mxu0 0.0
  %1230 = vmatprep.subr.mxu0 0.0
  %1231 = vmatpush1.msra.mxu0 0.0
  %1232 = vmatprep.subr.mxu0 0.0
  %1233 = vmatpush1.msra.mxu0 0.0
  %1234 = vmatprep.subr.mxu0 0.0
  %1235 = vmatpush1.msra.mxu0 0.0
  %1236 = vmatprep.subr.mxu0 0.0
  %1237 = vmatpush1.msra.mxu0 0.0
  %1238 = vmatprep.mubr.f32.mxu0 0.0
  %v1239 = vand.u32 %v558, 4294901760
  %1240 = vmatmul.mubr.f32.gmra.mrb[0].mxu0 %v1239
  %v1241 = vpop.f32.mrb[0].mxu0
  %v1242 = vadd.f32 %v1149, %v1241
  %v1243 = vpop.f32.mrb[0].mxu0
  %1244 = vmatprep.mubr.f32.mxu0 0.0
  %v1245 = vand.u32 %v564, 4294901760
  %1246 = vmatmul.mubr.f32.gmra.mrb[0].mxu0 %v1245
  %v1247 = vpop.f32.mrb[0].mxu0
  %v1248 = vadd.f32 %v1155, %v1247
  %v1249 = vpop.f32.mrb[0].mxu0
  %1250 = vdwg.mxu0
  %1251 = vmatprep.subr.mxu0 0.0
  %v1252 = vand.u32 %v22, 4294901760
  %1253 = vmatpush1.msra.mxu0 %v1252
  %1254 = vmatprep.subr.mxu0 0.0
  %v1255 = vand.u32 %v23, 4294901760
  %1256 = vmatpush1.msra.mxu0 %v1255
  %1257 = vmatprep.subr.mxu0 0.0
  %1258 = vmatpush1.msra.mxu0 0.0
  %1259 = vmatprep.subr.mxu0 0.0
  %1260 = vmatpush1.msra.mxu0 0.0
  %1261 = vmatprep.subr.mxu0 0.0
  %1262 = vmatpush1.msra.mxu0 0.0
  %1263 = vmatprep.subr.mxu0 0.0
  %1264 = vmatpush1.msra.mxu0 0.0
  %1265 = vmatprep.subr.mxu0 0.0
  %1266 = vmatpush1.msra.mxu0 0.0
  %1267 = vmatprep.subr.mxu0 0.0
  %1268 = vmatpush1.msra.mxu0 0.0
  %1269 = vmatprep.subr.mxu0 0.0
  %1270 = vmatpush1.msra.mxu0 0.0
  %1271 = vmatprep.subr.mxu0 0.0
  %1272 = vmatpush1.msra.mxu0 0.0
  %1273 = vmatprep.subr.mxu0 0.0
  %1274 = vmatpush1.msra.mxu0 0.0
  %1275 = vmatprep.subr.mxu0 0.0
  %1276 = vmatpush1.msra.mxu0 0.0
  %1277 = vmatprep.subr.mxu0 0.0
  %1278 = vmatpush1.msra.mxu0 0.0
  %1279 = vmatprep.subr.mxu0 0.0
  %1280 = vmatpush1.msra.mxu0 0.0
  %1281 = vmatprep.subr.mxu0 0.0
  %1282 = vmatpush1.msra.mxu0 0.0
  %1283 = vmatprep.subr.mxu0 0.0
  %1284 = vmatpush1.msra.mxu0 0.0
  %1285 = vmatprep.subr.mxu0 0.0
  %1286 = vmatpush1.msra.mxu0 0.0
  %1287 = vmatprep.subr.mxu0 0.0
  %1288 = vmatpush1.msra.mxu0 0.0
  %1289 = vmatprep.subr.mxu0 0.0
  %1290 = vmatpush1.msra.mxu0 0.0
  %1291 = vmatprep.subr.mxu0 0.0
  %1292 = vmatpush1.msra.mxu0 0.0
  %1293 = vmatprep.subr.mxu0 0.0
  %1294 = vmatpush1.msra.mxu0 0.0
  %1295 = vmatprep.subr.mxu0 0.0
  %1296 = vmatpush1.msra.mxu0 0.0
  %1297 = vmatprep.subr.mxu0 0.0
  %1298 = vmatpush1.msra.mxu0 0.0
  %1299 = vmatprep.subr.mxu0 0.0
  %1300 = vmatpush1.msra.mxu0 0.0
  %1301 = vmatprep.subr.mxu0 0.0
  %1302 = vmatpush1.msra.mxu0 0.0
  %1303 = vmatprep.subr.mxu0 0.0
  %1304 = vmatpush1.msra.mxu0 0.0
  %1305 = vmatprep.subr.mxu0 0.0
  %1306 = vmatpush1.msra.mxu0 0.0
  %1307 = vmatprep.subr.mxu0 0.0
  %1308 = vmatpush1.msra.mxu0 0.0
  %1309 = vmatprep.subr.mxu0 0.0
  %1310 = vmatpush1.msra.mxu0 0.0
  %1311 = vmatprep.subr.mxu0 0.0
  %1312 = vmatpush1.msra.mxu0 0.0
  %1313 = vmatprep.subr.mxu0 0.0
  %1314 = vmatpush1.msra.mxu0 0.0
  %1315 = vmatprep.subr.mxu0 0.0
  %1316 = vmatpush1.msra.mxu0 0.0
  %1317 = vmatprep.mubr.f32.mxu0 0.0
  %v1318 = vand.u32 %v60, 4294901760
  %v1319 = vsub.f32 %v60, %v1318
  %v1320 = vand.u32 %v1319, 4294901760
  %v1321 = vsub.f32 %v1319, %v1320
  %v1322 = vand.u32 %v1321, 4294901760
  %1323 = vmatmul.mubr.f32.gmra.mrb[0].mxu0 %v1322
  %v1324 = vpop.f32.mrb[0].mxu0
  %v1325 = vadd.f32 0.0, %v1324
  %v1326 = vpop.f32.mrb[0].mxu0
  %1327 = vmatprep.mubr.f32.mxu0 0.0
  %v1328 = vand.u32 %v63, 4294901760
  %v1329 = vsub.f32 %v63, %v1328
  %v1330 = vand.u32 %v1329, 4294901760
  %v1331 = vsub.f32 %v1329, %v1330
  %v1332 = vand.u32 %v1331, 4294901760
  %1333 = vmatmul.mubr.f32.gmra.mrb[0].mxu0 %v1332
  %v1334 = vpop.f32.mrb[0].mxu0
  %v1335 = vadd.f32 0.0, %v1334
  %v1336 = vpop.f32.mrb[0].mxu0
  %1337 = vdwg.mxu0
  %1338 = vmatprep.subr.mxu0 0.0
  %v1339 = vand.u32 %v22, 4294901760
  %v1340 = vsub.f32 %v22, %v1339
  %v1341 = vand.u32 %v1340, 4294901760
  %v1342 = vsub.f32 %v1340, %v1341
  %v1343 = vand.u32 %v1342, 4294901760
  %1344 = vmatpush1.msra.mxu0 %v1343
  %1345 = vmatprep.subr.mxu0 0.0
  %v1346 = vand.u32 %v23, 4294901760
  %v1347 = vsub.f32 %v23, %v1346
  %v1348 = vand.u32 %v1347, 4294901760
  %v1349 = vsub.f32 %v1347, %v1348
  %v1350 = vand.u32 %v1349, 4294901760
  %1351 = vmatpush1.msra.mxu0 %v1350
  %1352 = vmatprep.subr.mxu0 0.0
  %1353 = vmatpush1.msra.mxu0 0.0
  %1354 = vmatprep.subr.mxu0 0.0
  %1355 = vmatpush1.msra.mxu0 0.0
  %1356 = vmatprep.subr.mxu0 0.0
  %1357 = vmatpush1.msra.mxu0 0.0
  %1358 = vmatprep.subr.mxu0 0.0
  %1359 = vmatpush1.msra.mxu0 0.0
  %1360 = vmatprep.subr.mxu0 0.0
  %1361 = vmatpush1.msra.mxu0 0.0
  %1362 = vmatprep.subr.mxu0 0.0
  %1363 = vmatpush1.msra.mxu0 0.0
  %1364 = vmatprep.subr.mxu0 0.0
  %1365 = vmatpush1.msra.mxu0 0.0
  %1366 = vmatprep.subr.mxu0 0.0
  %1367 = vmatpush1.msra.mxu0 0.0
  %1368 = vmatprep.subr.mxu0 0.0
  %1369 = vmatpush1.msra.mxu0 0.0
  %1370 = vmatprep.subr.mxu0 0.0
  %1371 = vmatpush1.msra.mxu0 0.0
  %1372 = vmatprep.subr.mxu0 0.0
  %1373 = vmatpush1.msra.mxu0 0.0
  %1374 = vmatprep.subr.mxu0 0.0
  %1375 = vmatpush1.msra.mxu0 0.0
  %1376 = vmatprep.subr.mxu0 0.0
  %1377 = vmatpush1.msra.mxu0 0.0
  %1378 = vmatprep.subr.mxu0 0.0
  %1379 = vmatpush1.msra.mxu0 0.0
  %1380 = vmatprep.subr.mxu0 0.0
  %1381 = vmatpush1.msra.mxu0 0.0
  %1382 = vmatprep.subr.mxu0 0.0
  %1383 = vmatpush1.msra.mxu0 0.0
  %1384 = vmatprep.subr.mxu0 0.0
  %1385 = vmatpush1.msra.mxu0 0.0
  %1386 = vmatprep.subr.mxu0 0.0
  %1387 = vmatpush1.msra.mxu0 0.0
  %1388 = vmatprep.subr.mxu0 0.0
  %1389 = vmatpush1.msra.mxu0 0.0
  %1390 = vmatprep.subr.mxu0 0.0
  %1391 = vmatpush1.msra.mxu0 0.0
  %1392 = vmatprep.subr.mxu0 0.0
  %1393 = vmatpush1.msra.mxu0 0.0
  %1394 = vmatprep.subr.mxu0 0.0
  %1395 = vmatpush1.msra.mxu0 0.0
  %1396 = vmatprep.subr.mxu0 0.0
  %1397 = vmatpush1.msra.mxu0 0.0
  %1398 = vmatprep.subr.mxu0 0.0
  %1399 = vmatpush1.msra.mxu0 0.0
  %1400 = vmatprep.subr.mxu0 0.0
  %1401 = vmatpush1.msra.mxu0 0.0
  %1402 = vmatprep.subr.mxu0 0.0
  %1403 = vmatpush1.msra.mxu0 0.0
  %1404 = vmatprep.subr.mxu0 0.0
  %1405 = vmatpush1.msra.mxu0 0.0
  %1406 = vmatprep.subr.mxu0 0.0
  %1407 = vmatpush1.msra.mxu0 0.0
  %1408 = vmatprep.subr.mxu0 0.0
  %1409 = vmatpush1.msra.mxu0 0.0
  %1410 = vmatprep.subr.mxu0 0.0
  %1411 = vmatpush1.msra.mxu0 0.0
  %1412 = vmatprep.mubr.f32.mxu0 0.0
  %v1413 = vand.u32 %v60, 4294901760
  %1414 = vmatmul.mubr.f32.gmra.mrb[0].mxu0 %v1413
  %v1415 = vpop.f32.mrb[0].mxu0
  %v1416 = vadd.f32 %v1325, %v1415
  %v1417 = vpop.f32.mrb[0].mxu0
  %1418 = vmatprep.mubr.f32.mxu0 0.0
  %v1419 = vand.u32 %v63, 4294901760
  %1420 = vmatmul.mubr.f32.gmra.mrb[0].mxu0 %v1419
  %v1421 = vpop.f32.mrb[0].mxu0
  %v1422 = vadd.f32 %v1335, %v1421
  %v1423 = vpop.f32.mrb[0].mxu0
  %1424 = vdwg.mxu0
  %1425 = vmatprep.subr.mxu0 0.0
  %v1426 = vand.u32 %v22, 4294901760
  %v1427 = vsub.f32 %v22, %v1426
  %1428 = vmatpush1.msra.mxu0 %v1427
  %1429 = vmatprep.subr.mxu0 0.0
  %v1430 = vand.u32 %v23, 4294901760
  %v1431 = vsub.f32 %v23, %v1430
  %1432 = vmatpush1.msra.mxu0 %v1431
  %1433 = vmatprep.subr.mxu0 0.0
  %1434 = vmatpush1.msra.mxu0 0.0
  %1435 = vmatprep.subr.mxu0 0.0
  %1436 = vmatpush1.msra.mxu0 0.0
  %1437 = vmatprep.subr.mxu0 0.0
  %1438 = vmatpush1.msra.mxu0 0.0
  %1439 = vmatprep.subr.mxu0 0.0
  %1440 = vmatpush1.msra.mxu0 0.0
  %1441 = vmatprep.subr.mxu0 0.0
  %1442 = vmatpush1.msra.mxu0 0.0
  %1443 = vmatprep.subr.mxu0 0.0
  %1444 = vmatpush1.msra.mxu0 0.0
  %1445 = vmatprep.subr.mxu0 0.0
  %1446 = vmatpush1.msra.mxu0 0.0
  %1447 = vmatprep.subr.mxu0 0.0
  %1448 = vmatpush1.msra.mxu0 0.0
  %1449 = vmatprep.subr.mxu0 0.0
  %1450 = vmatpush1.msra.mxu0 0.0
  %1451 = vmatprep.subr.mxu0 0.0
  %1452 = vmatpush1.msra.mxu0 0.0
  %1453 = vmatprep.subr.mxu0 0.0
  %1454 = vmatpush1.msra.mxu0 0.0
  %1455 = vmatprep.subr.mxu0 0.0
  %1456 = vmatpush1.msra.mxu0 0.0
  %1457 = vmatprep.subr.mxu0 0.0
  %1458 = vmatpush1.msra.mxu0 0.0
  %1459 = vmatprep.subr.mxu0 0.0
  %1460 = vmatpush1.msra.mxu0 0.0
  %1461 = vmatprep.subr.mxu0 0.0
  %1462 = vmatpush1.msra.mxu0 0.0
  %1463 = vmatprep.subr.mxu0 0.0
  %1464 = vmatpush1.msra.mxu0 0.0
  %1465 = vmatprep.subr.mxu0 0.0
  %1466 = vmatpush1.msra.mxu0 0.0
  %1467 = vmatprep.subr.mxu0 0.0
  %1468 = vmatpush1.msra.mxu0 0.0
  %1469 = vmatprep.subr.mxu0 0.0
  %1470 = vmatpush1.msra.mxu0 0.0
  %1471 = vmatprep.subr.mxu0 0.0
  %1472 = vmatpush1.msra.mxu0 0.0
  %1473 = vmatprep.subr.mxu0 0.0
  %1474 = vmatpush1.msra.mxu0 0.0
  %1475 = vmatprep.subr.mxu0 0.0
  %1476 = vmatpush1.msra.mxu0 0.0
  %1477 = vmatprep.subr.mxu0 0.0
  %1478 = vmatpush1.msra.mxu0 0.0
  %1479 = vmatprep.subr.mxu0 0.0
  %1480 = vmatpush1.msra.mxu0 0.0
  %1481 = vmatprep.subr.mxu0 0.0
  %1482 = vmatpush1.msra.mxu0 0.0
  %1483 = vmatprep.subr.mxu0 0.0
  %1484 = vmatpush1.msra.mxu0 0.0
  %1485 = vmatprep.subr.mxu0 0.0
  %1486 = vmatpush1.msra.mxu0 0.0
  %1487 = vmatprep.subr.mxu0 0.0
  %1488 = vmatpush1.msra.mxu0 0.0
  %1489 = vmatprep.subr.mxu0 0.0
  %1490 = vmatpush1.msra.mxu0 0.0
  %1491 = vmatprep.subr.mxu0 0.0
  %1492 = vmatpush1.msra.mxu0 0.0
  %1493 = vmatprep.mubr.f32.mxu0 0.0
  %v1494 = vand.u32 %v60, 4294901760
  %v1495 = vsub.f32 %v60, %v1494
  %1496 = vmatmul.mubr.f32.gmra.mrb[0].mxu0 %v1495
  %v1497 = vpop.f32.mrb[0].mxu0
  %v1498 = vadd.f32 %v1416, %v1497
  %v1499 = vpop.f32.mrb[0].mxu0
  %1500 = vmatprep.mubr.f32.mxu0 0.0
  %v1501 = vand.u32 %v63, 4294901760
  %v1502 = vsub.f32 %v63, %v1501
  %1503 = vmatmul.mubr.f32.gmra.mrb[0].mxu0 %v1502
  %v1504 = vpop.f32.mrb[0].mxu0
  %v1505 = vadd.f32 %v1422, %v1504
  %v1506 = vpop.f32.mrb[0].mxu0
  %1507 = vdwg.mxu0
  %1508 = vmatprep.subr.mxu0 0.0
  %v1509 = vand.u32 %v22, 4294901760
  %1510 = vmatpush1.msra.mxu0 %v1509
  %1511 = vmatprep.subr.mxu0 0.0
  %v1512 = vand.u32 %v23, 4294901760
  %1513 = vmatpush1.msra.mxu0 %v1512
  %1514 = vmatprep.subr.mxu0 0.0
  %1515 = vmatpush1.msra.mxu0 0.0
  %1516 = vmatprep.subr.mxu0 0.0
  %1517 = vmatpush1.msra.mxu0 0.0
  %1518 = vmatprep.subr.mxu0 0.0
  %1519 = vmatpush1.msra.mxu0 0.0
  %1520 = vmatprep.subr.mxu0 0.0
  %1521 = vmatpush1.msra.mxu0 0.0
  %1522 = vmatprep.subr.mxu0 0.0
  %1523 = vmatpush1.msra.mxu0 0.0
  %1524 = vmatprep.subr.mxu0 0.0
  %1525 = vmatpush1.msra.mxu0 0.0
  %1526 = vmatprep.subr.mxu0 0.0
  %1527 = vmatpush1.msra.mxu0 0.0
  %1528 = vmatprep.subr.mxu0 0.0
  %1529 = vmatpush1.msra.mxu0 0.0
  %1530 = vmatprep.subr.mxu0 0.0
  %1531 = vmatpush1.msra.mxu0 0.0
  %1532 = vmatprep.subr.mxu0 0.0
  %1533 = vmatpush1.msra.mxu0 0.0
  %1534 = vmatprep.subr.mxu0 0.0
  %1535 = vmatpush1.msra.mxu0 0.0
  %1536 = vmatprep.subr.mxu0 0.0
  %1537 = vmatpush1.msra.mxu0 0.0
  %1538 = vmatprep.subr.mxu0 0.0
  %1539 = vmatpush1.msra.mxu0 0.0
  %1540 = vmatprep.subr.mxu0 0.0
  %1541 = vmatpush1.msra.mxu0 0.0
  %1542 = vmatprep.subr.mxu0 0.0
  %1543 = vmatpush1.msra.mxu0 0.0
  %1544 = vmatprep.subr.mxu0 0.0
  %1545 = vmatpush1.msra.mxu0 0.0
  %1546 = vmatprep.subr.mxu0 0.0
  %1547 = vmatpush1.msra.mxu0 0.0
  %1548 = vmatprep.subr.mxu0 0.0
  %1549 = vmatpush1.msra.mxu0 0.0
  %1550 = vmatprep.subr.mxu0 0.0
  %1551 = vmatpush1.msra.mxu0 0.0
  %1552 = vmatprep.subr.mxu0 0.0
  %1553 = vmatpush1.msra.mxu0 0.0
  %1554 = vmatprep.subr.mxu0 0.0
  %1555 = vmatpush1.msra.mxu0 0.0
  %1556 = vmatprep.subr.mxu0 0.0
  %1557 = vmatpush1.msra.mxu0 0.0
  %1558 = vmatprep.subr.mxu0 0.0
  %1559 = vmatpush1.msra.mxu0 0.0
  %1560 = vmatprep.subr.mxu0 0.0
  %1561 = vmatpush1.msra.mxu0 0.0
  %1562 = vmatprep.subr.mxu0 0.0
  %1563 = vmatpush1.msra.mxu0 0.0
  %1564 = vmatprep.subr.mxu0 0.0
  %1565 = vmatpush1.msra.mxu0 0.0
  %1566 = vmatprep.subr.mxu0 0.0
  %1567 = vmatpush1.msra.mxu0 0.0
  %1568 = vmatprep.subr.mxu0 0.0
  %1569 = vmatpush1.msra.mxu0 0.0
  %1570 = vmatprep.subr.mxu0 0.0
  %1571 = vmatpush1.msra.mxu0 0.0
  %1572 = vmatprep.subr.mxu0 0.0
  %1573 = vmatpush1.msra.mxu0 0.0
  %1574 = vmatprep.mubr.f32.mxu0 0.0
  %v1575 = vand.u32 %v60, 4294901760
  %v1576 = vsub.f32 %v60, %v1575
  %v1577 = vand.u32 %v1576, 4294901760
  %1578 = vmatmul.mubr.f32.gmra.mrb[0].mxu0 %v1577
  %v1579 = vpop.f32.mrb[0].mxu0
  %v1580 = vadd.f32 %v1498, %v1579
  %v1581 = vpop.f32.mrb[0].mxu0
  %1582 = vmatprep.mubr.f32.mxu0 0.0
  %v1583 = vand.u32 %v63, 4294901760
  %v1584 = vsub.f32 %v63, %v1583
  %v1585 = vand.u32 %v1584, 4294901760
  %1586 = vmatmul.mubr.f32.gmra.mrb[0].mxu0 %v1585
  %v1587 = vpop.f32.mrb[0].mxu0
  %v1588 = vadd.f32 %v1505, %v1587
  %v1589 = vpop.f32.mrb[0].mxu0
  %1590 = vdwg.mxu0
  %1591 = vmatprep.subr.mxu0 0.0
  %v1592 = vand.u32 %v22, 4294901760
  %v1593 = vsub.f32 %v22, %v1592
  %v1594 = vand.u32 %v1593, 4294901760
  %1595 = vmatpush1.msra.mxu0 %v1594
  %1596 = vmatprep.subr.mxu0 0.0
  %v1597 = vand.u32 %v23, 4294901760
  %v1598 = vsub.f32 %v23, %v1597
  %v1599 = vand.u32 %v1598, 4294901760
  %1600 = vmatpush1.msra.mxu0 %v1599
  %1601 = vmatprep.subr.mxu0 0.0
  %1602 = vmatpush1.msra.mxu0 0.0
  %1603 = vmatprep.subr.mxu0 0.0
  %1604 = vmatpush1.msra.mxu0 0.0
  %1605 = vmatprep.subr.mxu0 0.0
  %1606 = vmatpush1.msra.mxu0 0.0
  %1607 = vmatprep.subr.mxu0 0.0
  %1608 = vmatpush1.msra.mxu0 0.0
  %1609 = vmatprep.subr.mxu0 0.0
  %1610 = vmatpush1.msra.mxu0 0.0
  %1611 = vmatprep.subr.mxu0 0.0
  %1612 = vmatpush1.msra.mxu0 0.0
  %1613 = vmatprep.subr.mxu0 0.0
  %1614 = vmatpush1.msra.mxu0 0.0
  %1615 = vmatprep.subr.mxu0 0.0
  %1616 = vmatpush1.msra.mxu0 0.0
  %1617 = vmatprep.subr.mxu0 0.0
  %1618 = vmatpush1.msra.mxu0 0.0
  %1619 = vmatprep.subr.mxu0 0.0
  %1620 = vmatpush1.msra.mxu0 0.0
  %1621 = vmatprep.subr.mxu0 0.0
  %1622 = vmatpush1.msra.mxu0 0.0
  %1623 = vmatprep.subr.mxu0 0.0
  %1624 = vmatpush1.msra.mxu0 0.0
  %1625 = vmatprep.subr.mxu0 0.0
  %1626 = vmatpush1.msra.mxu0 0.0
  %1627 = vmatprep.subr.mxu0 0.0
  %1628 = vmatpush1.msra.mxu0 0.0
  %1629 = vmatprep.subr.mxu0 0.0
  %1630 = vmatpush1.msra.mxu0 0.0
  %1631 = vmatprep.subr.mxu0 0.0
  %1632 = vmatpush1.msra.mxu0 0.0
  %1633 = vmatprep.subr.mxu0 0.0
  %1634 = vmatpush1.msra.mxu0 0.0
  %1635 = vmatprep.subr.mxu0 0.0
  %1636 = vmatpush1.msra.mxu0 0.0
  %1637 = vmatprep.subr.mxu0 0.0
  %1638 = vmatpush1.msra.mxu0 0.0
  %1639 = vmatprep.subr.mxu0 0.0
  %1640 = vmatpush1.msra.mxu0 0.0
  %1641 = vmatprep.subr.mxu0 0.0
  %1642 = vmatpush1.msra.mxu0 0.0
  %1643 = vmatprep.subr.mxu0 0.0
  %1644 = vmatpush1.msra.mxu0 0.0
  %1645 = vmatprep.subr.mxu0 0.0
  %1646 = vmatpush1.msra.mxu0 0.0
  %1647 = vmatprep.subr.mxu0 0.0
  %1648 = vmatpush1.msra.mxu0 0.0
  %1649 = vmatprep.subr.mxu0 0.0
  %1650 = vmatpush1.msra.mxu0 0.0
  %1651 = vmatprep.subr.mxu0 0.0
  %1652 = vmatpush1.msra.mxu0 0.0
  %1653 = vmatprep.subr.mxu0 0.0
  %1654 = vmatpush1.msra.mxu0 0.0
  %1655 = vmatprep.subr.mxu0 0.0
  %1656 = vmatpush1.msra.mxu0 0.0
  %1657 = vmatprep.subr.mxu0 0.0
  %1658 = vmatpush1.msra.mxu0 0.0
  %1659 = vmatprep.subr.mxu0 0.0
  %1660 = vmatpush1.msra.mxu0 0.0
  %1661 = vmatprep.mubr.f32.mxu0 0.0
  %v1662 = vand.u32 %v60, 4294901760
  %1663 = vmatmul.mubr.f32.gmra.mrb[0].mxu0 %v1662
  %v1664 = vpop.f32.mrb[0].mxu0
  %v1665 = vadd.f32 %v1580, %v1664
  %v1666 = vpop.f32.mrb[0].mxu0
  %1667 = vmatprep.mubr.f32.mxu0 0.0
  %v1668 = vand.u32 %v63, 4294901760
  %1669 = vmatmul.mubr.f32.gmra.mrb[0].mxu0 %v1668
  %v1670 = vpop.f32.mrb[0].mxu0
  %v1671 = vadd.f32 %v1588, %v1670
  %v1672 = vpop.f32.mrb[0].mxu0
  %1673 = vdwg.mxu0
  %1674 = vmatprep.subr.mxu0 0.0
  %v1675 = vand.u32 %v22, 4294901760
  %1676 = vmatpush1.msra.mxu0 %v1675
  %1677 = vmatprep.subr.mxu0 0.0
  %v1678 = vand.u32 %v23, 4294901760
  %1679 = vmatpush1.msra.mxu0 %v1678
  %1680 = vmatprep.subr.mxu0 0.0
  %1681 = vmatpush1.msra.mxu0 0.0
  %1682 = vmatprep.subr.mxu0 0.0
  %1683 = vmatpush1.msra.mxu0 0.0
  %1684 = vmatprep.subr.mxu0 0.0
  %1685 = vmatpush1.msra.mxu0 0.0
  %1686 = vmatprep.subr.mxu0 0.0
  %1687 = vmatpush1.msra.mxu0 0.0
  %1688 = vmatprep.subr.mxu0 0.0
  %1689 = vmatpush1.msra.mxu0 0.0
  %1690 = vmatprep.subr.mxu0 0.0
  %1691 = vmatpush1.msra.mxu0 0.0
  %1692 = vmatprep.subr.mxu0 0.0
  %1693 = vmatpush1.msra.mxu0 0.0
  %1694 = vmatprep.subr.mxu0 0.0
  %1695 = vmatpush1.msra.mxu0 0.0
  %1696 = vmatprep.subr.mxu0 0.0
  %1697 = vmatpush1.msra.mxu0 0.0
  %1698 = vmatprep.subr.mxu0 0.0
  %1699 = vmatpush1.msra.mxu0 0.0
  %1700 = vmatprep.subr.mxu0 0.0
  %1701 = vmatpush1.msra.mxu0 0.0
  %1702 = vmatprep.subr.mxu0 0.0
  %1703 = vmatpush1.msra.mxu0 0.0
  %1704 = vmatprep.subr.mxu0 0.0
  %1705 = vmatpush1.msra.mxu0 0.0
  %1706 = vmatprep.subr.mxu0 0.0
  %1707 = vmatpush1.msra.mxu0 0.0
  %1708 = vmatprep.subr.mxu0 0.0
  %1709 = vmatpush1.msra.mxu0 0.0
  %1710 = vmatprep.subr.mxu0 0.0
  %1711 = vmatpush1.msra.mxu0 0.0
  %1712 = vmatprep.subr.mxu0 0.0
  %1713 = vmatpush1.msra.mxu0 0.0
  %1714 = vmatprep.subr.mxu0 0.0
  %1715 = vmatpush1.msra.mxu0 0.0
  %1716 = vmatprep.subr.mxu0 0.0
  %1717 = vmatpush1.msra.mxu0 0.0
  %1718 = vmatprep.subr.mxu0 0.0
  %1719 = vmatpush1.msra.mxu0 0.0
  %1720 = vmatprep.subr.mxu0 0.0
  %1721 = vmatpush1.msra.mxu0 0.0
  %1722 = vmatprep.subr.mxu0 0.0
  %1723 = vmatpush1.msra.mxu0 0.0
  %1724 = vmatprep.subr.mxu0 0.0
  %1725 = vmatpush1.msra.mxu0 0.0
  %1726 = vmatprep.subr.mxu0 0.0
  %1727 = vmatpush1.msra.mxu0 0.0
  %1728 = vmatprep.subr.mxu0 0.0
  %1729 = vmatpush1.msra.mxu0 0.0
  %1730 = vmatprep.subr.mxu0 0.0
  %1731 = vmatpush1.msra.mxu0 0.0
  %1732 = vmatprep.subr.mxu0 0.0
  %1733 = vmatpush1.msra.mxu0 0.0
  %1734 = vmatprep.subr.mxu0 0.0
  %1735 = vmatpush1.msra.mxu0 0.0
  %1736 = vmatprep.subr.mxu0 0.0
  %1737 = vmatpush1.msra.mxu0 0.0
  %1738 = vmatprep.subr.mxu0 0.0
  %1739 = vmatpush1.msra.mxu0 0.0
  %1740 = vmatprep.mubr.f32.mxu0 0.0
  %v1741 = vand.u32 %v60, 4294901760
  %1742 = vmatmul.mubr.f32.gmra.mrb[0].mxu0 %v1741
  %v1743 = vpop.f32.mrb[0].mxu0
  %v1744 = vadd.f32 %v1665, %v1743
  %v1745 = vpop.f32.mrb[0].mxu0
  %1746 = vmatprep.mubr.f32.mxu0 0.0
  %v1747 = vand.u32 %v63, 4294901760
  %1748 = vmatmul.mubr.f32.gmra.mrb[0].mxu0 %v1747
  %v1749 = vpop.f32.mrb[0].mxu0
  %v1750 = vadd.f32 %v1671, %v1749
  %v1751 = vpop.f32.mrb[0].mxu0
  %1752 = vdwg.mxu0
  %1753 = vmatprep.subr.mxu0 0.0
  %v1754 = vand.u32 %v26, 4294901760
  %1755 = vmatpush1.msra.mxu0 %v1754
  %1756 = vmatprep.subr.mxu0 0.0
  %v1757 = vand.u32 %v27, 4294901760
  %1758 = vmatpush1.msra.mxu0 %v1757
  %1759 = vmatprep.subr.mxu0 0.0
  %v1760 = vand.u32 %v28, 4294901760
  %1761 = vmatpush1.msra.mxu0 %v1760
  %1762 = vmatprep.subr.mxu0 0.0
  %v1763 = vand.u32 %v29, 4294901760
  %1764 = vmatpush1.msra.mxu0 %v1763
  %1765 = vmatprep.subr.mxu0 0.0
  %v1766 = vand.u32 %v30, 4294901760
  %1767 = vmatpush1.msra.mxu0 %v1766
  %1768 = vmatprep.subr.mxu0 0.0
  %v1769 = vand.u32 %v31, 4294901760
  %1770 = vmatpush1.msra.mxu0 %v1769
  %1771 = vmatprep.subr.mxu0 0.0
  %v1772 = vand.u32 %v32, 4294901760
  %1773 = vmatpush1.msra.mxu0 %v1772
  %1774 = vmatprep.subr.mxu0 0.0
  %v1775 = vand.u32 %v33, 4294901760
  %1776 = vmatpush1.msra.mxu0 %v1775
  %1777 = vmatprep.subr.mxu0 0.0
  %v1778 = vand.u32 %v34, 4294901760
  %1779 = vmatpush1.msra.mxu0 %v1778
  %1780 = vmatprep.subr.mxu0 0.0
  %v1781 = vand.u32 %v35, 4294901760
  %1782 = vmatpush1.msra.mxu0 %v1781
  %1783 = vmatprep.subr.mxu0 0.0
  %v1784 = vand.u32 %v36, 4294901760
  %1785 = vmatpush1.msra.mxu0 %v1784
  %1786 = vmatprep.subr.mxu0 0.0
  %v1787 = vand.u32 %v37, 4294901760
  %1788 = vmatpush1.msra.mxu0 %v1787
  %1789 = vmatprep.subr.mxu0 0.0
  %v1790 = vand.u32 %v38, 4294901760
  %1791 = vmatpush1.msra.mxu0 %v1790
  %1792 = vmatprep.subr.mxu0 0.0
  %v1793 = vand.u32 %v39, 4294901760
  %1794 = vmatpush1.msra.mxu0 %v1793
  %1795 = vmatprep.subr.mxu0 0.0
  %v1796 = vand.u32 %v40, 4294901760
  %1797 = vmatpush1.msra.mxu0 %v1796
  %1798 = vmatprep.subr.mxu0 0.0
  %v1799 = vand.u32 %v41, 4294901760
  %1800 = vmatpush1.msra.mxu0 %v1799
  %1801 = vmatprep.subr.mxu0 0.0
  %1802 = vmatpush1.msra.mxu0 0.0
  %1803 = vmatprep.subr.mxu0 0.0
  %1804 = vmatpush1.msra.mxu0 0.0
  %1805 = vmatprep.subr.mxu0 0.0
  %1806 = vmatpush1.msra.mxu0 0.0
  %1807 = vmatprep.subr.mxu0 0.0
  %1808 = vmatpush1.msra.mxu0 0.0
  %1809 = vmatprep.subr.mxu0 0.0
  %1810 = vmatpush1.msra.mxu0 0.0
  %1811 = vmatprep.subr.mxu0 0.0
  %1812 = vmatpush1.msra.mxu0 0.0
  %1813 = vmatprep.subr.mxu0 0.0
  %1814 = vmatpush1.msra.mxu0 0.0
  %1815 = vmatprep.subr.mxu0 0.0
  %1816 = vmatpush1.msra.mxu0 0.0
  %1817 = vmatprep.subr.mxu0 0.0
  %1818 = vmatpush1.msra.mxu0 0.0
  %1819 = vmatprep.subr.mxu0 0.0
  %1820 = vmatpush1.msra.mxu0 0.0
  %1821 = vmatprep.subr.mxu0 0.0
  %1822 = vmatpush1.msra.mxu0 0.0
  %1823 = vmatprep.subr.mxu0 0.0
  %1824 = vmatpush1.msra.mxu0 0.0
  %1825 = vmatprep.subr.mxu0 0.0
  %1826 = vmatpush1.msra.mxu0 0.0
  %1827 = vmatprep.subr.mxu0 0.0
  %1828 = vmatpush1.msra.mxu0 0.0
  %1829 = vmatprep.subr.mxu0 0.0
  %1830 = vmatpush1.msra.mxu0 0.0
  %1831 = vmatprep.subr.mxu0 0.0
  %1832 = vmatpush1.msra.mxu0 0.0
  %1833 = vmatprep.mubr.f32.mxu0 0.0
  %v1834 = vand.u32 %v1744, 4294901760
  %v1835 = vsub.f32 %v1744, %v1834
  %v1836 = vand.u32 %v1835, 4294901760
  %v1837 = vsub.f32 %v1835, %v1836
  %v1838 = vand.u32 %v1837, 4294901760
  %1839 = vmatmul.mubr.f32.gmra.mrb[0].mxu0 %v1838
  %v1840 = vpop.f32.mrb[0].mxu0
  %v1841 = vadd.f32 0.0, %v1840
  %v1842 = vpop.f32.mrb[0].mxu0
  %1843 = vmatprep.mubr.f32.mxu0 0.0
  %v1844 = vand.u32 %v1750, 4294901760
  %v1845 = vsub.f32 %v1750, %v1844
  %v1846 = vand.u32 %v1845, 4294901760
  %v1847 = vsub.f32 %v1845, %v1846
  %v1848 = vand.u32 %v1847, 4294901760
  %1849 = vmatmul.mubr.f32.gmra.mrb[0].mxu0 %v1848
  %v1850 = vpop.f32.mrb[0].mxu0
  %v1851 = vadd.f32 0.0, %v1850
  %v1852 = vpop.f32.mrb[0].mxu0
  %1853 = vdwg.mxu0
  %1854 = vmatprep.subr.mxu0 0.0
  %v1855 = vand.u32 %v26, 4294901760
  %v1856 = vsub.f32 %v26, %v1855
  %v1857 = vand.u32 %v1856, 4294901760
  %v1858 = vsub.f32 %v1856, %v1857
  %v1859 = vand.u32 %v1858, 4294901760
  %1860 = vmatpush1.msra.mxu0 %v1859
  %1861 = vmatprep.subr.mxu0 0.0
  %v1862 = vand.u32 %v27, 4294901760
  %v1863 = vsub.f32 %v27, %v1862
  %v1864 = vand.u32 %v1863, 4294901760
  %v1865 = vsub.f32 %v1863, %v1864
  %v1866 = vand.u32 %v1865, 4294901760
  %1867 = vmatpush1.msra.mxu0 %v1866
  %1868 = vmatprep.subr.mxu0 0.0
  %v1869 = vand.u32 %v28, 4294901760
  %v1870 = vsub.f32 %v28, %v1869
  %v1871 = vand.u32 %v1870, 4294901760
  %v1872 = vsub.f32 %v1870, %v1871
  %v1873 = vand.u32 %v1872, 4294901760
  %1874 = vmatpush1.msra.mxu0 %v1873
  %1875 = vmatprep.subr.mxu0 0.0
  %v1876 = vand.u32 %v29, 4294901760
  %v1877 = vsub.f32 %v29, %v1876
  %v1878 = vand.u32 %v1877, 4294901760
  %v1879 = vsub.f32 %v1877, %v1878
  %v1880 = vand.u32 %v1879, 4294901760
  %1881 = vmatpush1.msra.mxu0 %v1880
  %1882 = vmatprep.subr.mxu0 0.0
  %v1883 = vand.u32 %v30, 4294901760
  %v1884 = vsub.f32 %v30, %v1883
  %v1885 = vand.u32 %v1884, 4294901760
  %v1886 = vsub.f32 %v1884, %v1885
  %v1887 = vand.u32 %v1886, 4294901760
  %1888 = vmatpush1.msra.mxu0 %v1887
  %1889 = vmatprep.subr.mxu0 0.0
  %v1890 = vand.u32 %v31, 4294901760
  %v1891 = vsub.f32 %v31, %v1890
  %v1892 = vand.u32 %v1891, 4294901760
  %v1893 = vsub.f32 %v1891, %v1892
  %v1894 = vand.u32 %v1893, 4294901760
  %1895 = vmatpush1.msra.mxu0 %v1894
  %1896 = vmatprep.subr.mxu0 0.0
  %v1897 = vand.u32 %v32, 4294901760
  %v1898 = vsub.f32 %v32, %v1897
  %v1899 = vand.u32 %v1898, 4294901760
  %v1900 = vsub.f32 %v1898, %v1899
  %v1901 = vand.u32 %v1900, 4294901760
  %1902 = vmatpush1.msra.mxu0 %v1901
  %1903 = vmatprep.subr.mxu0 0.0
  %v1904 = vand.u32 %v33, 4294901760
  %v1905 = vsub.f32 %v33, %v1904
  %v1906 = vand.u32 %v1905, 4294901760
  %v1907 = vsub.f32 %v1905, %v1906
  %v1908 = vand.u32 %v1907, 4294901760
  %1909 = vmatpush1.msra.mxu0 %v1908
  %1910 = vmatprep.subr.mxu0 0.0
  %v1911 = vand.u32 %v34, 4294901760
  %v1912 = vsub.f32 %v34, %v1911
  %v1913 = vand.u32 %v1912, 4294901760
  %v1914 = vsub.f32 %v1912, %v1913
  %v1915 = vand.u32 %v1914, 4294901760
  %1916 = vmatpush1.msra.mxu0 %v1915
  %1917 = vmatprep.subr.mxu0 0.0
  %v1918 = vand.u32 %v35, 4294901760
  %v1919 = vsub.f32 %v35, %v1918
  %v1920 = vand.u32 %v1919, 4294901760
  %v1921 = vsub.f32 %v1919, %v1920
  %v1922 = vand.u32 %v1921, 4294901760
  %1923 = vmatpush1.msra.mxu0 %v1922
  %1924 = vmatprep.subr.mxu0 0.0
  %v1925 = vand.u32 %v36, 4294901760
  %v1926 = vsub.f32 %v36, %v1925
  %v1927 = vand.u32 %v1926, 4294901760
  %v1928 = vsub.f32 %v1926, %v1927
  %v1929 = vand.u32 %v1928, 4294901760
  %1930 = vmatpush1.msra.mxu0 %v1929
  %1931 = vmatprep.subr.mxu0 0.0
  %v1932 = vand.u32 %v37, 4294901760
  %v1933 = vsub.f32 %v37, %v1932
  %v1934 = vand.u32 %v1933, 4294901760
  %v1935 = vsub.f32 %v1933, %v1934
  %v1936 = vand.u32 %v1935, 4294901760
  %1937 = vmatpush1.msra.mxu0 %v1936
  %1938 = vmatprep.subr.mxu0 0.0
  %v1939 = vand.u32 %v38, 4294901760
  %v1940 = vsub.f32 %v38, %v1939
  %v1941 = vand.u32 %v1940, 4294901760
  %v1942 = vsub.f32 %v1940, %v1941
  %v1943 = vand.u32 %v1942, 4294901760
  %1944 = vmatpush1.msra.mxu0 %v1943
  %1945 = vmatprep.subr.mxu0 0.0
  %v1946 = vand.u32 %v39, 4294901760
  %v1947 = vsub.f32 %v39, %v1946
  %v1948 = vand.u32 %v1947, 4294901760
  %v1949 = vsub.f32 %v1947, %v1948
  %v1950 = vand.u32 %v1949, 4294901760
  %1951 = vmatpush1.msra.mxu0 %v1950
  %1952 = vmatprep.subr.mxu0 0.0
  %v1953 = vand.u32 %v40, 4294901760
  %v1954 = vsub.f32 %v40, %v1953
  %v1955 = vand.u32 %v1954, 4294901760
  %v1956 = vsub.f32 %v1954, %v1955
  %v1957 = vand.u32 %v1956, 4294901760
  %1958 = vmatpush1.msra.mxu0 %v1957
  %1959 = vmatprep.subr.mxu0 0.0
  %v1960 = vand.u32 %v41, 4294901760
  %v1961 = vsub.f32 %v41, %v1960
  %v1962 = vand.u32 %v1961, 4294901760
  %v1963 = vsub.f32 %v1961, %v1962
  %v1964 = vand.u32 %v1963, 4294901760
  %1965 = vmatpush1.msra.mxu0 %v1964
  %1966 = vmatprep.subr.mxu0 0.0
  %1967 = vmatpush1.msra.mxu0 0.0
  %1968 = vmatprep.subr.mxu0 0.0
  %1969 = vmatpush1.msra.mxu0 0.0
  %1970 = vmatprep.subr.mxu0 0.0
  %1971 = vmatpush1.msra.mxu0 0.0
  %1972 = vmatprep.subr.mxu0 0.0
  %1973 = vmatpush1.msra.mxu0 0.0
  %1974 = vmatprep.subr.mxu0 0.0
  %1975 = vmatpush1.msra.mxu0 0.0
  %1976 = vmatprep.subr.mxu0 0.0
  %1977 = vmatpush1.msra.mxu0 0.0
  %1978 = vmatprep.subr.mxu0 0.0
  %1979 = vmatpush1.msra.mxu0 0.0
  %1980 = vmatprep.subr.mxu0 0.0
  %1981 = vmatpush1.msra.mxu0 0.0
  %1982 = vmatprep.subr.mxu0 0.0
  %1983 = vmatpush1.msra.mxu0 0.0
  %1984 = vmatprep.subr.mxu0 0.0
  %1985 = vmatpush1.msra.mxu0 0.0
  %1986 = vmatprep.subr.mxu0 0.0
  %1987 = vmatpush1.msra.mxu0 0.0
  %1988 = vmatprep.subr.mxu0 0.0
  %1989 = vmatpush1.msra.mxu0 0.0
  %1990 = vmatprep.subr.mxu0 0.0
  %1991 = vmatpush1.msra.mxu0 0.0
  %1992 = vmatprep.subr.mxu0 0.0
  %1993 = vmatpush1.msra.mxu0 0.0
  %1994 = vmatprep.subr.mxu0 0.0
  %1995 = vmatpush1.msra.mxu0 0.0
  %1996 = vmatprep.subr.mxu0 0.0
  %1997 = vmatpush1.msra.mxu0 0.0
  %1998 = vmatprep.mubr.f32.mxu0 0.0
  %v1999 = vand.u32 %v1744, 4294901760
  %2000 = vmatmul.mubr.f32.gmra.mrb[0].mxu0 %v1999
  %v2001 = vpop.f32.mrb[0].mxu0
  %v2002 = vadd.f32 %v1841, %v2001
  %v2003 = vpop.f32.mrb[0].mxu0
  %2004 = vmatprep.mubr.f32.mxu0 0.0
  %v2005 = vand.u32 %v1750, 4294901760
  %2006 = vmatmul.mubr.f32.gmra.mrb[0].mxu0 %v2005
  %v2007 = vpop.f32.mrb[0].mxu0
  %v2008 = vadd.f32 %v1851, %v2007
  %v2009 = vpop.f32.mrb[0].mxu0
  %2010 = vdwg.mxu0
  %2011 = vmatprep.subr.mxu0 0.0
  %v2012 = vand.u32 %v26, 4294901760
  %v2013 = vsub.f32 %v26, %v2012
  %2014 = vmatpush1.msra.mxu0 %v2013
  %2015 = vmatprep.subr.mxu0 0.0
  %v2016 = vand.u32 %v27, 4294901760
  %v2017 = vsub.f32 %v27, %v2016
  %2018 = vmatpush1.msra.mxu0 %v2017
  %2019 = vmatprep.subr.mxu0 0.0
  %v2020 = vand.u32 %v28, 4294901760
  %v2021 = vsub.f32 %v28, %v2020
  %2022 = vmatpush1.msra.mxu0 %v2021
  %2023 = vmatprep.subr.mxu0 0.0
  %v2024 = vand.u32 %v29, 4294901760
  %v2025 = vsub.f32 %v29, %v2024
  %2026 = vmatpush1.msra.mxu0 %v2025
  %2027 = vmatprep.subr.mxu0 0.0
  %v2028 = vand.u32 %v30, 4294901760
  %v2029 = vsub.f32 %v30, %v2028
  %2030 = vmatpush1.msra.mxu0 %v2029
  %2031 = vmatprep.subr.mxu0 0.0
  %v2032 = vand.u32 %v31, 4294901760
  %v2033 = vsub.f32 %v31, %v2032
  %2034 = vmatpush1.msra.mxu0 %v2033
  %2035 = vmatprep.subr.mxu0 0.0
  %v2036 = vand.u32 %v32, 4294901760
  %v2037 = vsub.f32 %v32, %v2036
  %2038 = vmatpush1.msra.mxu0 %v2037
  %2039 = vmatprep.subr.mxu0 0.0
  %v2040 = vand.u32 %v33, 4294901760
  %v2041 = vsub.f32 %v33, %v2040
  %2042 = vmatpush1.msra.mxu0 %v2041
  %2043 = vmatprep.subr.mxu0 0.0
  %v2044 = vand.u32 %v34, 4294901760
  %v2045 = vsub.f32 %v34, %v2044
  %2046 = vmatpush1.msra.mxu0 %v2045
  %2047 = vmatprep.subr.mxu0 0.0
  %v2048 = vand.u32 %v35, 4294901760
  %v2049 = vsub.f32 %v35, %v2048
  %2050 = vmatpush1.msra.mxu0 %v2049
  %2051 = vmatprep.subr.mxu0 0.0
  %v2052 = vand.u32 %v36, 4294901760
  %v2053 = vsub.f32 %v36, %v2052
  %2054 = vmatpush1.msra.mxu0 %v2053
  %2055 = vmatprep.subr.mxu0 0.0
  %v2056 = vand.u32 %v37, 4294901760
  %v2057 = vsub.f32 %v37, %v2056
  %2058 = vmatpush1.msra.mxu0 %v2057
  %2059 = vmatprep.subr.mxu0 0.0
  %v2060 = vand.u32 %v38, 4294901760
  %v2061 = vsub.f32 %v38, %v2060
  %2062 = vmatpush1.msra.mxu0 %v2061
  %2063 = vmatprep.subr.mxu0 0.0
  %v2064 = vand.u32 %v39, 4294901760
  %v2065 = vsub.f32 %v39, %v2064
  %2066 = vmatpush1.msra.mxu0 %v2065
  %2067 = vmatprep.subr.mxu0 0.0
  %v2068 = vand.u32 %v40, 4294901760
  %v2069 = vsub.f32 %v40, %v2068
  %2070 = vmatpush1.msra.mxu0 %v2069
  %2071 = vmatprep.subr.mxu0 0.0
  %v2072 = vand.u32 %v41, 4294901760
  %v2073 = vsub.f32 %v41, %v2072
  %2074 = vmatpush1.msra.mxu0 %v2073
  %2075 = vmatprep.subr.mxu0 0.0
  %2076 = vmatpush1.msra.mxu0 0.0
  %2077 = vmatprep.subr.mxu0 0.0
  %2078 = vmatpush1.msra.mxu0 0.0
  %2079 = vmatprep.subr.mxu0 0.0
  %2080 = vmatpush1.msra.mxu0 0.0
  %2081 = vmatprep.subr.mxu0 0.0
  %2082 = vmatpush1.msra.mxu0 0.0
  %2083 = vmatprep.subr.mxu0 0.0
  %2084 = vmatpush1.msra.mxu0 0.0
  %2085 = vmatprep.subr.mxu0 0.0
  %2086 = vmatpush1.msra.mxu0 0.0
  %2087 = vmatprep.subr.mxu0 0.0
  %2088 = vmatpush1.msra.mxu0 0.0
  %2089 = vmatprep.subr.mxu0 0.0
  %2090 = vmatpush1.msra.mxu0 0.0
  %2091 = vmatprep.subr.mxu0 0.0
  %2092 = vmatpush1.msra.mxu0 0.0
  %2093 = vmatprep.subr.mxu0 0.0
  %2094 = vmatpush1.msra.mxu0 0.0
  %2095 = vmatprep.subr.mxu0 0.0
  %2096 = vmatpush1.msra.mxu0 0.0
  %2097 = vmatprep.subr.mxu0 0.0
  %2098 = vmatpush1.msra.mxu0 0.0
  %2099 = vmatprep.subr.mxu0 0.0
  %2100 = vmatpush1.msra.mxu0 0.0
  %2101 = vmatprep.subr.mxu0 0.0
  %2102 = vmatpush1.msra.mxu0 0.0
  %2103 = vmatprep.subr.mxu0 0.0
  %2104 = vmatpush1.msra.mxu0 0.0
  %2105 = vmatprep.subr.mxu0 0.0
  %2106 = vmatpush1.msra.mxu0 0.0
  %2107 = vmatprep.mubr.f32.mxu0 0.0
  %v2108 = vand.u32 %v1744, 4294901760
  %v2109 = vsub.f32 %v1744, %v2108
  %2110 = vmatmul.mubr.f32.gmra.mrb[0].mxu0 %v2109
  %v2111 = vpop.f32.mrb[0].mxu0
  %v2112 = vadd.f32 %v2002, %v2111
  %v2113 = vpop.f32.mrb[0].mxu0
  %2114 = vmatprep.mubr.f32.mxu0 0.0
  %v2115 = vand.u32 %v1750, 4294901760
  %v2116 = vsub.f32 %v1750, %v2115
  %2117 = vmatmul.mubr.f32.gmra.mrb[0].mxu0 %v2116
  %v2118 = vpop.f32.mrb[0].mxu0
  %v2119 = vadd.f32 %v2008, %v2118
  %v2120 = vpop.f32.mrb[0].mxu0
  %2121 = vdwg.mxu0
  %2122 = vmatprep.subr.mxu0 0.0
  %v2123 = vand.u32 %v26, 4294901760
  %2124 = vmatpush1.msra.mxu0 %v2123
  %2125 = vmatprep.subr.mxu0 0.0
  %v2126 = vand.u32 %v27, 4294901760
  %2127 = vmatpush1.msra.mxu0 %v2126
  %2128 = vmatprep.subr.mxu0 0.0
  %v2129 = vand.u32 %v28, 4294901760
  %2130 = vmatpush1.msra.mxu0 %v2129
  %2131 = vmatprep.subr.mxu0 0.0
  %v2132 = vand.u32 %v29, 4294901760
  %2133 = vmatpush1.msra.mxu0 %v2132
  %2134 = vmatprep.subr.mxu0 0.0
  %v2135 = vand.u32 %v30, 4294901760
  %2136 = vmatpush1.msra.mxu0 %v2135
  %2137 = vmatprep.subr.mxu0 0.0
  %v2138 = vand.u32 %v31, 4294901760
  %2139 = vmatpush1.msra.mxu0 %v2138
  %2140 = vmatprep.subr.mxu0 0.0
  %v2141 = vand.u32 %v32, 4294901760
  %2142 = vmatpush1.msra.mxu0 %v2141
  %2143 = vmatprep.subr.mxu0 0.0
  %v2144 = vand.u32 %v33, 4294901760
  %2145 = vmatpush1.msra.mxu0 %v2144
  %2146 = vmatprep.subr.mxu0 0.0
  %v2147 = vand.u32 %v34, 4294901760
  %2148 = vmatpush1.msra.mxu0 %v2147
  %2149 = vmatprep.subr.mxu0 0.0
  %v2150 = vand.u32 %v35, 4294901760
  %2151 = vmatpush1.msra.mxu0 %v2150
  %2152 = vmatprep.subr.mxu0 0.0
  %v2153 = vand.u32 %v36, 4294901760
  %2154 = vmatpush1.msra.mxu0 %v2153
  %2155 = vmatprep.subr.mxu0 0.0
  %v2156 = vand.u32 %v37, 4294901760
  %2157 = vmatpush1.msra.mxu0 %v2156
  %2158 = vmatprep.subr.mxu0 0.0
  %v2159 = vand.u32 %v38, 4294901760
  %2160 = vmatpush1.msra.mxu0 %v2159
  %2161 = vmatprep.subr.mxu0 0.0
  %v2162 = vand.u32 %v39, 4294901760
  %2163 = vmatpush1.msra.mxu0 %v2162
  %2164 = vmatprep.subr.mxu0 0.0
  %v2165 = vand.u32 %v40, 4294901760
  %2166 = vmatpush1.msra.mxu0 %v2165
  %2167 = vmatprep.subr.mxu0 0.0
  %v2168 = vand.u32 %v41, 4294901760
  %2169 = vmatpush1.msra.mxu0 %v2168
  %2170 = vmatprep.subr.mxu0 0.0
  %2171 = vmatpush1.msra.mxu0 0.0
  %2172 = vmatprep.subr.mxu0 0.0
  %2173 = vmatpush1.msra.mxu0 0.0
  %2174 = vmatprep.subr.mxu0 0.0
  %2175 = vmatpush1.msra.mxu0 0.0
  %2176 = vmatprep.subr.mxu0 0.0
  %2177 = vmatpush1.msra.mxu0 0.0
  %2178 = vmatprep.subr.mxu0 0.0
  %2179 = vmatpush1.msra.mxu0 0.0
  %2180 = vmatprep.subr.mxu0 0.0
  %2181 = vmatpush1.msra.mxu0 0.0
  %2182 = vmatprep.subr.mxu0 0.0
  %2183 = vmatpush1.msra.mxu0 0.0
  %2184 = vmatprep.subr.mxu0 0.0
  %2185 = vmatpush1.msra.mxu0 0.0
  %2186 = vmatprep.subr.mxu0 0.0
  %2187 = vmatpush1.msra.mxu0 0.0
  %2188 = vmatprep.subr.mxu0 0.0
  %2189 = vmatpush1.msra.mxu0 0.0
  %2190 = vmatprep.subr.mxu0 0.0
  %2191 = vmatpush1.msra.mxu0 0.0
  %2192 = vmatprep.subr.mxu0 0.0
  %2193 = vmatpush1.msra.mxu0 0.0
  %2194 = vmatprep.subr.mxu0 0.0
  %2195 = vmatpush1.msra.mxu0 0.0
  %2196 = vmatprep.subr.mxu0 0.0
  %2197 = vmatpush1.msra.mxu0 0.0
  %2198 = vmatprep.subr.mxu0 0.0
  %2199 = vmatpush1.msra.mxu0 0.0
  %2200 = vmatprep.subr.mxu0 0.0
  %2201 = vmatpush1.msra.mxu0 0.0
  %2202 = vmatprep.mubr.f32.mxu0 0.0
  %v2203 = vand.u32 %v1744, 4294901760
  %v2204 = vsub.f32 %v1744, %v2203
  %v2205 = vand.u32 %v2204, 4294901760
  %2206 = vmatmul.mubr.f32.gmra.mrb[0].mxu0 %v2205
  %v2207 = vpop.f32.mrb[0].mxu0
  %v2208 = vadd.f32 %v2112, %v2207
  %v2209 = vpop.f32.mrb[0].mxu0
  %2210 = vmatprep.mubr.f32.mxu0 0.0
  %v2211 = vand.u32 %v1750, 4294901760
  %v2212 = vsub.f32 %v1750, %v2211
  %v2213 = vand.u32 %v2212, 4294901760
  %2214 = vmatmul.mubr.f32.gmra.mrb[0].mxu0 %v2213
  %v2215 = vpop.f32.mrb[0].mxu0
  %v2216 = vadd.f32 %v2119, %v2215
  %v2217 = vpop.f32.mrb[0].mxu0
  %2218 = vdwg.mxu0
  %2219 = vmatprep.subr.mxu0 0.0
  %v2220 = vand.u32 %v26, 4294901760
  %v2221 = vsub.f32 %v26, %v2220
  %v2222 = vand.u32 %v2221, 4294901760
  %2223 = vmatpush1.msra.mxu0 %v2222
  %2224 = vmatprep.subr.mxu0 0.0
  %v2225 = vand.u32 %v27, 4294901760
  %v2226 = vsub.f32 %v27, %v2225
  %v2227 = vand.u32 %v2226, 4294901760
  %2228 = vmatpush1.msra.mxu0 %v2227
  %2229 = vmatprep.subr.mxu0 0.0
  %v2230 = vand.u32 %v28, 4294901760
  %v2231 = vsub.f32 %v28, %v2230
  %v2232 = vand.u32 %v2231, 4294901760
  %2233 = vmatpush1.msra.mxu0 %v2232
  %2234 = vmatprep.subr.mxu0 0.0
  %v2235 = vand.u32 %v29, 4294901760
  %v2236 = vsub.f32 %v29, %v2235
  %v2237 = vand.u32 %v2236, 4294901760
  %2238 = vmatpush1.msra.mxu0 %v2237
  %2239 = vmatprep.subr.mxu0 0.0
  %v2240 = vand.u32 %v30, 4294901760
  %v2241 = vsub.f32 %v30, %v2240
  %v2242 = vand.u32 %v2241, 4294901760
  %2243 = vmatpush1.msra.mxu0 %v2242
  %2244 = vmatprep.subr.mxu0 0.0
  %v2245 = vand.u32 %v31, 4294901760
  %v2246 = vsub.f32 %v31, %v2245
  %v2247 = vand.u32 %v2246, 4294901760
  %2248 = vmatpush1.msra.mxu0 %v2247
  %2249 = vmatprep.subr.mxu0 0.0
  %v2250 = vand.u32 %v32, 4294901760
  %v2251 = vsub.f32 %v32, %v2250
  %v2252 = vand.u32 %v2251, 4294901760
  %2253 = vmatpush1.msra.mxu0 %v2252
  %2254 = vmatprep.subr.mxu0 0.0
  %v2255 = vand.u32 %v33, 4294901760
  %v2256 = vsub.f32 %v33, %v2255
  %v2257 = vand.u32 %v2256, 4294901760
  %2258 = vmatpush1.msra.mxu0 %v2257
  %2259 = vmatprep.subr.mxu0 0.0
  %v2260 = vand.u32 %v34, 4294901760
  %v2261 = vsub.f32 %v34, %v2260
  %v2262 = vand.u32 %v2261, 4294901760
  %2263 = vmatpush1.msra.mxu0 %v2262
  %2264 = vmatprep.subr.mxu0 0.0
  %v2265 = vand.u32 %v35, 4294901760
  %v2266 = vsub.f32 %v35, %v2265
  %v2267 = vand.u32 %v2266, 4294901760
  %2268 = vmatpush1.msra.mxu0 %v2267
  %2269 = vmatprep.subr.mxu0 0.0
  %v2270 = vand.u32 %v36, 4294901760
  %v2271 = vsub.f32 %v36, %v2270
  %v2272 = vand.u32 %v2271, 4294901760
  %2273 = vmatpush1.msra.mxu0 %v2272
  %2274 = vmatprep.subr.mxu0 0.0
  %v2275 = vand.u32 %v37, 4294901760
  %v2276 = vsub.f32 %v37, %v2275
  %v2277 = vand.u32 %v2276, 4294901760
  %2278 = vmatpush1.msra.mxu0 %v2277
  %2279 = vmatprep.subr.mxu0 0.0
  %v2280 = vand.u32 %v38, 4294901760
  %v2281 = vsub.f32 %v38, %v2280
  %v2282 = vand.u32 %v2281, 4294901760
  %2283 = vmatpush1.msra.mxu0 %v2282
  %2284 = vmatprep.subr.mxu0 0.0
  %v2285 = vand.u32 %v39, 4294901760
  %v2286 = vsub.f32 %v39, %v2285
  %v2287 = vand.u32 %v2286, 4294901760
  %2288 = vmatpush1.msra.mxu0 %v2287
  %2289 = vmatprep.subr.mxu0 0.0
  %v2290 = vand.u32 %v40, 4294901760
  %v2291 = vsub.f32 %v40, %v2290
  %v2292 = vand.u32 %v2291, 4294901760
  %2293 = vmatpush1.msra.mxu0 %v2292
  %2294 = vmatprep.subr.mxu0 0.0
  %v2295 = vand.u32 %v41, 4294901760
  %v2296 = vsub.f32 %v41, %v2295
  %v2297 = vand.u32 %v2296, 4294901760
  %2298 = vmatpush1.msra.mxu0 %v2297
  %2299 = vmatprep.subr.mxu0 0.0
  %2300 = vmatpush1.msra.mxu0 0.0
  %2301 = vmatprep.subr.mxu0 0.0
  %2302 = vmatpush1.msra.mxu0 0.0
  %2303 = vmatprep.subr.mxu0 0.0
  %2304 = vmatpush1.msra.mxu0 0.0
  %2305 = vmatprep.subr.mxu0 0.0
  %2306 = vmatpush1.msra.mxu0 0.0
  %2307 = vmatprep.subr.mxu0 0.0
  %2308 = vmatpush1.msra.mxu0 0.0
  %2309 = vmatprep.subr.mxu0 0.0
  %2310 = vmatpush1.msra.mxu0 0.0
  %2311 = vmatprep.subr.mxu0 0.0
  %2312 = vmatpush1.msra.mxu0 0.0
  %2313 = vmatprep.subr.mxu0 0.0
  %2314 = vmatpush1.msra.mxu0 0.0
  %2315 = vmatprep.subr.mxu0 0.0
  %2316 = vmatpush1.msra.mxu0 0.0
  %2317 = vmatprep.subr.mxu0 0.0
  %2318 = vmatpush1.msra.mxu0 0.0
  %2319 = vmatprep.subr.mxu0 0.0
  %2320 = vmatpush1.msra.mxu0 0.0
  %2321 = vmatprep.subr.mxu0 0.0
  %2322 = vmatpush1.msra.mxu0 0.0
  %2323 = vmatprep.subr.mxu0 0.0
  %2324 = vmatpush1.msra.mxu0 0.0
  %2325 = vmatprep.subr.mxu0 0.0
  %2326 = vmatpush1.msra.mxu0 0.0
  %2327 = vmatprep.subr.mxu0 0.0
  %2328 = vmatpush1.msra.mxu0 0.0
  %2329 = vmatprep.subr.mxu0 0.0
  %2330 = vmatpush1.msra.mxu0 0.0
  %2331 = vmatprep.mubr.f32.mxu0 0.0
  %v2332 = vand.u32 %v1744, 4294901760
  %2333 = vmatmul.mubr.f32.gmra.mrb[0].mxu0 %v2332
  %v2334 = vpop.f32.mrb[0].mxu0
  %v2335 = vadd.f32 %v2208, %v2334
  %v2336 = vpop.f32.mrb[0].mxu0
  %2337 = vmatprep.mubr.f32.mxu0 0.0
  %v2338 = vand.u32 %v1750, 4294901760
  %2339 = vmatmul.mubr.f32.gmra.mrb[0].mxu0 %v2338
  %v2340 = vpop.f32.mrb[0].mxu0
  %v2341 = vadd.f32 %v2216, %v2340
  %v2342 = vpop.f32.mrb[0].mxu0
  %2343 = vdwg.mxu0
  %2344 = vmatprep.subr.mxu0 0.0
  %v2345 = vand.u32 %v26, 4294901760
  %2346 = vmatpush1.msra.mxu0 %v2345
  %2347 = vmatprep.subr.mxu0 0.0
  %v2348 = vand.u32 %v27, 4294901760
  %2349 = vmatpush1.msra.mxu0 %v2348
  %2350 = vmatprep.subr.mxu0 0.0
  %v2351 = vand.u32 %v28, 4294901760
  %2352 = vmatpush1.msra.mxu0 %v2351
  %2353 = vmatprep.subr.mxu0 0.0
  %v2354 = vand.u32 %v29, 4294901760
  %2355 = vmatpush1.msra.mxu0 %v2354
  %2356 = vmatprep.subr.mxu0 0.0
  %v2357 = vand.u32 %v30, 4294901760
  %2358 = vmatpush1.msra.mxu0 %v2357
  %2359 = vmatprep.subr.mxu0 0.0
  %v2360 = vand.u32 %v31, 4294901760
  %2361 = vmatpush1.msra.mxu0 %v2360
  %2362 = vmatprep.subr.mxu0 0.0
  %v2363 = vand.u32 %v32, 4294901760
  %2364 = vmatpush1.msra.mxu0 %v2363
  %2365 = vmatprep.subr.mxu0 0.0
  %v2366 = vand.u32 %v33, 4294901760
  %2367 = vmatpush1.msra.mxu0 %v2366
  %2368 = vmatprep.subr.mxu0 0.0
  %v2369 = vand.u32 %v34, 4294901760
  %2370 = vmatpush1.msra.mxu0 %v2369
  %2371 = vmatprep.subr.mxu0 0.0
  %v2372 = vand.u32 %v35, 4294901760
  %2373 = vmatpush1.msra.mxu0 %v2372
  %2374 = vmatprep.subr.mxu0 0.0
  %v2375 = vand.u32 %v36, 4294901760
  %2376 = vmatpush1.msra.mxu0 %v2375
  %2377 = vmatprep.subr.mxu0 0.0
  %v2378 = vand.u32 %v37, 4294901760
  %2379 = vmatpush1.msra.mxu0 %v2378
  %2380 = vmatprep.subr.mxu0 0.0
  %v2381 = vand.u32 %v38, 4294901760
  %2382 = vmatpush1.msra.mxu0 %v2381
  %2383 = vmatprep.subr.mxu0 0.0
  %v2384 = vand.u32 %v39, 4294901760
  %2385 = vmatpush1.msra.mxu0 %v2384
  %2386 = vmatprep.subr.mxu0 0.0
  %v2387 = vand.u32 %v40, 4294901760
  %2388 = vmatpush1.msra.mxu0 %v2387
  %2389 = vmatprep.subr.mxu0 0.0
  %v2390 = vand.u32 %v41, 4294901760
  %2391 = vmatpush1.msra.mxu0 %v2390
  %2392 = vmatprep.subr.mxu0 0.0
  %2393 = vmatpush1.msra.mxu0 0.0
  %2394 = vmatprep.subr.mxu0 0.0
  %2395 = vmatpush1.msra.mxu0 0.0
  %2396 = vmatprep.subr.mxu0 0.0
  %2397 = vmatpush1.msra.mxu0 0.0
  %2398 = vmatprep.subr.mxu0 0.0
  %2399 = vmatpush1.msra.mxu0 0.0
  %2400 = vmatprep.subr.mxu0 0.0
  %2401 = vmatpush1.msra.mxu0 0.0
  %2402 = vmatprep.subr.mxu0 0.0
  %2403 = vmatpush1.msra.mxu0 0.0
  %2404 = vmatprep.subr.mxu0 0.0
  %2405 = vmatpush1.msra.mxu0 0.0
  %2406 = vmatprep.subr.mxu0 0.0
  %2407 = vmatpush1.msra.mxu0 0.0
  %2408 = vmatprep.subr.mxu0 0.0
  %2409 = vmatpush1.msra.mxu0 0.0
  %2410 = vmatprep.subr.mxu0 0.0
  %2411 = vmatpush1.msra.mxu0 0.0
  %2412 = vmatprep.subr.mxu0 0.0
  %2413 = vmatpush1.msra.mxu0 0.0
  %2414 = vmatprep.subr.mxu0 0.0
  %2415 = vmatpush1.msra.mxu0 0.0
  %2416 = vmatprep.subr.mxu0 0.0
  %2417 = vmatpush1.msra.mxu0 0.0
  %2418 = vmatprep.subr.mxu0 0.0
  %2419 = vmatpush1.msra.mxu0 0.0
  %2420 = vmatprep.subr.mxu0 0.0
  %2421 = vmatpush1.msra.mxu0 0.0
  %2422 = vmatprep.subr.mxu0 0.0
  %2423 = vmatpush1.msra.mxu0 0.0
  %2424 = vmatprep.mubr.f32.mxu0 0.0
  %v2425 = vand.u32 %v1744, 4294901760
  %2426 = vmatmul.mubr.f32.gmra.mrb[0].mxu0 %v2425
  %v2427 = vpop.f32.mrb[0].mxu0
  %v2428 = vadd.f32 %v2335, %v2427
  %v2429 = vpop.f32.mrb[0].mxu0
  %2430 = vmatprep.mubr.f32.mxu0 0.0
  %v2431 = vand.u32 %v1750, 4294901760
  %2432 = vmatmul.mubr.f32.gmra.mrb[0].mxu0 %v2431
  %v2433 = vpop.f32.mrb[0].mxu0
  %v2434 = vadd.f32 %v2341, %v2433
  %v2435 = vpop.f32.mrb[0].mxu0
  %2436 = vdwg.mxu0
  %v2437 = vmul.f32 %v20, %v20
  %v2438 = vmul.f32 %v21, %v21
  %2439 = vmatprep.subr.mxu0 0.0
  %v2440 = vand.u32 %v2437, 4294901760
  %2441 = vmatpush1.msra.mxu0 %v2440
  %2442 = vmatprep.subr.mxu0 0.0
  %v2443 = vand.u32 %v2438, 4294901760
  %2444 = vmatpush1.msra.mxu0 %v2443
  %2445 = vmatprep.subr.mxu0 0.0
  %2446 = vmatpush1.msra.mxu0 0.0
  %2447 = vmatprep.subr.mxu0 0.0
  %2448 = vmatpush1.msra.mxu0 0.0
  %2449 = vmatprep.subr.mxu0 0.0
  %2450 = vmatpush1.msra.mxu0 0.0
  %2451 = vmatprep.subr.mxu0 0.0
  %2452 = vmatpush1.msra.mxu0 0.0
  %2453 = vmatprep.subr.mxu0 0.0
  %2454 = vmatpush1.msra.mxu0 0.0
  %2455 = vmatprep.subr.mxu0 0.0
  %2456 = vmatpush1.msra.mxu0 0.0
  %2457 = vmatprep.subr.mxu0 0.0
  %2458 = vmatpush1.msra.mxu0 0.0
  %2459 = vmatprep.subr.mxu0 0.0
  %2460 = vmatpush1.msra.mxu0 0.0
  %2461 = vmatprep.subr.mxu0 0.0
  %2462 = vmatpush1.msra.mxu0 0.0
  %2463 = vmatprep.subr.mxu0 0.0
  %2464 = vmatpush1.msra.mxu0 0.0
  %2465 = vmatprep.subr.mxu0 0.0
  %2466 = vmatpush1.msra.mxu0 0.0
  %2467 = vmatprep.subr.mxu0 0.0
  %2468 = vmatpush1.msra.mxu0 0.0
  %2469 = vmatprep.subr.mxu0 0.0
  %2470 = vmatpush1.msra.mxu0 0.0
  %2471 = vmatprep.subr.mxu0 0.0
  %2472 = vmatpush1.msra.mxu0 0.0
  %2473 = vmatprep.subr.mxu0 0.0
  %2474 = vmatpush1.msra.mxu0 0.0
  %2475 = vmatprep.subr.mxu0 0.0
  %2476 = vmatpush1.msra.mxu0 0.0
  %2477 = vmatprep.subr.mxu0 0.0
  %2478 = vmatpush1.msra.mxu0 0.0
  %2479 = vmatprep.subr.mxu0 0.0
  %2480 = vmatpush1.msra.mxu0 0.0
  %2481 = vmatprep.subr.mxu0 0.0
  %2482 = vmatpush1.msra.mxu0 0.0
  %2483 = vmatprep.subr.mxu0 0.0
  %2484 = vmatpush1.msra.mxu0 0.0
  %2485 = vmatprep.subr.mxu0 0.0
  %2486 = vmatpush1.msra.mxu0 0.0
  %2487 = vmatprep.subr.mxu0 0.0
  %2488 = vmatpush1.msra.mxu0 0.0
  %2489 = vmatprep.subr.mxu0 0.0
  %2490 = vmatpush1.msra.mxu0 0.0
  %2491 = vmatprep.subr.mxu0 0.0
  %2492 = vmatpush1.msra.mxu0 0.0
  %2493 = vmatprep.subr.mxu0 0.0
  %2494 = vmatpush1.msra.mxu0 0.0
  %2495 = vmatprep.subr.mxu0 0.0
  %2496 = vmatpush1.msra.mxu0 0.0
  %2497 = vmatprep.subr.mxu0 0.0
  %2498 = vmatpush1.msra.mxu0 0.0
  %2499 = vmatprep.subr.mxu0 0.0
  %2500 = vmatpush1.msra.mxu0 0.0
  %2501 = vmatprep.subr.mxu0 0.0
  %2502 = vmatpush1.msra.mxu0 0.0
  %2503 = vmatprep.subr.mxu0 0.0
  %2504 = vmatpush1.msra.mxu0 0.0
  %2505 = vmatprep.mubr.f32.mxu0 0.0
  %v2506 = vand.u32 %v60, 4294901760
  %v2507 = vsub.f32 %v60, %v2506
  %v2508 = vand.u32 %v2507, 4294901760
  %v2509 = vsub.f32 %v2507, %v2508
  %v2510 = vand.u32 %v2509, 4294901760
  %2511 = vmatmul.mubr.f32.gmra.mrb[0].mxu0 %v2510
  %v2512 = vpop.f32.mrb[0].mxu0
  %v2513 = vadd.f32 0.0, %v2512
  %v2514 = vpop.f32.mrb[0].mxu0
  %2515 = vmatprep.mubr.f32.mxu0 0.0
  %v2516 = vand.u32 %v63, 4294901760
  %v2517 = vsub.f32 %v63, %v2516
  %v2518 = vand.u32 %v2517, 4294901760
  %v2519 = vsub.f32 %v2517, %v2518
  %v2520 = vand.u32 %v2519, 4294901760
  %2521 = vmatmul.mubr.f32.gmra.mrb[0].mxu0 %v2520
  %v2522 = vpop.f32.mrb[0].mxu0
  %v2523 = vadd.f32 0.0, %v2522
  %v2524 = vpop.f32.mrb[0].mxu0
  %2525 = vdwg.mxu0
  %2526 = vmatprep.subr.mxu0 0.0
  %v2527 = vand.u32 %v2437, 4294901760
  %v2528 = vsub.f32 %v2437, %v2527
  %v2529 = vand.u32 %v2528, 4294901760
  %v2530 = vsub.f32 %v2528, %v2529
  %v2531 = vand.u32 %v2530, 4294901760
  %2532 = vmatpush1.msra.mxu0 %v2531
  %2533 = vmatprep.subr.mxu0 0.0
  %v2534 = vand.u32 %v2438, 4294901760
  %v2535 = vsub.f32 %v2438, %v2534
  %v2536 = vand.u32 %v2535, 4294901760
  %v2537 = vsub.f32 %v2535, %v2536
  %v2538 = vand.u32 %v2537, 4294901760
  %2539 = vmatpush1.msra.mxu0 %v2538
  %2540 = vmatprep.subr.mxu0 0.0
  %2541 = vmatpush1.msra.mxu0 0.0
  %2542 = vmatprep.subr.mxu0 0.0
  %2543 = vmatpush1.msra.mxu0 0.0
  %2544 = vmatprep.subr.mxu0 0.0
  %2545 = vmatpush1.msra.mxu0 0.0
  %2546 = vmatprep.subr.mxu0 0.0
  %2547 = vmatpush1.msra.mxu0 0.0
  %2548 = vmatprep.subr.mxu0 0.0
  %2549 = vmatpush1.msra.mxu0 0.0
  %2550 = vmatprep.subr.mxu0 0.0
  %2551 = vmatpush1.msra.mxu0 0.0
  %2552 = vmatprep.subr.mxu0 0.0
  %2553 = vmatpush1.msra.mxu0 0.0
  %2554 = vmatprep.subr.mxu0 0.0
  %2555 = vmatpush1.msra.mxu0 0.0
  %2556 = vmatprep.subr.mxu0 0.0
  %2557 = vmatpush1.msra.mxu0 0.0
  %2558 = vmatprep.subr.mxu0 0.0
  %2559 = vmatpush1.msra.mxu0 0.0
  %2560 = vmatprep.subr.mxu0 0.0
  %2561 = vmatpush1.msra.mxu0 0.0
  %2562 = vmatprep.subr.mxu0 0.0
  %2563 = vmatpush1.msra.mxu0 0.0
  %2564 = vmatprep.subr.mxu0 0.0
  %2565 = vmatpush1.msra.mxu0 0.0
  %2566 = vmatprep.subr.mxu0 0.0
  %2567 = vmatpush1.msra.mxu0 0.0
  %2568 = vmatprep.subr.mxu0 0.0
  %2569 = vmatpush1.msra.mxu0 0.0
  %2570 = vmatprep.subr.mxu0 0.0
  %2571 = vmatpush1.msra.mxu0 0.0
  %2572 = vmatprep.subr.mxu0 0.0
  %2573 = vmatpush1.msra.mxu0 0.0
  %2574 = vmatprep.subr.mxu0 0.0
  %2575 = vmatpush1.msra.mxu0 0.0
  %2576 = vmatprep.subr.mxu0 0.0
  %2577 = vmatpush1.msra.mxu0 0.0
  %2578 = vmatprep.subr.mxu0 0.0
  %2579 = vmatpush1.msra.mxu0 0.0
  %2580 = vmatprep.subr.mxu0 0.0
  %2581 = vmatpush1.msra.mxu0 0.0
  %2582 = vmatprep.subr.mxu0 0.0
  %2583 = vmatpush1.msra.mxu0 0.0
  %2584 = vmatprep.subr.mxu0 0.0
  %2585 = vmatpush1.msra.mxu0 0.0
  %2586 = vmatprep.subr.mxu0 0.0
  %2587 = vmatpush1.msra.mxu0 0.0
  %2588 = vmatprep.subr.mxu0 0.0
  %2589 = vmatpush1.msra.mxu0 0.0
  %2590 = vmatprep.subr.mxu0 0.0
  %2591 = vmatpush1.msra.mxu0 0.0
  %2592 = vmatprep.subr.mxu0 0.0
  %2593 = vmatpush1.msra.mxu0 0.0
  %2594 = vmatprep.subr.mxu0 0.0
  %2595 = vmatpush1.msra.mxu0 0.0
  %2596 = vmatprep.subr.mxu0 0.0
  %2597 = vmatpush1.msra.mxu0 0.0
  %2598 = vmatprep.subr.mxu0 0.0
  %2599 = vmatpush1.msra.mxu0 0.0
  %2600 = vmatprep.mubr.f32.mxu0 0.0
  %v2601 = vand.u32 %v60, 4294901760
  %2602 = vmatmul.mubr.f32.gmra.mrb[0].mxu0 %v2601
  %v2603 = vpop.f32.mrb[0].mxu0
  %v2604 = vadd.f32 %v2513, %v2603
  %v2605 = vpop.f32.mrb[0].mxu0
  %2606 = vmatprep.mubr.f32.mxu0 0.0
  %v2607 = vand.u32 %v63, 4294901760
  %2608 = vmatmul.mubr.f32.gmra.mrb[0].mxu0 %v2607
  %v2609 = vpop.f32.mrb[0].mxu0
  %v2610 = vadd.f32 %v2523, %v2609
  %v2611 = vpop.f32.mrb[0].mxu0
  %2612 = vdwg.mxu0
  %2613 = vmatprep.subr.mxu0 0.0
  %v2614 = vand.u32 %v2437, 4294901760
  %v2615 = vsub.f32 %v2437, %v2614
  %2616 = vmatpush1.msra.mxu0 %v2615
  %2617 = vmatprep.subr.mxu0 0.0
  %v2618 = vand.u32 %v2438, 4294901760
  %v2619 = vsub.f32 %v2438, %v2618
  %2620 = vmatpush1.msra.mxu0 %v2619
  %2621 = vmatprep.subr.mxu0 0.0
  %2622 = vmatpush1.msra.mxu0 0.0
  %2623 = vmatprep.subr.mxu0 0.0
  %2624 = vmatpush1.msra.mxu0 0.0
  %2625 = vmatprep.subr.mxu0 0.0
  %2626 = vmatpush1.msra.mxu0 0.0
  %2627 = vmatprep.subr.mxu0 0.0
  %2628 = vmatpush1.msra.mxu0 0.0
  %2629 = vmatprep.subr.mxu0 0.0
  %2630 = vmatpush1.msra.mxu0 0.0
  %2631 = vmatprep.subr.mxu0 0.0
  %2632 = vmatpush1.msra.mxu0 0.0
  %2633 = vmatprep.subr.mxu0 0.0
  %2634 = vmatpush1.msra.mxu0 0.0
  %2635 = vmatprep.subr.mxu0 0.0
  %2636 = vmatpush1.msra.mxu0 0.0
  %2637 = vmatprep.subr.mxu0 0.0
  %2638 = vmatpush1.msra.mxu0 0.0
  %2639 = vmatprep.subr.mxu0 0.0
  %2640 = vmatpush1.msra.mxu0 0.0
  %2641 = vmatprep.subr.mxu0 0.0
  %2642 = vmatpush1.msra.mxu0 0.0
  %2643 = vmatprep.subr.mxu0 0.0
  %2644 = vmatpush1.msra.mxu0 0.0
  %2645 = vmatprep.subr.mxu0 0.0
  %2646 = vmatpush1.msra.mxu0 0.0
  %2647 = vmatprep.subr.mxu0 0.0
  %2648 = vmatpush1.msra.mxu0 0.0
  %2649 = vmatprep.subr.mxu0 0.0
  %2650 = vmatpush1.msra.mxu0 0.0
  %2651 = vmatprep.subr.mxu0 0.0
  %2652 = vmatpush1.msra.mxu0 0.0
  %2653 = vmatprep.subr.mxu0 0.0
  %2654 = vmatpush1.msra.mxu0 0.0
  %2655 = vmatprep.subr.mxu0 0.0
  %2656 = vmatpush1.msra.mxu0 0.0
  %2657 = vmatprep.subr.mxu0 0.0
  %2658 = vmatpush1.msra.mxu0 0.0
  %2659 = vmatprep.subr.mxu0 0.0
  %2660 = vmatpush1.msra.mxu0 0.0
  %2661 = vmatprep.subr.mxu0 0.0
  %2662 = vmatpush1.msra.mxu0 0.0
  %2663 = vmatprep.subr.mxu0 0.0
  %2664 = vmatpush1.msra.mxu0 0.0
  %2665 = vmatprep.subr.mxu0 0.0
  %2666 = vmatpush1.msra.mxu0 0.0
  %2667 = vmatprep.subr.mxu0 0.0
  %2668 = vmatpush1.msra.mxu0 0.0
  %2669 = vmatprep.subr.mxu0 0.0
  %2670 = vmatpush1.msra.mxu0 0.0
  %2671 = vmatprep.subr.mxu0 0.0
  %2672 = vmatpush1.msra.mxu0 0.0
  %2673 = vmatprep.subr.mxu0 0.0
  %2674 = vmatpush1.msra.mxu0 0.0
  %2675 = vmatprep.subr.mxu0 0.0
  %2676 = vmatpush1.msra.mxu0 0.0
  %2677 = vmatprep.subr.mxu0 0.0
  %2678 = vmatpush1.msra.mxu0 0.0
  %2679 = vmatprep.subr.mxu0 0.0
  %2680 = vmatpush1.msra.mxu0 0.0
  %2681 = vmatprep.mubr.f32.mxu0 0.0
  %v2682 = vand.u32 %v60, 4294901760
  %v2683 = vsub.f32 %v60, %v2682
  %2684 = vmatmul.mubr.f32.gmra.mrb[0].mxu0 %v2683
  %v2685 = vpop.f32.mrb[0].mxu0
  %v2686 = vadd.f32 %v2604, %v2685
  %v2687 = vpop.f32.mrb[0].mxu0
  %2688 = vmatprep.mubr.f32.mxu0 0.0
  %v2689 = vand.u32 %v63, 4294901760
  %v2690 = vsub.f32 %v63, %v2689
  %2691 = vmatmul.mubr.f32.gmra.mrb[0].mxu0 %v2690
  %v2692 = vpop.f32.mrb[0].mxu0
  %v2693 = vadd.f32 %v2610, %v2692
  %v2694 = vpop.f32.mrb[0].mxu0
  %2695 = vdwg.mxu0
  %2696 = vmatprep.subr.mxu0 0.0
  %v2697 = vand.u32 %v2437, 4294901760
  %2698 = vmatpush1.msra.mxu0 %v2697
  %2699 = vmatprep.subr.mxu0 0.0
  %v2700 = vand.u32 %v2438, 4294901760
  %2701 = vmatpush1.msra.mxu0 %v2700
  %2702 = vmatprep.subr.mxu0 0.0
  %2703 = vmatpush1.msra.mxu0 0.0
  %2704 = vmatprep.subr.mxu0 0.0
  %2705 = vmatpush1.msra.mxu0 0.0
  %2706 = vmatprep.subr.mxu0 0.0
  %2707 = vmatpush1.msra.mxu0 0.0
  %2708 = vmatprep.subr.mxu0 0.0
  %2709 = vmatpush1.msra.mxu0 0.0
  %2710 = vmatprep.subr.mxu0 0.0
  %2711 = vmatpush1.msra.mxu0 0.0
  %2712 = vmatprep.subr.mxu0 0.0
  %2713 = vmatpush1.msra.mxu0 0.0
  %2714 = vmatprep.subr.mxu0 0.0
  %2715 = vmatpush1.msra.mxu0 0.0
  %2716 = vmatprep.subr.mxu0 0.0
  %2717 = vmatpush1.msra.mxu0 0.0
  %2718 = vmatprep.subr.mxu0 0.0
  %2719 = vmatpush1.msra.mxu0 0.0
  %2720 = vmatprep.subr.mxu0 0.0
  %2721 = vmatpush1.msra.mxu0 0.0
  %2722 = vmatprep.subr.mxu0 0.0
  %2723 = vmatpush1.msra.mxu0 0.0
  %2724 = vmatprep.subr.mxu0 0.0
  %2725 = vmatpush1.msra.mxu0 0.0
  %2726 = vmatprep.subr.mxu0 0.0
  %2727 = vmatpush1.msra.mxu0 0.0
  %2728 = vmatprep.subr.mxu0 0.0
  %2729 = vmatpush1.msra.mxu0 0.0
  %2730 = vmatprep.subr.mxu0 0.0
  %2731 = vmatpush1.msra.mxu0 0.0
  %2732 = vmatprep.subr.mxu0 0.0
  %2733 = vmatpush1.msra.mxu0 0.0
  %2734 = vmatprep.subr.mxu0 0.0
  %2735 = vmatpush1.msra.mxu0 0.0
  %2736 = vmatprep.subr.mxu0 0.0
  %2737 = vmatpush1.msra.mxu0 0.0
  %2738 = vmatprep.subr.mxu0 0.0
  %2739 = vmatpush1.msra.mxu0 0.0
  %2740 = vmatprep.subr.mxu0 0.0
  %2741 = vmatpush1.msra.mxu0 0.0
  %2742 = vmatprep.subr.mxu0 0.0
  %2743 = vmatpush1.msra.mxu0 0.0
  %2744 = vmatprep.subr.mxu0 0.0
  %2745 = vmatpush1.msra.mxu0 0.0
  %2746 = vmatprep.subr.mxu0 0.0
  %2747 = vmatpush1.msra.mxu0 0.0
  %2748 = vmatprep.subr.mxu0 0.0
  %2749 = vmatpush1.msra.mxu0 0.0
  %2750 = vmatprep.subr.mxu0 0.0
  %2751 = vmatpush1.msra.mxu0 0.0
  %2752 = vmatprep.subr.mxu0 0.0
  %2753 = vmatpush1.msra.mxu0 0.0
  %2754 = vmatprep.subr.mxu0 0.0
  %2755 = vmatpush1.msra.mxu0 0.0
  %2756 = vmatprep.subr.mxu0 0.0
  %2757 = vmatpush1.msra.mxu0 0.0
  %2758 = vmatprep.subr.mxu0 0.0
  %2759 = vmatpush1.msra.mxu0 0.0
  %2760 = vmatprep.subr.mxu0 0.0
  %2761 = vmatpush1.msra.mxu0 0.0
  %2762 = vmatprep.mubr.f32.mxu0 0.0
  %v2763 = vand.u32 %v60, 4294901760
  %v2764 = vsub.f32 %v60, %v2763
  %v2765 = vand.u32 %v2764, 4294901760
  %2766 = vmatmul.mubr.f32.gmra.mrb[0].mxu0 %v2765
  %v2767 = vpop.f32.mrb[0].mxu0
  %v2768 = vadd.f32 %v2686, %v2767
  %v2769 = vpop.f32.mrb[0].mxu0
  %2770 = vmatprep.mubr.f32.mxu0 0.0
  %v2771 = vand.u32 %v63, 4294901760
  %v2772 = vsub.f32 %v63, %v2771
  %v2773 = vand.u32 %v2772, 4294901760
  %2774 = vmatmul.mubr.f32.gmra.mrb[0].mxu0 %v2773
  %v2775 = vpop.f32.mrb[0].mxu0
  %v2776 = vadd.f32 %v2693, %v2775
  %v2777 = vpop.f32.mrb[0].mxu0
  %2778 = vdwg.mxu0
  %2779 = vmatprep.subr.mxu0 0.0
  %v2780 = vand.u32 %v2437, 4294901760
  %v2781 = vsub.f32 %v2437, %v2780
  %v2782 = vand.u32 %v2781, 4294901760
  %2783 = vmatpush1.msra.mxu0 %v2782
  %2784 = vmatprep.subr.mxu0 0.0
  %v2785 = vand.u32 %v2438, 4294901760
  %v2786 = vsub.f32 %v2438, %v2785
  %v2787 = vand.u32 %v2786, 4294901760
  %2788 = vmatpush1.msra.mxu0 %v2787
  %2789 = vmatprep.subr.mxu0 0.0
  %2790 = vmatpush1.msra.mxu0 0.0
  %2791 = vmatprep.subr.mxu0 0.0
  %2792 = vmatpush1.msra.mxu0 0.0
  %2793 = vmatprep.subr.mxu0 0.0
  %2794 = vmatpush1.msra.mxu0 0.0
  %2795 = vmatprep.subr.mxu0 0.0
  %2796 = vmatpush1.msra.mxu0 0.0
  %2797 = vmatprep.subr.mxu0 0.0
  %2798 = vmatpush1.msra.mxu0 0.0
  %2799 = vmatprep.subr.mxu0 0.0
  %2800 = vmatpush1.msra.mxu0 0.0
  %2801 = vmatprep.subr.mxu0 0.0
  %2802 = vmatpush1.msra.mxu0 0.0
  %2803 = vmatprep.subr.mxu0 0.0
  %2804 = vmatpush1.msra.mxu0 0.0
  %2805 = vmatprep.subr.mxu0 0.0
  %2806 = vmatpush1.msra.mxu0 0.0
  %2807 = vmatprep.subr.mxu0 0.0
  %2808 = vmatpush1.msra.mxu0 0.0
  %2809 = vmatprep.subr.mxu0 0.0
  %2810 = vmatpush1.msra.mxu0 0.0
  %2811 = vmatprep.subr.mxu0 0.0
  %2812 = vmatpush1.msra.mxu0 0.0
  %2813 = vmatprep.subr.mxu0 0.0
  %2814 = vmatpush1.msra.mxu0 0.0
  %2815 = vmatprep.subr.mxu0 0.0
  %2816 = vmatpush1.msra.mxu0 0.0
  %2817 = vmatprep.subr.mxu0 0.0
  %2818 = vmatpush1.msra.mxu0 0.0
  %2819 = vmatprep.subr.mxu0 0.0
  %2820 = vmatpush1.msra.mxu0 0.0
  %2821 = vmatprep.subr.mxu0 0.0
  %2822 = vmatpush1.msra.mxu0 0.0
  %2823 = vmatprep.subr.mxu0 0.0
  %2824 = vmatpush1.msra.mxu0 0.0
  %2825 = vmatprep.subr.mxu0 0.0
  %2826 = vmatpush1.msra.mxu0 0.0
  %2827 = vmatprep.subr.mxu0 0.0
  %2828 = vmatpush1.msra.mxu0 0.0
  %2829 = vmatprep.subr.mxu0 0.0
  %2830 = vmatpush1.msra.mxu0 0.0
  %2831 = vmatprep.subr.mxu0 0.0
  %2832 = vmatpush1.msra.mxu0 0.0
  %2833 = vmatprep.subr.mxu0 0.0
  %2834 = vmatpush1.msra.mxu0 0.0
  %2835 = vmatprep.subr.mxu0 0.0
  %2836 = vmatpush1.msra.mxu0 0.0
  %2837 = vmatprep.subr.mxu0 0.0
  %2838 = vmatpush1.msra.mxu0 0.0
  %2839 = vmatprep.subr.mxu0 0.0
  %2840 = vmatpush1.msra.mxu0 0.0
  %2841 = vmatprep.subr.mxu0 0.0
  %2842 = vmatpush1.msra.mxu0 0.0
  %2843 = vmatprep.subr.mxu0 0.0
  %2844 = vmatpush1.msra.mxu0 0.0
  %2845 = vmatprep.subr.mxu0 0.0
  %2846 = vmatpush1.msra.mxu0 0.0
  %2847 = vmatprep.subr.mxu0 0.0
  %2848 = vmatpush1.msra.mxu0 0.0
  %2849 = vmatprep.mubr.f32.mxu0 0.0
  %v2850 = vand.u32 %v60, 4294901760
  %2851 = vmatmul.mubr.f32.gmra.mrb[0].mxu0 %v2850
  %v2852 = vpop.f32.mrb[0].mxu0
  %v2853 = vadd.f32 %v2768, %v2852
  %v2854 = vpop.f32.mrb[0].mxu0
  %2855 = vmatprep.mubr.f32.mxu0 0.0
  %v2856 = vand.u32 %v63, 4294901760
  %2857 = vmatmul.mubr.f32.gmra.mrb[0].mxu0 %v2856
  %v2858 = vpop.f32.mrb[0].mxu0
  %v2859 = vadd.f32 %v2776, %v2858
  %v2860 = vpop.f32.mrb[0].mxu0
  %2861 = vdwg.mxu0
  %2862 = vmatprep.subr.mxu0 0.0
  %v2863 = vand.u32 %v2437, 4294901760
  %2864 = vmatpush1.msra.mxu0 %v2863
  %2865 = vmatprep.subr.mxu0 0.0
  %v2866 = vand.u32 %v2438, 4294901760
  %2867 = vmatpush1.msra.mxu0 %v2866
  %2868 = vmatprep.subr.mxu0 0.0
  %2869 = vmatpush1.msra.mxu0 0.0
  %2870 = vmatprep.subr.mxu0 0.0
  %2871 = vmatpush1.msra.mxu0 0.0
  %2872 = vmatprep.subr.mxu0 0.0
  %2873 = vmatpush1.msra.mxu0 0.0
  %2874 = vmatprep.subr.mxu0 0.0
  %2875 = vmatpush1.msra.mxu0 0.0
  %2876 = vmatprep.subr.mxu0 0.0
  %2877 = vmatpush1.msra.mxu0 0.0
  %2878 = vmatprep.subr.mxu0 0.0
  %2879 = vmatpush1.msra.mxu0 0.0
  %2880 = vmatprep.subr.mxu0 0.0
  %2881 = vmatpush1.msra.mxu0 0.0
  %2882 = vmatprep.subr.mxu0 0.0
  %2883 = vmatpush1.msra.mxu0 0.0
  %2884 = vmatprep.subr.mxu0 0.0
  %2885 = vmatpush1.msra.mxu0 0.0
  %2886 = vmatprep.subr.mxu0 0.0
  %2887 = vmatpush1.msra.mxu0 0.0
  %2888 = vmatprep.subr.mxu0 0.0
  %2889 = vmatpush1.msra.mxu0 0.0
  %2890 = vmatprep.subr.mxu0 0.0
  %2891 = vmatpush1.msra.mxu0 0.0
  %2892 = vmatprep.subr.mxu0 0.0
  %2893 = vmatpush1.msra.mxu0 0.0
  %2894 = vmatprep.subr.mxu0 0.0
  %2895 = vmatpush1.msra.mxu0 0.0
  %2896 = vmatprep.subr.mxu0 0.0
  %2897 = vmatpush1.msra.mxu0 0.0
  %2898 = vmatprep.subr.mxu0 0.0
  %2899 = vmatpush1.msra.mxu0 0.0
  %2900 = vmatprep.subr.mxu0 0.0
  %2901 = vmatpush1.msra.mxu0 0.0
  %2902 = vmatprep.subr.mxu0 0.0
  %2903 = vmatpush1.msra.mxu0 0.0
  %2904 = vmatprep.subr.mxu0 0.0
  %2905 = vmatpush1.msra.mxu0 0.0
  %2906 = vmatprep.subr.mxu0 0.0
  %2907 = vmatpush1.msra.mxu0 0.0
  %2908 = vmatprep.subr.mxu0 0.0
  %2909 = vmatpush1.msra.mxu0 0.0
  %2910 = vmatprep.subr.mxu0 0.0
  %2911 = vmatpush1.msra.mxu0 0.0
  %2912 = vmatprep.subr.mxu0 0.0
  %2913 = vmatpush1.msra.mxu0 0.0
  %2914 = vmatprep.subr.mxu0 0.0
  %2915 = vmatpush1.msra.mxu0 0.0
  %2916 = vmatprep.subr.mxu0 0.0
  %2917 = vmatpush1.msra.mxu0 0.0
  %2918 = vmatprep.subr.mxu0 0.0
  %2919 = vmatpush1.msra.mxu0 0.0
  %2920 = vmatprep.subr.mxu0 0.0
  %2921 = vmatpush1.msra.mxu0 0.0
  %2922 = vmatprep.subr.mxu0 0.0
  %2923 = vmatpush1.msra.mxu0 0.0
  %2924 = vmatprep.subr.mxu0 0.0
  %2925 = vmatpush1.msra.mxu0 0.0
  %2926 = vmatprep.subr.mxu0 0.0
  %2927 = vmatpush1.msra.mxu0 0.0
  %2928 = vmatprep.mubr.f32.mxu0 0.0
  %v2929 = vand.u32 %v60, 4294901760
  %2930 = vmatmul.mubr.f32.gmra.mrb[0].mxu0 %v2929
  %v2931 = vpop.f32.mrb[0].mxu0
  %v2932 = vadd.f32 %v2853, %v2931
  %v2933 = vpop.f32.mrb[0].mxu0
  %2934 = vmatprep.mubr.f32.mxu0 0.0
  %v2935 = vand.u32 %v63, 4294901760
  %2936 = vmatmul.mubr.f32.gmra.mrb[0].mxu0 %v2935
  %v2937 = vpop.f32.mrb[0].mxu0
  %v2938 = vadd.f32 %v2859, %v2937
  %v2939 = vpop.f32.mrb[0].mxu0
  %2940 = vdwg.mxu0
  %2941 = vmatprep.subr.mxu0 0.0
  %v2942 = vand.u32 %v26, 4294901760
  %2943 = vmatpush1.msra.mxu0 %v2942
  %2944 = vmatprep.subr.mxu0 0.0
  %v2945 = vand.u32 %v27, 4294901760
  %2946 = vmatpush1.msra.mxu0 %v2945
  %2947 = vmatprep.subr.mxu0 0.0
  %v2948 = vand.u32 %v28, 4294901760
  %2949 = vmatpush1.msra.mxu0 %v2948
  %2950 = vmatprep.subr.mxu0 0.0
  %v2951 = vand.u32 %v29, 4294901760
  %2952 = vmatpush1.msra.mxu0 %v2951
  %2953 = vmatprep.subr.mxu0 0.0
  %v2954 = vand.u32 %v30, 4294901760
  %2955 = vmatpush1.msra.mxu0 %v2954
  %2956 = vmatprep.subr.mxu0 0.0
  %v2957 = vand.u32 %v31, 4294901760
  %2958 = vmatpush1.msra.mxu0 %v2957
  %2959 = vmatprep.subr.mxu0 0.0
  %v2960 = vand.u32 %v32, 4294901760
  %2961 = vmatpush1.msra.mxu0 %v2960
  %2962 = vmatprep.subr.mxu0 0.0
  %v2963 = vand.u32 %v33, 4294901760
  %2964 = vmatpush1.msra.mxu0 %v2963
  %2965 = vmatprep.subr.mxu0 0.0
  %v2966 = vand.u32 %v34, 4294901760
  %2967 = vmatpush1.msra.mxu0 %v2966
  %2968 = vmatprep.subr.mxu0 0.0
  %v2969 = vand.u32 %v35, 4294901760
  %2970 = vmatpush1.msra.mxu0 %v2969
  %2971 = vmatprep.subr.mxu0 0.0
  %v2972 = vand.u32 %v36, 4294901760
  %2973 = vmatpush1.msra.mxu0 %v2972
  %2974 = vmatprep.subr.mxu0 0.0
  %v2975 = vand.u32 %v37, 4294901760
  %2976 = vmatpush1.msra.mxu0 %v2975
  %2977 = vmatprep.subr.mxu0 0.0
  %v2978 = vand.u32 %v38, 4294901760
  %2979 = vmatpush1.msra.mxu0 %v2978
  %2980 = vmatprep.subr.mxu0 0.0
  %v2981 = vand.u32 %v39, 4294901760
  %2982 = vmatpush1.msra.mxu0 %v2981
  %2983 = vmatprep.subr.mxu0 0.0
  %v2984 = vand.u32 %v40, 4294901760
  %2985 = vmatpush1.msra.mxu0 %v2984
  %2986 = vmatprep.subr.mxu0 0.0
  %v2987 = vand.u32 %v41, 4294901760
  %2988 = vmatpush1.msra.mxu0 %v2987
  %2989 = vmatprep.subr.mxu0 0.0
  %2990 = vmatpush1.msra.mxu0 0.0
  %2991 = vmatprep.subr.mxu0 0.0
  %2992 = vmatpush1.msra.mxu0 0.0
  %2993 = vmatprep.subr.mxu0 0.0
  %2994 = vmatpush1.msra.mxu0 0.0
  %2995 = vmatprep.subr.mxu0 0.0
  %2996 = vmatpush1.msra.mxu0 0.0
  %2997 = vmatprep.subr.mxu0 0.0
  %2998 = vmatpush1.msra.mxu0 0.0
  %2999 = vmatprep.subr.mxu0 0.0
  %3000 = vmatpush1.msra.mxu0 0.0
  %3001 = vmatprep.subr.mxu0 0.0
  %3002 = vmatpush1.msra.mxu0 0.0
  %3003 = vmatprep.subr.mxu0 0.0
  %3004 = vmatpush1.msra.mxu0 0.0
  %3005 = vmatprep.subr.mxu0 0.0
  %3006 = vmatpush1.msra.mxu0 0.0
  %3007 = vmatprep.subr.mxu0 0.0
  %3008 = vmatpush1.msra.mxu0 0.0
  %3009 = vmatprep.subr.mxu0 0.0
  %3010 = vmatpush1.msra.mxu0 0.0
  %3011 = vmatprep.subr.mxu0 0.0
  %3012 = vmatpush1.msra.mxu0 0.0
  %3013 = vmatprep.subr.mxu0 0.0
  %3014 = vmatpush1.msra.mxu0 0.0
  %3015 = vmatprep.subr.mxu0 0.0
  %3016 = vmatpush1.msra.mxu0 0.0
  %3017 = vmatprep.subr.mxu0 0.0
  %3018 = vmatpush1.msra.mxu0 0.0
  %3019 = vmatprep.subr.mxu0 0.0
  %3020 = vmatpush1.msra.mxu0 0.0
  %3021 = vmatprep.mubr.f32.mxu0 0.0
  %v3022 = vand.u32 %v2932, 4294901760
  %v3023 = vsub.f32 %v2932, %v3022
  %v3024 = vand.u32 %v3023, 4294901760
  %v3025 = vsub.f32 %v3023, %v3024
  %v3026 = vand.u32 %v3025, 4294901760
  %3027 = vmatmul.mubr.f32.gmra.mrb[0].mxu0 %v3026
  %v3028 = vpop.f32.mrb[0].mxu0
  %v3029 = vadd.f32 0.0, %v3028
  %v3030 = vpop.f32.mrb[0].mxu0
  %3031 = vmatprep.mubr.f32.mxu0 0.0
  %v3032 = vand.u32 %v2938, 4294901760
  %v3033 = vsub.f32 %v2938, %v3032
  %v3034 = vand.u32 %v3033, 4294901760
  %v3035 = vsub.f32 %v3033, %v3034
  %v3036 = vand.u32 %v3035, 4294901760
  %3037 = vmatmul.mubr.f32.gmra.mrb[0].mxu0 %v3036
  %v3038 = vpop.f32.mrb[0].mxu0
  %v3039 = vadd.f32 0.0, %v3038
  %v3040 = vpop.f32.mrb[0].mxu0
  %3041 = vdwg.mxu0
  %3042 = vmatprep.subr.mxu0 0.0
  %v3043 = vand.u32 %v26, 4294901760
  %v3044 = vsub.f32 %v26, %v3043
  %v3045 = vand.u32 %v3044, 4294901760
  %v3046 = vsub.f32 %v3044, %v3045
  %v3047 = vand.u32 %v3046, 4294901760
  %3048 = vmatpush1.msra.mxu0 %v3047
  %3049 = vmatprep.subr.mxu0 0.0
  %v3050 = vand.u32 %v27, 4294901760
  %v3051 = vsub.f32 %v27, %v3050
  %v3052 = vand.u32 %v3051, 4294901760
  %v3053 = vsub.f32 %v3051, %v3052
  %v3054 = vand.u32 %v3053, 4294901760
  %3055 = vmatpush1.msra.mxu0 %v3054
  %3056 = vmatprep.subr.mxu0 0.0
  %v3057 = vand.u32 %v28, 4294901760
  %v3058 = vsub.f32 %v28, %v3057
  %v3059 = vand.u32 %v3058, 4294901760
  %v3060 = vsub.f32 %v3058, %v3059
  %v3061 = vand.u32 %v3060, 4294901760
  %3062 = vmatpush1.msra.mxu0 %v3061
  %3063 = vmatprep.subr.mxu0 0.0
  %v3064 = vand.u32 %v29, 4294901760
  %v3065 = vsub.f32 %v29, %v3064
  %v3066 = vand.u32 %v3065, 4294901760
  %v3067 = vsub.f32 %v3065, %v3066
  %v3068 = vand.u32 %v3067, 4294901760
  %3069 = vmatpush1.msra.mxu0 %v3068
  %3070 = vmatprep.subr.mxu0 0.0
  %v3071 = vand.u32 %v30, 4294901760
  %v3072 = vsub.f32 %v30, %v3071
  %v3073 = vand.u32 %v3072, 4294901760
  %v3074 = vsub.f32 %v3072, %v3073
  %v3075 = vand.u32 %v3074, 4294901760
  %3076 = vmatpush1.msra.mxu0 %v3075
  %3077 = vmatprep.subr.mxu0 0.0
  %v3078 = vand.u32 %v31, 4294901760
  %v3079 = vsub.f32 %v31, %v3078
  %v3080 = vand.u32 %v3079, 4294901760
  %v3081 = vsub.f32 %v3079, %v3080
  %v3082 = vand.u32 %v3081, 4294901760
  %3083 = vmatpush1.msra.mxu0 %v3082
  %3084 = vmatprep.subr.mxu0 0.0
  %v3085 = vand.u32 %v32, 4294901760
  %v3086 = vsub.f32 %v32, %v3085
  %v3087 = vand.u32 %v3086, 4294901760
  %v3088 = vsub.f32 %v3086, %v3087
  %v3089 = vand.u32 %v3088, 4294901760
  %3090 = vmatpush1.msra.mxu0 %v3089
  %3091 = vmatprep.subr.mxu0 0.0
  %v3092 = vand.u32 %v33, 4294901760
  %v3093 = vsub.f32 %v33, %v3092
  %v3094 = vand.u32 %v3093, 4294901760
  %v3095 = vsub.f32 %v3093, %v3094
  %v3096 = vand.u32 %v3095, 4294901760
  %3097 = vmatpush1.msra.mxu0 %v3096
  %3098 = vmatprep.subr.mxu0 0.0
  %v3099 = vand.u32 %v34, 4294901760
  %v3100 = vsub.f32 %v34, %v3099
  %v3101 = vand.u32 %v3100, 4294901760
  %v3102 = vsub.f32 %v3100, %v3101
  %v3103 = vand.u32 %v3102, 4294901760
  %3104 = vmatpush1.msra.mxu0 %v3103
  %3105 = vmatprep.subr.mxu0 0.0
  %v3106 = vand.u32 %v35, 4294901760
  %v3107 = vsub.f32 %v35, %v3106
  %v3108 = vand.u32 %v3107, 4294901760
  %v3109 = vsub.f32 %v3107, %v3108
  %v3110 = vand.u32 %v3109, 4294901760
  %3111 = vmatpush1.msra.mxu0 %v3110
  %3112 = vmatprep.subr.mxu0 0.0
  %v3113 = vand.u32 %v36, 4294901760
  %v3114 = vsub.f32 %v36, %v3113
  %v3115 = vand.u32 %v3114, 4294901760
  %v3116 = vsub.f32 %v3114, %v3115
  %v3117 = vand.u32 %v3116, 4294901760
  %3118 = vmatpush1.msra.mxu0 %v3117
  %3119 = vmatprep.subr.mxu0 0.0
  %v3120 = vand.u32 %v37, 4294901760
  %v3121 = vsub.f32 %v37, %v3120
  %v3122 = vand.u32 %v3121, 4294901760
  %v3123 = vsub.f32 %v3121, %v3122
  %v3124 = vand.u32 %v3123, 4294901760
  %3125 = vmatpush1.msra.mxu0 %v3124
  %3126 = vmatprep.subr.mxu0 0.0
  %v3127 = vand.u32 %v38, 4294901760
  %v3128 = vsub.f32 %v38, %v3127
  %v3129 = vand.u32 %v3128, 4294901760
  %v3130 = vsub.f32 %v3128, %v3129
  %v3131 = vand.u32 %v3130, 4294901760
  %3132 = vmatpush1.msra.mxu0 %v3131
  %3133 = vmatprep.subr.mxu0 0.0
  %v3134 = vand.u32 %v39, 4294901760
  %v3135 = vsub.f32 %v39, %v3134
  %v3136 = vand.u32 %v3135, 4294901760
  %v3137 = vsub.f32 %v3135, %v3136
  %v3138 = vand.u32 %v3137, 4294901760
  %3139 = vmatpush1.msra.mxu0 %v3138
  %3140 = vmatprep.subr.mxu0 0.0
  %v3141 = vand.u32 %v40, 4294901760
  %v3142 = vsub.f32 %v40, %v3141
  %v3143 = vand.u32 %v3142, 4294901760
  %v3144 = vsub.f32 %v3142, %v3143
  %v3145 = vand.u32 %v3144, 4294901760
  %3146 = vmatpush1.msra.mxu0 %v3145
  %3147 = vmatprep.subr.mxu0 0.0
  %v3148 = vand.u32 %v41, 4294901760
  %v3149 = vsub.f32 %v41, %v3148
  %v3150 = vand.u32 %v3149, 4294901760
  %v3151 = vsub.f32 %v3149, %v3150
  %v3152 = vand.u32 %v3151, 4294901760
  %3153 = vmatpush1.msra.mxu0 %v3152
  %3154 = vmatprep.subr.mxu0 0.0
  %3155 = vmatpush1.msra.mxu0 0.0
  %3156 = vmatprep.subr.mxu0 0.0
  %3157 = vmatpush1.msra.mxu0 0.0
  %3158 = vmatprep.subr.mxu0 0.0
  %3159 = vmatpush1.msra.mxu0 0.0
  %3160 = vmatprep.subr.mxu0 0.0
  %3161 = vmatpush1.msra.mxu0 0.0
  %3162 = vmatprep.subr.mxu0 0.0
  %3163 = vmatpush1.msra.mxu0 0.0
  %3164 = vmatprep.subr.mxu0 0.0
  %3165 = vmatpush1.msra.mxu0 0.0
  %3166 = vmatprep.subr.mxu0 0.0
  %3167 = vmatpush1.msra.mxu0 0.0
  %3168 = vmatprep.subr.mxu0 0.0
  %3169 = vmatpush1.msra.mxu0 0.0
  %3170 = vmatprep.subr.mxu0 0.0
  %3171 = vmatpush1.msra.mxu0 0.0
  %3172 = vmatprep.subr.mxu0 0.0
  %3173 = vmatpush1.msra.mxu0 0.0
  %3174 = vmatprep.subr.mxu0 0.0
  %3175 = vmatpush1.msra.mxu0 0.0
  %3176 = vmatprep.subr.mxu0 0.0
  %3177 = vmatpush1.msra.mxu0 0.0
  %3178 = vmatprep.subr.mxu0 0.0
  %3179 = vmatpush1.msra.mxu0 0.0
  %3180 = vmatprep.subr.mxu0 0.0
  %3181 = vmatpush1.msra.mxu0 0.0
  %3182 = vmatprep.subr.mxu0 0.0
  %3183 = vmatpush1.msra.mxu0 0.0
  %3184 = vmatprep.subr.mxu0 0.0
  %3185 = vmatpush1.msra.mxu0 0.0
  %3186 = vmatprep.mubr.f32.mxu0 0.0
  %v3187 = vand.u32 %v2932, 4294901760
  %3188 = vmatmul.mubr.f32.gmra.mrb[0].mxu0 %v3187
  %v3189 = vpop.f32.mrb[0].mxu0
  %v3190 = vadd.f32 %v3029, %v3189
  %v3191 = vpop.f32.mrb[0].mxu0
  %3192 = vmatprep.mubr.f32.mxu0 0.0
  %v3193 = vand.u32 %v2938, 4294901760
  %3194 = vmatmul.mubr.f32.gmra.mrb[0].mxu0 %v3193
  %v3195 = vpop.f32.mrb[0].mxu0
  %v3196 = vadd.f32 %v3039, %v3195
  %v3197 = vpop.f32.mrb[0].mxu0
  %3198 = vdwg.mxu0
  %3199 = vmatprep.subr.mxu0 0.0
  %v3200 = vand.u32 %v26, 4294901760
  %v3201 = vsub.f32 %v26, %v3200
  %3202 = vmatpush1.msra.mxu0 %v3201
  %3203 = vmatprep.subr.mxu0 0.0
  %v3204 = vand.u32 %v27, 4294901760
  %v3205 = vsub.f32 %v27, %v3204
  %3206 = vmatpush1.msra.mxu0 %v3205
  %3207 = vmatprep.subr.mxu0 0.0
  %v3208 = vand.u32 %v28, 4294901760
  %v3209 = vsub.f32 %v28, %v3208
  %3210 = vmatpush1.msra.mxu0 %v3209
  %3211 = vmatprep.subr.mxu0 0.0
  %v3212 = vand.u32 %v29, 4294901760
  %v3213 = vsub.f32 %v29, %v3212
  %3214 = vmatpush1.msra.mxu0 %v3213
  %3215 = vmatprep.subr.mxu0 0.0
  %v3216 = vand.u32 %v30, 4294901760
  %v3217 = vsub.f32 %v30, %v3216
  %3218 = vmatpush1.msra.mxu0 %v3217
  %3219 = vmatprep.subr.mxu0 0.0
  %v3220 = vand.u32 %v31, 4294901760
  %v3221 = vsub.f32 %v31, %v3220
  %3222 = vmatpush1.msra.mxu0 %v3221
  %3223 = vmatprep.subr.mxu0 0.0
  %v3224 = vand.u32 %v32, 4294901760
  %v3225 = vsub.f32 %v32, %v3224
  %3226 = vmatpush1.msra.mxu0 %v3225
  %3227 = vmatprep.subr.mxu0 0.0
  %v3228 = vand.u32 %v33, 4294901760
  %v3229 = vsub.f32 %v33, %v3228
  %3230 = vmatpush1.msra.mxu0 %v3229
  %3231 = vmatprep.subr.mxu0 0.0
  %v3232 = vand.u32 %v34, 4294901760
  %v3233 = vsub.f32 %v34, %v3232
  %3234 = vmatpush1.msra.mxu0 %v3233
  %3235 = vmatprep.subr.mxu0 0.0
  %v3236 = vand.u32 %v35, 4294901760
  %v3237 = vsub.f32 %v35, %v3236
  %3238 = vmatpush1.msra.mxu0 %v3237
  %3239 = vmatprep.subr.mxu0 0.0
  %v3240 = vand.u32 %v36, 4294901760
  %v3241 = vsub.f32 %v36, %v3240
  %3242 = vmatpush1.msra.mxu0 %v3241
  %3243 = vmatprep.subr.mxu0 0.0
  %v3244 = vand.u32 %v37, 4294901760
  %v3245 = vsub.f32 %v37, %v3244
  %3246 = vmatpush1.msra.mxu0 %v3245
  %3247 = vmatprep.subr.mxu0 0.0
  %v3248 = vand.u32 %v38, 4294901760
  %v3249 = vsub.f32 %v38, %v3248
  %3250 = vmatpush1.msra.mxu0 %v3249
  %3251 = vmatprep.subr.mxu0 0.0
  %v3252 = vand.u32 %v39, 4294901760
  %v3253 = vsub.f32 %v39, %v3252
  %3254 = vmatpush1.msra.mxu0 %v3253
  %3255 = vmatprep.subr.mxu0 0.0
  %v3256 = vand.u32 %v40, 4294901760
  %v3257 = vsub.f32 %v40, %v3256
  %3258 = vmatpush1.msra.mxu0 %v3257
  %3259 = vmatprep.subr.mxu0 0.0
  %v3260 = vand.u32 %v41, 4294901760
  %v3261 = vsub.f32 %v41, %v3260
  %3262 = vmatpush1.msra.mxu0 %v3261
  %3263 = vmatprep.subr.mxu0 0.0
  %3264 = vmatpush1.msra.mxu0 0.0
  %3265 = vmatprep.subr.mxu0 0.0
  %3266 = vmatpush1.msra.mxu0 0.0
  %3267 = vmatprep.subr.mxu0 0.0
  %3268 = vmatpush1.msra.mxu0 0.0
  %3269 = vmatprep.subr.mxu0 0.0
  %3270 = vmatpush1.msra.mxu0 0.0
  %3271 = vmatprep.subr.mxu0 0.0
  %3272 = vmatpush1.msra.mxu0 0.0
  %3273 = vmatprep.subr.mxu0 0.0
  %3274 = vmatpush1.msra.mxu0 0.0
  %3275 = vmatprep.subr.mxu0 0.0
  %3276 = vmatpush1.msra.mxu0 0.0
  %3277 = vmatprep.subr.mxu0 0.0
  %3278 = vmatpush1.msra.mxu0 0.0
  %3279 = vmatprep.subr.mxu0 0.0
  %3280 = vmatpush1.msra.mxu0 0.0
  %3281 = vmatprep.subr.mxu0 0.0
  %3282 = vmatpush1.msra.mxu0 0.0
  %3283 = vmatprep.subr.mxu0 0.0
  %3284 = vmatpush1.msra.mxu0 0.0
  %3285 = vmatprep.subr.mxu0 0.0
  %3286 = vmatpush1.msra.mxu0 0.0
  %3287 = vmatprep.subr.mxu0 0.0
  %3288 = vmatpush1.msra.mxu0 0.0
  %3289 = vmatprep.subr.mxu0 0.0
  %3290 = vmatpush1.msra.mxu0 0.0
  %3291 = vmatprep.subr.mxu0 0.0
  %3292 = vmatpush1.msra.mxu0 0.0
  %3293 = vmatprep.subr.mxu0 0.0
  %3294 = vmatpush1.msra.mxu0 0.0
  %3295 = vmatprep.mubr.f32.mxu0 0.0
  %v3296 = vand.u32 %v2932, 4294901760
  %v3297 = vsub.f32 %v2932, %v3296
  %3298 = vmatmul.mubr.f32.gmra.mrb[0].mxu0 %v3297
  %v3299 = vpop.f32.mrb[0].mxu0
  %v3300 = vadd.f32 %v3190, %v3299
  %v3301 = vpop.f32.mrb[0].mxu0
  %3302 = vmatprep.mubr.f32.mxu0 0.0
  %v3303 = vand.u32 %v2938, 4294901760
  %v3304 = vsub.f32 %v2938, %v3303
  %3305 = vmatmul.mubr.f32.gmra.mrb[0].mxu0 %v3304
  %v3306 = vpop.f32.mrb[0].mxu0
  %v3307 = vadd.f32 %v3196, %v3306
  %v3308 = vpop.f32.mrb[0].mxu0
  %3309 = vdwg.mxu0
  %3310 = vmatprep.subr.mxu0 0.0
  %v3311 = vand.u32 %v26, 4294901760
  %3312 = vmatpush1.msra.mxu0 %v3311
  %3313 = vmatprep.subr.mxu0 0.0
  %v3314 = vand.u32 %v27, 4294901760
  %3315 = vmatpush1.msra.mxu0 %v3314
  %3316 = vmatprep.subr.mxu0 0.0
  %v3317 = vand.u32 %v28, 4294901760
  %3318 = vmatpush1.msra.mxu0 %v3317
  %3319 = vmatprep.subr.mxu0 0.0
  %v3320 = vand.u32 %v29, 4294901760
  %3321 = vmatpush1.msra.mxu0 %v3320
  %3322 = vmatprep.subr.mxu0 0.0
  %v3323 = vand.u32 %v30, 4294901760
  %3324 = vmatpush1.msra.mxu0 %v3323
  %3325 = vmatprep.subr.mxu0 0.0
  %v3326 = vand.u32 %v31, 4294901760
  %3327 = vmatpush1.msra.mxu0 %v3326
  %3328 = vmatprep.subr.mxu0 0.0
  %v3329 = vand.u32 %v32, 4294901760
  %3330 = vmatpush1.msra.mxu0 %v3329
  %3331 = vmatprep.subr.mxu0 0.0
  %v3332 = vand.u32 %v33, 4294901760
  %3333 = vmatpush1.msra.mxu0 %v3332
  %3334 = vmatprep.subr.mxu0 0.0
  %v3335 = vand.u32 %v34, 4294901760
  %3336 = vmatpush1.msra.mxu0 %v3335
  %3337 = vmatprep.subr.mxu0 0.0
  %v3338 = vand.u32 %v35, 4294901760
  %3339 = vmatpush1.msra.mxu0 %v3338
  %3340 = vmatprep.subr.mxu0 0.0
  %v3341 = vand.u32 %v36, 4294901760
  %3342 = vmatpush1.msra.mxu0 %v3341
  %3343 = vmatprep.subr.mxu0 0.0
  %v3344 = vand.u32 %v37, 4294901760
  %3345 = vmatpush1.msra.mxu0 %v3344
  %3346 = vmatprep.subr.mxu0 0.0
  %v3347 = vand.u32 %v38, 4294901760
  %3348 = vmatpush1.msra.mxu0 %v3347
  %3349 = vmatprep.subr.mxu0 0.0
  %v3350 = vand.u32 %v39, 4294901760
  %3351 = vmatpush1.msra.mxu0 %v3350
  %3352 = vmatprep.subr.mxu0 0.0
  %v3353 = vand.u32 %v40, 4294901760
  %3354 = vmatpush1.msra.mxu0 %v3353
  %3355 = vmatprep.subr.mxu0 0.0
  %v3356 = vand.u32 %v41, 4294901760
  %3357 = vmatpush1.msra.mxu0 %v3356
  %3358 = vmatprep.subr.mxu0 0.0
  %3359 = vmatpush1.msra.mxu0 0.0
  %3360 = vmatprep.subr.mxu0 0.0
  %3361 = vmatpush1.msra.mxu0 0.0
  %3362 = vmatprep.subr.mxu0 0.0
  %3363 = vmatpush1.msra.mxu0 0.0
  %3364 = vmatprep.subr.mxu0 0.0
  %3365 = vmatpush1.msra.mxu0 0.0
  %3366 = vmatprep.subr.mxu0 0.0
  %3367 = vmatpush1.msra.mxu0 0.0
  %3368 = vmatprep.subr.mxu0 0.0
  %3369 = vmatpush1.msra.mxu0 0.0
  %3370 = vmatprep.subr.mxu0 0.0
  %3371 = vmatpush1.msra.mxu0 0.0
  %3372 = vmatprep.subr.mxu0 0.0
  %3373 = vmatpush1.msra.mxu0 0.0
  %3374 = vmatprep.subr.mxu0 0.0
  %3375 = vmatpush1.msra.mxu0 0.0
  %3376 = vmatprep.subr.mxu0 0.0
  %3377 = vmatpush1.msra.mxu0 0.0
  %3378 = vmatprep.subr.mxu0 0.0
  %3379 = vmatpush1.msra.mxu0 0.0
  %3380 = vmatprep.subr.mxu0 0.0
  %3381 = vmatpush1.msra.mxu0 0.0
  %3382 = vmatprep.subr.mxu0 0.0
  %3383 = vmatpush1.msra.mxu0 0.0
  %3384 = vmatprep.subr.mxu0 0.0
  %3385 = vmatpush1.msra.mxu0 0.0
  %3386 = vmatprep.subr.mxu0 0.0
  %3387 = vmatpush1.msra.mxu0 0.0
  %3388 = vmatprep.subr.mxu0 0.0
  %3389 = vmatpush1.msra.mxu0 0.0
  %3390 = vmatprep.mubr.f32.mxu0 0.0
  %v3391 = vand.u32 %v2932, 4294901760
  %v3392 = vsub.f32 %v2932, %v3391
  %v3393 = vand.u32 %v3392, 4294901760
  %3394 = vmatmul.mubr.f32.gmra.mrb[0].mxu0 %v3393
  %v3395 = vpop.f32.mrb[0].mxu0
  %v3396 = vadd.f32 %v3300, %v3395
  %v3397 = vpop.f32.mrb[0].mxu0
  %3398 = vmatprep.mubr.f32.mxu0 0.0
  %v3399 = vand.u32 %v2938, 4294901760
  %v3400 = vsub.f32 %v2938, %v3399
  %v3401 = vand.u32 %v3400, 4294901760
  %3402 = vmatmul.mubr.f32.gmra.mrb[0].mxu0 %v3401
  %v3403 = vpop.f32.mrb[0].mxu0
  %v3404 = vadd.f32 %v3307, %v3403
  %v3405 = vpop.f32.mrb[0].mxu0
  %3406 = vdwg.mxu0
  %3407 = vmatprep.subr.mxu0 0.0
  %v3408 = vand.u32 %v26, 4294901760
  %v3409 = vsub.f32 %v26, %v3408
  %v3410 = vand.u32 %v3409, 4294901760
  %3411 = vmatpush1.msra.mxu0 %v3410
  %3412 = vmatprep.subr.mxu0 0.0
  %v3413 = vand.u32 %v27, 4294901760
  %v3414 = vsub.f32 %v27, %v3413
  %v3415 = vand.u32 %v3414, 4294901760
  %3416 = vmatpush1.msra.mxu0 %v3415
  %3417 = vmatprep.subr.mxu0 0.0
  %v3418 = vand.u32 %v28, 4294901760
  %v3419 = vsub.f32 %v28, %v3418
  %v3420 = vand.u32 %v3419, 4294901760
  %3421 = vmatpush1.msra.mxu0 %v3420
  %3422 = vmatprep.subr.mxu0 0.0
  %v3423 = vand.u32 %v29, 4294901760
  %v3424 = vsub.f32 %v29, %v3423
  %v3425 = vand.u32 %v3424, 4294901760
  %3426 = vmatpush1.msra.mxu0 %v3425
  %3427 = vmatprep.subr.mxu0 0.0
  %v3428 = vand.u32 %v30, 4294901760
  %v3429 = vsub.f32 %v30, %v3428
  %v3430 = vand.u32 %v3429, 4294901760
  %3431 = vmatpush1.msra.mxu0 %v3430
  %3432 = vmatprep.subr.mxu0 0.0
  %v3433 = vand.u32 %v31, 4294901760
  %v3434 = vsub.f32 %v31, %v3433
  %v3435 = vand.u32 %v3434, 4294901760
  %3436 = vmatpush1.msra.mxu0 %v3435
  %3437 = vmatprep.subr.mxu0 0.0
  %v3438 = vand.u32 %v32, 4294901760
  %v3439 = vsub.f32 %v32, %v3438
  %v3440 = vand.u32 %v3439, 4294901760
  %3441 = vmatpush1.msra.mxu0 %v3440
  %3442 = vmatprep.subr.mxu0 0.0
  %v3443 = vand.u32 %v33, 4294901760
  %v3444 = vsub.f32 %v33, %v3443
  %v3445 = vand.u32 %v3444, 4294901760
  %3446 = vmatpush1.msra.mxu0 %v3445
  %3447 = vmatprep.subr.mxu0 0.0
  %v3448 = vand.u32 %v34, 4294901760
  %v3449 = vsub.f32 %v34, %v3448
  %v3450 = vand.u32 %v3449, 4294901760
  %3451 = vmatpush1.msra.mxu0 %v3450
  %3452 = vmatprep.subr.mxu0 0.0
  %v3453 = vand.u32 %v35, 4294901760
  %v3454 = vsub.f32 %v35, %v3453
  %v3455 = vand.u32 %v3454, 4294901760
  %3456 = vmatpush1.msra.mxu0 %v3455
  %3457 = vmatprep.subr.mxu0 0.0
  %v3458 = vand.u32 %v36, 4294901760
  %v3459 = vsub.f32 %v36, %v3458
  %v3460 = vand.u32 %v3459, 4294901760
  %3461 = vmatpush1.msra.mxu0 %v3460
  %3462 = vmatprep.subr.mxu0 0.0
  %v3463 = vand.u32 %v37, 4294901760
  %v3464 = vsub.f32 %v37, %v3463
  %v3465 = vand.u32 %v3464, 4294901760
  %3466 = vmatpush1.msra.mxu0 %v3465
  %3467 = vmatprep.subr.mxu0 0.0
  %v3468 = vand.u32 %v38, 4294901760
  %v3469 = vsub.f32 %v38, %v3468
  %v3470 = vand.u32 %v3469, 4294901760
  %3471 = vmatpush1.msra.mxu0 %v3470
  %3472 = vmatprep.subr.mxu0 0.0
  %v3473 = vand.u32 %v39, 4294901760
  %v3474 = vsub.f32 %v39, %v3473
  %v3475 = vand.u32 %v3474, 4294901760
  %3476 = vmatpush1.msra.mxu0 %v3475
  %3477 = vmatprep.subr.mxu0 0.0
  %v3478 = vand.u32 %v40, 4294901760
  %v3479 = vsub.f32 %v40, %v3478
  %v3480 = vand.u32 %v3479, 4294901760
  %3481 = vmatpush1.msra.mxu0 %v3480
  %3482 = vmatprep.subr.mxu0 0.0
  %v3483 = vand.u32 %v41, 4294901760
  %v3484 = vsub.f32 %v41, %v3483
  %v3485 = vand.u32 %v3484, 4294901760
  %3486 = vmatpush1.msra.mxu0 %v3485
  %3487 = vmatprep.subr.mxu0 0.0
  %3488 = vmatpush1.msra.mxu0 0.0
  %3489 = vmatprep.subr.mxu0 0.0
  %3490 = vmatpush1.msra.mxu0 0.0
  %3491 = vmatprep.subr.mxu0 0.0
  %3492 = vmatpush1.msra.mxu0 0.0
  %3493 = vmatprep.subr.mxu0 0.0
  %3494 = vmatpush1.msra.mxu0 0.0
  %3495 = vmatprep.subr.mxu0 0.0
  %3496 = vmatpush1.msra.mxu0 0.0
  %3497 = vmatprep.subr.mxu0 0.0
  %3498 = vmatpush1.msra.mxu0 0.0
  %3499 = vmatprep.subr.mxu0 0.0
  %3500 = vmatpush1.msra.mxu0 0.0
  %3501 = vmatprep.subr.mxu0 0.0
  %3502 = vmatpush1.msra.mxu0 0.0
  %3503 = vmatprep.subr.mxu0 0.0
  %3504 = vmatpush1.msra.mxu0 0.0
  %3505 = vmatprep.subr.mxu0 0.0
  %3506 = vmatpush1.msra.mxu0 0.0
  %3507 = vmatprep.subr.mxu0 0.0
  %3508 = vmatpush1.msra.mxu0 0.0
  %3509 = vmatprep.subr.mxu0 0.0
  %3510 = vmatpush1.msra.mxu0 0.0
  %3511 = vmatprep.subr.mxu0 0.0
  %3512 = vmatpush1.msra.mxu0 0.0
  %3513 = vmatprep.subr.mxu0 0.0
  %3514 = vmatpush1.msra.mxu0 0.0
  %3515 = vmatprep.subr.mxu0 0.0
  %3516 = vmatpush1.msra.mxu0 0.0
  %3517 = vmatprep.subr.mxu0 0.0
  %3518 = vmatpush1.msra.mxu0 0.0
  %3519 = vmatprep.mubr.f32.mxu0 0.0
  %v3520 = vand.u32 %v2932, 4294901760
  %3521 = vmatmul.mubr.f32.gmra.mrb[0].mxu0 %v3520
  %v3522 = vpop.f32.mrb[0].mxu0
  %v3523 = vadd.f32 %v3396, %v3522
  %v3524 = vpop.f32.mrb[0].mxu0
  %3525 = vmatprep.mubr.f32.mxu0 0.0
  %v3526 = vand.u32 %v2938, 4294901760
  %3527 = vmatmul.mubr.f32.gmra.mrb[0].mxu0 %v3526
  %v3528 = vpop.f32.mrb[0].mxu0
  %v3529 = vadd.f32 %v3404, %v3528
  %v3530 = vpop.f32.mrb[0].mxu0
  %3531 = vdwg.mxu0
  %3532 = vmatprep.subr.mxu0 0.0
  %v3533 = vand.u32 %v26, 4294901760
  %3534 = vmatpush1.msra.mxu0 %v3533
  %3535 = vmatprep.subr.mxu0 0.0
  %v3536 = vand.u32 %v27, 4294901760
  %3537 = vmatpush1.msra.mxu0 %v3536
  %3538 = vmatprep.subr.mxu0 0.0
  %v3539 = vand.u32 %v28, 4294901760
  %3540 = vmatpush1.msra.mxu0 %v3539
  %3541 = vmatprep.subr.mxu0 0.0
  %v3542 = vand.u32 %v29, 4294901760
  %3543 = vmatpush1.msra.mxu0 %v3542
  %3544 = vmatprep.subr.mxu0 0.0
  %v3545 = vand.u32 %v30, 4294901760
  %3546 = vmatpush1.msra.mxu0 %v3545
  %3547 = vmatprep.subr.mxu0 0.0
  %v3548 = vand.u32 %v31, 4294901760
  %3549 = vmatpush1.msra.mxu0 %v3548
  %3550 = vmatprep.subr.mxu0 0.0
  %v3551 = vand.u32 %v32, 4294901760
  %3552 = vmatpush1.msra.mxu0 %v3551
  %3553 = vmatprep.subr.mxu0 0.0
  %v3554 = vand.u32 %v33, 4294901760
  %3555 = vmatpush1.msra.mxu0 %v3554
  %3556 = vmatprep.subr.mxu0 0.0
  %v3557 = vand.u32 %v34, 4294901760
  %3558 = vmatpush1.msra.mxu0 %v3557
  %3559 = vmatprep.subr.mxu0 0.0
  %v3560 = vand.u32 %v35, 4294901760
  %3561 = vmatpush1.msra.mxu0 %v3560
  %3562 = vmatprep.subr.mxu0 0.0
  %v3563 = vand.u32 %v36, 4294901760
  %3564 = vmatpush1.msra.mxu0 %v3563
  %3565 = vmatprep.subr.mxu0 0.0
  %v3566 = vand.u32 %v37, 4294901760
  %3567 = vmatpush1.msra.mxu0 %v3566
  %3568 = vmatprep.subr.mxu0 0.0
  %v3569 = vand.u32 %v38, 4294901760
  %3570 = vmatpush1.msra.mxu0 %v3569
  %3571 = vmatprep.subr.mxu0 0.0
  %v3572 = vand.u32 %v39, 4294901760
  %3573 = vmatpush1.msra.mxu0 %v3572
  %3574 = vmatprep.subr.mxu0 0.0
  %v3575 = vand.u32 %v40, 4294901760
  %3576 = vmatpush1.msra.mxu0 %v3575
  %3577 = vmatprep.subr.mxu0 0.0
  %v3578 = vand.u32 %v41, 4294901760
  %3579 = vmatpush1.msra.mxu0 %v3578
  %3580 = vmatprep.subr.mxu0 0.0
  %3581 = vmatpush1.msra.mxu0 0.0
  %3582 = vmatprep.subr.mxu0 0.0
  %3583 = vmatpush1.msra.mxu0 0.0
  %3584 = vmatprep.subr.mxu0 0.0
  %3585 = vmatpush1.msra.mxu0 0.0
  %3586 = vmatprep.subr.mxu0 0.0
  %3587 = vmatpush1.msra.mxu0 0.0
  %3588 = vmatprep.subr.mxu0 0.0
  %3589 = vmatpush1.msra.mxu0 0.0
  %3590 = vmatprep.subr.mxu0 0.0
  %3591 = vmatpush1.msra.mxu0 0.0
  %3592 = vmatprep.subr.mxu0 0.0
  %3593 = vmatpush1.msra.mxu0 0.0
  %3594 = vmatprep.subr.mxu0 0.0
  %3595 = vmatpush1.msra.mxu0 0.0
  %3596 = vmatprep.subr.mxu0 0.0
  %3597 = vmatpush1.msra.mxu0 0.0
  %3598 = vmatprep.subr.mxu0 0.0
  %3599 = vmatpush1.msra.mxu0 0.0
  %3600 = vmatprep.subr.mxu0 0.0
  %3601 = vmatpush1.msra.mxu0 0.0
  %3602 = vmatprep.subr.mxu0 0.0
  %3603 = vmatpush1.msra.mxu0 0.0
  %3604 = vmatprep.subr.mxu0 0.0
  %3605 = vmatpush1.msra.mxu0 0.0
  %3606 = vmatprep.subr.mxu0 0.0
  %3607 = vmatpush1.msra.mxu0 0.0
  %3608 = vmatprep.subr.mxu0 0.0
  %3609 = vmatpush1.msra.mxu0 0.0
  %3610 = vmatprep.subr.mxu0 0.0
  %3611 = vmatpush1.msra.mxu0 0.0
  %3612 = vmatprep.mubr.f32.mxu0 0.0
  %v3613 = vand.u32 %v2932, 4294901760
  %3614 = vmatmul.mubr.f32.gmra.mrb[0].mxu0 %v3613
  %v3615 = vpop.f32.mrb[0].mxu0
  %v3616 = vadd.f32 %v3523, %v3615
  %v3617 = vpop.f32.mrb[0].mxu0
  %3618 = vmatprep.mubr.f32.mxu0 0.0
  %v3619 = vand.u32 %v2938, 4294901760
  %3620 = vmatmul.mubr.f32.gmra.mrb[0].mxu0 %v3619
  %v3621 = vpop.f32.mrb[0].mxu0
  %v3622 = vadd.f32 %v3529, %v3621
  %v3623 = vpop.f32.mrb[0].mxu0
  %3624 = vdwg.mxu0
  %v3625 = vmul.f32 %v22, %v22
  %v3626 = vmul.f32 %v23, %v23
  %3627 = vmatprep.subr.mxu0 0.0
  %v3628 = vand.u32 %v3625, 4294901760
  %3629 = vmatpush1.msra.mxu0 %v3628
  %3630 = vmatprep.subr.mxu0 0.0
  %v3631 = vand.u32 %v3626, 4294901760
  %3632 = vmatpush1.msra.mxu0 %v3631
  %3633 = vmatprep.subr.mxu0 0.0
  %3634 = vmatpush1.msra.mxu0 0.0
  %3635 = vmatprep.subr.mxu0 0.0
  %3636 = vmatpush1.msra.mxu0 0.0
  %3637 = vmatprep.subr.mxu0 0.0
  %3638 = vmatpush1.msra.mxu0 0.0
  %3639 = vmatprep.subr.mxu0 0.0
  %3640 = vmatpush1.msra.mxu0 0.0
  %3641 = vmatprep.subr.mxu0 0.0
  %3642 = vmatpush1.msra.mxu0 0.0
  %3643 = vmatprep.subr.mxu0 0.0
  %3644 = vmatpush1.msra.mxu0 0.0
  %3645 = vmatprep.subr.mxu0 0.0
  %3646 = vmatpush1.msra.mxu0 0.0
  %3647 = vmatprep.subr.mxu0 0.0
  %3648 = vmatpush1.msra.mxu0 0.0
  %3649 = vmatprep.subr.mxu0 0.0
  %3650 = vmatpush1.msra.mxu0 0.0
  %3651 = vmatprep.subr.mxu0 0.0
  %3652 = vmatpush1.msra.mxu0 0.0
  %3653 = vmatprep.subr.mxu0 0.0
  %3654 = vmatpush1.msra.mxu0 0.0
  %3655 = vmatprep.subr.mxu0 0.0
  %3656 = vmatpush1.msra.mxu0 0.0
  %3657 = vmatprep.subr.mxu0 0.0
  %3658 = vmatpush1.msra.mxu0 0.0
  %3659 = vmatprep.subr.mxu0 0.0
  %3660 = vmatpush1.msra.mxu0 0.0
  %3661 = vmatprep.subr.mxu0 0.0
  %3662 = vmatpush1.msra.mxu0 0.0
  %3663 = vmatprep.subr.mxu0 0.0
  %3664 = vmatpush1.msra.mxu0 0.0
  %3665 = vmatprep.subr.mxu0 0.0
  %3666 = vmatpush1.msra.mxu0 0.0
  %3667 = vmatprep.subr.mxu0 0.0
  %3668 = vmatpush1.msra.mxu0 0.0
  %3669 = vmatprep.subr.mxu0 0.0
  %3670 = vmatpush1.msra.mxu0 0.0
  %3671 = vmatprep.subr.mxu0 0.0
  %3672 = vmatpush1.msra.mxu0 0.0
  %3673 = vmatprep.subr.mxu0 0.0
  %3674 = vmatpush1.msra.mxu0 0.0
  %3675 = vmatprep.subr.mxu0 0.0
  %3676 = vmatpush1.msra.mxu0 0.0
  %3677 = vmatprep.subr.mxu0 0.0
  %3678 = vmatpush1.msra.mxu0 0.0
  %3679 = vmatprep.subr.mxu0 0.0
  %3680 = vmatpush1.msra.mxu0 0.0
  %3681 = vmatprep.subr.mxu0 0.0
  %3682 = vmatpush1.msra.mxu0 0.0
  %3683 = vmatprep.subr.mxu0 0.0
  %3684 = vmatpush1.msra.mxu0 0.0
  %3685 = vmatprep.subr.mxu0 0.0
  %3686 = vmatpush1.msra.mxu0 0.0
  %3687 = vmatprep.subr.mxu0 0.0
  %3688 = vmatpush1.msra.mxu0 0.0
  %3689 = vmatprep.subr.mxu0 0.0
  %3690 = vmatpush1.msra.mxu0 0.0
  %3691 = vmatprep.subr.mxu0 0.0
  %3692 = vmatpush1.msra.mxu0 0.0
  %3693 = vmatprep.mubr.f32.mxu0 0.0
  %v3694 = vand.u32 %v60, 4294901760
  %v3695 = vsub.f32 %v60, %v3694
  %v3696 = vand.u32 %v3695, 4294901760
  %v3697 = vsub.f32 %v3695, %v3696
  %v3698 = vand.u32 %v3697, 4294901760
  %3699 = vmatmul.mubr.f32.gmra.mrb[0].mxu0 %v3698
  %v3700 = vpop.f32.mrb[0].mxu0
  %v3701 = vadd.f32 0.0, %v3700
  %v3702 = vpop.f32.mrb[0].mxu0
  %3703 = vmatprep.mubr.f32.mxu0 0.0
  %v3704 = vand.u32 %v63, 4294901760
  %v3705 = vsub.f32 %v63, %v3704
  %v3706 = vand.u32 %v3705, 4294901760
  %v3707 = vsub.f32 %v3705, %v3706
  %v3708 = vand.u32 %v3707, 4294901760
  %3709 = vmatmul.mubr.f32.gmra.mrb[0].mxu0 %v3708
  %v3710 = vpop.f32.mrb[0].mxu0
  %v3711 = vadd.f32 0.0, %v3710
  %v3712 = vpop.f32.mrb[0].mxu0
  %3713 = vdwg.mxu0
  %3714 = vmatprep.subr.mxu0 0.0
  %v3715 = vand.u32 %v3625, 4294901760
  %v3716 = vsub.f32 %v3625, %v3715
  %v3717 = vand.u32 %v3716, 4294901760
  %v3718 = vsub.f32 %v3716, %v3717
  %v3719 = vand.u32 %v3718, 4294901760
  %3720 = vmatpush1.msra.mxu0 %v3719
  %3721 = vmatprep.subr.mxu0 0.0
  %v3722 = vand.u32 %v3626, 4294901760
  %v3723 = vsub.f32 %v3626, %v3722
  %v3724 = vand.u32 %v3723, 4294901760
  %v3725 = vsub.f32 %v3723, %v3724
  %v3726 = vand.u32 %v3725, 4294901760
  %3727 = vmatpush1.msra.mxu0 %v3726
  %3728 = vmatprep.subr.mxu0 0.0
  %3729 = vmatpush1.msra.mxu0 0.0
  %3730 = vmatprep.subr.mxu0 0.0
  %3731 = vmatpush1.msra.mxu0 0.0
  %3732 = vmatprep.subr.mxu0 0.0
  %3733 = vmatpush1.msra.mxu0 0.0
  %3734 = vmatprep.subr.mxu0 0.0
  %3735 = vmatpush1.msra.mxu0 0.0
  %3736 = vmatprep.subr.mxu0 0.0
  %3737 = vmatpush1.msra.mxu0 0.0
  %3738 = vmatprep.subr.mxu0 0.0
  %3739 = vmatpush1.msra.mxu0 0.0
  %3740 = vmatprep.subr.mxu0 0.0
  %3741 = vmatpush1.msra.mxu0 0.0
  %3742 = vmatprep.subr.mxu0 0.0
  %3743 = vmatpush1.msra.mxu0 0.0
  %3744 = vmatprep.subr.mxu0 0.0
  %3745 = vmatpush1.msra.mxu0 0.0
  %3746 = vmatprep.subr.mxu0 0.0
  %3747 = vmatpush1.msra.mxu0 0.0
  %3748 = vmatprep.subr.mxu0 0.0
  %3749 = vmatpush1.msra.mxu0 0.0
  %3750 = vmatprep.subr.mxu0 0.0
  %3751 = vmatpush1.msra.mxu0 0.0
  %3752 = vmatprep.subr.mxu0 0.0
  %3753 = vmatpush1.msra.mxu0 0.0
  %3754 = vmatprep.subr.mxu0 0.0
  %3755 = vmatpush1.msra.mxu0 0.0
  %3756 = vmatprep.subr.mxu0 0.0
  %3757 = vmatpush1.msra.mxu0 0.0
  %3758 = vmatprep.subr.mxu0 0.0
  %3759 = vmatpush1.msra.mxu0 0.0
  %3760 = vmatprep.subr.mxu0 0.0
  %3761 = vmatpush1.msra.mxu0 0.0
  %3762 = vmatprep.subr.mxu0 0.0
  %3763 = vmatpush1.msra.mxu0 0.0
  %3764 = vmatprep.subr.mxu0 0.0
  %3765 = vmatpush1.msra.mxu0 0.0
  %3766 = vmatprep.subr.mxu0 0.0
  %3767 = vmatpush1.msra.mxu0 0.0
  %3768 = vmatprep.subr.mxu0 0.0
  %3769 = vmatpush1.msra.mxu0 0.0
  %3770 = vmatprep.subr.mxu0 0.0
  %3771 = vmatpush1.msra.mxu0 0.0
  %3772 = vmatprep.subr.mxu0 0.0
  %3773 = vmatpush1.msra.mxu0 0.0
  %3774 = vmatprep.subr.mxu0 0.0
  %3775 = vmatpush1.msra.mxu0 0.0
  %3776 = vmatprep.subr.mxu0 0.0
  %3777 = vmatpush1.msra.mxu0 0.0
  %3778 = vmatprep.subr.mxu0 0.0
  %3779 = vmatpush1.msra.mxu0 0.0
  %3780 = vmatprep.subr.mxu0 0.0
  %3781 = vmatpush1.msra.mxu0 0.0
  %3782 = vmatprep.subr.mxu0 0.0
  %3783 = vmatpush1.msra.mxu0 0.0
  %3784 = vmatprep.subr.mxu0 0.0
  %3785 = vmatpush1.msra.mxu0 0.0
  %3786 = vmatprep.subr.mxu0 0.0
  %3787 = vmatpush1.msra.mxu0 0.0
  %3788 = vmatprep.mubr.f32.mxu0 0.0
  %v3789 = vand.u32 %v60, 4294901760
  %3790 = vmatmul.mubr.f32.gmra.mrb[0].mxu0 %v3789
  %v3791 = vpop.f32.mrb[0].mxu0
  %v3792 = vadd.f32 %v3701, %v3791
  %v3793 = vpop.f32.mrb[0].mxu0
  %3794 = vmatprep.mubr.f32.mxu0 0.0
  %v3795 = vand.u32 %v63, 4294901760
  %3796 = vmatmul.mubr.f32.gmra.mrb[0].mxu0 %v3795
  %v3797 = vpop.f32.mrb[0].mxu0
  %v3798 = vadd.f32 %v3711, %v3797
  %v3799 = vpop.f32.mrb[0].mxu0
  %3800 = vdwg.mxu0
  %3801 = vmatprep.subr.mxu0 0.0
  %v3802 = vand.u32 %v3625, 4294901760
  %v3803 = vsub.f32 %v3625, %v3802
  %3804 = vmatpush1.msra.mxu0 %v3803
  %3805 = vmatprep.subr.mxu0 0.0
  %v3806 = vand.u32 %v3626, 4294901760
  %v3807 = vsub.f32 %v3626, %v3806
  %3808 = vmatpush1.msra.mxu0 %v3807
  %3809 = vmatprep.subr.mxu0 0.0
  %3810 = vmatpush1.msra.mxu0 0.0
  %3811 = vmatprep.subr.mxu0 0.0
  %3812 = vmatpush1.msra.mxu0 0.0
  %3813 = vmatprep.subr.mxu0 0.0
  %3814 = vmatpush1.msra.mxu0 0.0
  %3815 = vmatprep.subr.mxu0 0.0
  %3816 = vmatpush1.msra.mxu0 0.0
  %3817 = vmatprep.subr.mxu0 0.0
  %3818 = vmatpush1.msra.mxu0 0.0
  %3819 = vmatprep.subr.mxu0 0.0
  %3820 = vmatpush1.msra.mxu0 0.0
  %3821 = vmatprep.subr.mxu0 0.0
  %3822 = vmatpush1.msra.mxu0 0.0
  %3823 = vmatprep.subr.mxu0 0.0
  %3824 = vmatpush1.msra.mxu0 0.0
  %3825 = vmatprep.subr.mxu0 0.0
  %3826 = vmatpush1.msra.mxu0 0.0
  %3827 = vmatprep.subr.mxu0 0.0
  %3828 = vmatpush1.msra.mxu0 0.0
  %3829 = vmatprep.subr.mxu0 0.0
  %3830 = vmatpush1.msra.mxu0 0.0
  %3831 = vmatprep.subr.mxu0 0.0
  %3832 = vmatpush1.msra.mxu0 0.0
  %3833 = vmatprep.subr.mxu0 0.0
  %3834 = vmatpush1.msra.mxu0 0.0
  %3835 = vmatprep.subr.mxu0 0.0
  %3836 = vmatpush1.msra.mxu0 0.0
  %3837 = vmatprep.subr.mxu0 0.0
  %3838 = vmatpush1.msra.mxu0 0.0
  %3839 = vmatprep.subr.mxu0 0.0
  %3840 = vmatpush1.msra.mxu0 0.0
  %3841 = vmatprep.subr.mxu0 0.0
  %3842 = vmatpush1.msra.mxu0 0.0
  %3843 = vmatprep.subr.mxu0 0.0
  %3844 = vmatpush1.msra.mxu0 0.0
  %3845 = vmatprep.subr.mxu0 0.0
  %3846 = vmatpush1.msra.mxu0 0.0
  %3847 = vmatprep.subr.mxu0 0.0
  %3848 = vmatpush1.msra.mxu0 0.0
  %3849 = vmatprep.subr.mxu0 0.0
  %3850 = vmatpush1.msra.mxu0 0.0
  %3851 = vmatprep.subr.mxu0 0.0
  %3852 = vmatpush1.msra.mxu0 0.0
  %3853 = vmatprep.subr.mxu0 0.0
  %3854 = vmatpush1.msra.mxu0 0.0
  %3855 = vmatprep.subr.mxu0 0.0
  %3856 = vmatpush1.msra.mxu0 0.0
  %3857 = vmatprep.subr.mxu0 0.0
  %3858 = vmatpush1.msra.mxu0 0.0
  %3859 = vmatprep.subr.mxu0 0.0
  %3860 = vmatpush1.msra.mxu0 0.0
  %3861 = vmatprep.subr.mxu0 0.0
  %3862 = vmatpush1.msra.mxu0 0.0
  %3863 = vmatprep.subr.mxu0 0.0
  %3864 = vmatpush1.msra.mxu0 0.0
  %3865 = vmatprep.subr.mxu0 0.0
  %3866 = vmatpush1.msra.mxu0 0.0
  %3867 = vmatprep.subr.mxu0 0.0
  %3868 = vmatpush1.msra.mxu0 0.0
  %3869 = vmatprep.mubr.f32.mxu0 0.0
  %v3870 = vand.u32 %v60, 4294901760
  %v3871 = vsub.f32 %v60, %v3870
  %3872 = vmatmul.mubr.f32.gmra.mrb[0].mxu0 %v3871
  %v3873 = vpop.f32.mrb[0].mxu0
  %v3874 = vadd.f32 %v3792, %v3873
  %v3875 = vpop.f32.mrb[0].mxu0
  %3876 = vmatprep.mubr.f32.mxu0 0.0
  %v3877 = vand.u32 %v63, 4294901760
  %v3878 = vsub.f32 %v63, %v3877
  %3879 = vmatmul.mubr.f32.gmra.mrb[0].mxu0 %v3878
  %v3880 = vpop.f32.mrb[0].mxu0
  %v3881 = vadd.f32 %v3798, %v3880
  %v3882 = vpop.f32.mrb[0].mxu0
  %3883 = vdwg.mxu0
  %3884 = vmatprep.subr.mxu0 0.0
  %v3885 = vand.u32 %v3625, 4294901760
  %3886 = vmatpush1.msra.mxu0 %v3885
  %3887 = vmatprep.subr.mxu0 0.0
  %v3888 = vand.u32 %v3626, 4294901760
  %3889 = vmatpush1.msra.mxu0 %v3888
  %3890 = vmatprep.subr.mxu0 0.0
  %3891 = vmatpush1.msra.mxu0 0.0
  %3892 = vmatprep.subr.mxu0 0.0
  %3893 = vmatpush1.msra.mxu0 0.0
  %3894 = vmatprep.subr.mxu0 0.0
  %3895 = vmatpush1.msra.mxu0 0.0
  %3896 = vmatprep.subr.mxu0 0.0
  %3897 = vmatpush1.msra.mxu0 0.0
  %3898 = vmatprep.subr.mxu0 0.0
  %3899 = vmatpush1.msra.mxu0 0.0
  %3900 = vmatprep.subr.mxu0 0.0
  %3901 = vmatpush1.msra.mxu0 0.0
  %3902 = vmatprep.subr.mxu0 0.0
  %3903 = vmatpush1.msra.mxu0 0.0
  %3904 = vmatprep.subr.mxu0 0.0
  %3905 = vmatpush1.msra.mxu0 0.0
  %3906 = vmatprep.subr.mxu0 0.0
  %3907 = vmatpush1.msra.mxu0 0.0
  %3908 = vmatprep.subr.mxu0 0.0
  %3909 = vmatpush1.msra.mxu0 0.0
  %3910 = vmatprep.subr.mxu0 0.0
  %3911 = vmatpush1.msra.mxu0 0.0
  %3912 = vmatprep.subr.mxu0 0.0
  %3913 = vmatpush1.msra.mxu0 0.0
  %3914 = vmatprep.subr.mxu0 0.0
  %3915 = vmatpush1.msra.mxu0 0.0
  %3916 = vmatprep.subr.mxu0 0.0
  %3917 = vmatpush1.msra.mxu0 0.0
  %3918 = vmatprep.subr.mxu0 0.0
  %3919 = vmatpush1.msra.mxu0 0.0
  %3920 = vmatprep.subr.mxu0 0.0
  %3921 = vmatpush1.msra.mxu0 0.0
  %3922 = vmatprep.subr.mxu0 0.0
  %3923 = vmatpush1.msra.mxu0 0.0
  %3924 = vmatprep.subr.mxu0 0.0
  %3925 = vmatpush1.msra.mxu0 0.0
  %3926 = vmatprep.subr.mxu0 0.0
  %3927 = vmatpush1.msra.mxu0 0.0
  %3928 = vmatprep.subr.mxu0 0.0
  %3929 = vmatpush1.msra.mxu0 0.0
  %3930 = vmatprep.subr.mxu0 0.0
  %3931 = vmatpush1.msra.mxu0 0.0
  %3932 = vmatprep.subr.mxu0 0.0
  %3933 = vmatpush1.msra.mxu0 0.0
  %3934 = vmatprep.subr.mxu0 0.0
  %3935 = vmatpush1.msra.mxu0 0.0
  %3936 = vmatprep.subr.mxu0 0.0
  %3937 = vmatpush1.msra.mxu0 0.0
  %3938 = vmatprep.subr.mxu0 0.0
  %3939 = vmatpush1.msra.mxu0 0.0
  %3940 = vmatprep.subr.mxu0 0.0
  %3941 = vmatpush1.msra.mxu0 0.0
  %3942 = vmatprep.subr.mxu0 0.0
  %3943 = vmatpush1.msra.mxu0 0.0
  %3944 = vmatprep.subr.mxu0 0.0
  %3945 = vmatpush1.msra.mxu0 0.0
  %3946 = vmatprep.subr.mxu0 0.0
  %3947 = vmatpush1.msra.mxu0 0.0
  %3948 = vmatprep.subr.mxu0 0.0
  %3949 = vmatpush1.msra.mxu0 0.0
  %3950 = vmatprep.mubr.f32.mxu0 0.0
  %v3951 = vand.u32 %v60, 4294901760
  %v3952 = vsub.f32 %v60, %v3951
  %v3953 = vand.u32 %v3952, 4294901760
  %3954 = vmatmul.mubr.f32.gmra.mrb[0].mxu0 %v3953
  %v3955 = vpop.f32.mrb[0].mxu0
  %v3956 = vadd.f32 %v3874, %v3955
  %v3957 = vpop.f32.mrb[0].mxu0
  %3958 = vmatprep.mubr.f32.mxu0 0.0
  %v3959 = vand.u32 %v63, 4294901760
  %v3960 = vsub.f32 %v63, %v3959
  %v3961 = vand.u32 %v3960, 4294901760
  %3962 = vmatmul.mubr.f32.gmra.mrb[0].mxu0 %v3961
  %v3963 = vpop.f32.mrb[0].mxu0
  %v3964 = vadd.f32 %v3881, %v3963
  %v3965 = vpop.f32.mrb[0].mxu0
  %3966 = vdwg.mxu0
  %3967 = vmatprep.subr.mxu0 0.0
  %v3968 = vand.u32 %v3625, 4294901760
  %v3969 = vsub.f32 %v3625, %v3968
  %v3970 = vand.u32 %v3969, 4294901760
  %3971 = vmatpush1.msra.mxu0 %v3970
  %3972 = vmatprep.subr.mxu0 0.0
  %v3973 = vand.u32 %v3626, 4294901760
  %v3974 = vsub.f32 %v3626, %v3973
  %v3975 = vand.u32 %v3974, 4294901760
  %3976 = vmatpush1.msra.mxu0 %v3975
  %3977 = vmatprep.subr.mxu0 0.0
  %3978 = vmatpush1.msra.mxu0 0.0
  %3979 = vmatprep.subr.mxu0 0.0
  %3980 = vmatpush1.msra.mxu0 0.0
  %3981 = vmatprep.subr.mxu0 0.0
  %3982 = vmatpush1.msra.mxu0 0.0
  %3983 = vmatprep.subr.mxu0 0.0
  %3984 = vmatpush1.msra.mxu0 0.0
  %3985 = vmatprep.subr.mxu0 0.0
  %3986 = vmatpush1.msra.mxu0 0.0
  %3987 = vmatprep.subr.mxu0 0.0
  %3988 = vmatpush1.msra.mxu0 0.0
  %3989 = vmatprep.subr.mxu0 0.0
  %3990 = vmatpush1.msra.mxu0 0.0
  %3991 = vmatprep.subr.mxu0 0.0
  %3992 = vmatpush1.msra.mxu0 0.0
  %3993 = vmatprep.subr.mxu0 0.0
  %3994 = vmatpush1.msra.mxu0 0.0
  %3995 = vmatprep.subr.mxu0 0.0
  %3996 = vmatpush1.msra.mxu0 0.0
  %3997 = vmatprep.subr.mxu0 0.0
  %3998 = vmatpush1.msra.mxu0 0.0
  %3999 = vmatprep.subr.mxu0 0.0
  %4000 = vmatpush1.msra.mxu0 0.0
  %4001 = vmatprep.subr.mxu0 0.0
  %4002 = vmatpush1.msra.mxu0 0.0
  %4003 = vmatprep.subr.mxu0 0.0
  %4004 = vmatpush1.msra.mxu0 0.0
  %4005 = vmatprep.subr.mxu0 0.0
  %4006 = vmatpush1.msra.mxu0 0.0
  %4007 = vmatprep.subr.mxu0 0.0
  %4008 = vmatpush1.msra.mxu0 0.0
  %4009 = vmatprep.subr.mxu0 0.0
  %4010 = vmatpush1.msra.mxu0 0.0
  %4011 = vmatprep.subr.mxu0 0.0
  %4012 = vmatpush1.msra.mxu0 0.0
  %4013 = vmatprep.subr.mxu0 0.0
  %4014 = vmatpush1.msra.mxu0 0.0
  %4015 = vmatprep.subr.mxu0 0.0
  %4016 = vmatpush1.msra.mxu0 0.0
  %4017 = vmatprep.subr.mxu0 0.0
  %4018 = vmatpush1.msra.mxu0 0.0
  %4019 = vmatprep.subr.mxu0 0.0
  %4020 = vmatpush1.msra.mxu0 0.0
  %4021 = vmatprep.subr.mxu0 0.0
  %4022 = vmatpush1.msra.mxu0 0.0
  %4023 = vmatprep.subr.mxu0 0.0
  %4024 = vmatpush1.msra.mxu0 0.0
  %4025 = vmatprep.subr.mxu0 0.0
  %4026 = vmatpush1.msra.mxu0 0.0
  %4027 = vmatprep.subr.mxu0 0.0
  %4028 = vmatpush1.msra.mxu0 0.0
  %4029 = vmatprep.subr.mxu0 0.0
  %4030 = vmatpush1.msra.mxu0 0.0
  %4031 = vmatprep.subr.mxu0 0.0
  %4032 = vmatpush1.msra.mxu0 0.0
  %4033 = vmatprep.subr.mxu0 0.0
  %4034 = vmatpush1.msra.mxu0 0.0
  %4035 = vmatprep.subr.mxu0 0.0
  %4036 = vmatpush1.msra.mxu0 0.0
  %4037 = vmatprep.mubr.f32.mxu0 0.0
  %v4038 = vand.u32 %v60, 4294901760
  %4039 = vmatmul.mubr.f32.gmra.mrb[0].mxu0 %v4038
  %v4040 = vpop.f32.mrb[0].mxu0
  %v4041 = vadd.f32 %v3956, %v4040
  %v4042 = vpop.f32.mrb[0].mxu0
  %4043 = vmatprep.mubr.f32.mxu0 0.0
  %v4044 = vand.u32 %v63, 4294901760
  %4045 = vmatmul.mubr.f32.gmra.mrb[0].mxu0 %v4044
  %v4046 = vpop.f32.mrb[0].mxu0
  %v4047 = vadd.f32 %v3964, %v4046
  %v4048 = vpop.f32.mrb[0].mxu0
  %4049 = vdwg.mxu0
  %4050 = vmatprep.subr.mxu0 0.0
  %v4051 = vand.u32 %v3625, 4294901760
  %4052 = vmatpush1.msra.mxu0 %v4051
  %4053 = vmatprep.subr.mxu0 0.0
  %v4054 = vand.u32 %v3626, 4294901760
  %4055 = vmatpush1.msra.mxu0 %v4054
  %4056 = vmatprep.subr.mxu0 0.0
  %4057 = vmatpush1.msra.mxu0 0.0
  %4058 = vmatprep.subr.mxu0 0.0
  %4059 = vmatpush1.msra.mxu0 0.0
  %4060 = vmatprep.subr.mxu0 0.0
  %4061 = vmatpush1.msra.mxu0 0.0
  %4062 = vmatprep.subr.mxu0 0.0
  %4063 = vmatpush1.msra.mxu0 0.0
  %4064 = vmatprep.subr.mxu0 0.0
  %4065 = vmatpush1.msra.mxu0 0.0
  %4066 = vmatprep.subr.mxu0 0.0
  %4067 = vmatpush1.msra.mxu0 0.0
  %4068 = vmatprep.subr.mxu0 0.0
  %4069 = vmatpush1.msra.mxu0 0.0
  %4070 = vmatprep.subr.mxu0 0.0
  %4071 = vmatpush1.msra.mxu0 0.0
  %4072 = vmatprep.subr.mxu0 0.0
  %4073 = vmatpush1.msra.mxu0 0.0
  %4074 = vmatprep.subr.mxu0 0.0
  %4075 = vmatpush1.msra.mxu0 0.0
  %4076 = vmatprep.subr.mxu0 0.0
  %4077 = vmatpush1.msra.mxu0 0.0
  %4078 = vmatprep.subr.mxu0 0.0
  %4079 = vmatpush1.msra.mxu0 0.0
  %4080 = vmatprep.subr.mxu0 0.0
  %4081 = vmatpush1.msra.mxu0 0.0
  %4082 = vmatprep.subr.mxu0 0.0
  %4083 = vmatpush1.msra.mxu0 0.0
  %4084 = vmatprep.subr.mxu0 0.0
  %4085 = vmatpush1.msra.mxu0 0.0
  %4086 = vmatprep.subr.mxu0 0.0
  %4087 = vmatpush1.msra.mxu0 0.0
  %4088 = vmatprep.subr.mxu0 0.0
  %4089 = vmatpush1.msra.mxu0 0.0
  %4090 = vmatprep.subr.mxu0 0.0
  %4091 = vmatpush1.msra.mxu0 0.0
  %4092 = vmatprep.subr.mxu0 0.0
  %4093 = vmatpush1.msra.mxu0 0.0
  %4094 = vmatprep.subr.mxu0 0.0
  %4095 = vmatpush1.msra.mxu0 0.0
  %4096 = vmatprep.subr.mxu0 0.0
  %4097 = vmatpush1.msra.mxu0 0.0
  %4098 = vmatprep.subr.mxu0 0.0
  %4099 = vmatpush1.msra.mxu0 0.0
  %4100 = vmatprep.subr.mxu0 0.0
  %4101 = vmatpush1.msra.mxu0 0.0
  %4102 = vmatprep.subr.mxu0 0.0
  %4103 = vmatpush1.msra.mxu0 0.0
  %4104 = vmatprep.subr.mxu0 0.0
  %4105 = vmatpush1.msra.mxu0 0.0
  %4106 = vmatprep.subr.mxu0 0.0
  %4107 = vmatpush1.msra.mxu0 0.0
  %4108 = vmatprep.subr.mxu0 0.0
  %4109 = vmatpush1.msra.mxu0 0.0
  %4110 = vmatprep.subr.mxu0 0.0
  %4111 = vmatpush1.msra.mxu0 0.0
  %4112 = vmatprep.subr.mxu0 0.0
  %4113 = vmatpush1.msra.mxu0 0.0
  %4114 = vmatprep.subr.mxu0 0.0
  %4115 = vmatpush1.msra.mxu0 0.0
  %4116 = vmatprep.mubr.f32.mxu0 0.0
  %v4117 = vand.u32 %v60, 4294901760
  %4118 = vmatmul.mubr.f32.gmra.mrb[0].mxu0 %v4117
  %v4119 = vpop.f32.mrb[0].mxu0
  %v4120 = vadd.f32 %v4041, %v4119
  %v4121 = vpop.f32.mrb[0].mxu0
  %4122 = vmatprep.mubr.f32.mxu0 0.0
  %v4123 = vand.u32 %v63, 4294901760
  %4124 = vmatmul.mubr.f32.gmra.mrb[0].mxu0 %v4123
  %v4125 = vpop.f32.mrb[0].mxu0
  %v4126 = vadd.f32 %v4047, %v4125
  %v4127 = vpop.f32.mrb[0].mxu0
  %4128 = vdwg.mxu0
  %4129 = vmatprep.subr.mxu0 0.0
  %v4130 = vand.u32 %v26, 4294901760
  %4131 = vmatpush1.msra.mxu0 %v4130
  %4132 = vmatprep.subr.mxu0 0.0
  %v4133 = vand.u32 %v27, 4294901760
  %4134 = vmatpush1.msra.mxu0 %v4133
  %4135 = vmatprep.subr.mxu0 0.0
  %v4136 = vand.u32 %v28, 4294901760
  %4137 = vmatpush1.msra.mxu0 %v4136
  %4138 = vmatprep.subr.mxu0 0.0
  %v4139 = vand.u32 %v29, 4294901760
  %4140 = vmatpush1.msra.mxu0 %v4139
  %4141 = vmatprep.subr.mxu0 0.0
  %v4142 = vand.u32 %v30, 4294901760
  %4143 = vmatpush1.msra.mxu0 %v4142
  %4144 = vmatprep.subr.mxu0 0.0
  %v4145 = vand.u32 %v31, 4294901760
  %4146 = vmatpush1.msra.mxu0 %v4145
  %4147 = vmatprep.subr.mxu0 0.0
  %v4148 = vand.u32 %v32, 4294901760
  %4149 = vmatpush1.msra.mxu0 %v4148
  %4150 = vmatprep.subr.mxu0 0.0
  %v4151 = vand.u32 %v33, 4294901760
  %4152 = vmatpush1.msra.mxu0 %v4151
  %4153 = vmatprep.subr.mxu0 0.0
  %v4154 = vand.u32 %v34, 4294901760
  %4155 = vmatpush1.msra.mxu0 %v4154
  %4156 = vmatprep.subr.mxu0 0.0
  %v4157 = vand.u32 %v35, 4294901760
  %4158 = vmatpush1.msra.mxu0 %v4157
  %4159 = vmatprep.subr.mxu0 0.0
  %v4160 = vand.u32 %v36, 4294901760
  %4161 = vmatpush1.msra.mxu0 %v4160
  %4162 = vmatprep.subr.mxu0 0.0
  %v4163 = vand.u32 %v37, 4294901760
  %4164 = vmatpush1.msra.mxu0 %v4163
  %4165 = vmatprep.subr.mxu0 0.0
  %v4166 = vand.u32 %v38, 4294901760
  %4167 = vmatpush1.msra.mxu0 %v4166
  %4168 = vmatprep.subr.mxu0 0.0
  %v4169 = vand.u32 %v39, 4294901760
  %4170 = vmatpush1.msra.mxu0 %v4169
  %4171 = vmatprep.subr.mxu0 0.0
  %v4172 = vand.u32 %v40, 4294901760
  %4173 = vmatpush1.msra.mxu0 %v4172
  %4174 = vmatprep.subr.mxu0 0.0
  %v4175 = vand.u32 %v41, 4294901760
  %4176 = vmatpush1.msra.mxu0 %v4175
  %4177 = vmatprep.subr.mxu0 0.0
  %4178 = vmatpush1.msra.mxu0 0.0
  %4179 = vmatprep.subr.mxu0 0.0
  %4180 = vmatpush1.msra.mxu0 0.0
  %4181 = vmatprep.subr.mxu0 0.0
  %4182 = vmatpush1.msra.mxu0 0.0
  %4183 = vmatprep.subr.mxu0 0.0
  %4184 = vmatpush1.msra.mxu0 0.0
  %4185 = vmatprep.subr.mxu0 0.0
  %4186 = vmatpush1.msra.mxu0 0.0
  %4187 = vmatprep.subr.mxu0 0.0
  %4188 = vmatpush1.msra.mxu0 0.0
  %4189 = vmatprep.subr.mxu0 0.0
  %4190 = vmatpush1.msra.mxu0 0.0
  %4191 = vmatprep.subr.mxu0 0.0
  %4192 = vmatpush1.msra.mxu0 0.0
  %4193 = vmatprep.subr.mxu0 0.0
  %4194 = vmatpush1.msra.mxu0 0.0
  %4195 = vmatprep.subr.mxu0 0.0
  %4196 = vmatpush1.msra.mxu0 0.0
  %4197 = vmatprep.subr.mxu0 0.0
  %4198 = vmatpush1.msra.mxu0 0.0
  %4199 = vmatprep.subr.mxu0 0.0
  %4200 = vmatpush1.msra.mxu0 0.0
  %4201 = vmatprep.subr.mxu0 0.0
  %4202 = vmatpush1.msra.mxu0 0.0
  %4203 = vmatprep.subr.mxu0 0.0
  %4204 = vmatpush1.msra.mxu0 0.0
  %4205 = vmatprep.subr.mxu0 0.0
  %4206 = vmatpush1.msra.mxu0 0.0
  %4207 = vmatprep.subr.mxu0 0.0
  %4208 = vmatpush1.msra.mxu0 0.0
  %4209 = vmatprep.mubr.f32.mxu0 0.0
  %v4210 = vand.u32 %v4120, 4294901760
  %v4211 = vsub.f32 %v4120, %v4210
  %v4212 = vand.u32 %v4211, 4294901760
  %v4213 = vsub.f32 %v4211, %v4212
  %v4214 = vand.u32 %v4213, 4294901760
  %4215 = vmatmul.mubr.f32.gmra.mrb[0].mxu0 %v4214
  %v4216 = vpop.f32.mrb[0].mxu0
  %v4217 = vadd.f32 0.0, %v4216
  %v4218 = vpop.f32.mrb[0].mxu0
  %4219 = vmatprep.mubr.f32.mxu0 0.0
  %v4220 = vand.u32 %v4126, 4294901760
  %v4221 = vsub.f32 %v4126, %v4220
  %v4222 = vand.u32 %v4221, 4294901760
  %v4223 = vsub.f32 %v4221, %v4222
  %v4224 = vand.u32 %v4223, 4294901760
  %4225 = vmatmul.mubr.f32.gmra.mrb[0].mxu0 %v4224
  %v4226 = vpop.f32.mrb[0].mxu0
  %v4227 = vadd.f32 0.0, %v4226
  %v4228 = vpop.f32.mrb[0].mxu0
  %4229 = vdwg.mxu0
  %4230 = vmatprep.subr.mxu0 0.0
  %v4231 = vand.u32 %v26, 4294901760
  %v4232 = vsub.f32 %v26, %v4231
  %v4233 = vand.u32 %v4232, 4294901760
  %v4234 = vsub.f32 %v4232, %v4233
  %v4235 = vand.u32 %v4234, 4294901760
  %4236 = vmatpush1.msra.mxu0 %v4235
  %4237 = vmatprep.subr.mxu0 0.0
  %v4238 = vand.u32 %v27, 4294901760
  %v4239 = vsub.f32 %v27, %v4238
  %v4240 = vand.u32 %v4239, 4294901760
  %v4241 = vsub.f32 %v4239, %v4240
  %v4242 = vand.u32 %v4241, 4294901760
  %4243 = vmatpush1.msra.mxu0 %v4242
  %4244 = vmatprep.subr.mxu0 0.0
  %v4245 = vand.u32 %v28, 4294901760
  %v4246 = vsub.f32 %v28, %v4245
  %v4247 = vand.u32 %v4246, 4294901760
  %v4248 = vsub.f32 %v4246, %v4247
  %v4249 = vand.u32 %v4248, 4294901760
  %4250 = vmatpush1.msra.mxu0 %v4249
  %4251 = vmatprep.subr.mxu0 0.0
  %v4252 = vand.u32 %v29, 4294901760
  %v4253 = vsub.f32 %v29, %v4252
  %v4254 = vand.u32 %v4253, 4294901760
  %v4255 = vsub.f32 %v4253, %v4254
  %v4256 = vand.u32 %v4255, 4294901760
  %4257 = vmatpush1.msra.mxu0 %v4256
  %4258 = vmatprep.subr.mxu0 0.0
  %v4259 = vand.u32 %v30, 4294901760
  %v4260 = vsub.f32 %v30, %v4259
  %v4261 = vand.u32 %v4260, 4294901760
  %v4262 = vsub.f32 %v4260, %v4261
  %v4263 = vand.u32 %v4262, 4294901760
  %4264 = vmatpush1.msra.mxu0 %v4263
  %4265 = vmatprep.subr.mxu0 0.0
  %v4266 = vand.u32 %v31, 4294901760
  %v4267 = vsub.f32 %v31, %v4266
  %v4268 = vand.u32 %v4267, 4294901760
  %v4269 = vsub.f32 %v4267, %v4268
  %v4270 = vand.u32 %v4269, 4294901760
  %4271 = vmatpush1.msra.mxu0 %v4270
  %4272 = vmatprep.subr.mxu0 0.0
  %v4273 = vand.u32 %v32, 4294901760
  %v4274 = vsub.f32 %v32, %v4273
  %v4275 = vand.u32 %v4274, 4294901760
  %v4276 = vsub.f32 %v4274, %v4275
  %v4277 = vand.u32 %v4276, 4294901760
  %4278 = vmatpush1.msra.mxu0 %v4277
  %4279 = vmatprep.subr.mxu0 0.0
  %v4280 = vand.u32 %v33, 4294901760
  %v4281 = vsub.f32 %v33, %v4280
  %v4282 = vand.u32 %v4281, 4294901760
  %v4283 = vsub.f32 %v4281, %v4282
  %v4284 = vand.u32 %v4283, 4294901760
  %4285 = vmatpush1.msra.mxu0 %v4284
  %4286 = vmatprep.subr.mxu0 0.0
  %v4287 = vand.u32 %v34, 4294901760
  %v4288 = vsub.f32 %v34, %v4287
  %v4289 = vand.u32 %v4288, 4294901760
  %v4290 = vsub.f32 %v4288, %v4289
  %v4291 = vand.u32 %v4290, 4294901760
  %4292 = vmatpush1.msra.mxu0 %v4291
  %4293 = vmatprep.subr.mxu0 0.0
  %v4294 = vand.u32 %v35, 4294901760
  %v4295 = vsub.f32 %v35, %v4294
  %v4296 = vand.u32 %v4295, 4294901760
  %v4297 = vsub.f32 %v4295, %v4296
  %v4298 = vand.u32 %v4297, 4294901760
  %4299 = vmatpush1.msra.mxu0 %v4298
  %4300 = vmatprep.subr.mxu0 0.0
  %v4301 = vand.u32 %v36, 4294901760
  %v4302 = vsub.f32 %v36, %v4301
  %v4303 = vand.u32 %v4302, 4294901760
  %v4304 = vsub.f32 %v4302, %v4303
  %v4305 = vand.u32 %v4304, 4294901760
  %4306 = vmatpush1.msra.mxu0 %v4305
  %4307 = vmatprep.subr.mxu0 0.0
  %v4308 = vand.u32 %v37, 4294901760
  %v4309 = vsub.f32 %v37, %v4308
  %v4310 = vand.u32 %v4309, 4294901760
  %v4311 = vsub.f32 %v4309, %v4310
  %v4312 = vand.u32 %v4311, 4294901760
  %4313 = vmatpush1.msra.mxu0 %v4312
  %4314 = vmatprep.subr.mxu0 0.0
  %v4315 = vand.u32 %v38, 4294901760
  %v4316 = vsub.f32 %v38, %v4315
  %v4317 = vand.u32 %v4316, 4294901760
  %v4318 = vsub.f32 %v4316, %v4317
  %v4319 = vand.u32 %v4318, 4294901760
  %4320 = vmatpush1.msra.mxu0 %v4319
  %4321 = vmatprep.subr.mxu0 0.0
  %v4322 = vand.u32 %v39, 4294901760
  %v4323 = vsub.f32 %v39, %v4322
  %v4324 = vand.u32 %v4323, 4294901760
  %v4325 = vsub.f32 %v4323, %v4324
  %v4326 = vand.u32 %v4325, 4294901760
  %4327 = vmatpush1.msra.mxu0 %v4326
  %4328 = vmatprep.subr.mxu0 0.0
  %v4329 = vand.u32 %v40, 4294901760
  %v4330 = vsub.f32 %v40, %v4329
  %v4331 = vand.u32 %v4330, 4294901760
  %v4332 = vsub.f32 %v4330, %v4331
  %v4333 = vand.u32 %v4332, 4294901760
  %4334 = vmatpush1.msra.mxu0 %v4333
  %4335 = vmatprep.subr.mxu0 0.0
  %v4336 = vand.u32 %v41, 4294901760
  %v4337 = vsub.f32 %v41, %v4336
  %v4338 = vand.u32 %v4337, 4294901760
  %v4339 = vsub.f32 %v4337, %v4338
  %v4340 = vand.u32 %v4339, 4294901760
  %4341 = vmatpush1.msra.mxu0 %v4340
  %4342 = vmatprep.subr.mxu0 0.0
  %4343 = vmatpush1.msra.mxu0 0.0
  %4344 = vmatprep.subr.mxu0 0.0
  %4345 = vmatpush1.msra.mxu0 0.0
  %4346 = vmatprep.subr.mxu0 0.0
  %4347 = vmatpush1.msra.mxu0 0.0
  %4348 = vmatprep.subr.mxu0 0.0
  %4349 = vmatpush1.msra.mxu0 0.0
  %4350 = vmatprep.subr.mxu0 0.0
  %4351 = vmatpush1.msra.mxu0 0.0
  %4352 = vmatprep.subr.mxu0 0.0
  %4353 = vmatpush1.msra.mxu0 0.0
  %4354 = vmatprep.subr.mxu0 0.0
  %4355 = vmatpush1.msra.mxu0 0.0
  %4356 = vmatprep.subr.mxu0 0.0
  %4357 = vmatpush1.msra.mxu0 0.0
  %4358 = vmatprep.subr.mxu0 0.0
  %4359 = vmatpush1.msra.mxu0 0.0
  %4360 = vmatprep.subr.mxu0 0.0
  %4361 = vmatpush1.msra.mxu0 0.0
  %4362 = vmatprep.subr.mxu0 0.0
  %4363 = vmatpush1.msra.mxu0 0.0
  %4364 = vmatprep.subr.mxu0 0.0
  %4365 = vmatpush1.msra.mxu0 0.0
  %4366 = vmatprep.subr.mxu0 0.0
  %4367 = vmatpush1.msra.mxu0 0.0
  %4368 = vmatprep.subr.mxu0 0.0
  %4369 = vmatpush1.msra.mxu0 0.0
  %4370 = vmatprep.subr.mxu0 0.0
  %4371 = vmatpush1.msra.mxu0 0.0
  %4372 = vmatprep.subr.mxu0 0.0
  %4373 = vmatpush1.msra.mxu0 0.0
  %4374 = vmatprep.mubr.f32.mxu0 0.0
  %v4375 = vand.u32 %v4120, 4294901760
  %4376 = vmatmul.mubr.f32.gmra.mrb[0].mxu0 %v4375
  %v4377 = vpop.f32.mrb[0].mxu0
  %v4378 = vadd.f32 %v4217, %v4377
  %v4379 = vpop.f32.mrb[0].mxu0
  %4380 = vmatprep.mubr.f32.mxu0 0.0
  %v4381 = vand.u32 %v4126, 4294901760
  %4382 = vmatmul.mubr.f32.gmra.mrb[0].mxu0 %v4381
  %v4383 = vpop.f32.mrb[0].mxu0
  %v4384 = vadd.f32 %v4227, %v4383
  %v4385 = vpop.f32.mrb[0].mxu0
  %4386 = vdwg.mxu0
  %4387 = vmatprep.subr.mxu0 0.0
  %v4388 = vand.u32 %v26, 4294901760
  %v4389 = vsub.f32 %v26, %v4388
  %4390 = vmatpush1.msra.mxu0 %v4389
  %4391 = vmatprep.subr.mxu0 0.0
  %v4392 = vand.u32 %v27, 4294901760
  %v4393 = vsub.f32 %v27, %v4392
  %4394 = vmatpush1.msra.mxu0 %v4393
  %4395 = vmatprep.subr.mxu0 0.0
  %v4396 = vand.u32 %v28, 4294901760
  %v4397 = vsub.f32 %v28, %v4396
  %4398 = vmatpush1.msra.mxu0 %v4397
  %4399 = vmatprep.subr.mxu0 0.0
  %v4400 = vand.u32 %v29, 4294901760
  %v4401 = vsub.f32 %v29, %v4400
  %4402 = vmatpush1.msra.mxu0 %v4401
  %4403 = vmatprep.subr.mxu0 0.0
  %v4404 = vand.u32 %v30, 4294901760
  %v4405 = vsub.f32 %v30, %v4404
  %4406 = vmatpush1.msra.mxu0 %v4405
  %4407 = vmatprep.subr.mxu0 0.0
  %v4408 = vand.u32 %v31, 4294901760
  %v4409 = vsub.f32 %v31, %v4408
  %4410 = vmatpush1.msra.mxu0 %v4409
  %4411 = vmatprep.subr.mxu0 0.0
  %v4412 = vand.u32 %v32, 4294901760
  %v4413 = vsub.f32 %v32, %v4412
  %4414 = vmatpush1.msra.mxu0 %v4413
  %4415 = vmatprep.subr.mxu0 0.0
  %v4416 = vand.u32 %v33, 4294901760
  %v4417 = vsub.f32 %v33, %v4416
  %4418 = vmatpush1.msra.mxu0 %v4417
  %4419 = vmatprep.subr.mxu0 0.0
  %v4420 = vand.u32 %v34, 4294901760
  %v4421 = vsub.f32 %v34, %v4420
  %4422 = vmatpush1.msra.mxu0 %v4421
  %4423 = vmatprep.subr.mxu0 0.0
  %v4424 = vand.u32 %v35, 4294901760
  %v4425 = vsub.f32 %v35, %v4424
  %4426 = vmatpush1.msra.mxu0 %v4425
  %4427 = vmatprep.subr.mxu0 0.0
  %v4428 = vand.u32 %v36, 4294901760
  %v4429 = vsub.f32 %v36, %v4428
  %4430 = vmatpush1.msra.mxu0 %v4429
  %4431 = vmatprep.subr.mxu0 0.0
  %v4432 = vand.u32 %v37, 4294901760
  %v4433 = vsub.f32 %v37, %v4432
  %4434 = vmatpush1.msra.mxu0 %v4433
  %4435 = vmatprep.subr.mxu0 0.0
  %v4436 = vand.u32 %v38, 4294901760
  %v4437 = vsub.f32 %v38, %v4436
  %4438 = vmatpush1.msra.mxu0 %v4437
  %4439 = vmatprep.subr.mxu0 0.0
  %v4440 = vand.u32 %v39, 4294901760
  %v4441 = vsub.f32 %v39, %v4440
  %4442 = vmatpush1.msra.mxu0 %v4441
  %4443 = vmatprep.subr.mxu0 0.0
  %v4444 = vand.u32 %v40, 4294901760
  %v4445 = vsub.f32 %v40, %v4444
  %4446 = vmatpush1.msra.mxu0 %v4445
  %4447 = vmatprep.subr.mxu0 0.0
  %v4448 = vand.u32 %v41, 4294901760
  %v4449 = vsub.f32 %v41, %v4448
  %4450 = vmatpush1.msra.mxu0 %v4449
  %4451 = vmatprep.subr.mxu0 0.0
  %4452 = vmatpush1.msra.mxu0 0.0
  %4453 = vmatprep.subr.mxu0 0.0
  %4454 = vmatpush1.msra.mxu0 0.0
  %4455 = vmatprep.subr.mxu0 0.0
  %4456 = vmatpush1.msra.mxu0 0.0
  %4457 = vmatprep.subr.mxu0 0.0
  %4458 = vmatpush1.msra.mxu0 0.0
  %4459 = vmatprep.subr.mxu0 0.0
  %4460 = vmatpush1.msra.mxu0 0.0
  %4461 = vmatprep.subr.mxu0 0.0
  %4462 = vmatpush1.msra.mxu0 0.0
  %4463 = vmatprep.subr.mxu0 0.0
  %4464 = vmatpush1.msra.mxu0 0.0
  %4465 = vmatprep.subr.mxu0 0.0
  %4466 = vmatpush1.msra.mxu0 0.0
  %4467 = vmatprep.subr.mxu0 0.0
  %4468 = vmatpush1.msra.mxu0 0.0
  %4469 = vmatprep.subr.mxu0 0.0
  %4470 = vmatpush1.msra.mxu0 0.0
  %4471 = vmatprep.subr.mxu0 0.0
  %4472 = vmatpush1.msra.mxu0 0.0
  %4473 = vmatprep.subr.mxu0 0.0
  %4474 = vmatpush1.msra.mxu0 0.0
  %4475 = vmatprep.subr.mxu0 0.0
  %4476 = vmatpush1.msra.mxu0 0.0
  %4477 = vmatprep.subr.mxu0 0.0
  %4478 = vmatpush1.msra.mxu0 0.0
  %4479 = vmatprep.subr.mxu0 0.0
  %4480 = vmatpush1.msra.mxu0 0.0
  %4481 = vmatprep.subr.mxu0 0.0
  %4482 = vmatpush1.msra.mxu0 0.0
  %4483 = vmatprep.mubr.f32.mxu0 0.0
  %v4484 = vand.u32 %v4120, 4294901760
  %v4485 = vsub.f32 %v4120, %v4484
  %4486 = vmatmul.mubr.f32.gmra.mrb[0].mxu0 %v4485
  %v4487 = vpop.f32.mrb[0].mxu0
  %v4488 = vadd.f32 %v4378, %v4487
  %v4489 = vpop.f32.mrb[0].mxu0
  %4490 = vmatprep.mubr.f32.mxu0 0.0
  %v4491 = vand.u32 %v4126, 4294901760
  %v4492 = vsub.f32 %v4126, %v4491
  %4493 = vmatmul.mubr.f32.gmra.mrb[0].mxu0 %v4492
  %v4494 = vpop.f32.mrb[0].mxu0
  %v4495 = vadd.f32 %v4384, %v4494
  %v4496 = vpop.f32.mrb[0].mxu0
  %4497 = vdwg.mxu0
  %4498 = vmatprep.subr.mxu0 0.0
  %v4499 = vand.u32 %v26, 4294901760
  %4500 = vmatpush1.msra.mxu0 %v4499
  %4501 = vmatprep.subr.mxu0 0.0
  %v4502 = vand.u32 %v27, 4294901760
  %4503 = vmatpush1.msra.mxu0 %v4502
  %4504 = vmatprep.subr.mxu0 0.0
  %v4505 = vand.u32 %v28, 4294901760
  %4506 = vmatpush1.msra.mxu0 %v4505
  %4507 = vmatprep.subr.mxu0 0.0
  %v4508 = vand.u32 %v29, 4294901760
  %4509 = vmatpush1.msra.mxu0 %v4508
  %4510 = vmatprep.subr.mxu0 0.0
  %v4511 = vand.u32 %v30, 4294901760
  %4512 = vmatpush1.msra.mxu0 %v4511
  %4513 = vmatprep.subr.mxu0 0.0
  %v4514 = vand.u32 %v31, 4294901760
  %4515 = vmatpush1.msra.mxu0 %v4514
  %4516 = vmatprep.subr.mxu0 0.0
  %v4517 = vand.u32 %v32, 4294901760
  %4518 = vmatpush1.msra.mxu0 %v4517
  %4519 = vmatprep.subr.mxu0 0.0
  %v4520 = vand.u32 %v33, 4294901760
  %4521 = vmatpush1.msra.mxu0 %v4520
  %4522 = vmatprep.subr.mxu0 0.0
  %v4523 = vand.u32 %v34, 4294901760
  %4524 = vmatpush1.msra.mxu0 %v4523
  %4525 = vmatprep.subr.mxu0 0.0
  %v4526 = vand.u32 %v35, 4294901760
  %4527 = vmatpush1.msra.mxu0 %v4526
  %4528 = vmatprep.subr.mxu0 0.0
  %v4529 = vand.u32 %v36, 4294901760
  %4530 = vmatpush1.msra.mxu0 %v4529
  %4531 = vmatprep.subr.mxu0 0.0
  %v4532 = vand.u32 %v37, 4294901760
  %4533 = vmatpush1.msra.mxu0 %v4532
  %4534 = vmatprep.subr.mxu0 0.0
  %v4535 = vand.u32 %v38, 4294901760
  %4536 = vmatpush1.msra.mxu0 %v4535
  %4537 = vmatprep.subr.mxu0 0.0
  %v4538 = vand.u32 %v39, 4294901760
  %4539 = vmatpush1.msra.mxu0 %v4538
  %4540 = vmatprep.subr.mxu0 0.0
  %v4541 = vand.u32 %v40, 4294901760
  %4542 = vmatpush1.msra.mxu0 %v4541
  %4543 = vmatprep.subr.mxu0 0.0
  %v4544 = vand.u32 %v41, 4294901760
  %4545 = vmatpush1.msra.mxu0 %v4544
  %4546 = vmatprep.subr.mxu0 0.0
  %4547 = vmatpush1.msra.mxu0 0.0
  %4548 = vmatprep.subr.mxu0 0.0
  %4549 = vmatpush1.msra.mxu0 0.0
  %4550 = vmatprep.subr.mxu0 0.0
  %4551 = vmatpush1.msra.mxu0 0.0
  %4552 = vmatprep.subr.mxu0 0.0
  %4553 = vmatpush1.msra.mxu0 0.0
  %4554 = vmatprep.subr.mxu0 0.0
  %4555 = vmatpush1.msra.mxu0 0.0
  %4556 = vmatprep.subr.mxu0 0.0
  %4557 = vmatpush1.msra.mxu0 0.0
  %4558 = vmatprep.subr.mxu0 0.0
  %4559 = vmatpush1.msra.mxu0 0.0
  %4560 = vmatprep.subr.mxu0 0.0
  %4561 = vmatpush1.msra.mxu0 0.0
  %4562 = vmatprep.subr.mxu0 0.0
  %4563 = vmatpush1.msra.mxu0 0.0
  %4564 = vmatprep.subr.mxu0 0.0
  %4565 = vmatpush1.msra.mxu0 0.0
  %4566 = vmatprep.subr.mxu0 0.0
  %4567 = vmatpush1.msra.mxu0 0.0
  %4568 = vmatprep.subr.mxu0 0.0
  %4569 = vmatpush1.msra.mxu0 0.0
  %4570 = vmatprep.subr.mxu0 0.0
  %4571 = vmatpush1.msra.mxu0 0.0
  %4572 = vmatprep.subr.mxu0 0.0
  %4573 = vmatpush1.msra.mxu0 0.0
  %4574 = vmatprep.subr.mxu0 0.0
  %4575 = vmatpush1.msra.mxu0 0.0
  %4576 = vmatprep.subr.mxu0 0.0
  %4577 = vmatpush1.msra.mxu0 0.0
  %4578 = vmatprep.mubr.f32.mxu0 0.0
  %v4579 = vand.u32 %v4120, 4294901760
  %v4580 = vsub.f32 %v4120, %v4579
  %v4581 = vand.u32 %v4580, 4294901760
  %4582 = vmatmul.mubr.f32.gmra.mrb[0].mxu0 %v4581
  %v4583 = vpop.f32.mrb[0].mxu0
  %v4584 = vadd.f32 %v4488, %v4583
  %v4585 = vpop.f32.mrb[0].mxu0
  %4586 = vmatprep.mubr.f32.mxu0 0.0
  %v4587 = vand.u32 %v4126, 4294901760
  %v4588 = vsub.f32 %v4126, %v4587
  %v4589 = vand.u32 %v4588, 4294901760
  %4590 = vmatmul.mubr.f32.gmra.mrb[0].mxu0 %v4589
  %v4591 = vpop.f32.mrb[0].mxu0
  %v4592 = vadd.f32 %v4495, %v4591
  %v4593 = vpop.f32.mrb[0].mxu0
  %4594 = vdwg.mxu0
  %4595 = vmatprep.subr.mxu0 0.0
  %v4596 = vand.u32 %v26, 4294901760
  %v4597 = vsub.f32 %v26, %v4596
  %v4598 = vand.u32 %v4597, 4294901760
  %4599 = vmatpush1.msra.mxu0 %v4598
  %4600 = vmatprep.subr.mxu0 0.0
  %v4601 = vand.u32 %v27, 4294901760
  %v4602 = vsub.f32 %v27, %v4601
  %v4603 = vand.u32 %v4602, 4294901760
  %4604 = vmatpush1.msra.mxu0 %v4603
  %4605 = vmatprep.subr.mxu0 0.0
  %v4606 = vand.u32 %v28, 4294901760
  %v4607 = vsub.f32 %v28, %v4606
  %v4608 = vand.u32 %v4607, 4294901760
  %4609 = vmatpush1.msra.mxu0 %v4608
  %4610 = vmatprep.subr.mxu0 0.0
  %v4611 = vand.u32 %v29, 4294901760
  %v4612 = vsub.f32 %v29, %v4611
  %v4613 = vand.u32 %v4612, 4294901760
  %4614 = vmatpush1.msra.mxu0 %v4613
  %4615 = vmatprep.subr.mxu0 0.0
  %v4616 = vand.u32 %v30, 4294901760
  %v4617 = vsub.f32 %v30, %v4616
  %v4618 = vand.u32 %v4617, 4294901760
  %4619 = vmatpush1.msra.mxu0 %v4618
  %4620 = vmatprep.subr.mxu0 0.0
  %v4621 = vand.u32 %v31, 4294901760
  %v4622 = vsub.f32 %v31, %v4621
  %v4623 = vand.u32 %v4622, 4294901760
  %4624 = vmatpush1.msra.mxu0 %v4623
  %4625 = vmatprep.subr.mxu0 0.0
  %v4626 = vand.u32 %v32, 4294901760
  %v4627 = vsub.f32 %v32, %v4626
  %v4628 = vand.u32 %v4627, 4294901760
  %4629 = vmatpush1.msra.mxu0 %v4628
  %4630 = vmatprep.subr.mxu0 0.0
  %v4631 = vand.u32 %v33, 4294901760
  %v4632 = vsub.f32 %v33, %v4631
  %v4633 = vand.u32 %v4632, 4294901760
  %4634 = vmatpush1.msra.mxu0 %v4633
  %4635 = vmatprep.subr.mxu0 0.0
  %v4636 = vand.u32 %v34, 4294901760
  %v4637 = vsub.f32 %v34, %v4636
  %v4638 = vand.u32 %v4637, 4294901760
  %4639 = vmatpush1.msra.mxu0 %v4638
  %4640 = vmatprep.subr.mxu0 0.0
  %v4641 = vand.u32 %v35, 4294901760
  %v4642 = vsub.f32 %v35, %v4641
  %v4643 = vand.u32 %v4642, 4294901760
  %4644 = vmatpush1.msra.mxu0 %v4643
  %4645 = vmatprep.subr.mxu0 0.0
  %v4646 = vand.u32 %v36, 4294901760
  %v4647 = vsub.f32 %v36, %v4646
  %v4648 = vand.u32 %v4647, 4294901760
  %4649 = vmatpush1.msra.mxu0 %v4648
  %4650 = vmatprep.subr.mxu0 0.0
  %v4651 = vand.u32 %v37, 4294901760
  %v4652 = vsub.f32 %v37, %v4651
  %v4653 = vand.u32 %v4652, 4294901760
  %4654 = vmatpush1.msra.mxu0 %v4653
  %4655 = vmatprep.subr.mxu0 0.0
  %v4656 = vand.u32 %v38, 4294901760
  %v4657 = vsub.f32 %v38, %v4656
  %v4658 = vand.u32 %v4657, 4294901760
  %4659 = vmatpush1.msra.mxu0 %v4658
  %4660 = vmatprep.subr.mxu0 0.0
  %v4661 = vand.u32 %v39, 4294901760
  %v4662 = vsub.f32 %v39, %v4661
  %v4663 = vand.u32 %v4662, 4294901760
  %4664 = vmatpush1.msra.mxu0 %v4663
  %4665 = vmatprep.subr.mxu0 0.0
  %v4666 = vand.u32 %v40, 4294901760
  %v4667 = vsub.f32 %v40, %v4666
  %v4668 = vand.u32 %v4667, 4294901760
  %4669 = vmatpush1.msra.mxu0 %v4668
  %4670 = vmatprep.subr.mxu0 0.0
  %v4671 = vand.u32 %v41, 4294901760
  %v4672 = vsub.f32 %v41, %v4671
  %v4673 = vand.u32 %v4672, 4294901760
  %4674 = vmatpush1.msra.mxu0 %v4673
  %4675 = vmatprep.subr.mxu0 0.0
  %4676 = vmatpush1.msra.mxu0 0.0
  %4677 = vmatprep.subr.mxu0 0.0
  %4678 = vmatpush1.msra.mxu0 0.0
  %4679 = vmatprep.subr.mxu0 0.0
  %4680 = vmatpush1.msra.mxu0 0.0
  %4681 = vmatprep.subr.mxu0 0.0
  %4682 = vmatpush1.msra.mxu0 0.0
  %4683 = vmatprep.subr.mxu0 0.0
  %4684 = vmatpush1.msra.mxu0 0.0
  %4685 = vmatprep.subr.mxu0 0.0
  %4686 = vmatpush1.msra.mxu0 0.0
  %4687 = vmatprep.subr.mxu0 0.0
  %4688 = vmatpush1.msra.mxu0 0.0
  %4689 = vmatprep.subr.mxu0 0.0
  %4690 = vmatpush1.msra.mxu0 0.0
  %4691 = vmatprep.subr.mxu0 0.0
  %4692 = vmatpush1.msra.mxu0 0.0
  %4693 = vmatprep.subr.mxu0 0.0
  %4694 = vmatpush1.msra.mxu0 0.0
  %4695 = vmatprep.subr.mxu0 0.0
  %4696 = vmatpush1.msra.mxu0 0.0
  %4697 = vmatprep.subr.mxu0 0.0
  %4698 = vmatpush1.msra.mxu0 0.0
  %4699 = vmatprep.subr.mxu0 0.0
  %4700 = vmatpush1.msra.mxu0 0.0
  %4701 = vmatprep.subr.mxu0 0.0
  %4702 = vmatpush1.msra.mxu0 0.0
  %4703 = vmatprep.subr.mxu0 0.0
  %4704 = vmatpush1.msra.mxu0 0.0
  %4705 = vmatprep.subr.mxu0 0.0
  %4706 = vmatpush1.msra.mxu0 0.0
  %4707 = vmatprep.mubr.f32.mxu0 0.0
  %v4708 = vand.u32 %v4120, 4294901760
  %4709 = vmatmul.mubr.f32.gmra.mrb[0].mxu0 %v4708
  %v4710 = vpop.f32.mrb[0].mxu0
  %v4711 = vadd.f32 %v4584, %v4710
  %v4712 = vpop.f32.mrb[0].mxu0
  %4713 = vmatprep.mubr.f32.mxu0 0.0
  %v4714 = vand.u32 %v4126, 4294901760
  %4715 = vmatmul.mubr.f32.gmra.mrb[0].mxu0 %v4714
  %v4716 = vpop.f32.mrb[0].mxu0
  %v4717 = vadd.f32 %v4592, %v4716
  %v4718 = vpop.f32.mrb[0].mxu0
  %4719 = vdwg.mxu0
  %4720 = vmatprep.subr.mxu0 0.0
  %v4721 = vand.u32 %v26, 4294901760
  %4722 = vmatpush1.msra.mxu0 %v4721
  %4723 = vmatprep.subr.mxu0 0.0
  %v4724 = vand.u32 %v27, 4294901760
  %4725 = vmatpush1.msra.mxu0 %v4724
  %4726 = vmatprep.subr.mxu0 0.0
  %v4727 = vand.u32 %v28, 4294901760
  %4728 = vmatpush1.msra.mxu0 %v4727
  %4729 = vmatprep.subr.mxu0 0.0
  %v4730 = vand.u32 %v29, 4294901760
  %4731 = vmatpush1.msra.mxu0 %v4730
  %4732 = vmatprep.subr.mxu0 0.0
  %v4733 = vand.u32 %v30, 4294901760
  %4734 = vmatpush1.msra.mxu0 %v4733
  %4735 = vmatprep.subr.mxu0 0.0
  %v4736 = vand.u32 %v31, 4294901760
  %4737 = vmatpush1.msra.mxu0 %v4736
  %4738 = vmatprep.subr.mxu0 0.0
  %v4739 = vand.u32 %v32, 4294901760
  %4740 = vmatpush1.msra.mxu0 %v4739
  %4741 = vmatprep.subr.mxu0 0.0
  %v4742 = vand.u32 %v33, 4294901760
  %4743 = vmatpush1.msra.mxu0 %v4742
  %4744 = vmatprep.subr.mxu0 0.0
  %v4745 = vand.u32 %v34, 4294901760
  %4746 = vmatpush1.msra.mxu0 %v4745
  %4747 = vmatprep.subr.mxu0 0.0
  %v4748 = vand.u32 %v35, 4294901760
  %4749 = vmatpush1.msra.mxu0 %v4748
  %4750 = vmatprep.subr.mxu0 0.0
  %v4751 = vand.u32 %v36, 4294901760
  %4752 = vmatpush1.msra.mxu0 %v4751
  %4753 = vmatprep.subr.mxu0 0.0
  %v4754 = vand.u32 %v37, 4294901760
  %4755 = vmatpush1.msra.mxu0 %v4754
  %4756 = vmatprep.subr.mxu0 0.0
  %v4757 = vand.u32 %v38, 4294901760
  %4758 = vmatpush1.msra.mxu0 %v4757
  %4759 = vmatprep.subr.mxu0 0.0
  %v4760 = vand.u32 %v39, 4294901760
  %4761 = vmatpush1.msra.mxu0 %v4760
  %4762 = vmatprep.subr.mxu0 0.0
  %v4763 = vand.u32 %v40, 4294901760
  %4764 = vmatpush1.msra.mxu0 %v4763
  %4765 = vmatprep.subr.mxu0 0.0
  %v4766 = vand.u32 %v41, 4294901760
  %4767 = vmatpush1.msra.mxu0 %v4766
  %4768 = vmatprep.subr.mxu0 0.0
  %4769 = vmatpush1.msra.mxu0 0.0
  %4770 = vmatprep.subr.mxu0 0.0
  %4771 = vmatpush1.msra.mxu0 0.0
  %4772 = vmatprep.subr.mxu0 0.0
  %4773 = vmatpush1.msra.mxu0 0.0
  %4774 = vmatprep.subr.mxu0 0.0
  %4775 = vmatpush1.msra.mxu0 0.0
  %4776 = vmatprep.subr.mxu0 0.0
  %4777 = vmatpush1.msra.mxu0 0.0
  %4778 = vmatprep.subr.mxu0 0.0
  %4779 = vmatpush1.msra.mxu0 0.0
  %4780 = vmatprep.subr.mxu0 0.0
  %4781 = vmatpush1.msra.mxu0 0.0
  %4782 = vmatprep.subr.mxu0 0.0
  %4783 = vmatpush1.msra.mxu0 0.0
  %4784 = vmatprep.subr.mxu0 0.0
  %4785 = vmatpush1.msra.mxu0 0.0
  %4786 = vmatprep.subr.mxu0 0.0
  %4787 = vmatpush1.msra.mxu0 0.0
  %4788 = vmatprep.subr.mxu0 0.0
  %4789 = vmatpush1.msra.mxu0 0.0
  %4790 = vmatprep.subr.mxu0 0.0
  %4791 = vmatpush1.msra.mxu0 0.0
  %4792 = vmatprep.subr.mxu0 0.0
  %4793 = vmatpush1.msra.mxu0 0.0
  %4794 = vmatprep.subr.mxu0 0.0
  %4795 = vmatpush1.msra.mxu0 0.0
  %4796 = vmatprep.subr.mxu0 0.0
  %4797 = vmatpush1.msra.mxu0 0.0
  %4798 = vmatprep.subr.mxu0 0.0
  %4799 = vmatpush1.msra.mxu0 0.0
  %4800 = vmatprep.mubr.f32.mxu0 0.0
  %v4801 = vand.u32 %v4120, 4294901760
  %4802 = vmatmul.mubr.f32.gmra.mrb[0].mxu0 %v4801
  %v4803 = vpop.f32.mrb[0].mxu0
  %v4804 = vadd.f32 %v4711, %v4803
  %v4805 = vpop.f32.mrb[0].mxu0
  %4806 = vmatprep.mubr.f32.mxu0 0.0
  %v4807 = vand.u32 %v4126, 4294901760
  %4808 = vmatmul.mubr.f32.gmra.mrb[0].mxu0 %v4807
  %v4809 = vpop.f32.mrb[0].mxu0
  %v4810 = vadd.f32 %v4717, %v4809
  %v4811 = vpop.f32.mrb[0].mxu0
  %4812 = vdwg.mxu0
  %v4813 = vmul.f32 %v20, %v22
  %v4814 = vmul.f32 %v21, %v23
  %4815 = vmatprep.subr.mxu0 0.0
  %v4816 = vand.u32 %v4813, 4294901760
  %4817 = vmatpush1.msra.mxu0 %v4816
  %4818 = vmatprep.subr.mxu0 0.0
  %v4819 = vand.u32 %v4814, 4294901760
  %4820 = vmatpush1.msra.mxu0 %v4819
  %4821 = vmatprep.subr.mxu0 0.0
  %4822 = vmatpush1.msra.mxu0 0.0
  %4823 = vmatprep.subr.mxu0 0.0
  %4824 = vmatpush1.msra.mxu0 0.0
  %4825 = vmatprep.subr.mxu0 0.0
  %4826 = vmatpush1.msra.mxu0 0.0
  %4827 = vmatprep.subr.mxu0 0.0
  %4828 = vmatpush1.msra.mxu0 0.0
  %4829 = vmatprep.subr.mxu0 0.0
  %4830 = vmatpush1.msra.mxu0 0.0
  %4831 = vmatprep.subr.mxu0 0.0
  %4832 = vmatpush1.msra.mxu0 0.0
  %4833 = vmatprep.subr.mxu0 0.0
  %4834 = vmatpush1.msra.mxu0 0.0
  %4835 = vmatprep.subr.mxu0 0.0
  %4836 = vmatpush1.msra.mxu0 0.0
  %4837 = vmatprep.subr.mxu0 0.0
  %4838 = vmatpush1.msra.mxu0 0.0
  %4839 = vmatprep.subr.mxu0 0.0
  %4840 = vmatpush1.msra.mxu0 0.0
  %4841 = vmatprep.subr.mxu0 0.0
  %4842 = vmatpush1.msra.mxu0 0.0
  %4843 = vmatprep.subr.mxu0 0.0
  %4844 = vmatpush1.msra.mxu0 0.0
  %4845 = vmatprep.subr.mxu0 0.0
  %4846 = vmatpush1.msra.mxu0 0.0
  %4847 = vmatprep.subr.mxu0 0.0
  %4848 = vmatpush1.msra.mxu0 0.0
  %4849 = vmatprep.subr.mxu0 0.0
  %4850 = vmatpush1.msra.mxu0 0.0
  %4851 = vmatprep.subr.mxu0 0.0
  %4852 = vmatpush1.msra.mxu0 0.0
  %4853 = vmatprep.subr.mxu0 0.0
  %4854 = vmatpush1.msra.mxu0 0.0
  %4855 = vmatprep.subr.mxu0 0.0
  %4856 = vmatpush1.msra.mxu0 0.0
  %4857 = vmatprep.subr.mxu0 0.0
  %4858 = vmatpush1.msra.mxu0 0.0
  %4859 = vmatprep.subr.mxu0 0.0
  %4860 = vmatpush1.msra.mxu0 0.0
  %4861 = vmatprep.subr.mxu0 0.0
  %4862 = vmatpush1.msra.mxu0 0.0
  %4863 = vmatprep.subr.mxu0 0.0
  %4864 = vmatpush1.msra.mxu0 0.0
  %4865 = vmatprep.subr.mxu0 0.0
  %4866 = vmatpush1.msra.mxu0 0.0
  %4867 = vmatprep.subr.mxu0 0.0
  %4868 = vmatpush1.msra.mxu0 0.0
  %4869 = vmatprep.subr.mxu0 0.0
  %4870 = vmatpush1.msra.mxu0 0.0
  %4871 = vmatprep.subr.mxu0 0.0
  %4872 = vmatpush1.msra.mxu0 0.0
  %4873 = vmatprep.subr.mxu0 0.0
  %4874 = vmatpush1.msra.mxu0 0.0
  %4875 = vmatprep.subr.mxu0 0.0
  %4876 = vmatpush1.msra.mxu0 0.0
  %4877 = vmatprep.subr.mxu0 0.0
  %4878 = vmatpush1.msra.mxu0 0.0
  %4879 = vmatprep.subr.mxu0 0.0
  %4880 = vmatpush1.msra.mxu0 0.0
  %4881 = vmatprep.mubr.f32.mxu0 0.0
  %v4882 = vand.u32 %v60, 4294901760
  %v4883 = vsub.f32 %v60, %v4882
  %v4884 = vand.u32 %v4883, 4294901760
  %v4885 = vsub.f32 %v4883, %v4884
  %v4886 = vand.u32 %v4885, 4294901760
  %4887 = vmatmul.mubr.f32.gmra.mrb[0].mxu0 %v4886
  %v4888 = vpop.f32.mrb[0].mxu0
  %v4889 = vadd.f32 0.0, %v4888
  %v4890 = vpop.f32.mrb[0].mxu0
  %4891 = vmatprep.mubr.f32.mxu0 0.0
  %v4892 = vand.u32 %v63, 4294901760
  %v4893 = vsub.f32 %v63, %v4892
  %v4894 = vand.u32 %v4893, 4294901760
  %v4895 = vsub.f32 %v4893, %v4894
  %v4896 = vand.u32 %v4895, 4294901760
  %4897 = vmatmul.mubr.f32.gmra.mrb[0].mxu0 %v4896
  %v4898 = vpop.f32.mrb[0].mxu0
  %v4899 = vadd.f32 0.0, %v4898
  %v4900 = vpop.f32.mrb[0].mxu0
  %4901 = vdwg.mxu0
  %4902 = vmatprep.subr.mxu0 0.0
  %v4903 = vand.u32 %v4813, 4294901760
  %v4904 = vsub.f32 %v4813, %v4903
  %v4905 = vand.u32 %v4904, 4294901760
  %v4906 = vsub.f32 %v4904, %v4905
  %v4907 = vand.u32 %v4906, 4294901760
  %4908 = vmatpush1.msra.mxu0 %v4907
  %4909 = vmatprep.subr.mxu0 0.0
  %v4910 = vand.u32 %v4814, 4294901760
  %v4911 = vsub.f32 %v4814, %v4910
  %v4912 = vand.u32 %v4911, 4294901760
  %v4913 = vsub.f32 %v4911, %v4912
  %v4914 = vand.u32 %v4913, 4294901760
  %4915 = vmatpush1.msra.mxu0 %v4914
  %4916 = vmatprep.subr.mxu0 0.0
  %4917 = vmatpush1.msra.mxu0 0.0
  %4918 = vmatprep.subr.mxu0 0.0
  %4919 = vmatpush1.msra.mxu0 0.0
  %4920 = vmatprep.subr.mxu0 0.0
  %4921 = vmatpush1.msra.mxu0 0.0
  %4922 = vmatprep.subr.mxu0 0.0
  %4923 = vmatpush1.msra.mxu0 0.0
  %4924 = vmatprep.subr.mxu0 0.0
  %4925 = vmatpush1.msra.mxu0 0.0
  %4926 = vmatprep.subr.mxu0 0.0
  %4927 = vmatpush1.msra.mxu0 0.0
  %4928 = vmatprep.subr.mxu0 0.0
  %4929 = vmatpush1.msra.mxu0 0.0
  %4930 = vmatprep.subr.mxu0 0.0
  %4931 = vmatpush1.msra.mxu0 0.0
  %4932 = vmatprep.subr.mxu0 0.0
  %4933 = vmatpush1.msra.mxu0 0.0
  %4934 = vmatprep.subr.mxu0 0.0
  %4935 = vmatpush1.msra.mxu0 0.0
  %4936 = vmatprep.subr.mxu0 0.0
  %4937 = vmatpush1.msra.mxu0 0.0
  %4938 = vmatprep.subr.mxu0 0.0
  %4939 = vmatpush1.msra.mxu0 0.0
  %4940 = vmatprep.subr.mxu0 0.0
  %4941 = vmatpush1.msra.mxu0 0.0
  %4942 = vmatprep.subr.mxu0 0.0
  %4943 = vmatpush1.msra.mxu0 0.0
  %4944 = vmatprep.subr.mxu0 0.0
  %4945 = vmatpush1.msra.mxu0 0.0
  %4946 = vmatprep.subr.mxu0 0.0
  %4947 = vmatpush1.msra.mxu0 0.0
  %4948 = vmatprep.subr.mxu0 0.0
  %4949 = vmatpush1.msra.mxu0 0.0
  %4950 = vmatprep.subr.mxu0 0.0
  %4951 = vmatpush1.msra.mxu0 0.0
  %4952 = vmatprep.subr.mxu0 0.0
  %4953 = vmatpush1.msra.mxu0 0.0
  %4954 = vmatprep.subr.mxu0 0.0
  %4955 = vmatpush1.msra.mxu0 0.0
  %4956 = vmatprep.subr.mxu0 0.0
  %4957 = vmatpush1.msra.mxu0 0.0
  %4958 = vmatprep.subr.mxu0 0.0
  %4959 = vmatpush1.msra.mxu0 0.0
  %4960 = vmatprep.subr.mxu0 0.0
  %4961 = vmatpush1.msra.mxu0 0.0
  %4962 = vmatprep.subr.mxu0 0.0
  %4963 = vmatpush1.msra.mxu0 0.0
  %4964 = vmatprep.subr.mxu0 0.0
  %4965 = vmatpush1.msra.mxu0 0.0
  %4966 = vmatprep.subr.mxu0 0.0
  %4967 = vmatpush1.msra.mxu0 0.0
  %4968 = vmatprep.subr.mxu0 0.0
  %4969 = vmatpush1.msra.mxu0 0.0
  %4970 = vmatprep.subr.mxu0 0.0
  %4971 = vmatpush1.msra.mxu0 0.0
  %4972 = vmatprep.subr.mxu0 0.0
  %4973 = vmatpush1.msra.mxu0 0.0
  %4974 = vmatprep.subr.mxu0 0.0
  %4975 = vmatpush1.msra.mxu0 0.0
  %4976 = vmatprep.mubr.f32.mxu0 0.0
  %v4977 = vand.u32 %v60, 4294901760
  %4978 = vmatmul.mubr.f32.gmra.mrb[0].mxu0 %v4977
  %v4979 = vpop.f32.mrb[0].mxu0
  %v4980 = vadd.f32 %v4889, %v4979
  %v4981 = vpop.f32.mrb[0].mxu0
  %4982 = vmatprep.mubr.f32.mxu0 0.0
  %v4983 = vand.u32 %v63, 4294901760
  %4984 = vmatmul.mubr.f32.gmra.mrb[0].mxu0 %v4983
  %v4985 = vpop.f32.mrb[0].mxu0
  %v4986 = vadd.f32 %v4899, %v4985
  %v4987 = vpop.f32.mrb[0].mxu0
  %4988 = vdwg.mxu0
  %4989 = vmatprep.subr.mxu0 0.0
  %v4990 = vand.u32 %v4813, 4294901760
  %v4991 = vsub.f32 %v4813, %v4990
  %4992 = vmatpush1.msra.mxu0 %v4991
  %4993 = vmatprep.subr.mxu0 0.0
  %v4994 = vand.u32 %v4814, 4294901760
  %v4995 = vsub.f32 %v4814, %v4994
  %4996 = vmatpush1.msra.mxu0 %v4995
  %4997 = vmatprep.subr.mxu0 0.0
  %4998 = vmatpush1.msra.mxu0 0.0
  %4999 = vmatprep.subr.mxu0 0.0
  %5000 = vmatpush1.msra.mxu0 0.0
  %5001 = vmatprep.subr.mxu0 0.0
  %5002 = vmatpush1.msra.mxu0 0.0
  %5003 = vmatprep.subr.mxu0 0.0
  %5004 = vmatpush1.msra.mxu0 0.0
  %5005 = vmatprep.subr.mxu0 0.0
  %5006 = vmatpush1.msra.mxu0 0.0
  %5007 = vmatprep.subr.mxu0 0.0
  %5008 = vmatpush1.msra.mxu0 0.0
  %5009 = vmatprep.subr.mxu0 0.0
  %5010 = vmatpush1.msra.mxu0 0.0
  %5011 = vmatprep.subr.mxu0 0.0
  %5012 = vmatpush1.msra.mxu0 0.0
  %5013 = vmatprep.subr.mxu0 0.0
  %5014 = vmatpush1.msra.mxu0 0.0
  %5015 = vmatprep.subr.mxu0 0.0
  %5016 = vmatpush1.msra.mxu0 0.0
  %5017 = vmatprep.subr.mxu0 0.0
  %5018 = vmatpush1.msra.mxu0 0.0
  %5019 = vmatprep.subr.mxu0 0.0
  %5020 = vmatpush1.msra.mxu0 0.0
  %5021 = vmatprep.subr.mxu0 0.0
  %5022 = vmatpush1.msra.mxu0 0.0
  %5023 = vmatprep.subr.mxu0 0.0
  %5024 = vmatpush1.msra.mxu0 0.0
  %5025 = vmatprep.subr.mxu0 0.0
  %5026 = vmatpush1.msra.mxu0 0.0
  %5027 = vmatprep.subr.mxu0 0.0
  %5028 = vmatpush1.msra.mxu0 0.0
  %5029 = vmatprep.subr.mxu0 0.0
  %5030 = vmatpush1.msra.mxu0 0.0
  %5031 = vmatprep.subr.mxu0 0.0
  %5032 = vmatpush1.msra.mxu0 0.0
  %5033 = vmatprep.subr.mxu0 0.0
  %5034 = vmatpush1.msra.mxu0 0.0
  %5035 = vmatprep.subr.mxu0 0.0
  %5036 = vmatpush1.msra.mxu0 0.0
  %5037 = vmatprep.subr.mxu0 0.0
  %5038 = vmatpush1.msra.mxu0 0.0
  %5039 = vmatprep.subr.mxu0 0.0
  %5040 = vmatpush1.msra.mxu0 0.0
  %5041 = vmatprep.subr.mxu0 0.0
  %5042 = vmatpush1.msra.mxu0 0.0
  %5043 = vmatprep.subr.mxu0 0.0
  %5044 = vmatpush1.msra.mxu0 0.0
  %5045 = vmatprep.subr.mxu0 0.0
  %5046 = vmatpush1.msra.mxu0 0.0
  %5047 = vmatprep.subr.mxu0 0.0
  %5048 = vmatpush1.msra.mxu0 0.0
  %5049 = vmatprep.subr.mxu0 0.0
  %5050 = vmatpush1.msra.mxu0 0.0
  %5051 = vmatprep.subr.mxu0 0.0
  %5052 = vmatpush1.msra.mxu0 0.0
  %5053 = vmatprep.subr.mxu0 0.0
  %5054 = vmatpush1.msra.mxu0 0.0
  %5055 = vmatprep.subr.mxu0 0.0
  %5056 = vmatpush1.msra.mxu0 0.0
  %5057 = vmatprep.mubr.f32.mxu0 0.0
  %v5058 = vand.u32 %v60, 4294901760
  %v5059 = vsub.f32 %v60, %v5058
  %5060 = vmatmul.mubr.f32.gmra.mrb[0].mxu0 %v5059
  %v5061 = vpop.f32.mrb[0].mxu0
  %v5062 = vadd.f32 %v4980, %v5061
  %v5063 = vpop.f32.mrb[0].mxu0
  %5064 = vmatprep.mubr.f32.mxu0 0.0
  %v5065 = vand.u32 %v63, 4294901760
  %v5066 = vsub.f32 %v63, %v5065
  %5067 = vmatmul.mubr.f32.gmra.mrb[0].mxu0 %v5066
  %v5068 = vpop.f32.mrb[0].mxu0
  %v5069 = vadd.f32 %v4986, %v5068
  %v5070 = vpop.f32.mrb[0].mxu0
  %5071 = vdwg.mxu0
  %5072 = vmatprep.subr.mxu0 0.0
  %v5073 = vand.u32 %v4813, 4294901760
  %5074 = vmatpush1.msra.mxu0 %v5073
  %5075 = vmatprep.subr.mxu0 0.0
  %v5076 = vand.u32 %v4814, 4294901760
  %5077 = vmatpush1.msra.mxu0 %v5076
  %5078 = vmatprep.subr.mxu0 0.0
  %5079 = vmatpush1.msra.mxu0 0.0
  %5080 = vmatprep.subr.mxu0 0.0
  %5081 = vmatpush1.msra.mxu0 0.0
  %5082 = vmatprep.subr.mxu0 0.0
  %5083 = vmatpush1.msra.mxu0 0.0
  %5084 = vmatprep.subr.mxu0 0.0
  %5085 = vmatpush1.msra.mxu0 0.0
  %5086 = vmatprep.subr.mxu0 0.0
  %5087 = vmatpush1.msra.mxu0 0.0
  %5088 = vmatprep.subr.mxu0 0.0
  %5089 = vmatpush1.msra.mxu0 0.0
  %5090 = vmatprep.subr.mxu0 0.0
  %5091 = vmatpush1.msra.mxu0 0.0
  %5092 = vmatprep.subr.mxu0 0.0
  %5093 = vmatpush1.msra.mxu0 0.0
  %5094 = vmatprep.subr.mxu0 0.0
  %5095 = vmatpush1.msra.mxu0 0.0
  %5096 = vmatprep.subr.mxu0 0.0
  %5097 = vmatpush1.msra.mxu0 0.0
  %5098 = vmatprep.subr.mxu0 0.0
  %5099 = vmatpush1.msra.mxu0 0.0
  %5100 = vmatprep.subr.mxu0 0.0
  %5101 = vmatpush1.msra.mxu0 0.0
  %5102 = vmatprep.subr.mxu0 0.0
  %5103 = vmatpush1.msra.mxu0 0.0
  %5104 = vmatprep.subr.mxu0 0.0
  %5105 = vmatpush1.msra.mxu0 0.0
  %5106 = vmatprep.subr.mxu0 0.0
  %5107 = vmatpush1.msra.mxu0 0.0
  %5108 = vmatprep.subr.mxu0 0.0
  %5109 = vmatpush1.msra.mxu0 0.0
  %5110 = vmatprep.subr.mxu0 0.0
  %5111 = vmatpush1.msra.mxu0 0.0
  %5112 = vmatprep.subr.mxu0 0.0
  %5113 = vmatpush1.msra.mxu0 0.0
  %5114 = vmatprep.subr.mxu0 0.0
  %5115 = vmatpush1.msra.mxu0 0.0
  %5116 = vmatprep.subr.mxu0 0.0
  %5117 = vmatpush1.msra.mxu0 0.0
  %5118 = vmatprep.subr.mxu0 0.0
  %5119 = vmatpush1.msra.mxu0 0.0
  %5120 = vmatprep.subr.mxu0 0.0
  %5121 = vmatpush1.msra.mxu0 0.0
  %5122 = vmatprep.subr.mxu0 0.0
  %5123 = vmatpush1.msra.mxu0 0.0
  %5124 = vmatprep.subr.mxu0 0.0
  %5125 = vmatpush1.msra.mxu0 0.0
  %5126 = vmatprep.subr.mxu0 0.0
  %5127 = vmatpush1.msra.mxu0 0.0
  %5128 = vmatprep.subr.mxu0 0.0
  %5129 = vmatpush1.msra.mxu0 0.0
  %5130 = vmatprep.subr.mxu0 0.0
  %5131 = vmatpush1.msra.mxu0 0.0
  %5132 = vmatprep.subr.mxu0 0.0
  %5133 = vmatpush1.msra.mxu0 0.0
  %5134 = vmatprep.subr.mxu0 0.0
  %5135 = vmatpush1.msra.mxu0 0.0
  %5136 = vmatprep.subr.mxu0 0.0
  %5137 = vmatpush1.msra.mxu0 0.0
  %5138 = vmatprep.mubr.f32.mxu0 0.0
  %v5139 = vand.u32 %v60, 4294901760
  %v5140 = vsub.f32 %v60, %v5139
  %v5141 = vand.u32 %v5140, 4294901760
  %5142 = vmatmul.mubr.f32.gmra.mrb[0].mxu0 %v5141
  %v5143 = vpop.f32.mrb[0].mxu0
  %v5144 = vadd.f32 %v5062, %v5143
  %v5145 = vpop.f32.mrb[0].mxu0
  %5146 = vmatprep.mubr.f32.mxu0 0.0
  %v5147 = vand.u32 %v63, 4294901760
  %v5148 = vsub.f32 %v63, %v5147
  %v5149 = vand.u32 %v5148, 4294901760
  %5150 = vmatmul.mubr.f32.gmra.mrb[0].mxu0 %v5149
  %v5151 = vpop.f32.mrb[0].mxu0
  %v5152 = vadd.f32 %v5069, %v5151
  %v5153 = vpop.f32.mrb[0].mxu0
  %5154 = vdwg.mxu0
  %5155 = vmatprep.subr.mxu0 0.0
  %v5156 = vand.u32 %v4813, 4294901760
  %v5157 = vsub.f32 %v4813, %v5156
  %v5158 = vand.u32 %v5157, 4294901760
  %5159 = vmatpush1.msra.mxu0 %v5158
  %5160 = vmatprep.subr.mxu0 0.0
  %v5161 = vand.u32 %v4814, 4294901760
  %v5162 = vsub.f32 %v4814, %v5161
  %v5163 = vand.u32 %v5162, 4294901760
  %5164 = vmatpush1.msra.mxu0 %v5163
  %5165 = vmatprep.subr.mxu0 0.0
  %5166 = vmatpush1.msra.mxu0 0.0
  %5167 = vmatprep.subr.mxu0 0.0
  %5168 = vmatpush1.msra.mxu0 0.0
  %5169 = vmatprep.subr.mxu0 0.0
  %5170 = vmatpush1.msra.mxu0 0.0
  %5171 = vmatprep.subr.mxu0 0.0
  %5172 = vmatpush1.msra.mxu0 0.0
  %5173 = vmatprep.subr.mxu0 0.0
  %5174 = vmatpush1.msra.mxu0 0.0
  %5175 = vmatprep.subr.mxu0 0.0
  %5176 = vmatpush1.msra.mxu0 0.0
  %5177 = vmatprep.subr.mxu0 0.0
  %5178 = vmatpush1.msra.mxu0 0.0
  %5179 = vmatprep.subr.mxu0 0.0
  %5180 = vmatpush1.msra.mxu0 0.0
  %5181 = vmatprep.subr.mxu0 0.0
  %5182 = vmatpush1.msra.mxu0 0.0
  %5183 = vmatprep.subr.mxu0 0.0
  %5184 = vmatpush1.msra.mxu0 0.0
  %5185 = vmatprep.subr.mxu0 0.0
  %5186 = vmatpush1.msra.mxu0 0.0
  %5187 = vmatprep.subr.mxu0 0.0
  %5188 = vmatpush1.msra.mxu0 0.0
  %5189 = vmatprep.subr.mxu0 0.0
  %5190 = vmatpush1.msra.mxu0 0.0
  %5191 = vmatprep.subr.mxu0 0.0
  %5192 = vmatpush1.msra.mxu0 0.0
  %5193 = vmatprep.subr.mxu0 0.0
  %5194 = vmatpush1.msra.mxu0 0.0
  %5195 = vmatprep.subr.mxu0 0.0
  %5196 = vmatpush1.msra.mxu0 0.0
  %5197 = vmatprep.subr.mxu0 0.0
  %5198 = vmatpush1.msra.mxu0 0.0
  %5199 = vmatprep.subr.mxu0 0.0
  %5200 = vmatpush1.msra.mxu0 0.0
  %5201 = vmatprep.subr.mxu0 0.0
  %5202 = vmatpush1.msra.mxu0 0.0
  %5203 = vmatprep.subr.mxu0 0.0
  %5204 = vmatpush1.msra.mxu0 0.0
  %5205 = vmatprep.subr.mxu0 0.0
  %5206 = vmatpush1.msra.mxu0 0.0
  %5207 = vmatprep.subr.mxu0 0.0
  %5208 = vmatpush1.msra.mxu0 0.0
  %5209 = vmatprep.subr.mxu0 0.0
  %5210 = vmatpush1.msra.mxu0 0.0
  %5211 = vmatprep.subr.mxu0 0.0
  %5212 = vmatpush1.msra.mxu0 0.0
  %5213 = vmatprep.subr.mxu0 0.0
  %5214 = vmatpush1.msra.mxu0 0.0
  %5215 = vmatprep.subr.mxu0 0.0
  %5216 = vmatpush1.msra.mxu0 0.0
  %5217 = vmatprep.subr.mxu0 0.0
  %5218 = vmatpush1.msra.mxu0 0.0
  %5219 = vmatprep.subr.mxu0 0.0
  %5220 = vmatpush1.msra.mxu0 0.0
  %5221 = vmatprep.subr.mxu0 0.0
  %5222 = vmatpush1.msra.mxu0 0.0
  %5223 = vmatprep.subr.mxu0 0.0
  %5224 = vmatpush1.msra.mxu0 0.0
  %5225 = vmatprep.mubr.f32.mxu0 0.0
  %v5226 = vand.u32 %v60, 4294901760
  %5227 = vmatmul.mubr.f32.gmra.mrb[0].mxu0 %v5226
  %v5228 = vpop.f32.mrb[0].mxu0
  %v5229 = vadd.f32 %v5144, %v5228
  %v5230 = vpop.f32.mrb[0].mxu0
  %5231 = vmatprep.mubr.f32.mxu0 0.0
  %v5232 = vand.u32 %v63, 4294901760
  %5233 = vmatmul.mubr.f32.gmra.mrb[0].mxu0 %v5232
  %v5234 = vpop.f32.mrb[0].mxu0
  %v5235 = vadd.f32 %v5152, %v5234
  %v5236 = vpop.f32.mrb[0].mxu0
  %5237 = vdwg.mxu0
  %5238 = vmatprep.subr.mxu0 0.0
  %v5239 = vand.u32 %v4813, 4294901760
  %5240 = vmatpush1.msra.mxu0 %v5239
  %5241 = vmatprep.subr.mxu0 0.0
  %v5242 = vand.u32 %v4814, 4294901760
  %5243 = vmatpush1.msra.mxu0 %v5242
  %5244 = vmatprep.subr.mxu0 0.0
  %5245 = vmatpush1.msra.mxu0 0.0
  %5246 = vmatprep.subr.mxu0 0.0
  %5247 = vmatpush1.msra.mxu0 0.0
  %5248 = vmatprep.subr.mxu0 0.0
  %5249 = vmatpush1.msra.mxu0 0.0
  %5250 = vmatprep.subr.mxu0 0.0
  %5251 = vmatpush1.msra.mxu0 0.0
  %5252 = vmatprep.subr.mxu0 0.0
  %5253 = vmatpush1.msra.mxu0 0.0
  %5254 = vmatprep.subr.mxu0 0.0
  %5255 = vmatpush1.msra.mxu0 0.0
  %5256 = vmatprep.subr.mxu0 0.0
  %5257 = vmatpush1.msra.mxu0 0.0
  %5258 = vmatprep.subr.mxu0 0.0
  %5259 = vmatpush1.msra.mxu0 0.0
  %5260 = vmatprep.subr.mxu0 0.0
  %5261 = vmatpush1.msra.mxu0 0.0
  %5262 = vmatprep.subr.mxu0 0.0
  %5263 = vmatpush1.msra.mxu0 0.0
  %5264 = vmatprep.subr.mxu0 0.0
  %5265 = vmatpush1.msra.mxu0 0.0
  %5266 = vmatprep.subr.mxu0 0.0
  %5267 = vmatpush1.msra.mxu0 0.0
  %5268 = vmatprep.subr.mxu0 0.0
  %5269 = vmatpush1.msra.mxu0 0.0
  %5270 = vmatprep.subr.mxu0 0.0
  %5271 = vmatpush1.msra.mxu0 0.0
  %5272 = vmatprep.subr.mxu0 0.0
  %5273 = vmatpush1.msra.mxu0 0.0
  %5274 = vmatprep.subr.mxu0 0.0
  %5275 = vmatpush1.msra.mxu0 0.0
  %5276 = vmatprep.subr.mxu0 0.0
  %5277 = vmatpush1.msra.mxu0 0.0
  %5278 = vmatprep.subr.mxu0 0.0
  %5279 = vmatpush1.msra.mxu0 0.0
  %5280 = vmatprep.subr.mxu0 0.0
  %5281 = vmatpush1.msra.mxu0 0.0
  %5282 = vmatprep.subr.mxu0 0.0
  %5283 = vmatpush1.msra.mxu0 0.0
  %5284 = vmatprep.subr.mxu0 0.0
  %5285 = vmatpush1.msra.mxu0 0.0
  %5286 = vmatprep.subr.mxu0 0.0
  %5287 = vmatpush1.msra.mxu0 0.0
  %5288 = vmatprep.subr.mxu0 0.0
  %5289 = vmatpush1.msra.mxu0 0.0
  %5290 = vmatprep.subr.mxu0 0.0
  %5291 = vmatpush1.msra.mxu0 0.0
  %5292 = vmatprep.subr.mxu0 0.0
  %5293 = vmatpush1.msra.mxu0 0.0
  %5294 = vmatprep.subr.mxu0 0.0
  %5295 = vmatpush1.msra.mxu0 0.0
  %5296 = vmatprep.subr.mxu0 0.0
  %5297 = vmatpush1.msra.mxu0 0.0
  %5298 = vmatprep.subr.mxu0 0.0
  %5299 = vmatpush1.msra.mxu0 0.0
  %5300 = vmatprep.subr.mxu0 0.0
  %5301 = vmatpush1.msra.mxu0 0.0
  %5302 = vmatprep.subr.mxu0 0.0
  %5303 = vmatpush1.msra.mxu0 0.0
  %5304 = vmatprep.mubr.f32.mxu0 0.0
  %v5305 = vand.u32 %v60, 4294901760
  %5306 = vmatmul.mubr.f32.gmra.mrb[0].mxu0 %v5305
  %v5307 = vpop.f32.mrb[0].mxu0
  %v5308 = vadd.f32 %v5229, %v5307
  %v5309 = vpop.f32.mrb[0].mxu0
  %5310 = vmatprep.mubr.f32.mxu0 0.0
  %v5311 = vand.u32 %v63, 4294901760
  %5312 = vmatmul.mubr.f32.gmra.mrb[0].mxu0 %v5311
  %v5313 = vpop.f32.mrb[0].mxu0
  %v5314 = vadd.f32 %v5235, %v5313
  %v5315 = vpop.f32.mrb[0].mxu0
  %5316 = vdwg.mxu0
  %5317 = vmatprep.subr.mxu0 0.0
  %v5318 = vand.u32 %v26, 4294901760
  %5319 = vmatpush1.msra.mxu0 %v5318
  %5320 = vmatprep.subr.mxu0 0.0
  %v5321 = vand.u32 %v27, 4294901760
  %5322 = vmatpush1.msra.mxu0 %v5321
  %5323 = vmatprep.subr.mxu0 0.0
  %v5324 = vand.u32 %v28, 4294901760
  %5325 = vmatpush1.msra.mxu0 %v5324
  %5326 = vmatprep.subr.mxu0 0.0
  %v5327 = vand.u32 %v29, 4294901760
  %5328 = vmatpush1.msra.mxu0 %v5327
  %5329 = vmatprep.subr.mxu0 0.0
  %v5330 = vand.u32 %v30, 4294901760
  %5331 = vmatpush1.msra.mxu0 %v5330
  %5332 = vmatprep.subr.mxu0 0.0
  %v5333 = vand.u32 %v31, 4294901760
  %5334 = vmatpush1.msra.mxu0 %v5333
  %5335 = vmatprep.subr.mxu0 0.0
  %v5336 = vand.u32 %v32, 4294901760
  %5337 = vmatpush1.msra.mxu0 %v5336
  %5338 = vmatprep.subr.mxu0 0.0
  %v5339 = vand.u32 %v33, 4294901760
  %5340 = vmatpush1.msra.mxu0 %v5339
  %5341 = vmatprep.subr.mxu0 0.0
  %v5342 = vand.u32 %v34, 4294901760
  %5343 = vmatpush1.msra.mxu0 %v5342
  %5344 = vmatprep.subr.mxu0 0.0
  %v5345 = vand.u32 %v35, 4294901760
  %5346 = vmatpush1.msra.mxu0 %v5345
  %5347 = vmatprep.subr.mxu0 0.0
  %v5348 = vand.u32 %v36, 4294901760
  %5349 = vmatpush1.msra.mxu0 %v5348
  %5350 = vmatprep.subr.mxu0 0.0
  %v5351 = vand.u32 %v37, 4294901760
  %5352 = vmatpush1.msra.mxu0 %v5351
  %5353 = vmatprep.subr.mxu0 0.0
  %v5354 = vand.u32 %v38, 4294901760
  %5355 = vmatpush1.msra.mxu0 %v5354
  %5356 = vmatprep.subr.mxu0 0.0
  %v5357 = vand.u32 %v39, 4294901760
  %5358 = vmatpush1.msra.mxu0 %v5357
  %5359 = vmatprep.subr.mxu0 0.0
  %v5360 = vand.u32 %v40, 4294901760
  %5361 = vmatpush1.msra.mxu0 %v5360
  %5362 = vmatprep.subr.mxu0 0.0
  %v5363 = vand.u32 %v41, 4294901760
  %5364 = vmatpush1.msra.mxu0 %v5363
  %5365 = vmatprep.subr.mxu0 0.0
  %5366 = vmatpush1.msra.mxu0 0.0
  %5367 = vmatprep.subr.mxu0 0.0
  %5368 = vmatpush1.msra.mxu0 0.0
  %5369 = vmatprep.subr.mxu0 0.0
  %5370 = vmatpush1.msra.mxu0 0.0
  %5371 = vmatprep.subr.mxu0 0.0
  %5372 = vmatpush1.msra.mxu0 0.0
  %5373 = vmatprep.subr.mxu0 0.0
  %5374 = vmatpush1.msra.mxu0 0.0
  %5375 = vmatprep.subr.mxu0 0.0
  %5376 = vmatpush1.msra.mxu0 0.0
  %5377 = vmatprep.subr.mxu0 0.0
  %5378 = vmatpush1.msra.mxu0 0.0
  %5379 = vmatprep.subr.mxu0 0.0
  %5380 = vmatpush1.msra.mxu0 0.0
  %5381 = vmatprep.subr.mxu0 0.0
  %5382 = vmatpush1.msra.mxu0 0.0
  %5383 = vmatprep.subr.mxu0 0.0
  %5384 = vmatpush1.msra.mxu0 0.0
  %5385 = vmatprep.subr.mxu0 0.0
  %5386 = vmatpush1.msra.mxu0 0.0
  %5387 = vmatprep.subr.mxu0 0.0
  %5388 = vmatpush1.msra.mxu0 0.0
  %5389 = vmatprep.subr.mxu0 0.0
  %5390 = vmatpush1.msra.mxu0 0.0
  %5391 = vmatprep.subr.mxu0 0.0
  %5392 = vmatpush1.msra.mxu0 0.0
  %5393 = vmatprep.subr.mxu0 0.0
  %5394 = vmatpush1.msra.mxu0 0.0
  %5395 = vmatprep.subr.mxu0 0.0
  %5396 = vmatpush1.msra.mxu0 0.0
  %5397 = vmatprep.mubr.f32.mxu0 0.0
  %v5398 = vand.u32 %v5308, 4294901760
  %v5399 = vsub.f32 %v5308, %v5398
  %v5400 = vand.u32 %v5399, 4294901760
  %v5401 = vsub.f32 %v5399, %v5400
  %v5402 = vand.u32 %v5401, 4294901760
  %5403 = vmatmul.mubr.f32.gmra.mrb[0].mxu0 %v5402
  %v5404 = vpop.f32.mrb[0].mxu0
  %v5405 = vadd.f32 0.0, %v5404
  %v5406 = vpop.f32.mrb[0].mxu0
  %5407 = vmatprep.mubr.f32.mxu0 0.0
  %v5408 = vand.u32 %v5314, 4294901760
  %v5409 = vsub.f32 %v5314, %v5408
  %v5410 = vand.u32 %v5409, 4294901760
  %v5411 = vsub.f32 %v5409, %v5410
  %v5412 = vand.u32 %v5411, 4294901760
  %5413 = vmatmul.mubr.f32.gmra.mrb[0].mxu0 %v5412
  %v5414 = vpop.f32.mrb[0].mxu0
  %v5415 = vadd.f32 0.0, %v5414
  %v5416 = vpop.f32.mrb[0].mxu0
  %5417 = vdwg.mxu0
  %5418 = vmatprep.subr.mxu0 0.0
  %v5419 = vand.u32 %v26, 4294901760
  %v5420 = vsub.f32 %v26, %v5419
  %v5421 = vand.u32 %v5420, 4294901760
  %v5422 = vsub.f32 %v5420, %v5421
  %v5423 = vand.u32 %v5422, 4294901760
  %5424 = vmatpush1.msra.mxu0 %v5423
  %5425 = vmatprep.subr.mxu0 0.0
  %v5426 = vand.u32 %v27, 4294901760
  %v5427 = vsub.f32 %v27, %v5426
  %v5428 = vand.u32 %v5427, 4294901760
  %v5429 = vsub.f32 %v5427, %v5428
  %v5430 = vand.u32 %v5429, 4294901760
  %5431 = vmatpush1.msra.mxu0 %v5430
  %5432 = vmatprep.subr.mxu0 0.0
  %v5433 = vand.u32 %v28, 4294901760
  %v5434 = vsub.f32 %v28, %v5433
  %v5435 = vand.u32 %v5434, 4294901760
  %v5436 = vsub.f32 %v5434, %v5435
  %v5437 = vand.u32 %v5436, 4294901760
  %5438 = vmatpush1.msra.mxu0 %v5437
  %5439 = vmatprep.subr.mxu0 0.0
  %v5440 = vand.u32 %v29, 4294901760
  %v5441 = vsub.f32 %v29, %v5440
  %v5442 = vand.u32 %v5441, 4294901760
  %v5443 = vsub.f32 %v5441, %v5442
  %v5444 = vand.u32 %v5443, 4294901760
  %5445 = vmatpush1.msra.mxu0 %v5444
  %5446 = vmatprep.subr.mxu0 0.0
  %v5447 = vand.u32 %v30, 4294901760
  %v5448 = vsub.f32 %v30, %v5447
  %v5449 = vand.u32 %v5448, 4294901760
  %v5450 = vsub.f32 %v5448, %v5449
  %v5451 = vand.u32 %v5450, 4294901760
  %5452 = vmatpush1.msra.mxu0 %v5451
  %5453 = vmatprep.subr.mxu0 0.0
  %v5454 = vand.u32 %v31, 4294901760
  %v5455 = vsub.f32 %v31, %v5454
  %v5456 = vand.u32 %v5455, 4294901760
  %v5457 = vsub.f32 %v5455, %v5456
  %v5458 = vand.u32 %v5457, 4294901760
  %5459 = vmatpush1.msra.mxu0 %v5458
  %5460 = vmatprep.subr.mxu0 0.0
  %v5461 = vand.u32 %v32, 4294901760
  %v5462 = vsub.f32 %v32, %v5461
  %v5463 = vand.u32 %v5462, 4294901760
  %v5464 = vsub.f32 %v5462, %v5463
  %v5465 = vand.u32 %v5464, 4294901760
  %5466 = vmatpush1.msra.mxu0 %v5465
  %5467 = vmatprep.subr.mxu0 0.0
  %v5468 = vand.u32 %v33, 4294901760
  %v5469 = vsub.f32 %v33, %v5468
  %v5470 = vand.u32 %v5469, 4294901760
  %v5471 = vsub.f32 %v5469, %v5470
  %v5472 = vand.u32 %v5471, 4294901760
  %5473 = vmatpush1.msra.mxu0 %v5472
  %5474 = vmatprep.subr.mxu0 0.0
  %v5475 = vand.u32 %v34, 4294901760
  %v5476 = vsub.f32 %v34, %v5475
  %v5477 = vand.u32 %v5476, 4294901760
  %v5478 = vsub.f32 %v5476, %v5477
  %v5479 = vand.u32 %v5478, 4294901760
  %5480 = vmatpush1.msra.mxu0 %v5479
  %5481 = vmatprep.subr.mxu0 0.0
  %v5482 = vand.u32 %v35, 4294901760
  %v5483 = vsub.f32 %v35, %v5482
  %v5484 = vand.u32 %v5483, 4294901760
  %v5485 = vsub.f32 %v5483, %v5484
  %v5486 = vand.u32 %v5485, 4294901760
  %5487 = vmatpush1.msra.mxu0 %v5486
  %5488 = vmatprep.subr.mxu0 0.0
  %v5489 = vand.u32 %v36, 4294901760
  %v5490 = vsub.f32 %v36, %v5489
  %v5491 = vand.u32 %v5490, 4294901760
  %v5492 = vsub.f32 %v5490, %v5491
  %v5493 = vand.u32 %v5492, 4294901760
  %5494 = vmatpush1.msra.mxu0 %v5493
  %5495 = vmatprep.subr.mxu0 0.0
  %v5496 = vand.u32 %v37, 4294901760
  %v5497 = vsub.f32 %v37, %v5496
  %v5498 = vand.u32 %v5497, 4294901760
  %v5499 = vsub.f32 %v5497, %v5498
  %v5500 = vand.u32 %v5499, 4294901760
  %5501 = vmatpush1.msra.mxu0 %v5500
  %5502 = vmatprep.subr.mxu0 0.0
  %v5503 = vand.u32 %v38, 4294901760
  %v5504 = vsub.f32 %v38, %v5503
  %v5505 = vand.u32 %v5504, 4294901760
  %v5506 = vsub.f32 %v5504, %v5505
  %v5507 = vand.u32 %v5506, 4294901760
  %5508 = vmatpush1.msra.mxu0 %v5507
  %5509 = vmatprep.subr.mxu0 0.0
  %v5510 = vand.u32 %v39, 4294901760
  %v5511 = vsub.f32 %v39, %v5510
  %v5512 = vand.u32 %v5511, 4294901760
  %v5513 = vsub.f32 %v5511, %v5512
  %v5514 = vand.u32 %v5513, 4294901760
  %5515 = vmatpush1.msra.mxu0 %v5514
  %5516 = vmatprep.subr.mxu0 0.0
  %v5517 = vand.u32 %v40, 4294901760
  %v5518 = vsub.f32 %v40, %v5517
  %v5519 = vand.u32 %v5518, 4294901760
  %v5520 = vsub.f32 %v5518, %v5519
  %v5521 = vand.u32 %v5520, 4294901760
  %5522 = vmatpush1.msra.mxu0 %v5521
  %5523 = vmatprep.subr.mxu0 0.0
  %v5524 = vand.u32 %v41, 4294901760
  %v5525 = vsub.f32 %v41, %v5524
  %v5526 = vand.u32 %v5525, 4294901760
  %v5527 = vsub.f32 %v5525, %v5526
  %v5528 = vand.u32 %v5527, 4294901760
  %5529 = vmatpush1.msra.mxu0 %v5528
  %5530 = vmatprep.subr.mxu0 0.0
  %5531 = vmatpush1.msra.mxu0 0.0
  %5532 = vmatprep.subr.mxu0 0.0
  %5533 = vmatpush1.msra.mxu0 0.0
  %5534 = vmatprep.subr.mxu0 0.0
  %5535 = vmatpush1.msra.mxu0 0.0
  %5536 = vmatprep.subr.mxu0 0.0
  %5537 = vmatpush1.msra.mxu0 0.0
  %5538 = vmatprep.subr.mxu0 0.0
  %5539 = vmatpush1.msra.mxu0 0.0
  %5540 = vmatprep.subr.mxu0 0.0
  %5541 = vmatpush1.msra.mxu0 0.0
  %5542 = vmatprep.subr.mxu0 0.0
  %5543 = vmatpush1.msra.mxu0 0.0
  %5544 = vmatprep.subr.mxu0 0.0
  %5545 = vmatpush1.msra.mxu0 0.0
  %5546 = vmatprep.subr.mxu0 0.0
  %5547 = vmatpush1.msra.mxu0 0.0
  %5548 = vmatprep.subr.mxu0 0.0
  %5549 = vmatpush1.msra.mxu0 0.0
  %5550 = vmatprep.subr.mxu0 0.0
  %5551 = vmatpush1.msra.mxu0 0.0
  %5552 = vmatprep.subr.mxu0 0.0
  %5553 = vmatpush1.msra.mxu0 0.0
  %5554 = vmatprep.subr.mxu0 0.0
  %5555 = vmatpush1.msra.mxu0 0.0
  %5556 = vmatprep.subr.mxu0 0.0
  %5557 = vmatpush1.msra.mxu0 0.0
  %5558 = vmatprep.subr.mxu0 0.0
  %5559 = vmatpush1.msra.mxu0 0.0
  %5560 = vmatprep.subr.mxu0 0.0
  %5561 = vmatpush1.msra.mxu0 0.0
  %5562 = vmatprep.mubr.f32.mxu0 0.0
  %v5563 = vand.u32 %v5308, 4294901760
  %5564 = vmatmul.mubr.f32.gmra.mrb[0].mxu0 %v5563
  %v5565 = vpop.f32.mrb[0].mxu0
  %v5566 = vadd.f32 %v5405, %v5565
  %v5567 = vpop.f32.mrb[0].mxu0
  %5568 = vmatprep.mubr.f32.mxu0 0.0
  %v5569 = vand.u32 %v5314, 4294901760
  %5570 = vmatmul.mubr.f32.gmra.mrb[0].mxu0 %v5569
  %v5571 = vpop.f32.mrb[0].mxu0
  %v5572 = vadd.f32 %v5415, %v5571
  %v5573 = vpop.f32.mrb[0].mxu0
  %5574 = vdwg.mxu0
  %5575 = vmatprep.subr.mxu0 0.0
  %v5576 = vand.u32 %v26, 4294901760
  %v5577 = vsub.f32 %v26, %v5576
  %5578 = vmatpush1.msra.mxu0 %v5577
  %5579 = vmatprep.subr.mxu0 0.0
  %v5580 = vand.u32 %v27, 4294901760
  %v5581 = vsub.f32 %v27, %v5580
  %5582 = vmatpush1.msra.mxu0 %v5581
  %5583 = vmatprep.subr.mxu0 0.0
  %v5584 = vand.u32 %v28, 4294901760
  %v5585 = vsub.f32 %v28, %v5584
  %5586 = vmatpush1.msra.mxu0 %v5585
  %5587 = vmatprep.subr.mxu0 0.0
  %v5588 = vand.u32 %v29, 4294901760
  %v5589 = vsub.f32 %v29, %v5588
  %5590 = vmatpush1.msra.mxu0 %v5589
  %5591 = vmatprep.subr.mxu0 0.0
  %v5592 = vand.u32 %v30, 4294901760
  %v5593 = vsub.f32 %v30, %v5592
  %5594 = vmatpush1.msra.mxu0 %v5593
  %5595 = vmatprep.subr.mxu0 0.0
  %v5596 = vand.u32 %v31, 4294901760
  %v5597 = vsub.f32 %v31, %v5596
  %5598 = vmatpush1.msra.mxu0 %v5597
  %5599 = vmatprep.subr.mxu0 0.0
  %v5600 = vand.u32 %v32, 4294901760
  %v5601 = vsub.f32 %v32, %v5600
  %5602 = vmatpush1.msra.mxu0 %v5601
  %5603 = vmatprep.subr.mxu0 0.0
  %v5604 = vand.u32 %v33, 4294901760
  %v5605 = vsub.f32 %v33, %v5604
  %5606 = vmatpush1.msra.mxu0 %v5605
  %5607 = vmatprep.subr.mxu0 0.0
  %v5608 = vand.u32 %v34, 4294901760
  %v5609 = vsub.f32 %v34, %v5608
  %5610 = vmatpush1.msra.mxu0 %v5609
  %5611 = vmatprep.subr.mxu0 0.0
  %v5612 = vand.u32 %v35, 4294901760
  %v5613 = vsub.f32 %v35, %v5612
  %5614 = vmatpush1.msra.mxu0 %v5613
  %5615 = vmatprep.subr.mxu0 0.0
  %v5616 = vand.u32 %v36, 4294901760
  %v5617 = vsub.f32 %v36, %v5616
  %5618 = vmatpush1.msra.mxu0 %v5617
  %5619 = vmatprep.subr.mxu0 0.0
  %v5620 = vand.u32 %v37, 4294901760
  %v5621 = vsub.f32 %v37, %v5620
  %5622 = vmatpush1.msra.mxu0 %v5621
  %5623 = vmatprep.subr.mxu0 0.0
  %v5624 = vand.u32 %v38, 4294901760
  %v5625 = vsub.f32 %v38, %v5624
  %5626 = vmatpush1.msra.mxu0 %v5625
  %5627 = vmatprep.subr.mxu0 0.0
  %v5628 = vand.u32 %v39, 4294901760
  %v5629 = vsub.f32 %v39, %v5628
  %5630 = vmatpush1.msra.mxu0 %v5629
  %5631 = vmatprep.subr.mxu0 0.0
  %v5632 = vand.u32 %v40, 4294901760
  %v5633 = vsub.f32 %v40, %v5632
  %5634 = vmatpush1.msra.mxu0 %v5633
  %5635 = vmatprep.subr.mxu0 0.0
  %v5636 = vand.u32 %v41, 4294901760
  %v5637 = vsub.f32 %v41, %v5636
  %5638 = vmatpush1.msra.mxu0 %v5637
  %5639 = vmatprep.subr.mxu0 0.0
  %5640 = vmatpush1.msra.mxu0 0.0
  %5641 = vmatprep.subr.mxu0 0.0
  %5642 = vmatpush1.msra.mxu0 0.0
  %5643 = vmatprep.subr.mxu0 0.0
  %5644 = vmatpush1.msra.mxu0 0.0
  %5645 = vmatprep.subr.mxu0 0.0
  %5646 = vmatpush1.msra.mxu0 0.0
  %5647 = vmatprep.subr.mxu0 0.0
  %5648 = vmatpush1.msra.mxu0 0.0
  %5649 = vmatprep.subr.mxu0 0.0
  %5650 = vmatpush1.msra.mxu0 0.0
  %5651 = vmatprep.subr.mxu0 0.0
  %5652 = vmatpush1.msra.mxu0 0.0
  %5653 = vmatprep.subr.mxu0 0.0
  %5654 = vmatpush1.msra.mxu0 0.0
  %5655 = vmatprep.subr.mxu0 0.0
  %5656 = vmatpush1.msra.mxu0 0.0
  %5657 = vmatprep.subr.mxu0 0.0
  %5658 = vmatpush1.msra.mxu0 0.0
  %5659 = vmatprep.subr.mxu0 0.0
  %5660 = vmatpush1.msra.mxu0 0.0
  %5661 = vmatprep.subr.mxu0 0.0
  %5662 = vmatpush1.msra.mxu0 0.0
  %5663 = vmatprep.subr.mxu0 0.0
  %5664 = vmatpush1.msra.mxu0 0.0
  %5665 = vmatprep.subr.mxu0 0.0
  %5666 = vmatpush1.msra.mxu0 0.0
  %5667 = vmatprep.subr.mxu0 0.0
  %5668 = vmatpush1.msra.mxu0 0.0
  %5669 = vmatprep.subr.mxu0 0.0
  %5670 = vmatpush1.msra.mxu0 0.0
  %5671 = vmatprep.mubr.f32.mxu0 0.0
  %v5672 = vand.u32 %v5308, 4294901760
  %v5673 = vsub.f32 %v5308, %v5672
  %5674 = vmatmul.mubr.f32.gmra.mrb[0].mxu0 %v5673
  %v5675 = vpop.f32.mrb[0].mxu0
  %v5676 = vadd.f32 %v5566, %v5675
  %v5677 = vpop.f32.mrb[0].mxu0
  %5678 = vmatprep.mubr.f32.mxu0 0.0
  %v5679 = vand.u32 %v5314, 4294901760
  %v5680 = vsub.f32 %v5314, %v5679
  %5681 = vmatmul.mubr.f32.gmra.mrb[0].mxu0 %v5680
  %v5682 = vpop.f32.mrb[0].mxu0
  %v5683 = vadd.f32 %v5572, %v5682
  %v5684 = vpop.f32.mrb[0].mxu0
  %5685 = vdwg.mxu0
  %5686 = vmatprep.subr.mxu0 0.0
  %v5687 = vand.u32 %v26, 4294901760
  %5688 = vmatpush1.msra.mxu0 %v5687
  %5689 = vmatprep.subr.mxu0 0.0
  %v5690 = vand.u32 %v27, 4294901760
  %5691 = vmatpush1.msra.mxu0 %v5690
  %5692 = vmatprep.subr.mxu0 0.0
  %v5693 = vand.u32 %v28, 4294901760
  %5694 = vmatpush1.msra.mxu0 %v5693
  %5695 = vmatprep.subr.mxu0 0.0
  %v5696 = vand.u32 %v29, 4294901760
  %5697 = vmatpush1.msra.mxu0 %v5696
  %5698 = vmatprep.subr.mxu0 0.0
  %v5699 = vand.u32 %v30, 4294901760
  %5700 = vmatpush1.msra.mxu0 %v5699
  %5701 = vmatprep.subr.mxu0 0.0
  %v5702 = vand.u32 %v31, 4294901760
  %5703 = vmatpush1.msra.mxu0 %v5702
  %5704 = vmatprep.subr.mxu0 0.0
  %v5705 = vand.u32 %v32, 4294901760
  %5706 = vmatpush1.msra.mxu0 %v5705
  %5707 = vmatprep.subr.mxu0 0.0
  %v5708 = vand.u32 %v33, 4294901760
  %5709 = vmatpush1.msra.mxu0 %v5708
  %5710 = vmatprep.subr.mxu0 0.0
  %v5711 = vand.u32 %v34, 4294901760
  %5712 = vmatpush1.msra.mxu0 %v5711
  %5713 = vmatprep.subr.mxu0 0.0
  %v5714 = vand.u32 %v35, 4294901760
  %5715 = vmatpush1.msra.mxu0 %v5714
  %5716 = vmatprep.subr.mxu0 0.0
  %v5717 = vand.u32 %v36, 4294901760
  %5718 = vmatpush1.msra.mxu0 %v5717
  %5719 = vmatprep.subr.mxu0 0.0
  %v5720 = vand.u32 %v37, 4294901760
  %5721 = vmatpush1.msra.mxu0 %v5720
  %5722 = vmatprep.subr.mxu0 0.0
  %v5723 = vand.u32 %v38, 4294901760
  %5724 = vmatpush1.msra.mxu0 %v5723
  %5725 = vmatprep.subr.mxu0 0.0
  %v5726 = vand.u32 %v39, 4294901760
  %5727 = vmatpush1.msra.mxu0 %v5726
  %5728 = vmatprep.subr.mxu0 0.0
  %v5729 = vand.u32 %v40, 4294901760
  %5730 = vmatpush1.msra.mxu0 %v5729
  %5731 = vmatprep.subr.mxu0 0.0
  %v5732 = vand.u32 %v41, 4294901760
  %5733 = vmatpush1.msra.mxu0 %v5732
  %5734 = vmatprep.subr.mxu0 0.0
  %5735 = vmatpush1.msra.mxu0 0.0
  %5736 = vmatprep.subr.mxu0 0.0
  %5737 = vmatpush1.msra.mxu0 0.0
  %5738 = vmatprep.subr.mxu0 0.0
  %5739 = vmatpush1.msra.mxu0 0.0
  %5740 = vmatprep.subr.mxu0 0.0
  %5741 = vmatpush1.msra.mxu0 0.0
  %5742 = vmatprep.subr.mxu0 0.0
  %5743 = vmatpush1.msra.mxu0 0.0
  %5744 = vmatprep.subr.mxu0 0.0
  %5745 = vmatpush1.msra.mxu0 0.0
  %5746 = vmatprep.subr.mxu0 0.0
  %5747 = vmatpush1.msra.mxu0 0.0
  %5748 = vmatprep.subr.mxu0 0.0
  %5749 = vmatpush1.msra.mxu0 0.0
  %5750 = vmatprep.subr.mxu0 0.0
  %5751 = vmatpush1.msra.mxu0 0.0
  %5752 = vmatprep.subr.mxu0 0.0
  %5753 = vmatpush1.msra.mxu0 0.0
  %5754 = vmatprep.subr.mxu0 0.0
  %5755 = vmatpush1.msra.mxu0 0.0
  %5756 = vmatprep.subr.mxu0 0.0
  %5757 = vmatpush1.msra.mxu0 0.0
  %5758 = vmatprep.subr.mxu0 0.0
  %5759 = vmatpush1.msra.mxu0 0.0
  %5760 = vmatprep.subr.mxu0 0.0
  %5761 = vmatpush1.msra.mxu0 0.0
  %5762 = vmatprep.subr.mxu0 0.0
  %5763 = vmatpush1.msra.mxu0 0.0
  %5764 = vmatprep.subr.mxu0 0.0
  %5765 = vmatpush1.msra.mxu0 0.0
  %5766 = vmatprep.mubr.f32.mxu0 0.0
  %v5767 = vand.u32 %v5308, 4294901760
  %v5768 = vsub.f32 %v5308, %v5767
  %v5769 = vand.u32 %v5768, 4294901760
  %5770 = vmatmul.mubr.f32.gmra.mrb[0].mxu0 %v5769
  %v5771 = vpop.f32.mrb[0].mxu0
  %v5772 = vadd.f32 %v5676, %v5771
  %v5773 = vpop.f32.mrb[0].mxu0
  %5774 = vmatprep.mubr.f32.mxu0 0.0
  %v5775 = vand.u32 %v5314, 4294901760
  %v5776 = vsub.f32 %v5314, %v5775
  %v5777 = vand.u32 %v5776, 4294901760
  %5778 = vmatmul.mubr.f32.gmra.mrb[0].mxu0 %v5777
  %v5779 = vpop.f32.mrb[0].mxu0
  %v5780 = vadd.f32 %v5683, %v5779
  %v5781 = vpop.f32.mrb[0].mxu0
  %5782 = vdwg.mxu0
  %5783 = vmatprep.subr.mxu0 0.0
  %v5784 = vand.u32 %v26, 4294901760
  %v5785 = vsub.f32 %v26, %v5784
  %v5786 = vand.u32 %v5785, 4294901760
  %5787 = vmatpush1.msra.mxu0 %v5786
  %5788 = vmatprep.subr.mxu0 0.0
  %v5789 = vand.u32 %v27, 4294901760
  %v5790 = vsub.f32 %v27, %v5789
  %v5791 = vand.u32 %v5790, 4294901760
  %5792 = vmatpush1.msra.mxu0 %v5791
  %5793 = vmatprep.subr.mxu0 0.0
  %v5794 = vand.u32 %v28, 4294901760
  %v5795 = vsub.f32 %v28, %v5794
  %v5796 = vand.u32 %v5795, 4294901760
  %5797 = vmatpush1.msra.mxu0 %v5796
  %5798 = vmatprep.subr.mxu0 0.0
  %v5799 = vand.u32 %v29, 4294901760
  %v5800 = vsub.f32 %v29, %v5799
  %v5801 = vand.u32 %v5800, 4294901760
  %5802 = vmatpush1.msra.mxu0 %v5801
  %5803 = vmatprep.subr.mxu0 0.0
  %v5804 = vand.u32 %v30, 4294901760
  %v5805 = vsub.f32 %v30, %v5804
  %v5806 = vand.u32 %v5805, 4294901760
  %5807 = vmatpush1.msra.mxu0 %v5806
  %5808 = vmatprep.subr.mxu0 0.0
  %v5809 = vand.u32 %v31, 4294901760
  %v5810 = vsub.f32 %v31, %v5809
  %v5811 = vand.u32 %v5810, 4294901760
  %5812 = vmatpush1.msra.mxu0 %v5811
  %5813 = vmatprep.subr.mxu0 0.0
  %v5814 = vand.u32 %v32, 4294901760
  %v5815 = vsub.f32 %v32, %v5814
  %v5816 = vand.u32 %v5815, 4294901760
  %5817 = vmatpush1.msra.mxu0 %v5816
  %5818 = vmatprep.subr.mxu0 0.0
  %v5819 = vand.u32 %v33, 4294901760
  %v5820 = vsub.f32 %v33, %v5819
  %v5821 = vand.u32 %v5820, 4294901760
  %5822 = vmatpush1.msra.mxu0 %v5821
  %5823 = vmatprep.subr.mxu0 0.0
  %v5824 = vand.u32 %v34, 4294901760
  %v5825 = vsub.f32 %v34, %v5824
  %v5826 = vand.u32 %v5825, 4294901760
  %5827 = vmatpush1.msra.mxu0 %v5826
  %5828 = vmatprep.subr.mxu0 0.0
  %v5829 = vand.u32 %v35, 4294901760
  %v5830 = vsub.f32 %v35, %v5829
  %v5831 = vand.u32 %v5830, 4294901760
  %5832 = vmatpush1.msra.mxu0 %v5831
  %5833 = vmatprep.subr.mxu0 0.0
  %v5834 = vand.u32 %v36, 4294901760
  %v5835 = vsub.f32 %v36, %v5834
  %v5836 = vand.u32 %v5835, 4294901760
  %5837 = vmatpush1.msra.mxu0 %v5836
  %5838 = vmatprep.subr.mxu0 0.0
  %v5839 = vand.u32 %v37, 4294901760
  %v5840 = vsub.f32 %v37, %v5839
  %v5841 = vand.u32 %v5840, 4294901760
  %5842 = vmatpush1.msra.mxu0 %v5841
  %5843 = vmatprep.subr.mxu0 0.0
  %v5844 = vand.u32 %v38, 4294901760
  %v5845 = vsub.f32 %v38, %v5844
  %v5846 = vand.u32 %v5845, 4294901760
  %5847 = vmatpush1.msra.mxu0 %v5846
  %5848 = vmatprep.subr.mxu0 0.0
  %v5849 = vand.u32 %v39, 4294901760
  %v5850 = vsub.f32 %v39, %v5849
  %v5851 = vand.u32 %v5850, 4294901760
  %5852 = vmatpush1.msra.mxu0 %v5851
  %5853 = vmatprep.subr.mxu0 0.0
  %v5854 = vand.u32 %v40, 4294901760
  %v5855 = vsub.f32 %v40, %v5854
  %v5856 = vand.u32 %v5855, 4294901760
  %5857 = vmatpush1.msra.mxu0 %v5856
  %5858 = vmatprep.subr.mxu0 0.0
  %v5859 = vand.u32 %v41, 4294901760
  %v5860 = vsub.f32 %v41, %v5859
  %v5861 = vand.u32 %v5860, 4294901760
  %5862 = vmatpush1.msra.mxu0 %v5861
  %5863 = vmatprep.subr.mxu0 0.0
  %5864 = vmatpush1.msra.mxu0 0.0
  %5865 = vmatprep.subr.mxu0 0.0
  %5866 = vmatpush1.msra.mxu0 0.0
  %5867 = vmatprep.subr.mxu0 0.0
  %5868 = vmatpush1.msra.mxu0 0.0
  %5869 = vmatprep.subr.mxu0 0.0
  %5870 = vmatpush1.msra.mxu0 0.0
  %5871 = vmatprep.subr.mxu0 0.0
  %5872 = vmatpush1.msra.mxu0 0.0
  %5873 = vmatprep.subr.mxu0 0.0
  %5874 = vmatpush1.msra.mxu0 0.0
  %5875 = vmatprep.subr.mxu0 0.0
  %5876 = vmatpush1.msra.mxu0 0.0
  %5877 = vmatprep.subr.mxu0 0.0
  %5878 = vmatpush1.msra.mxu0 0.0
  %5879 = vmatprep.subr.mxu0 0.0
  %5880 = vmatpush1.msra.mxu0 0.0
  %5881 = vmatprep.subr.mxu0 0.0
  %5882 = vmatpush1.msra.mxu0 0.0
  %5883 = vmatprep.subr.mxu0 0.0
  %5884 = vmatpush1.msra.mxu0 0.0
  %5885 = vmatprep.subr.mxu0 0.0
  %5886 = vmatpush1.msra.mxu0 0.0
  %5887 = vmatprep.subr.mxu0 0.0
  %5888 = vmatpush1.msra.mxu0 0.0
  %5889 = vmatprep.subr.mxu0 0.0
  %5890 = vmatpush1.msra.mxu0 0.0
  %5891 = vmatprep.subr.mxu0 0.0
  %5892 = vmatpush1.msra.mxu0 0.0
  %5893 = vmatprep.subr.mxu0 0.0
  %5894 = vmatpush1.msra.mxu0 0.0
  %5895 = vmatprep.mubr.f32.mxu0 0.0
  %v5896 = vand.u32 %v5308, 4294901760
  %5897 = vmatmul.mubr.f32.gmra.mrb[0].mxu0 %v5896
  %v5898 = vpop.f32.mrb[0].mxu0
  %v5899 = vadd.f32 %v5772, %v5898
  %v5900 = vpop.f32.mrb[0].mxu0
  %5901 = vmatprep.mubr.f32.mxu0 0.0
  %v5902 = vand.u32 %v5314, 4294901760
  %5903 = vmatmul.mubr.f32.gmra.mrb[0].mxu0 %v5902
  %v5904 = vpop.f32.mrb[0].mxu0
  %v5905 = vadd.f32 %v5780, %v5904
  %v5906 = vpop.f32.mrb[0].mxu0
  %5907 = vdwg.mxu0
  %5908 = vmatprep.subr.mxu0 0.0
  %v5909 = vand.u32 %v26, 4294901760
  %5910 = vmatpush1.msra.mxu0 %v5909
  %5911 = vmatprep.subr.mxu0 0.0
  %v5912 = vand.u32 %v27, 4294901760
  %5913 = vmatpush1.msra.mxu0 %v5912
  %5914 = vmatprep.subr.mxu0 0.0
  %v5915 = vand.u32 %v28, 4294901760
  %5916 = vmatpush1.msra.mxu0 %v5915
  %5917 = vmatprep.subr.mxu0 0.0
  %v5918 = vand.u32 %v29, 4294901760
  %5919 = vmatpush1.msra.mxu0 %v5918
  %5920 = vmatprep.subr.mxu0 0.0
  %v5921 = vand.u32 %v30, 4294901760
  %5922 = vmatpush1.msra.mxu0 %v5921
  %5923 = vmatprep.subr.mxu0 0.0
  %v5924 = vand.u32 %v31, 4294901760
  %5925 = vmatpush1.msra.mxu0 %v5924
  %5926 = vmatprep.subr.mxu0 0.0
  %v5927 = vand.u32 %v32, 4294901760
  %5928 = vmatpush1.msra.mxu0 %v5927
  %5929 = vmatprep.subr.mxu0 0.0
  %v5930 = vand.u32 %v33, 4294901760
  %5931 = vmatpush1.msra.mxu0 %v5930
  %5932 = vmatprep.subr.mxu0 0.0
  %v5933 = vand.u32 %v34, 4294901760
  %5934 = vmatpush1.msra.mxu0 %v5933
  %5935 = vmatprep.subr.mxu0 0.0
  %v5936 = vand.u32 %v35, 4294901760
  %5937 = vmatpush1.msra.mxu0 %v5936
  %5938 = vmatprep.subr.mxu0 0.0
  %v5939 = vand.u32 %v36, 4294901760
  %5940 = vmatpush1.msra.mxu0 %v5939
  %5941 = vmatprep.subr.mxu0 0.0
  %v5942 = vand.u32 %v37, 4294901760
  %5943 = vmatpush1.msra.mxu0 %v5942
  %5944 = vmatprep.subr.mxu0 0.0
  %v5945 = vand.u32 %v38, 4294901760
  %5946 = vmatpush1.msra.mxu0 %v5945
  %5947 = vmatprep.subr.mxu0 0.0
  %v5948 = vand.u32 %v39, 4294901760
  %5949 = vmatpush1.msra.mxu0 %v5948
  %5950 = vmatprep.subr.mxu0 0.0
  %v5951 = vand.u32 %v40, 4294901760
  %5952 = vmatpush1.msra.mxu0 %v5951
  %5953 = vmatprep.subr.mxu0 0.0
  %v5954 = vand.u32 %v41, 4294901760
  %5955 = vmatpush1.msra.mxu0 %v5954
  %5956 = vmatprep.subr.mxu0 0.0
  %5957 = vmatpush1.msra.mxu0 0.0
  %5958 = vmatprep.subr.mxu0 0.0
  %5959 = vmatpush1.msra.mxu0 0.0
  %5960 = vmatprep.subr.mxu0 0.0
  %5961 = vmatpush1.msra.mxu0 0.0
  %5962 = vmatprep.subr.mxu0 0.0
  %5963 = vmatpush1.msra.mxu0 0.0
  %5964 = vmatprep.subr.mxu0 0.0
  %5965 = vmatpush1.msra.mxu0 0.0
  %5966 = vmatprep.subr.mxu0 0.0
  %5967 = vmatpush1.msra.mxu0 0.0
  %5968 = vmatprep.subr.mxu0 0.0
  %5969 = vmatpush1.msra.mxu0 0.0
  %5970 = vmatprep.subr.mxu0 0.0
  %5971 = vmatpush1.msra.mxu0 0.0
  %5972 = vmatprep.subr.mxu0 0.0
  %5973 = vmatpush1.msra.mxu0 0.0
  %5974 = vmatprep.subr.mxu0 0.0
  %5975 = vmatpush1.msra.mxu0 0.0
  %5976 = vmatprep.subr.mxu0 0.0
  %5977 = vmatpush1.msra.mxu0 0.0
  %5978 = vmatprep.subr.mxu0 0.0
  %5979 = vmatpush1.msra.mxu0 0.0
  %5980 = vmatprep.subr.mxu0 0.0
  %5981 = vmatpush1.msra.mxu0 0.0
  %5982 = vmatprep.subr.mxu0 0.0
  %5983 = vmatpush1.msra.mxu0 0.0
  %5984 = vmatprep.subr.mxu0 0.0
  %5985 = vmatpush1.msra.mxu0 0.0
  %5986 = vmatprep.subr.mxu0 0.0
  %5987 = vmatpush1.msra.mxu0 0.0
  %5988 = vmatprep.mubr.f32.mxu0 0.0
  %v5989 = vand.u32 %v5308, 4294901760
  %5990 = vmatmul.mubr.f32.gmra.mrb[0].mxu0 %v5989
  %v5991 = vpop.f32.mrb[0].mxu0
  %v5992 = vadd.f32 %v5899, %v5991
  %v5993 = vpop.f32.mrb[0].mxu0
  %5994 = vmatprep.mubr.f32.mxu0 0.0
  %v5995 = vand.u32 %v5314, 4294901760
  %5996 = vmatmul.mubr.f32.gmra.mrb[0].mxu0 %v5995
  %v5997 = vpop.f32.mrb[0].mxu0
  %v5998 = vadd.f32 %v5905, %v5997
  %v5999 = vpop.f32.mrb[0].mxu0
  %6000 = vdwg.mxu0
  %v6001 = vmul.f32 %v1242, %v1242
  %v6002 = vmul.f32 %v1248, %v1248
  %v6003 = vmul.f32 %v2428, %v2428
  %v6004 = vmul.f32 %v2434, %v2434
  %v6005 = vmul.f32 %v1242, %v2428
  %v6006 = vmul.f32 %v1248, %v2434
  %v6007 = vsub.f32 %v3616, %v6001
  %v6008 = vsub.f32 %v3622, %v6002
  %v6009 = vsub.f32 %v4804, %v6003
  %v6010 = vsub.f32 %v4810, %v6004
  %v6011 = vsub.f32 %v5992, %v6005
  %v6012 = vsub.f32 %v5998, %v6006
  %v6013 = vmul.f32 %v6005, 2.0
  %v6014 = vmul.f32 %v6006, 2.0
  %v6015 = vadd.f32 %v6013, 0.0001
  %v6016 = vadd.f32 %v6014, 0.0001
  %v6017 = vmul.f32 %v6011, 2.0
  %v6018 = vmul.f32 %v6012, 2.0
  %v6019 = vadd.f32 %v6017, 0.0009
  %v6020 = vadd.f32 %v6018, 0.0009
  %v6021 = vmul.f32 %v6015, %v6019
  %v6022 = vmul.f32 %v6016, %v6020
  %v6023 = vadd.f32 %v6001, %v6003
  %v6024 = vadd.f32 %v6002, %v6004
  %v6025 = vadd.f32 %v6023, 0.0001
  %v6026 = vadd.f32 %v6024, 0.0001
  %v6027 = vadd.f32 %v6007, %v6009
  %v6028 = vadd.f32 %v6008, %v6010
  %v6029 = vadd.f32 %v6027, 0.0009
  %v6030 = vadd.f32 %v6028, 0.0009
  %v6031 = vmul.f32 %v6025, %v6029
  %v6032 = vmul.f32 %v6026, %v6030
  %v6033 = vadd.f32 %v6031, 1e-12
  %v6034 = vadd.f32 %v6032, 1e-12
  %v6035 = vrcp.pop %v6033
  %v6036 = vrcp.pop %v6034
  %v6037 = vmul.f32 %v6021, %v6035
  %v6038 = vmul.f32 %v6022, %v6036
  %v6039 = vsub.f32 1.0, %v6037
  %v6040 = vsub.f32 1.0, %v6038
  %v6041 = vmul.f32 %v6039, 0.5
  %v6042 = vmul.f32 %v6040, 0.5
  %v6043 = vmax.f32 %v6041, 0.0
  %v6044 = vmax.f32 %v6042, 0.0
  %v6045 = vmin.f32 %v6043, 1.0
  %v6046 = vmin.f32 %v6044, 1.0
  %6047 = vmatprep.subr.mxu0 0.0
  %v6048 = vand.u32 %v42, 4294901760
  %6049 = vmatpush1.msra.mxu0 %v6048
  %6050 = vmatprep.subr.mxu0 0.0
  %v6051 = vand.u32 %v43, 4294901760
  %6052 = vmatpush1.msra.mxu0 %v6051
  %6053 = vmatprep.subr.mxu0 0.0
  %v6054 = vand.u32 %v44, 4294901760
  %6055 = vmatpush1.msra.mxu0 %v6054
  %6056 = vmatprep.subr.mxu0 0.0
  %v6057 = vand.u32 %v45, 4294901760
  %6058 = vmatpush1.msra.mxu0 %v6057
  %6059 = vmatprep.subr.mxu0 0.0
  %v6060 = vand.u32 %v46, 4294901760
  %6061 = vmatpush1.msra.mxu0 %v6060
  %6062 = vmatprep.subr.mxu0 0.0
  %v6063 = vand.u32 %v47, 4294901760
  %6064 = vmatpush1.msra.mxu0 %v6063
  %6065 = vmatprep.subr.mxu0 0.0
  %v6066 = vand.u32 %v48, 4294901760
  %6067 = vmatpush1.msra.mxu0 %v6066
  %6068 = vmatprep.subr.mxu0 0.0
  %v6069 = vand.u32 %v49, 4294901760
  %6070 = vmatpush1.msra.mxu0 %v6069
  %6071 = vmatprep.subr.mxu0 0.0
  %v6072 = vand.u32 %v50, 4294901760
  %6073 = vmatpush1.msra.mxu0 %v6072
  %6074 = vmatprep.subr.mxu0 0.0
  %v6075 = vand.u32 %v51, 4294901760
  %6076 = vmatpush1.msra.mxu0 %v6075
  %6077 = vmatprep.subr.mxu0 0.0
  %v6078 = vand.u32 %v52, 4294901760
  %6079 = vmatpush1.msra.mxu0 %v6078
  %6080 = vmatprep.subr.mxu0 0.0
  %v6081 = vand.u32 %v53, 4294901760
  %6082 = vmatpush1.msra.mxu0 %v6081
  %6083 = vmatprep.subr.mxu0 0.0
  %v6084 = vand.u32 %v54, 4294901760
  %6085 = vmatpush1.msra.mxu0 %v6084
  %6086 = vmatprep.subr.mxu0 0.0
  %v6087 = vand.u32 %v55, 4294901760
  %6088 = vmatpush1.msra.mxu0 %v6087
  %6089 = vmatprep.subr.mxu0 0.0
  %v6090 = vand.u32 %v56, 4294901760
  %6091 = vmatpush1.msra.mxu0 %v6090
  %6092 = vmatprep.subr.mxu0 0.0
  %v6093 = vand.u32 %v57, 4294901760
  %6094 = vmatpush1.msra.mxu0 %v6093
  %6095 = vmatprep.subr.mxu0 0.0
  %6096 = vmatpush1.msra.mxu0 0.0
  %6097 = vmatprep.subr.mxu0 0.0
  %6098 = vmatpush1.msra.mxu0 0.0
  %6099 = vmatprep.subr.mxu0 0.0
  %6100 = vmatpush1.msra.mxu0 0.0
  %6101 = vmatprep.subr.mxu0 0.0
  %6102 = vmatpush1.msra.mxu0 0.0
  %6103 = vmatprep.subr.mxu0 0.0
  %6104 = vmatpush1.msra.mxu0 0.0
  %6105 = vmatprep.subr.mxu0 0.0
  %6106 = vmatpush1.msra.mxu0 0.0
  %6107 = vmatprep.subr.mxu0 0.0
  %6108 = vmatpush1.msra.mxu0 0.0
  %6109 = vmatprep.subr.mxu0 0.0
  %6110 = vmatpush1.msra.mxu0 0.0
  %6111 = vmatprep.subr.mxu0 0.0
  %6112 = vmatpush1.msra.mxu0 0.0
  %6113 = vmatprep.subr.mxu0 0.0
  %6114 = vmatpush1.msra.mxu0 0.0
  %6115 = vmatprep.subr.mxu0 0.0
  %6116 = vmatpush1.msra.mxu0 0.0
  %6117 = vmatprep.subr.mxu0 0.0
  %6118 = vmatpush1.msra.mxu0 0.0
  %6119 = vmatprep.subr.mxu0 0.0
  %6120 = vmatpush1.msra.mxu0 0.0
  %6121 = vmatprep.subr.mxu0 0.0
  %6122 = vmatpush1.msra.mxu0 0.0
  %6123 = vmatprep.subr.mxu0 0.0
  %6124 = vmatpush1.msra.mxu0 0.0
  %6125 = vmatprep.subr.mxu0 0.0
  %6126 = vmatpush1.msra.mxu0 0.0
  %6127 = vmatprep.mubr.f32.mxu0 0.0
  %v6128 = vand.u32 %v6045, 4294901760
  %v6129 = vsub.f32 %v6045, %v6128
  %v6130 = vand.u32 %v6129, 4294901760
  %v6131 = vsub.f32 %v6129, %v6130
  %v6132 = vand.u32 %v6131, 4294901760
  %6133 = vmatmul.mubr.f32.gmra.mrb[0].mxu0 %v6132
  %v6134 = vpop.f32.mrb[0].mxu0
  %v6135 = vadd.f32 0.0, %v6134
  %v6136 = vpop.f32.mrb[0].mxu0
  %6137 = vmatprep.mubr.f32.mxu0 0.0
  %v6138 = vand.u32 %v6046, 4294901760
  %v6139 = vsub.f32 %v6046, %v6138
  %v6140 = vand.u32 %v6139, 4294901760
  %v6141 = vsub.f32 %v6139, %v6140
  %v6142 = vand.u32 %v6141, 4294901760
  %6143 = vmatmul.mubr.f32.gmra.mrb[0].mxu0 %v6142
  %v6144 = vpop.f32.mrb[0].mxu0
  %v6145 = vadd.f32 0.0, %v6144
  %v6146 = vpop.f32.mrb[0].mxu0
  %6147 = vdwg.mxu0
  %6148 = vmatprep.subr.mxu0 0.0
  %v6149 = vand.u32 %v42, 4294901760
  %v6150 = vsub.f32 %v42, %v6149
  %v6151 = vand.u32 %v6150, 4294901760
  %v6152 = vsub.f32 %v6150, %v6151
  %v6153 = vand.u32 %v6152, 4294901760
  %6154 = vmatpush1.msra.mxu0 %v6153
  %6155 = vmatprep.subr.mxu0 0.0
  %v6156 = vand.u32 %v43, 4294901760
  %v6157 = vsub.f32 %v43, %v6156
  %v6158 = vand.u32 %v6157, 4294901760
  %v6159 = vsub.f32 %v6157, %v6158
  %v6160 = vand.u32 %v6159, 4294901760
  %6161 = vmatpush1.msra.mxu0 %v6160
  %6162 = vmatprep.subr.mxu0 0.0
  %v6163 = vand.u32 %v44, 4294901760
  %v6164 = vsub.f32 %v44, %v6163
  %v6165 = vand.u32 %v6164, 4294901760
  %v6166 = vsub.f32 %v6164, %v6165
  %v6167 = vand.u32 %v6166, 4294901760
  %6168 = vmatpush1.msra.mxu0 %v6167
  %6169 = vmatprep.subr.mxu0 0.0
  %v6170 = vand.u32 %v45, 4294901760
  %v6171 = vsub.f32 %v45, %v6170
  %v6172 = vand.u32 %v6171, 4294901760
  %v6173 = vsub.f32 %v6171, %v6172
  %v6174 = vand.u32 %v6173, 4294901760
  %6175 = vmatpush1.msra.mxu0 %v6174
  %6176 = vmatprep.subr.mxu0 0.0
  %v6177 = vand.u32 %v46, 4294901760
  %v6178 = vsub.f32 %v46, %v6177
  %v6179 = vand.u32 %v6178, 4294901760
  %v6180 = vsub.f32 %v6178, %v6179
  %v6181 = vand.u32 %v6180, 4294901760
  %6182 = vmatpush1.msra.mxu0 %v6181
  %6183 = vmatprep.subr.mxu0 0.0
  %v6184 = vand.u32 %v47, 4294901760
  %v6185 = vsub.f32 %v47, %v6184
  %v6186 = vand.u32 %v6185, 4294901760
  %v6187 = vsub.f32 %v6185, %v6186
  %v6188 = vand.u32 %v6187, 4294901760
  %6189 = vmatpush1.msra.mxu0 %v6188
  %6190 = vmatprep.subr.mxu0 0.0
  %v6191 = vand.u32 %v48, 4294901760
  %v6192 = vsub.f32 %v48, %v6191
  %v6193 = vand.u32 %v6192, 4294901760
  %v6194 = vsub.f32 %v6192, %v6193
  %v6195 = vand.u32 %v6194, 4294901760
  %6196 = vmatpush1.msra.mxu0 %v6195
  %6197 = vmatprep.subr.mxu0 0.0
  %v6198 = vand.u32 %v49, 4294901760
  %v6199 = vsub.f32 %v49, %v6198
  %v6200 = vand.u32 %v6199, 4294901760
  %v6201 = vsub.f32 %v6199, %v6200
  %v6202 = vand.u32 %v6201, 4294901760
  %6203 = vmatpush1.msra.mxu0 %v6202
  %6204 = vmatprep.subr.mxu0 0.0
  %v6205 = vand.u32 %v50, 4294901760
  %v6206 = vsub.f32 %v50, %v6205
  %v6207 = vand.u32 %v6206, 4294901760
  %v6208 = vsub.f32 %v6206, %v6207
  %v6209 = vand.u32 %v6208, 4294901760
  %6210 = vmatpush1.msra.mxu0 %v6209
  %6211 = vmatprep.subr.mxu0 0.0
  %v6212 = vand.u32 %v51, 4294901760
  %v6213 = vsub.f32 %v51, %v6212
  %v6214 = vand.u32 %v6213, 4294901760
  %v6215 = vsub.f32 %v6213, %v6214
  %v6216 = vand.u32 %v6215, 4294901760
  %6217 = vmatpush1.msra.mxu0 %v6216
  %6218 = vmatprep.subr.mxu0 0.0
  %v6219 = vand.u32 %v52, 4294901760
  %v6220 = vsub.f32 %v52, %v6219
  %v6221 = vand.u32 %v6220, 4294901760
  %v6222 = vsub.f32 %v6220, %v6221
  %v6223 = vand.u32 %v6222, 4294901760
  %6224 = vmatpush1.msra.mxu0 %v6223
  %6225 = vmatprep.subr.mxu0 0.0
  %v6226 = vand.u32 %v53, 4294901760
  %v6227 = vsub.f32 %v53, %v6226
  %v6228 = vand.u32 %v6227, 4294901760
  %v6229 = vsub.f32 %v6227, %v6228
  %v6230 = vand.u32 %v6229, 4294901760
  %6231 = vmatpush1.msra.mxu0 %v6230
  %6232 = vmatprep.subr.mxu0 0.0
  %v6233 = vand.u32 %v54, 4294901760
  %v6234 = vsub.f32 %v54, %v6233
  %v6235 = vand.u32 %v6234, 4294901760
  %v6236 = vsub.f32 %v6234, %v6235
  %v6237 = vand.u32 %v6236, 4294901760
  %6238 = vmatpush1.msra.mxu0 %v6237
  %6239 = vmatprep.subr.mxu0 0.0
  %v6240 = vand.u32 %v55, 4294901760
  %v6241 = vsub.f32 %v55, %v6240
  %v6242 = vand.u32 %v6241, 4294901760
  %v6243 = vsub.f32 %v6241, %v6242
  %v6244 = vand.u32 %v6243, 4294901760
  %6245 = vmatpush1.msra.mxu0 %v6244
  %6246 = vmatprep.subr.mxu0 0.0
  %v6247 = vand.u32 %v56, 4294901760
  %v6248 = vsub.f32 %v56, %v6247
  %v6249 = vand.u32 %v6248, 4294901760
  %v6250 = vsub.f32 %v6248, %v6249
  %v6251 = vand.u32 %v6250, 4294901760
  %6252 = vmatpush1.msra.mxu0 %v6251
  %6253 = vmatprep.subr.mxu0 0.0
  %v6254 = vand.u32 %v57, 4294901760
  %v6255 = vsub.f32 %v57, %v6254
  %v6256 = vand.u32 %v6255, 4294901760
  %v6257 = vsub.f32 %v6255, %v6256
  %v6258 = vand.u32 %v6257, 4294901760
  %6259 = vmatpush1.msra.mxu0 %v6258
  %6260 = vmatprep.subr.mxu0 0.0
  %6261 = vmatpush1.msra.mxu0 0.0
  %6262 = vmatprep.subr.mxu0 0.0
  %6263 = vmatpush1.msra.mxu0 0.0
  %6264 = vmatprep.subr.mxu0 0.0
  %6265 = vmatpush1.msra.mxu0 0.0
  %6266 = vmatprep.subr.mxu0 0.0
  %6267 = vmatpush1.msra.mxu0 0.0
  %6268 = vmatprep.subr.mxu0 0.0
  %6269 = vmatpush1.msra.mxu0 0.0
  %6270 = vmatprep.subr.mxu0 0.0
  %6271 = vmatpush1.msra.mxu0 0.0
  %6272 = vmatprep.subr.mxu0 0.0
  %6273 = vmatpush1.msra.mxu0 0.0
  %6274 = vmatprep.subr.mxu0 0.0
  %6275 = vmatpush1.msra.mxu0 0.0
  %6276 = vmatprep.subr.mxu0 0.0
  %6277 = vmatpush1.msra.mxu0 0.0
  %6278 = vmatprep.subr.mxu0 0.0
  %6279 = vmatpush1.msra.mxu0 0.0
  %6280 = vmatprep.subr.mxu0 0.0
  %6281 = vmatpush1.msra.mxu0 0.0
  %6282 = vmatprep.subr.mxu0 0.0
  %6283 = vmatpush1.msra.mxu0 0.0
  %6284 = vmatprep.subr.mxu0 0.0
  %6285 = vmatpush1.msra.mxu0 0.0
  %6286 = vmatprep.subr.mxu0 0.0
  %6287 = vmatpush1.msra.mxu0 0.0
  %6288 = vmatprep.subr.mxu0 0.0
  %6289 = vmatpush1.msra.mxu0 0.0
  %6290 = vmatprep.subr.mxu0 0.0
  %6291 = vmatpush1.msra.mxu0 0.0
  %6292 = vmatprep.mubr.f32.mxu0 0.0
  %v6293 = vand.u32 %v6045, 4294901760
  %6294 = vmatmul.mubr.f32.gmra.mrb[0].mxu0 %v6293
  %v6295 = vpop.f32.mrb[0].mxu0
  %v6296 = vadd.f32 %v6135, %v6295
  %v6297 = vpop.f32.mrb[0].mxu0
  %6298 = vmatprep.mubr.f32.mxu0 0.0
  %v6299 = vand.u32 %v6046, 4294901760
  %6300 = vmatmul.mubr.f32.gmra.mrb[0].mxu0 %v6299
  %v6301 = vpop.f32.mrb[0].mxu0
  %v6302 = vadd.f32 %v6145, %v6301
  %v6303 = vpop.f32.mrb[0].mxu0
  %6304 = vdwg.mxu0
  %6305 = vmatprep.subr.mxu0 0.0
  %v6306 = vand.u32 %v42, 4294901760
  %v6307 = vsub.f32 %v42, %v6306
  %6308 = vmatpush1.msra.mxu0 %v6307
  %6309 = vmatprep.subr.mxu0 0.0
  %v6310 = vand.u32 %v43, 4294901760
  %v6311 = vsub.f32 %v43, %v6310
  %6312 = vmatpush1.msra.mxu0 %v6311
  %6313 = vmatprep.subr.mxu0 0.0
  %v6314 = vand.u32 %v44, 4294901760
  %v6315 = vsub.f32 %v44, %v6314
  %6316 = vmatpush1.msra.mxu0 %v6315
  %6317 = vmatprep.subr.mxu0 0.0
  %v6318 = vand.u32 %v45, 4294901760
  %v6319 = vsub.f32 %v45, %v6318
  %6320 = vmatpush1.msra.mxu0 %v6319
  %6321 = vmatprep.subr.mxu0 0.0
  %v6322 = vand.u32 %v46, 4294901760
  %v6323 = vsub.f32 %v46, %v6322
  %6324 = vmatpush1.msra.mxu0 %v6323
  %6325 = vmatprep.subr.mxu0 0.0
  %v6326 = vand.u32 %v47, 4294901760
  %v6327 = vsub.f32 %v47, %v6326
  %6328 = vmatpush1.msra.mxu0 %v6327
  %6329 = vmatprep.subr.mxu0 0.0
  %v6330 = vand.u32 %v48, 4294901760
  %v6331 = vsub.f32 %v48, %v6330
  %6332 = vmatpush1.msra.mxu0 %v6331
  %6333 = vmatprep.subr.mxu0 0.0
  %v6334 = vand.u32 %v49, 4294901760
  %v6335 = vsub.f32 %v49, %v6334
  %6336 = vmatpush1.msra.mxu0 %v6335
  %6337 = vmatprep.subr.mxu0 0.0
  %v6338 = vand.u32 %v50, 4294901760
  %v6339 = vsub.f32 %v50, %v6338
  %6340 = vmatpush1.msra.mxu0 %v6339
  %6341 = vmatprep.subr.mxu0 0.0
  %v6342 = vand.u32 %v51, 4294901760
  %v6343 = vsub.f32 %v51, %v6342
  %6344 = vmatpush1.msra.mxu0 %v6343
  %6345 = vmatprep.subr.mxu0 0.0
  %v6346 = vand.u32 %v52, 4294901760
  %v6347 = vsub.f32 %v52, %v6346
  %6348 = vmatpush1.msra.mxu0 %v6347
  %6349 = vmatprep.subr.mxu0 0.0
  %v6350 = vand.u32 %v53, 4294901760
  %v6351 = vsub.f32 %v53, %v6350
  %6352 = vmatpush1.msra.mxu0 %v6351
  %6353 = vmatprep.subr.mxu0 0.0
  %v6354 = vand.u32 %v54, 4294901760
  %v6355 = vsub.f32 %v54, %v6354
  %6356 = vmatpush1.msra.mxu0 %v6355
  %6357 = vmatprep.subr.mxu0 0.0
  %v6358 = vand.u32 %v55, 4294901760
  %v6359 = vsub.f32 %v55, %v6358
  %6360 = vmatpush1.msra.mxu0 %v6359
  %6361 = vmatprep.subr.mxu0 0.0
  %v6362 = vand.u32 %v56, 4294901760
  %v6363 = vsub.f32 %v56, %v6362
  %6364 = vmatpush1.msra.mxu0 %v6363
  %6365 = vmatprep.subr.mxu0 0.0
  %v6366 = vand.u32 %v57, 4294901760
  %v6367 = vsub.f32 %v57, %v6366
  %6368 = vmatpush1.msra.mxu0 %v6367
  %6369 = vmatprep.subr.mxu0 0.0
  %6370 = vmatpush1.msra.mxu0 0.0
  %6371 = vmatprep.subr.mxu0 0.0
  %6372 = vmatpush1.msra.mxu0 0.0
  %6373 = vmatprep.subr.mxu0 0.0
  %6374 = vmatpush1.msra.mxu0 0.0
  %6375 = vmatprep.subr.mxu0 0.0
  %6376 = vmatpush1.msra.mxu0 0.0
  %6377 = vmatprep.subr.mxu0 0.0
  %6378 = vmatpush1.msra.mxu0 0.0
  %6379 = vmatprep.subr.mxu0 0.0
  %6380 = vmatpush1.msra.mxu0 0.0
  %6381 = vmatprep.subr.mxu0 0.0
  %6382 = vmatpush1.msra.mxu0 0.0
  %6383 = vmatprep.subr.mxu0 0.0
  %6384 = vmatpush1.msra.mxu0 0.0
  %6385 = vmatprep.subr.mxu0 0.0
  %6386 = vmatpush1.msra.mxu0 0.0
  %6387 = vmatprep.subr.mxu0 0.0
  %6388 = vmatpush1.msra.mxu0 0.0
  %6389 = vmatprep.subr.mxu0 0.0
  %6390 = vmatpush1.msra.mxu0 0.0
  %6391 = vmatprep.subr.mxu0 0.0
  %6392 = vmatpush1.msra.mxu0 0.0
  %6393 = vmatprep.subr.mxu0 0.0
  %6394 = vmatpush1.msra.mxu0 0.0
  %6395 = vmatprep.subr.mxu0 0.0
  %6396 = vmatpush1.msra.mxu0 0.0
  %6397 = vmatprep.subr.mxu0 0.0
  %6398 = vmatpush1.msra.mxu0 0.0
  %6399 = vmatprep.subr.mxu0 0.0
  %6400 = vmatpush1.msra.mxu0 0.0
  %6401 = vmatprep.mubr.f32.mxu0 0.0
  %v6402 = vand.u32 %v6045, 4294901760
  %v6403 = vsub.f32 %v6045, %v6402
  %6404 = vmatmul.mubr.f32.gmra.mrb[0].mxu0 %v6403
  %v6405 = vpop.f32.mrb[0].mxu0
  %v6406 = vadd.f32 %v6296, %v6405
  %v6407 = vpop.f32.mrb[0].mxu0
  %6408 = vmatprep.mubr.f32.mxu0 0.0
  %v6409 = vand.u32 %v6046, 4294901760
  %v6410 = vsub.f32 %v6046, %v6409
  %6411 = vmatmul.mubr.f32.gmra.mrb[0].mxu0 %v6410
  %v6412 = vpop.f32.mrb[0].mxu0
  %v6413 = vadd.f32 %v6302, %v6412
  %v6414 = vpop.f32.mrb[0].mxu0
  %6415 = vdwg.mxu0
  %6416 = vmatprep.subr.mxu0 0.0
  %v6417 = vand.u32 %v42, 4294901760
  %6418 = vmatpush1.msra.mxu0 %v6417
  %6419 = vmatprep.subr.mxu0 0.0
  %v6420 = vand.u32 %v43, 4294901760
  %6421 = vmatpush1.msra.mxu0 %v6420
  %6422 = vmatprep.subr.mxu0 0.0
  %v6423 = vand.u32 %v44, 4294901760
  %6424 = vmatpush1.msra.mxu0 %v6423
  %6425 = vmatprep.subr.mxu0 0.0
  %v6426 = vand.u32 %v45, 4294901760
  %6427 = vmatpush1.msra.mxu0 %v6426
  %6428 = vmatprep.subr.mxu0 0.0
  %v6429 = vand.u32 %v46, 4294901760
  %6430 = vmatpush1.msra.mxu0 %v6429
  %6431 = vmatprep.subr.mxu0 0.0
  %v6432 = vand.u32 %v47, 4294901760
  %6433 = vmatpush1.msra.mxu0 %v6432
  %6434 = vmatprep.subr.mxu0 0.0
  %v6435 = vand.u32 %v48, 4294901760
  %6436 = vmatpush1.msra.mxu0 %v6435
  %6437 = vmatprep.subr.mxu0 0.0
  %v6438 = vand.u32 %v49, 4294901760
  %6439 = vmatpush1.msra.mxu0 %v6438
  %6440 = vmatprep.subr.mxu0 0.0
  %v6441 = vand.u32 %v50, 4294901760
  %6442 = vmatpush1.msra.mxu0 %v6441
  %6443 = vmatprep.subr.mxu0 0.0
  %v6444 = vand.u32 %v51, 4294901760
  %6445 = vmatpush1.msra.mxu0 %v6444
  %6446 = vmatprep.subr.mxu0 0.0
  %v6447 = vand.u32 %v52, 4294901760
  %6448 = vmatpush1.msra.mxu0 %v6447
  %6449 = vmatprep.subr.mxu0 0.0
  %v6450 = vand.u32 %v53, 4294901760
  %6451 = vmatpush1.msra.mxu0 %v6450
  %6452 = vmatprep.subr.mxu0 0.0
  %v6453 = vand.u32 %v54, 4294901760
  %6454 = vmatpush1.msra.mxu0 %v6453
  %6455 = vmatprep.subr.mxu0 0.0
  %v6456 = vand.u32 %v55, 4294901760
  %6457 = vmatpush1.msra.mxu0 %v6456
  %6458 = vmatprep.subr.mxu0 0.0
  %v6459 = vand.u32 %v56, 4294901760
  %6460 = vmatpush1.msra.mxu0 %v6459
  %6461 = vmatprep.subr.mxu0 0.0
  %v6462 = vand.u32 %v57, 4294901760
  %6463 = vmatpush1.msra.mxu0 %v6462
  %6464 = vmatprep.subr.mxu0 0.0
  %6465 = vmatpush1.msra.mxu0 0.0
  %6466 = vmatprep.subr.mxu0 0.0
  %6467 = vmatpush1.msra.mxu0 0.0
  %6468 = vmatprep.subr.mxu0 0.0
  %6469 = vmatpush1.msra.mxu0 0.0
  %6470 = vmatprep.subr.mxu0 0.0
  %6471 = vmatpush1.msra.mxu0 0.0
  %6472 = vmatprep.subr.mxu0 0.0
  %6473 = vmatpush1.msra.mxu0 0.0
  %6474 = vmatprep.subr.mxu0 0.0
  %6475 = vmatpush1.msra.mxu0 0.0
  %6476 = vmatprep.subr.mxu0 0.0
  %6477 = vmatpush1.msra.mxu0 0.0
  %6478 = vmatprep.subr.mxu0 0.0
  %6479 = vmatpush1.msra.mxu0 0.0
  %6480 = vmatprep.subr.mxu0 0.0
  %6481 = vmatpush1.msra.mxu0 0.0
  %6482 = vmatprep.subr.mxu0 0.0
  %6483 = vmatpush1.msra.mxu0 0.0
  %6484 = vmatprep.subr.mxu0 0.0
  %6485 = vmatpush1.msra.mxu0 0.0
  %6486 = vmatprep.subr.mxu0 0.0
  %6487 = vmatpush1.msra.mxu0 0.0
  %6488 = vmatprep.subr.mxu0 0.0
  %6489 = vmatpush1.msra.mxu0 0.0
  %6490 = vmatprep.subr.mxu0 0.0
  %6491 = vmatpush1.msra.mxu0 0.0
  %6492 = vmatprep.subr.mxu0 0.0
  %6493 = vmatpush1.msra.mxu0 0.0
  %6494 = vmatprep.subr.mxu0 0.0
  %6495 = vmatpush1.msra.mxu0 0.0
  %6496 = vmatprep.mubr.f32.mxu0 0.0
  %v6497 = vand.u32 %v6045, 4294901760
  %v6498 = vsub.f32 %v6045, %v6497
  %v6499 = vand.u32 %v6498, 4294901760
  %6500 = vmatmul.mubr.f32.gmra.mrb[0].mxu0 %v6499
  %v6501 = vpop.f32.mrb[0].mxu0
  %v6502 = vadd.f32 %v6406, %v6501
  %v6503 = vpop.f32.mrb[0].mxu0
  %6504 = vmatprep.mubr.f32.mxu0 0.0
  %v6505 = vand.u32 %v6046, 4294901760
  %v6506 = vsub.f32 %v6046, %v6505
  %v6507 = vand.u32 %v6506, 4294901760
  %6508 = vmatmul.mubr.f32.gmra.mrb[0].mxu0 %v6507
  %v6509 = vpop.f32.mrb[0].mxu0
  %v6510 = vadd.f32 %v6413, %v6509
  %v6511 = vpop.f32.mrb[0].mxu0
  %6512 = vdwg.mxu0
  %6513 = vmatprep.subr.mxu0 0.0
  %v6514 = vand.u32 %v42, 4294901760
  %v6515 = vsub.f32 %v42, %v6514
  %v6516 = vand.u32 %v6515, 4294901760
  %6517 = vmatpush1.msra.mxu0 %v6516
  %6518 = vmatprep.subr.mxu0 0.0
  %v6519 = vand.u32 %v43, 4294901760
  %v6520 = vsub.f32 %v43, %v6519
  %v6521 = vand.u32 %v6520, 4294901760
  %6522 = vmatpush1.msra.mxu0 %v6521
  %6523 = vmatprep.subr.mxu0 0.0
  %v6524 = vand.u32 %v44, 4294901760
  %v6525 = vsub.f32 %v44, %v6524
  %v6526 = vand.u32 %v6525, 4294901760
  %6527 = vmatpush1.msra.mxu0 %v6526
  %6528 = vmatprep.subr.mxu0 0.0
  %v6529 = vand.u32 %v45, 4294901760
  %v6530 = vsub.f32 %v45, %v6529
  %v6531 = vand.u32 %v6530, 4294901760
  %6532 = vmatpush1.msra.mxu0 %v6531
  %6533 = vmatprep.subr.mxu0 0.0
  %v6534 = vand.u32 %v46, 4294901760
  %v6535 = vsub.f32 %v46, %v6534
  %v6536 = vand.u32 %v6535, 4294901760
  %6537 = vmatpush1.msra.mxu0 %v6536
  %6538 = vmatprep.subr.mxu0 0.0
  %v6539 = vand.u32 %v47, 4294901760
  %v6540 = vsub.f32 %v47, %v6539
  %v6541 = vand.u32 %v6540, 4294901760
  %6542 = vmatpush1.msra.mxu0 %v6541
  %6543 = vmatprep.subr.mxu0 0.0
  %v6544 = vand.u32 %v48, 4294901760
  %v6545 = vsub.f32 %v48, %v6544
  %v6546 = vand.u32 %v6545, 4294901760
  %6547 = vmatpush1.msra.mxu0 %v6546
  %6548 = vmatprep.subr.mxu0 0.0
  %v6549 = vand.u32 %v49, 4294901760
  %v6550 = vsub.f32 %v49, %v6549
  %v6551 = vand.u32 %v6550, 4294901760
  %6552 = vmatpush1.msra.mxu0 %v6551
  %6553 = vmatprep.subr.mxu0 0.0
  %v6554 = vand.u32 %v50, 4294901760
  %v6555 = vsub.f32 %v50, %v6554
  %v6556 = vand.u32 %v6555, 4294901760
  %6557 = vmatpush1.msra.mxu0 %v6556
  %6558 = vmatprep.subr.mxu0 0.0
  %v6559 = vand.u32 %v51, 4294901760
  %v6560 = vsub.f32 %v51, %v6559
  %v6561 = vand.u32 %v6560, 4294901760
  %6562 = vmatpush1.msra.mxu0 %v6561
  %6563 = vmatprep.subr.mxu0 0.0
  %v6564 = vand.u32 %v52, 4294901760
  %v6565 = vsub.f32 %v52, %v6564
  %v6566 = vand.u32 %v6565, 4294901760
  %6567 = vmatpush1.msra.mxu0 %v6566
  %6568 = vmatprep.subr.mxu0 0.0
  %v6569 = vand.u32 %v53, 4294901760
  %v6570 = vsub.f32 %v53, %v6569
  %v6571 = vand.u32 %v6570, 4294901760
  %6572 = vmatpush1.msra.mxu0 %v6571
  %6573 = vmatprep.subr.mxu0 0.0
  %v6574 = vand.u32 %v54, 4294901760
  %v6575 = vsub.f32 %v54, %v6574
  %v6576 = vand.u32 %v6575, 4294901760
  %6577 = vmatpush1.msra.mxu0 %v6576
  %6578 = vmatprep.subr.mxu0 0.0
  %v6579 = vand.u32 %v55, 4294901760
  %v6580 = vsub.f32 %v55, %v6579
  %v6581 = vand.u32 %v6580, 4294901760
  %6582 = vmatpush1.msra.mxu0 %v6581
  %6583 = vmatprep.subr.mxu0 0.0
  %v6584 = vand.u32 %v56, 4294901760
  %v6585 = vsub.f32 %v56, %v6584
  %v6586 = vand.u32 %v6585, 4294901760
  %6587 = vmatpush1.msra.mxu0 %v6586
  %6588 = vmatprep.subr.mxu0 0.0
  %v6589 = vand.u32 %v57, 4294901760
  %v6590 = vsub.f32 %v57, %v6589
  %v6591 = vand.u32 %v6590, 4294901760
  %6592 = vmatpush1.msra.mxu0 %v6591
  %6593 = vmatprep.subr.mxu0 0.0
  %6594 = vmatpush1.msra.mxu0 0.0
  %6595 = vmatprep.subr.mxu0 0.0
  %6596 = vmatpush1.msra.mxu0 0.0
  %6597 = vmatprep.subr.mxu0 0.0
  %6598 = vmatpush1.msra.mxu0 0.0
  %6599 = vmatprep.subr.mxu0 0.0
  %6600 = vmatpush1.msra.mxu0 0.0
  %6601 = vmatprep.subr.mxu0 0.0
  %6602 = vmatpush1.msra.mxu0 0.0
  %6603 = vmatprep.subr.mxu0 0.0
  %6604 = vmatpush1.msra.mxu0 0.0
  %6605 = vmatprep.subr.mxu0 0.0
  %6606 = vmatpush1.msra.mxu0 0.0
  %6607 = vmatprep.subr.mxu0 0.0
  %6608 = vmatpush1.msra.mxu0 0.0
  %6609 = vmatprep.subr.mxu0 0.0
  %6610 = vmatpush1.msra.mxu0 0.0
  %6611 = vmatprep.subr.mxu0 0.0
  %6612 = vmatpush1.msra.mxu0 0.0
  %6613 = vmatprep.subr.mxu0 0.0
  %6614 = vmatpush1.msra.mxu0 0.0
  %6615 = vmatprep.subr.mxu0 0.0
  %6616 = vmatpush1.msra.mxu0 0.0
  %6617 = vmatprep.subr.mxu0 0.0
  %6618 = vmatpush1.msra.mxu0 0.0
  %6619 = vmatprep.subr.mxu0 0.0
  %6620 = vmatpush1.msra.mxu0 0.0
  %6621 = vmatprep.subr.mxu0 0.0
  %6622 = vmatpush1.msra.mxu0 0.0
  %6623 = vmatprep.subr.mxu0 0.0
  %6624 = vmatpush1.msra.mxu0 0.0
  %6625 = vmatprep.mubr.f32.mxu0 0.0
  %v6626 = vand.u32 %v6045, 4294901760
  %6627 = vmatmul.mubr.f32.gmra.mrb[0].mxu0 %v6626
  %v6628 = vpop.f32.mrb[0].mxu0
  %v6629 = vadd.f32 %v6502, %v6628
  %v6630 = vpop.f32.mrb[0].mxu0
  %6631 = vmatprep.mubr.f32.mxu0 0.0
  %v6632 = vand.u32 %v6046, 4294901760
  %6633 = vmatmul.mubr.f32.gmra.mrb[0].mxu0 %v6632
  %v6634 = vpop.f32.mrb[0].mxu0
  %v6635 = vadd.f32 %v6510, %v6634
  %v6636 = vpop.f32.mrb[0].mxu0
  %6637 = vdwg.mxu0
  %6638 = vmatprep.subr.mxu0 0.0
  %v6639 = vand.u32 %v42, 4294901760
  %6640 = vmatpush1.msra.mxu0 %v6639
  %6641 = vmatprep.subr.mxu0 0.0
  %v6642 = vand.u32 %v43, 4294901760
  %6643 = vmatpush1.msra.mxu0 %v6642
  %6644 = vmatprep.subr.mxu0 0.0
  %v6645 = vand.u32 %v44, 4294901760
  %6646 = vmatpush1.msra.mxu0 %v6645
  %6647 = vmatprep.subr.mxu0 0.0
  %v6648 = vand.u32 %v45, 4294901760
  %6649 = vmatpush1.msra.mxu0 %v6648
  %6650 = vmatprep.subr.mxu0 0.0
  %v6651 = vand.u32 %v46, 4294901760
  %6652 = vmatpush1.msra.mxu0 %v6651
  %6653 = vmatprep.subr.mxu0 0.0
  %v6654 = vand.u32 %v47, 4294901760
  %6655 = vmatpush1.msra.mxu0 %v6654
  %6656 = vmatprep.subr.mxu0 0.0
  %v6657 = vand.u32 %v48, 4294901760
  %6658 = vmatpush1.msra.mxu0 %v6657
  %6659 = vmatprep.subr.mxu0 0.0
  %v6660 = vand.u32 %v49, 4294901760
  %6661 = vmatpush1.msra.mxu0 %v6660
  %6662 = vmatprep.subr.mxu0 0.0
  %v6663 = vand.u32 %v50, 4294901760
  %6664 = vmatpush1.msra.mxu0 %v6663
  %6665 = vmatprep.subr.mxu0 0.0
  %v6666 = vand.u32 %v51, 4294901760
  %6667 = vmatpush1.msra.mxu0 %v6666
  %6668 = vmatprep.subr.mxu0 0.0
  %v6669 = vand.u32 %v52, 4294901760
  %6670 = vmatpush1.msra.mxu0 %v6669
  %6671 = vmatprep.subr.mxu0 0.0
  %v6672 = vand.u32 %v53, 4294901760
  %6673 = vmatpush1.msra.mxu0 %v6672
  %6674 = vmatprep.subr.mxu0 0.0
  %v6675 = vand.u32 %v54, 4294901760
  %6676 = vmatpush1.msra.mxu0 %v6675
  %6677 = vmatprep.subr.mxu0 0.0
  %v6678 = vand.u32 %v55, 4294901760
  %6679 = vmatpush1.msra.mxu0 %v6678
  %6680 = vmatprep.subr.mxu0 0.0
  %v6681 = vand.u32 %v56, 4294901760
  %6682 = vmatpush1.msra.mxu0 %v6681
  %6683 = vmatprep.subr.mxu0 0.0
  %v6684 = vand.u32 %v57, 4294901760
  %6685 = vmatpush1.msra.mxu0 %v6684
  %6686 = vmatprep.subr.mxu0 0.0
  %6687 = vmatpush1.msra.mxu0 0.0
  %6688 = vmatprep.subr.mxu0 0.0
  %6689 = vmatpush1.msra.mxu0 0.0
  %6690 = vmatprep.subr.mxu0 0.0
  %6691 = vmatpush1.msra.mxu0 0.0
  %6692 = vmatprep.subr.mxu0 0.0
  %6693 = vmatpush1.msra.mxu0 0.0
  %6694 = vmatprep.subr.mxu0 0.0
  %6695 = vmatpush1.msra.mxu0 0.0
  %6696 = vmatprep.subr.mxu0 0.0
  %6697 = vmatpush1.msra.mxu0 0.0
  %6698 = vmatprep.subr.mxu0 0.0
  %6699 = vmatpush1.msra.mxu0 0.0
  %6700 = vmatprep.subr.mxu0 0.0
  %6701 = vmatpush1.msra.mxu0 0.0
  %6702 = vmatprep.subr.mxu0 0.0
  %6703 = vmatpush1.msra.mxu0 0.0
  %6704 = vmatprep.subr.mxu0 0.0
  %6705 = vmatpush1.msra.mxu0 0.0
  %6706 = vmatprep.subr.mxu0 0.0
  %6707 = vmatpush1.msra.mxu0 0.0
  %6708 = vmatprep.subr.mxu0 0.0
  %6709 = vmatpush1.msra.mxu0 0.0
  %6710 = vmatprep.subr.mxu0 0.0
  %6711 = vmatpush1.msra.mxu0 0.0
  %6712 = vmatprep.subr.mxu0 0.0
  %6713 = vmatpush1.msra.mxu0 0.0
  %6714 = vmatprep.subr.mxu0 0.0
  %6715 = vmatpush1.msra.mxu0 0.0
  %6716 = vmatprep.subr.mxu0 0.0
  %6717 = vmatpush1.msra.mxu0 0.0
  %6718 = vmatprep.mubr.f32.mxu0 0.0
  %v6719 = vand.u32 %v6045, 4294901760
  %6720 = vmatmul.mubr.f32.gmra.mrb[0].mxu0 %v6719
  %v6721 = vpop.f32.mrb[0].mxu0
  %v6722 = vadd.f32 %v6629, %v6721
  %v6723 = vpop.f32.mrb[0].mxu0
  %6724 = vmatprep.mubr.f32.mxu0 0.0
  %v6725 = vand.u32 %v6046, 4294901760
  %6726 = vmatmul.mubr.f32.gmra.mrb[0].mxu0 %v6725
  %v6727 = vpop.f32.mrb[0].mxu0
  %v6728 = vadd.f32 %v6635, %v6727
  %v6729 = vpop.f32.mrb[0].mxu0
  %6730 = vdwg.mxu0
  %v6731 = vadd.f32 %v6722, %v6728
  %v6732 = vrot.slane %v6731, 4
  %v6733 = vadd.f32 %v6731, %v6732
  %v6734 = vrot.slane %v6733, 2
  %v6735 = vadd.f32 %v6733, %v6734
  %v6736 = vrot.slane %v6735, 1
  %v6737 = vadd.f32 %v6735, %v6736
  %6738 = vst [vmem:[%s5] sm:$0x1] %v6737
  // Predicated region
  $region22: #{ssim_loss_pallas.1} parent=0 // pred_check
    _
  $region23: #{ssim_loss_pallas.1} parent=0 // pred_check_branch
    %6740 = sbr.rel (0) target = $region25
  $region24: #{ssim_loss_pallas.1} parent=0 // pred_region
    _
  $region25: #{ssim_loss_pallas.1} parent=0 // pred_fallthru
    _
  // Predicated region
  $region26: #{ssim_loss_pallas.1} parent=0 // pred_check
    _
  $region27: #{ssim_loss_pallas.1} parent=0 // pred_check_branch
    %6742 = sbr.rel (0) target = $region29
  $region28: #{ssim_loss_pallas.1} parent=0 // pred_region
    _
  $region29: #{ssim_loss_pallas.1} parent=0 // pred_fallthru
    _

</llo_original>
